<compile_context>
chip_gen: v5e
topology: v5e:2x2
jax: 0.10.0
libtpu: 0.0.40
codegen_flags: <defaults>
</compile_context>

<pallas_src>
import functools
import math

import jax
import jax.numpy as jnp
from jax.experimental import pallas as pl
from jax.experimental.pallas import tpu as pltpu

NEG = -1e30          # additive mask value standing in for -inf (finite in f32)
EPS = 1e-5
PROB_DTYPE = jnp.float32   # switch to jnp.bfloat16 to halve attention-prob HBM writes


# ----------------------------------------------------------------------------
# In-kernel helpers
# ----------------------------------------------------------------------------
def _layernorm(y, g, b):
    """f32 LayerNorm over the last axis.  g/b are (1, D)."""
    mean = jnp.mean(y, axis=-1, keepdims=True)
    var = jnp.mean(jnp.square(y - mean), axis=-1, keepdims=True)
    return (y - mean) * jax.lax.rsqrt(var + EPS) * g + b


def _mha_heads(q_bf, k_bf, v_bf, mask_f32, prob_ref, ctx_ref,
               *, B, Sq, Sk, nhead, scale):
    """Per-(batch, head) softmax attention on bf16 q/k/v.

    q_bf: (B*Sq, D) bf16; k_bf, v_bf: (B*Sk, D) bf16;
    mask_f32: additive f32 mask (B, 1 or Sq, Sk).
    Writes probabilities to prob_ref[0, b, :, h*Sk:(h+1)*Sk] (lane-folded heads) and
    each head's context into ctx_ref[b*Sq:(b+1)*Sq, h*Dh:(h+1)*Dh] (no lane concat).
    """
    D = q_bf.shape[-1]
    Dh = D // nhead
    for b in range(B):                                   # static, B is tiny
        mb = jnp.broadcast_to(mask_f32[b], (Sq, Sk))
        qr = slice(b * Sq, (b + 1) * Sq)
        kr = slice(b * Sk, (b + 1) * Sk)
        for h in range(nhead):                           # static unrolled head loop
            hc = slice(h * Dh, (h + 1) * Dh)
            s = jax.lax.dot_general(                     # q @ k.T without explicit .T
                q_bf[qr, hc], k_bf[kr, hc],
                dimension_numbers=(((1,), (1,)), ((), ())),
                preferred_element_type=jnp.float32) * scale + mb
            s = s - jnp.max(s, axis=-1, keepdims=True)
            e = jnp.exp(s)
            p = e * pl.reciprocal(jnp.sum(e, axis=-1, keepdims=True), approx=True)
            prob_ref[0, b, :, h * Sk:(h + 1) * Sk] = p.astype(prob_ref.dtype)
            ctx_ref[qr, hc] = jnp.dot(p.astype(jnp.bfloat16), v_bf[kr, hc],
                                      preferred_element_type=jnp.float32)


# ----------------------------------------------------------------------------
# Whole-encoder-stack kernel (grid = layer index, "arbitrary")
# ----------------------------------------------------------------------------
def _encoder_stack_kernel(x_ref, mask_ref,
                          wqkv_ref, bqkv_ref, wo_ref, bo_ref, g1_ref, b1_ref,
                          w1_ref, fb1_ref, w2_ref, fb2_ref, g2_ref, b2_ref,
                          gf_ref, bff_ref,
                          layers_ref, probs_ref, memory_ref,
                          carry_ref, ctx_ref,
                          *, B, S, D, nhead, scale):
    i = pl.program_id(0)

    @pl.when(i == 0)
    def _init():
        carry_ref[...] = x_ref[...]                      # embeddings + PE, f32

    x = carry_ref[...]                                   # (B*S, D) f32
    mask = mask_ref[...]                                 # (B, 1, S) f32 additive

    # ---- self-attention sublayer (fused QKV, bf16 weights, f32 accumulation) ----
    qkv = jnp.dot(x.astype(jnp.bfloat16), wqkv_ref[0],
                  preferred_element_type=jnp.float32) + bqkv_ref[0]
    _mha_heads(qkv[:, :D].astype(jnp.bfloat16),
               qkv[:, D:2 * D].astype(jnp.bfloat16),
               qkv[:, 2 * D:].astype(jnp.bfloat16),
               mask, probs_ref, ctx_ref, B=B, Sq=S, Sk=S, nhead=nhead, scale=scale)
    attn = jnp.dot(ctx_ref[...].astype(jnp.bfloat16), wo_ref[0],
                   preferred_element_type=jnp.float32) + bo_ref[0]
    y = _layernorm(x + attn, g1_ref[0], b1_ref[0])

    # ---- feed-forward sublayer ----
    h = jnp.maximum(jnp.dot(y.astype(jnp.bfloat16), w1_ref[0],
                            preferred_element_type=jnp.float32) + fb1_ref[0], 0.0)
    y2 = y + jnp.dot(h.astype(jnp.bfloat16), w2_ref[0],
                     preferred_element_type=jnp.float32) + fb2_ref[0]
    y2 = _layernorm(y2, g2_ref[0], b2_ref[0])

    carry_ref[...] = y2
    layers_ref[0] = y2.astype(layers_ref.dtype)
    # Final encoder LayerNorm fused as epilogue; last grid step's value survives.
    memory_ref[...] = _layernorm(y2, gf_ref[...], bff_ref[...]).astype(memory_ref.dtype)


def encoder_stack(x_emb, enc_mask, ep, fin_g, fin_b, nhead):
    B, S, D = x_emb.shape
    L = ep["wqkv"].shape[0]
    F = ep["w1"].shape[2]
    H = nhead
    scale = 1.0 / math.sqrt(D // H)
    x2 = x_emb.reshape(B * S, D).astype(jnp.float32)

    const2 = lambda i: (0, 0)
    const3 = lambda i: (0, 0, 0)
    stk3 = lambda i: (i, 0, 0)

    kernel = functools.partial(_encoder_stack_kernel, B=B, S=S, D=D,
                               nhead=H, scale=scale)
    layers, probs, memory = pl.pallas_call(
        kernel,
        out_shape=(
            jax.ShapeDtypeStruct((L, B * S, D), jnp.float32),      # per-layer outputs
            jax.ShapeDtypeStruct((L, B, S, H * S), PROB_DTYPE),    # lane-folded probs
            jax.ShapeDtypeStruct((B * S, D), jnp.float32),         # final-norm memory
        ),
        grid=(L,),
        in_specs=[
            pl.BlockSpec((B * S, D), const2),            # embeddings + PE
            pl.BlockSpec((B, 1, S), const3),             # additive key-padding mask
            pl.BlockSpec((1, D, 3 * D), stk3),           # fused QKV weight (bf16)
            pl.BlockSpec((1, 1, 3 * D), stk3),           # fused QKV bias
            pl.BlockSpec((1, D, D), stk3),               # out-proj weight (bf16)
            pl.BlockSpec((1, 1, D), stk3),               # out-proj bias
            pl.BlockSpec((1, 1, D), stk3),               # norm1 gamma
            pl.BlockSpec((1, 1, D), stk3),               # norm1 beta
            pl.BlockSpec((1, D, F), stk3),               # lin1 weight (bf16)
            pl.BlockSpec((1, 1, F), stk3),               # lin1 bias
            pl.BlockSpec((1, F, D), stk3),               # lin2 weight (bf16)
            pl.BlockSpec((1, 1, D), stk3),               # lin2 bias
            pl.BlockSpec((1, 1, D), stk3),               # norm2 gamma
            pl.BlockSpec((1, 1, D), stk3),               # norm2 beta
            pl.BlockSpec((1, D), const2),                # final encoder norm gamma
            pl.BlockSpec((1, D), const2),                # final encoder norm beta
        ],
        out_specs=(
            pl.BlockSpec((1, B * S, D), stk3),
            pl.BlockSpec((1, B, S, H * S), lambda i: (i, 0, 0, 0)),
            pl.BlockSpec((B * S, D), const2),
        ),
        scratch_shapes=[pltpu.VMEM((B * S, D), jnp.float32),   # activation carry
                        pltpu.VMEM((B * S, D), jnp.float32)],  # per-head ctx accum
        compiler_params=pltpu.CompilerParams(dimension_semantics=("arbitrary",)),
    )(x2, enc_mask,
      ep["wqkv"], ep["bqkv"], ep["wo"], ep["bo"], ep["ln1_g"], ep["ln1_b"],
      ep["w1"], ep["b1"], ep["w2"], ep["b2"], ep["ln2_g"], ep["ln2_b"],
      fin_g, fin_b)

    enc_layers = [layers[l].reshape(B, S, D) for l in range(L)]
    enc_atts = _unfold_probs(probs, B, S, H, S)
    return memory.reshape(B, S, D), enc_layers, enc_atts


# ----------------------------------------------------------------------------
# Whole-decoder-stack kernel (grid = layer index, "arbitrary")
# ----------------------------------------------------------------------------
def _decoder_stack_kernel(y0_ref, mem_ref, smask_ref, cmask_ref,
                          swqkv_ref, sbqkv_ref, swo_ref, sbo_ref, g1_ref, b1_ref,
                          cwq_ref, cbq_ref, cwkv_ref, cbkv_ref, cwo_ref, cbo_ref,
                          g2_ref, b2_ref,
                          w1_ref, fb1_ref, w2_ref, fb2_ref, g3_ref, b3_ref,
                          gf_ref, bff_ref,
                          layers_ref, sprobs_ref, cprobs_ref, out_ref,
                          carry_ref, ctx_ref,
                          *, B, St, Ss, D, nhead, scale):
    i = pl.program_id(0)

    @pl.when(i == 0)
    def _init():
        carry_ref[...] = y0_ref[...]

    x = carry_ref[...]                                   # (B*St, D) f32
    mem = mem_ref[...]                                   # (B*Ss, D) f32
    smask = smask_ref[...]                               # (B, St, St) causal + padding
    cmask = cmask_ref[...]                               # (B, 1, Ss)

    # ---- masked self-attention (fused QKV) ----
    qkv = jnp.dot(x.astype(jnp.bfloat16), swqkv_ref[0],
                  preferred_element_type=jnp.float32) + sbqkv_ref[0]
    _mha_heads(qkv[:, :D].astype(jnp.bfloat16),
               qkv[:, D:2 * D].astype(jnp.bfloat16),
               qkv[:, 2 * D:].astype(jnp.bfloat16),
               smask, sprobs_ref, ctx_ref, B=B, Sq=St, Sk=St, nhead=nhead, scale=scale)
    sattn = jnp.dot(ctx_ref[...].astype(jnp.bfloat16), swo_ref[0],
                    preferred_element_type=jnp.float32) + sbo_ref[0]
    y1 = _layernorm(x + sattn, g1_ref[0], b1_ref[0])

    # ---- cross-attention (fused K|V on the encoder memory) ----
    q = jnp.dot(y1.astype(jnp.bfloat16), cwq_ref[0],
                preferred_element_type=jnp.float32) + cbq_ref[0]
    kv = jnp.dot(mem.astype(jnp.bfloat16), cwkv_ref[0],
                 preferred_element_type=jnp.float32) + cbkv_ref[0]
    _mha_heads(q.astype(jnp.bfloat16),
               kv[:, :D].astype(jnp.bfloat16),
               kv[:, D:].astype(jnp.bfloat16),
               cmask, cprobs_ref, ctx_ref, B=B, Sq=St, Sk=Ss, nhead=nhead, scale=scale)
    cattn = jnp.dot(ctx_ref[...].astype(jnp.bfloat16), cwo_ref[0],
                    preferred_element_type=jnp.float32) + cbo_ref[0]
    y2 = _layernorm(y1 + cattn, g2_ref[0], b2_ref[0])

    # ---- feed-forward sublayer ----
    h = jnp.maximum(jnp.dot(y2.astype(jnp.bfloat16), w1_ref[0],
                            preferred_element_type=jnp.float32) + fb1_ref[0], 0.0)
    y3 = y2 + jnp.dot(h.astype(jnp.bfloat16), w2_ref[0],
                      preferred_element_type=jnp.float32) + fb2_ref[0]
    y3 = _layernorm(y3, g3_ref[0], b3_ref[0])

    carry_ref[...] = y3
    layers_ref[0] = y3.astype(layers_ref.dtype)
    # Final decoder LayerNorm fused as epilogue; last grid step's value survives.
    out_ref[...] = _layernorm(y3, gf_ref[...], bff_ref[...]).astype(out_ref.dtype)


def decoder_stack(y_emb, memory, smask, cmask, dp, fin_g, fin_b, nhead):
    B, St, D = y_emb.shape
    Ss = memory.shape[1]
    L = dp["s_wqkv"].shape[0]
    F = dp["w1"].shape[2]
    H = nhead
    scale = 1.0 / math.sqrt(D // H)
    y2d = y_emb.reshape(B * St, D).astype(jnp.float32)
    mem2d = memory.reshape(B * Ss, D).astype(jnp.float32)

    const2 = lambda i: (0, 0)
    const3 = lambda i: (0, 0, 0)
    stk3 = lambda i: (i, 0, 0)
    stk4 = lambda i: (i, 0, 0, 0)

    kernel = functools.partial(_decoder_stack_kernel, B=B, St=St, Ss=Ss, D=D,
                               nhead=H, scale=scale)
    layers, sprobs, cprobs, out = pl.pallas_call(
        kernel,
        out_shape=(
            jax.ShapeDtypeStruct((L, B * St, D), jnp.float32),
            jax.ShapeDtypeStruct((L, B, St, H * St), PROB_DTYPE),
            jax.ShapeDtypeStruct((L, B, St, H * Ss), PROB_DTYPE),
            jax.ShapeDtypeStruct((B * St, D), jnp.float32),
        ),
        grid=(L,),
        in_specs=[
            pl.BlockSpec((B * St, D), const2),           # tgt embeddings + PE
            pl.BlockSpec((B * Ss, D), const2),           # encoder memory
            pl.BlockSpec((B, St, St), const3),           # causal + tgt padding mask
            pl.BlockSpec((B, 1, Ss), const3),            # memory padding mask (zeros)
            pl.BlockSpec((1, D, 3 * D), stk3), pl.BlockSpec((1, 1, 3 * D), stk3),
            pl.BlockSpec((1, D, D), stk3), pl.BlockSpec((1, 1, D), stk3),
            pl.BlockSpec((1, 1, D), stk3), pl.BlockSpec((1, 1, D), stk3),
            pl.BlockSpec((1, D, D), stk3), pl.BlockSpec((1, 1, D), stk3),
            pl.BlockSpec((1, D, 2 * D), stk3), pl.BlockSpec((1, 1, 2 * D), stk3),
            pl.BlockSpec((1, D, D), stk3), pl.BlockSpec((1, 1, D), stk3),
            pl.BlockSpec((1, 1, D), stk3), pl.BlockSpec((1, 1, D), stk3),
            pl.BlockSpec((1, D, F), stk3), pl.BlockSpec((1, 1, F), stk3),
            pl.BlockSpec((1, F, D), stk3), pl.BlockSpec((1, 1, D), stk3),
            pl.BlockSpec((1, 1, D), stk3), pl.BlockSpec((1, 1, D), stk3),
            pl.BlockSpec((1, D), const2), pl.BlockSpec((1, D), const2),
        ],
        out_specs=(
            pl.BlockSpec((1, B * St, D), stk3),
            pl.BlockSpec((1, B, St, H * St), stk4),
            pl.BlockSpec((1, B, St, H * Ss), stk4),
            pl.BlockSpec((B * St, D), const2),
        ),
        scratch_shapes=[pltpu.VMEM((B * St, D), jnp.float32),
                        pltpu.VMEM((B * St, D), jnp.float32)],
        compiler_params=pltpu.CompilerParams(dimension_semantics=("arbitrary",)),
    )(y2d, mem2d, smask, cmask,
      dp["s_wqkv"], dp["s_bqkv"], dp["s_wo"], dp["s_bo"], dp["ln1_g"], dp["ln1_b"],
      dp["c_wq"], dp["c_bq"], dp["c_wkv"], dp["c_bkv"], dp["c_wo"], dp["c_bo"],
      dp["ln2_g"], dp["ln2_b"],
      dp["w1"], dp["b1"], dp["w2"], dp["b2"], dp["ln3_g"], dp["ln3_b"],
      fin_g, fin_b)

    dec_layers = [layers[l].reshape(B, St, D) for l in range(L)]
    dec_atts = _unfold_probs(sprobs, B, St, H, St)
    dec_atts2 = _unfold_probs(cprobs, B, St, H, Ss)
    return out.reshape(B, St, D), dec_layers, dec_atts, dec_atts2


def _unfold_probs(folded, B, Sq, H, Sk):
    """(L, B, Sq, H*Sk) lane-folded -> list of per-layer (B, H, Sq, Sk) f32."""
    L = folded.shape[0]
    p = folded.astype(jnp.float32).reshape(L, B, Sq, H, Sk).transpose(0, 1, 3, 2, 4)
    return [p[l] for l in range(L)]


# ----------------------------------------------------------------------------
# Model glue
# ----------------------------------------------------------------------------
def make_positional_encoding(max_len, d_model):
    position = jnp.arange(max_len, dtype=jnp.float32)[:, None]
    div_term = jnp.exp(jnp.arange(0, d_model, 2, dtype=jnp.float32)
                       * -(math.log(10000.0) / d_model))
    pe = jnp.zeros((max_len, d_model), dtype=jnp.float32)
    pe = pe.at[:, 0::2].set(jnp.sin(position * div_term))
    pe = pe.at[:, 1::2].set(jnp.cos(position * div_term))
    return pe  # [max_len, d_model]


def translation_model_forward(params, src_tok, tgt_tok, nhead):
    B, Ss = src_tok.shape
    St = tgt_tok.shape[1]

    # get_key_padding_mask: tokens == 2; tgt_mask = causal.  Additive f32 masks are
    # precomputed once here (tiny) so the kernels do no mask math.
    src_pad = jnp.where(src_tok == 2, NEG, 0.0).astype(jnp.float32)       # (B, Ss)
    tgt_pad = jnp.where(tgt_tok == 2, NEG, 0.0).astype(jnp.float32)       # (B, St)
    enc_mask = src_pad[:, None, :]                                        # (B, 1, Ss)
    causal = jnp.where(jnp.arange(St)[None, :] > jnp.arange(St)[:, None],
                       NEG, 0.0).astype(jnp.float32)                      # (St, St)
    dec_self_mask = tgt_pad[:, None, :] + causal[None, :, :]              # (B, St, St)
    dec_cross_mask = jnp.zeros((B, 1, Ss), jnp.float32)  # memory_key_padding_mask=None

    # TODO(synk): embedding gather + positional-encoding add stay in plain JAX
    # (single XLA gather each); dropout is identity (eval mode).
    src = jnp.take(params["src_emb"], src_tok, axis=0) + params["pe"][None, :Ss, :]
    tgt = jnp.take(params["tgt_emb"], tgt_tok, axis=0) + params["pe"][None, :St, :]

    memory, enc_layers, enc_atts = encoder_stack(
        src, enc_mask, params["enc"], params["enc_norm_g"], params["enc_norm_b"], nhead)
    out, dec_layers, dec_atts, dec_atts2 = decoder_stack(
        tgt, memory, dec_self_mask, dec_cross_mask, params["dec"],
        params["dec_norm_g"], params["dec_norm_b"], nhead)

    return out, enc_layers, enc_atts, dec_layers, dec_atts, dec_atts2


# ----------------------------------------------------------------------------
# Deterministic parameter init (weights stacked over layers, weights in bf16)
# ----------------------------------------------------------------------------
def init_params(key, *, d_model, nhead, dim_ff, n_enc, n_dec,
                src_vocab, tgt_vocab, max_len):
    ks = iter(jax.random.split(key, 64))
    D, F = d_model, dim_ff
    W = jnp.bfloat16     # weight dtype at the kernel boundary (per perf review)

    def nrm(shape, dtype=jnp.float32):
        return (0.02 * jax.random.normal(next(ks), shape)).astype(dtype)

    def zeros(shape):
        return jnp.zeros(shape, jnp.float32)

    def ones(shape):
        return jnp.ones(shape, jnp.float32)

    enc = dict(
        wqkv=nrm((n_enc, D, 3 * D), W), bqkv=zeros((n_enc, 1, 3 * D)),
        wo=nrm((n_enc, D, D), W), bo=zeros((n_enc, 1, D)),
        ln1_g=ones((n_enc, 1, D)), ln1_b=zeros((n_enc, 1, D)),
        w1=nrm((n_enc, D, F), W), b1=zeros((n_enc, 1, F)),
        w2=nrm((n_enc, F, D), W), b2=zeros((n_enc, 1, D)),
        ln2_g=ones((n_enc, 1, D)), ln2_b=zeros((n_enc, 1, D)),
    )
    dec = dict(
        s_wqkv=nrm((n_dec, D, 3 * D), W), s_bqkv=zeros((n_dec, 1, 3 * D)),
        s_wo=nrm((n_dec, D, D), W), s_bo=zeros((n_dec, 1, D)),
        ln1_g=ones((n_dec, 1, D)), ln1_b=zeros((n_dec, 1, D)),
        c_wq=nrm((n_dec, D, D), W), c_bq=zeros((n_dec, 1, D)),
        c_wkv=nrm((n_dec, D, 2 * D), W), c_bkv=zeros((n_dec, 1, 2 * D)),
        c_wo=nrm((n_dec, D, D), W), c_bo=zeros((n_dec, 1, D)),
        ln2_g=ones((n_dec, 1, D)), ln2_b=zeros((n_dec, 1, D)),
        w1=nrm((n_dec, D, F), W), b1=zeros((n_dec, 1, F)),
        w2=nrm((n_dec, F, D), W), b2=zeros((n_dec, 1, D)),
        ln3_g=ones((n_dec, 1, D)), ln3_b=zeros((n_dec, 1, D)),
    )

    src_emb = nrm((src_vocab, D)).at[2, :].set(0.0)    # padding_idx=2
    tgt_emb = nrm((tgt_vocab, D)).at[2, :].set(0.0)    # padding_idx=2

    return dict(
        src_emb=src_emb, tgt_emb=tgt_emb,
        pe=make_positional_encoding(max_len, D),
        enc=enc, dec=dec,
        enc_norm_g=ones((1, D)), enc_norm_b=zeros((1, D)),
        dec_norm_g=ones((1, D)), dec_norm_b=zeros((1, D)),
        # TODO(synk): predictor Linear(d_model, len(tgt_vocab)) exists in __init__
        # but is never called in forward; omitted from the compute path.
    )


# ----------------------------------------------------------------------------
# Main
# ----------------------------------------------------------------------------
if __name__ == "__main__":
    D_MODEL, NHEAD, DIM_FF = 32, 4, 64
    N_ENC, N_DEC = 2, 2
    SRC_VOCAB, TGT_VOCAB = 50, 60
    MAX_LEN = 64
    B, S_SRC, S_TGT = 2, 8, 8

    key = jax.random.PRNGKey(0)
    kp, ksrc, ktgt = jax.random.split(key, 3)
    params = init_params(kp, d_model=D_MODEL, nhead=NHEAD, dim_ff=DIM_FF,
                         n_enc=N_ENC, n_dec=N_DEC,
                         src_vocab=SRC_VOCAB, tgt_vocab=TGT_VOCAB, max_len=MAX_LEN)

    # token ids >= 3, with trailing pad tokens (id 2) in each sequence
    src_tok = jax.random.randint(ksrc, (B, S_SRC), 3, SRC_VOCAB, dtype=jnp.int32)
    tgt_tok = jax.random.randint(ktgt, (B, S_TGT), 3, TGT_VOCAB, dtype=jnp.int32)
    src_tok = src_tok.at[:, -2:].set(2)
    tgt_tok = tgt_tok.at[:, -1:].set(2)

    fwd = jax.jit(functools.partial(translation_model_forward, nhead=NHEAD))
    (out, enc_layers, enc_atts,
     dec_layers, dec_atts, dec_atts2) = fwd(params, src_tok, tgt_tok)

    jax.block_until_ready(out)
    for t in enc_layers + enc_atts + dec_layers + dec_atts + dec_atts2:
        jax.block_until_ready(t)

    assert out.shape == (B, S_TGT, D_MODEL)
    assert len(enc_layers) == N_ENC and enc_atts[0].shape == (B, NHEAD, S_SRC, S_SRC)
    assert len(dec_layers) == N_DEC and dec_atts[0].shape == (B, NHEAD, S_TGT, S_TGT)
    assert dec_atts2[0].shape == (B, NHEAD, S_TGT, S_SRC)
    assert bool(jnp.all(jnp.isfinite(out)))
    # attention rows are proper (approx) probability distributions
    assert bool(jnp.all(jnp.abs(jnp.sum(enc_atts[0], axis=-1) - 1.0) < 1e-2))

    print("KERNEL_OK")
</pallas_src>

<mosaic_0001>
module attributes {stable_mosaic.version = 11 : i64} {
  func.func @_encoder_stack_kernel(%arg0: i32, %arg1: memref<16x32xf32, #tpu.memory_space<vmem>>, %arg2: memref<2x1x8xf32, #tpu.memory_space<vmem>>, %arg3: memref<1x32x96xbf16, #tpu.memory_space<vmem>>, %arg4: memref<1x1x96xf32, #tpu.memory_space<vmem>>, %arg5: memref<1x32x32xbf16, #tpu.memory_space<vmem>>, %arg6: memref<1x1x32xf32, #tpu.memory_space<vmem>>, %arg7: memref<1x1x32xf32, #tpu.memory_space<vmem>>, %arg8: memref<1x1x32xf32, #tpu.memory_space<vmem>>, %arg9: memref<1x32x64xbf16, #tpu.memory_space<vmem>>, %arg10: memref<1x1x64xf32, #tpu.memory_space<vmem>>, %arg11: memref<1x64x32xbf16, #tpu.memory_space<vmem>>, %arg12: memref<1x1x32xf32, #tpu.memory_space<vmem>>, %arg13: memref<1x1x32xf32, #tpu.memory_space<vmem>>, %arg14: memref<1x1x32xf32, #tpu.memory_space<vmem>>, %arg15: memref<1x32xf32, #tpu.memory_space<vmem>>, %arg16: memref<1x32xf32, #tpu.memory_space<vmem>>, %arg17: memref<1x16x32xf32, #tpu.memory_space<vmem>>, %arg18: memref<1x2x8x32xf32, #tpu.memory_space<vmem>>, %arg19: memref<16x32xf32, #tpu.memory_space<vmem>>, %arg20: memref<16x32xf32, #tpu.memory_space<vmem>>, %arg21: memref<16x32xf32, #tpu.memory_space<vmem>>) attributes {dimension_semantics = [#tpu.dimension_semantics<arbitrary>], iteration_bounds = array<i64: 2>, scalar_prefetch = 0 : i64, scratch_operands = 2 : i64, tpu.core_type = #tpu.core_type<tc>, window_params = [{pipeline_mode = #tpu.pipeline_mode<synchronous>, transform_indices = @transform_0, window_bounds = array<i64: 16, 32>}, {pipeline_mode = #tpu.pipeline_mode<synchronous>, transform_indices = @transform_1, window_bounds = array<i64: 2, 1, 8>}, {transform_indices = @transform_2, window_bounds = array<i64: 1, 32, 96>}, {transform_indices = @transform_3, window_bounds = array<i64: 1, 1, 96>}, {transform_indices = @transform_4, window_bounds = array<i64: 1, 32, 32>}, {transform_indices = @transform_5, window_bounds = array<i64: 1, 1, 32>}, {transform_indices = @transform_6, window_bounds = array<i64: 1, 1, 32>}, {transform_indices = @transform_7, window_bounds = array<i64: 1, 1, 32>}, {transform_indices = @transform_8, window_bounds = array<i64: 1, 32, 64>}, {transform_indices = @transform_9, window_bounds = array<i64: 1, 1, 64>}, {transform_indices = @transform_10, window_bounds = array<i64: 1, 64, 32>}, {transform_indices = @transform_11, window_bounds = array<i64: 1, 1, 32>}, {transform_indices = @transform_12, window_bounds = array<i64: 1, 1, 32>}, {transform_indices = @transform_13, window_bounds = array<i64: 1, 1, 32>}, {pipeline_mode = #tpu.pipeline_mode<synchronous>, transform_indices = @transform_14, window_bounds = array<i64: 1, 32>}, {pipeline_mode = #tpu.pipeline_mode<synchronous>, transform_indices = @transform_15, window_bounds = array<i64: 1, 32>}, {transform_indices = @transform_16, window_bounds = array<i64: 1, 16, 32>}, {transform_indices = @transform_17, window_bounds = array<i64: 1, 2, 8, 32>}, {pipeline_mode = #tpu.pipeline_mode<synchronous>, transform_indices = @transform_18, window_bounds = array<i64: 16, 32>}]} {
    %c0_i32 = arith.constant 0 : i32
    %0 = arith.cmpi eq, %arg0, %c0_i32 : i32
    %1 = arith.extui %0 : i1 to i32
    %c0_i32_0 = arith.constant 0 : i32
    %2 = arith.cmpi ne, %1, %c0_i32_0 : i32
    scf.if %2 {
      %c0_157 = arith.constant 0 : index
      %c0_158 = arith.constant 0 : index
      %321 = vector.load %arg1[%c0_157, %c0_158] : memref<16x32xf32, #tpu.memory_space<vmem>>, vector<16x32xf32>
      %c0_159 = arith.constant 0 : index
      %c0_160 = arith.constant 0 : index
      %322 = vector.load %arg20[%c0_159, %c0_160] : memref<16x32xf32, #tpu.memory_space<vmem>>, vector<16x32xf32>
      tpu.vector_store %arg20[%c0_159, %c0_160], %321 {strides = array<i32>} : memref<16x32xf32, #tpu.memory_space<vmem>>, vector<16x32xf32>,
    } else {
    }
    %c0 = arith.constant 0 : index
    %c0_1 = arith.constant 0 : index
    %3 = vector.load %arg20[%c0, %c0_1] : memref<16x32xf32, #tpu.memory_space<vmem>>, vector<16x32xf32>
    %c0_2 = arith.constant 0 : index
    %c0_3 = arith.constant 0 : index
    %c0_4 = arith.constant 0 : index
    %4 = vector.load %arg2[%c0_2, %c0_3, %c0_4] : memref<2x1x8xf32, #tpu.memory_space<vmem>>, vector<2x1x8xf32>
    %5 = arith.truncf %3 : vector<16x32xf32> to vector<16x32xbf16>
    %c0_5 = arith.constant 0 : index
    %c0_6 = arith.constant 0 : index
    %c0_7 = arith.constant 0 : index
    %6 = vector.load %arg3[%c0_5, %c0_6, %c0_7] : memref<1x32x96xbf16, #tpu.memory_space<vmem>>, vector<1x32x96xbf16>
    %7 = vector.shape_cast %6 : vector<1x32x96xbf16> to vector<32x96xbf16>
    %cst = arith.constant dense<0.000000e+00> : vector<16x96xf32>
    %8 = tpu.matmul %5, %7, %cst {dimension_numbers = #tpu.dot_dimension_numbers<[1], [0], [0], [1], [0, 0, 1, 1], [], []>} : vector<16x32xbf16>, vector<32x96xbf16>, vector<16x96xf32> -> vector<16x96xf32>
    %c0_8 = arith.constant 0 : index
    %c0_9 = arith.constant 0 : index
    %c0_10 = arith.constant 0 : index
    %9 = vector.load %arg4[%c0_8, %c0_9, %c0_10] : memref<1x1x96xf32, #tpu.memory_space<vmem>>, vector<1x1x96xf32>
    %10 = vector.shape_cast %9 : vector<1x1x96xf32> to vector<1x96xf32>
    %11 = vector.broadcast %10 : vector<1x96xf32> to vector<16x96xf32>
    %12 = arith.addf %8, %11 : vector<16x96xf32>
    %13 = vector.extract_strided_slice %12 {offsets = [0, 0], sizes = [16, 32], strides = [1, 1]} : vector<16x96xf32> to vector<16x32xf32>
    %14 = arith.truncf %13 : vector<16x32xf32> to vector<16x32xbf16>
    %15 = vector.extract_strided_slice %12 {offsets = [0, 32], sizes = [16, 32], strides = [1, 1]} : vector<16x96xf32> to vector<16x32xf32>
    %16 = arith.truncf %15 : vector<16x32xf32> to vector<16x32xbf16>
    %17 = vector.extract_strided_slice %12 {offsets = [0, 64], sizes = [16, 32], strides = [1, 1]} : vector<16x96xf32> to vector<16x32xf32>
    %18 = arith.truncf %17 : vector<16x32xf32> to vector<16x32xbf16>
    %19 = vector.extract_strided_slice %4 {offsets = [0, 0, 0], sizes = [1, 1, 8], strides = [1, 1, 1]} : vector<2x1x8xf32> to vector<1x1x8xf32>
    %20 = vector.shape_cast %19 : vector<1x1x8xf32> to vector<1x8xf32>
    %21 = vector.shape_cast %20 : vector<1x8xf32> to vector<1x8xf32>
    %22 = vector.broadcast %21 : vector<1x8xf32> to vector<8x8xf32>
    %23 = vector.extract_strided_slice %14 {offsets = [0, 0], sizes = [8, 8], strides = [1, 1]} : vector<16x32xbf16> to vector<8x8xbf16>
    %24 = vector.extract_strided_slice %16 {offsets = [0, 0], sizes = [8, 8], strides = [1, 1]} : vector<16x32xbf16> to vector<8x8xbf16>
    %cst_11 = arith.constant dense<0.000000e+00> : vector<8x8xf32>
    %25 = tpu.matmul %23, %24, %cst_11 {dimension_numbers = #tpu.dot_dimension_numbers<[1], [1], [0], [0], [0, 0, 1, 0], [], []>} : vector<8x8xbf16>, vector<8x8xbf16>, vector<8x8xf32> -> vector<8x8xf32>
    %cst_12 = arith.constant 0.353553385 : f32
    %26 = vector.broadcast %cst_12 : f32 to vector<8x8xf32>
    %27 = arith.mulf %25, %26 : vector<8x8xf32>
    %28 = arith.addf %27, %22 : vector<8x8xf32>
    %cst_13 = arith.constant dense<0xFF800000> : vector<8xf32>
    %29 = vector.multi_reduction <maximumf>, %28, %cst_13 [1] : vector<8x8xf32> to vector<8xf32>
    %30 = vector.shape_cast %29 : vector<8xf32> to vector<8x1xf32>
    %31 = vector.broadcast %30 : vector<8x1xf32> to vector<8x8xf32>
    %32 = arith.subf %28, %31 : vector<8x8xf32>
    %33 = math.exp %32 : vector<8x8xf32>
    %cst_14 = arith.constant dense<0.000000e+00> : vector<8xf32>
    %34 = vector.multi_reduction <add>, %33, %cst_14 [1] : vector<8x8xf32> to vector<8xf32>
    %35 = vector.shape_cast %34 : vector<8xf32> to vector<8x1xf32>
    %36 = tpu.reciprocal %35 {approx = true} : vector<8x1xf32> -> vector<8x1xf32>
    %37 = vector.broadcast %36 : vector<8x1xf32> to vector<8x8xf32>
    %38 = arith.mulf %33, %37 : vector<8x8xf32>
    %c0_15 = arith.constant 0 : index
    %c0_16 = arith.constant 0 : index
    %c0_17 = arith.constant 0 : index
    %c0_18 = arith.constant 0 : index
    %39 = vector.load %arg18[%c0_15, %c0_16, %c0_17, %c0_18] : memref<1x2x8x32xf32, #tpu.memory_space<vmem>>, vector<1x1x8x8xf32>
    %40 = vector.shape_cast %39 : vector<1x1x8x8xf32> to vector<8x8xf32>
    %41 = vector.shape_cast %38 : vector<8x8xf32> to vector<1x1x8x8xf32>
    tpu.vector_store %arg18[%c0_15, %c0_16, %c0_17, %c0_18], %41 {strides = array<i32>} : memref<1x2x8x32xf32, #tpu.memory_space<vmem>>, vector<1x1x8x8xf32>,
    %42 = arith.truncf %38 : vector<8x8xf32> to vector<8x8xbf16>
    %43 = vector.extract_strided_slice %18 {offsets = [0, 0], sizes = [8, 8], strides = [1, 1]} : vector<16x32xbf16> to vector<8x8xbf16>
    %cst_19 = arith.constant dense<0.000000e+00> : vector<8x8xf32>
    %44 = tpu.matmul %42, %43, %cst_19 {dimension_numbers = #tpu.dot_dimension_numbers<[1], [0], [0], [1], [0, 0, 1, 1], [], []>} : vector<8x8xbf16>, vector<8x8xbf16>, vector<8x8xf32> -> vector<8x8xf32>
    %c0_20 = arith.constant 0 : index
    %c0_21 = arith.constant 0 : index
    %45 = vector.load %arg21[%c0_20, %c0_21] : memref<16x32xf32, #tpu.memory_space<vmem>>, vector<8x8xf32>
    tpu.vector_store %arg21[%c0_20, %c0_21], %44 {strides = array<i32>} : memref<16x32xf32, #tpu.memory_space<vmem>>, vector<8x8xf32>,
    %46 = vector.extract_strided_slice %14 {offsets = [0, 8], sizes = [8, 8], strides = [1, 1]} : vector<16x32xbf16> to vector<8x8xbf16>
    %47 = vector.extract_strided_slice %16 {offsets = [0, 8], sizes = [8, 8], strides = [1, 1]} : vector<16x32xbf16> to vector<8x8xbf16>
    %cst_22 = arith.constant dense<0.000000e+00> : vector<8x8xf32>
    %48 = tpu.matmul %46, %47, %cst_22 {dimension_numbers = #tpu.dot_dimension_numbers<[1], [1], [0], [0], [0, 0, 1, 0], [], []>} : vector<8x8xbf16>, vector<8x8xbf16>, vector<8x8xf32> -> vector<8x8xf32>
    %cst_23 = arith.constant 0.353553385 : f32
    %49 = vector.broadcast %cst_23 : f32 to vector<8x8xf32>
    %50 = arith.mulf %48, %49 : vector<8x8xf32>
    %51 = arith.addf %50, %22 : vector<8x8xf32>
    %cst_24 = arith.constant dense<0xFF800000> : vector<8xf32>
    %52 = vector.multi_reduction <maximumf>, %51, %cst_24 [1] : vector<8x8xf32> to vector<8xf32>
    %53 = vector.shape_cast %52 : vector<8xf32> to vector<8x1xf32>
    %54 = vector.broadcast %53 : vector<8x1xf32> to vector<8x8xf32>
    %55 = arith.subf %51, %54 : vector<8x8xf32>
    %56 = math.exp %55 : vector<8x8xf32>
    %cst_25 = arith.constant dense<0.000000e+00> : vector<8xf32>
    %57 = vector.multi_reduction <add>, %56, %cst_25 [1] : vector<8x8xf32> to vector<8xf32>
    %58 = vector.shape_cast %57 : vector<8xf32> to vector<8x1xf32>
    %59 = tpu.reciprocal %58 {approx = true} : vector<8x1xf32> -> vector<8x1xf32>
    %60 = vector.broadcast %59 : vector<8x1xf32> to vector<8x8xf32>
    %61 = arith.mulf %56, %60 : vector<8x8xf32>
    %c0_26 = arith.constant 0 : index
    %c0_27 = arith.constant 0 : index
    %c0_28 = arith.constant 0 : index
    %c8 = arith.constant 8 : index
    %62 = vector.load %arg18[%c0_26, %c0_27, %c0_28, %c8] : memref<1x2x8x32xf32, #tpu.memory_space<vmem>>, vector<1x1x8x8xf32>
    %63 = vector.shape_cast %62 : vector<1x1x8x8xf32> to vector<8x8xf32>
    %64 = vector.shape_cast %61 : vector<8x8xf32> to vector<1x1x8x8xf32>
    tpu.vector_store %arg18[%c0_26, %c0_27, %c0_28, %c8], %64 {strides = array<i32>} : memref<1x2x8x32xf32, #tpu.memory_space<vmem>>, vector<1x1x8x8xf32>,
    %65 = arith.truncf %61 : vector<8x8xf32> to vector<8x8xbf16>
    %66 = vector.extract_strided_slice %18 {offsets = [0, 8], sizes = [8, 8], strides = [1, 1]} : vector<16x32xbf16> to vector<8x8xbf16>
    %cst_29 = arith.constant dense<0.000000e+00> : vector<8x8xf32>
    %67 = tpu.matmul %65, %66, %cst_29 {dimension_numbers = #tpu.dot_dimension_numbers<[1], [0], [0], [1], [0, 0, 1, 1], [], []>} : vector<8x8xbf16>, vector<8x8xbf16>, vector<8x8xf32> -> vector<8x8xf32>
    %c0_30 = arith.constant 0 : index
    %c8_31 = arith.constant 8 : index
    %68 = vector.load %arg21[%c0_30, %c8_31] : memref<16x32xf32, #tpu.memory_space<vmem>>, vector<8x8xf32>
    tpu.vector_store %arg21[%c0_30, %c8_31], %67 {strides = array<i32>} : memref<16x32xf32, #tpu.memory_space<vmem>>, vector<8x8xf32>,
    %69 = vector.extract_strided_slice %14 {offsets = [0, 16], sizes = [8, 8], strides = [1, 1]} : vector<16x32xbf16> to vector<8x8xbf16>
    %70 = vector.extract_strided_slice %16 {offsets = [0, 16], sizes = [8, 8], strides = [1, 1]} : vector<16x32xbf16> to vector<8x8xbf16>
    %cst_32 = arith.constant dense<0.000000e+00> : vector<8x8xf32>
    %71 = tpu.matmul %69, %70, %cst_32 {dimension_numbers = #tpu.dot_dimension_numbers<[1], [1], [0], [0], [0, 0, 1, 0], [], []>} : vector<8x8xbf16>, vector<8x8xbf16>, vector<8x8xf32> -> vector<8x8xf32>
    %cst_33 = arith.constant 0.353553385 : f32
    %72 = vector.broadcast %cst_33 : f32 to vector<8x8xf32>
    %73 = arith.mulf %71, %72 : vector<8x8xf32>
    %74 = arith.addf %73, %22 : vector<8x8xf32>
    %cst_34 = arith.constant dense<0xFF800000> : vector<8xf32>
    %75 = vector.multi_reduction <maximumf>, %74, %cst_34 [1] : vector<8x8xf32> to vector<8xf32>
    %76 = vector.shape_cast %75 : vector<8xf32> to vector<8x1xf32>
    %77 = vector.broadcast %76 : vector<8x1xf32> to vector<8x8xf32>
    %78 = arith.subf %74, %77 : vector<8x8xf32>
    %79 = math.exp %78 : vector<8x8xf32>
    %cst_35 = arith.constant dense<0.000000e+00> : vector<8xf32>
    %80 = vector.multi_reduction <add>, %79, %cst_35 [1] : vector<8x8xf32> to vector<8xf32>
    %81 = vector.shape_cast %80 : vector<8xf32> to vector<8x1xf32>
    %82 = tpu.reciprocal %81 {approx = true} : vector<8x1xf32> -> vector<8x1xf32>
    %83 = vector.broadcast %82 : vector<8x1xf32> to vector<8x8xf32>
    %84 = arith.mulf %79, %83 : vector<8x8xf32>
    %c0_36 = arith.constant 0 : index
    %c0_37 = arith.constant 0 : index
    %c0_38 = arith.constant 0 : index
    %c16 = arith.constant 16 : index
    %85 = vector.load %arg18[%c0_36, %c0_37, %c0_38, %c16] : memref<1x2x8x32xf32, #tpu.memory_space<vmem>>, vector<1x1x8x8xf32>
    %86 = vector.shape_cast %85 : vector<1x1x8x8xf32> to vector<8x8xf32>
    %87 = vector.shape_cast %84 : vector<8x8xf32> to vector<1x1x8x8xf32>
    tpu.vector_store %arg18[%c0_36, %c0_37, %c0_38, %c16], %87 {strides = array<i32>} : memref<1x2x8x32xf32, #tpu.memory_space<vmem>>, vector<1x1x8x8xf32>,
    %88 = arith.truncf %84 : vector<8x8xf32> to vector<8x8xbf16>
    %89 = vector.extract_strided_slice %18 {offsets = [0, 16], sizes = [8, 8], strides = [1, 1]} : vector<16x32xbf16> to vector<8x8xbf16>
    %cst_39 = arith.constant dense<0.000000e+00> : vector<8x8xf32>
    %90 = tpu.matmul %88, %89, %cst_39 {dimension_numbers = #tpu.dot_dimension_numbers<[1], [0], [0], [1], [0, 0, 1, 1], [], []>} : vector<8x8xbf16>, vector<8x8xbf16>, vector<8x8xf32> -> vector<8x8xf32>
    %c0_40 = arith.constant 0 : index
    %c16_41 = arith.constant 16 : index
    %91 = vector.load %arg21[%c0_40, %c16_41] : memref<16x32xf32, #tpu.memory_space<vmem>>, vector<8x8xf32>
    tpu.vector_store %arg21[%c0_40, %c16_41], %90 {strides = array<i32>} : memref<16x32xf32, #tpu.memory_space<vmem>>, vector<8x8xf32>,
    %92 = vector.extract_strided_slice %14 {offsets = [0, 24], sizes = [8, 8], strides = [1, 1]} : vector<16x32xbf16> to vector<8x8xbf16>
    %93 = vector.extract_strided_slice %16 {offsets = [0, 24], sizes = [8, 8], strides = [1, 1]} : vector<16x32xbf16> to vector<8x8xbf16>
    %cst_42 = arith.constant dense<0.000000e+00> : vector<8x8xf32>
    %94 = tpu.matmul %92, %93, %cst_42 {dimension_numbers = #tpu.dot_dimension_numbers<[1], [1], [0], [0], [0, 0, 1, 0], [], []>} : vector<8x8xbf16>, vector<8x8xbf16>, vector<8x8xf32> -> vector<8x8xf32>
    %cst_43 = arith.constant 0.353553385 : f32
    %95 = vector.broadcast %cst_43 : f32 to vector<8x8xf32>
    %96 = arith.mulf %94, %95 : vector<8x8xf32>
    %97 = arith.addf %96, %22 : vector<8x8xf32>
    %cst_44 = arith.constant dense<0xFF800000> : vector<8xf32>
    %98 = vector.multi_reduction <maximumf>, %97, %cst_44 [1] : vector<8x8xf32> to vector<8xf32>
    %99 = vector.shape_cast %98 : vector<8xf32> to vector<8x1xf32>
    %100 = vector.broadcast %99 : vector<8x1xf32> to vector<8x8xf32>
    %101 = arith.subf %97, %100 : vector<8x8xf32>
    %102 = math.exp %101 : vector<8x8xf32>
    %cst_45 = arith.constant dense<0.000000e+00> : vector<8xf32>
    %103 = vector.multi_reduction <add>, %102, %cst_45 [1] : vector<8x8xf32> to vector<8xf32>
    %104 = vector.shape_cast %103 : vector<8xf32> to vector<8x1xf32>
    %105 = tpu.reciprocal %104 {approx = true} : vector<8x1xf32> -> vector<8x1xf32>
    %106 = vector.broadcast %105 : vector<8x1xf32> to vector<8x8xf32>
    %107 = arith.mulf %102, %106 : vector<8x8xf32>
    %c0_46 = arith.constant 0 : index
    %c0_47 = arith.constant 0 : index
    %c0_48 = arith.constant 0 : index
    %c24 = arith.constant 24 : index
    %108 = vector.load %arg18[%c0_46, %c0_47, %c0_48, %c24] : memref<1x2x8x32xf32, #tpu.memory_space<vmem>>, vector<1x1x8x8xf32>
    %109 = vector.shape_cast %108 : vector<1x1x8x8xf32> to vector<8x8xf32>
    %110 = vector.shape_cast %107 : vector<8x8xf32> to vector<1x1x8x8xf32>
    tpu.vector_store %arg18[%c0_46, %c0_47, %c0_48, %c24], %110 {strides = array<i32>} : memref<1x2x8x32xf32, #tpu.memory_space<vmem>>, vector<1x1x8x8xf32>,
    %111 = arith.truncf %107 : vector<8x8xf32> to vector<8x8xbf16>
    %112 = vector.extract_strided_slice %18 {offsets = [0, 24], sizes = [8, 8], strides = [1, 1]} : vector<16x32xbf16> to vector<8x8xbf16>
    %cst_49 = arith.constant dense<0.000000e+00> : vector<8x8xf32>
    %113 = tpu.matmul %111, %112, %cst_49 {dimension_numbers = #tpu.dot_dimension_numbers<[1], [0], [0], [1], [0, 0, 1, 1], [], []>} : vector<8x8xbf16>, vector<8x8xbf16>, vector<8x8xf32> -> vector<8x8xf32>
    %c0_50 = arith.constant 0 : index
    %c24_51 = arith.constant 24 : index
    %114 = vector.load %arg21[%c0_50, %c24_51] : memref<16x32xf32, #tpu.memory_space<vmem>>, vector<8x8xf32>
    tpu.vector_store %arg21[%c0_50, %c24_51], %113 {strides = array<i32>} : memref<16x32xf32, #tpu.memory_space<vmem>>, vector<8x8xf32>,
    %115 = vector.extract_strided_slice %4 {offsets = [1, 0, 0], sizes = [1, 1, 8], strides = [1, 1, 1]} : vector<2x1x8xf32> to vector<1x1x8xf32>
    %116 = vector.shape_cast %115 : vector<1x1x8xf32> to vector<1x8xf32>
    %117 = vector.shape_cast %116 : vector<1x8xf32> to vector<1x8xf32>
    %118 = vector.broadcast %117 : vector<1x8xf32> to vector<8x8xf32>
    %119 = vector.extract_strided_slice %14 {offsets = [8, 0], sizes = [8, 8], strides = [1, 1]} : vector<16x32xbf16> to vector<8x8xbf16>
    %120 = vector.extract_strided_slice %16 {offsets = [8, 0], sizes = [8, 8], strides = [1, 1]} : vector<16x32xbf16> to vector<8x8xbf16>
    %cst_52 = arith.constant dense<0.000000e+00> : vector<8x8xf32>
    %121 = tpu.matmul %119, %120, %cst_52 {dimension_numbers = #tpu.dot_dimension_numbers<[1], [1], [0], [0], [0, 0, 1, 0], [], []>} : vector<8x8xbf16>, vector<8x8xbf16>, vector<8x8xf32> -> vector<8x8xf32>
    %cst_53 = arith.constant 0.353553385 : f32
    %122 = vector.broadcast %cst_53 : f32 to vector<8x8xf32>
    %123 = arith.mulf %121, %122 : vector<8x8xf32>
    %124 = arith.addf %123, %118 : vector<8x8xf32>
    %cst_54 = arith.constant dense<0xFF800000> : vector<8xf32>
    %125 = vector.multi_reduction <maximumf>, %124, %cst_54 [1] : vector<8x8xf32> to vector<8xf32>
    %126 = vector.shape_cast %125 : vector<8xf32> to vector<8x1xf32>
    %127 = vector.broadcast %126 : vector<8x1xf32> to vector<8x8xf32>
    %128 = arith.subf %124, %127 : vector<8x8xf32>
    %129 = math.exp %128 : vector<8x8xf32>
    %cst_55 = arith.constant dense<0.000000e+00> : vector<8xf32>
    %130 = vector.multi_reduction <add>, %129, %cst_55 [1] : vector<8x8xf32> to vector<8xf32>
    %131 = vector.shape_cast %130 : vector<8xf32> to vector<8x1xf32>
    %132 = tpu.reciprocal %131 {approx = true} : vector<8x1xf32> -> vector<8x1xf32>
    %133 = vector.broadcast %132 : vector<8x1xf32> to vector<8x8xf32>
    %134 = arith.mulf %129, %133 : vector<8x8xf32>
    %c0_56 = arith.constant 0 : index
    %c1 = arith.constant 1 : index
    %c0_57 = arith.constant 0 : index
    %c0_58 = arith.constant 0 : index
    %135 = vector.load %arg18[%c0_56, %c1, %c0_57, %c0_58] : memref<1x2x8x32xf32, #tpu.memory_space<vmem>>, vector<1x1x8x8xf32>
    %136 = vector.shape_cast %135 : vector<1x1x8x8xf32> to vector<8x8xf32>
    %137 = vector.shape_cast %134 : vector<8x8xf32> to vector<1x1x8x8xf32>
    tpu.vector_store %arg18[%c0_56, %c1, %c0_57, %c0_58], %137 {strides = array<i32>} : memref<1x2x8x32xf32, #tpu.memory_space<vmem>>, vector<1x1x8x8xf32>,
    %138 = arith.truncf %134 : vector<8x8xf32> to vector<8x8xbf16>
    %139 = vector.extract_strided_slice %18 {offsets = [8, 0], sizes = [8, 8], strides = [1, 1]} : vector<16x32xbf16> to vector<8x8xbf16>
    %cst_59 = arith.constant dense<0.000000e+00> : vector<8x8xf32>
    %140 = tpu.matmul %138, %139, %cst_59 {dimension_numbers = #tpu.dot_dimension_numbers<[1], [0], [0], [1], [0, 0, 1, 1], [], []>} : vector<8x8xbf16>, vector<8x8xbf16>, vector<8x8xf32> -> vector<8x8xf32>
    %c8_60 = arith.constant 8 : index
    %c0_61 = arith.constant 0 : index
    %141 = vector.load %arg21[%c8_60, %c0_61] : memref<16x32xf32, #tpu.memory_space<vmem>>, vector<8x8xf32>
    tpu.vector_store %arg21[%c8_60, %c0_61], %140 {strides = array<i32>} : memref<16x32xf32, #tpu.memory_space<vmem>>, vector<8x8xf32>,
    %142 = vector.extract_strided_slice %14 {offsets = [8, 8], sizes = [8, 8], strides = [1, 1]} : vector<16x32xbf16> to vector<8x8xbf16>
    %143 = vector.extract_strided_slice %16 {offsets = [8, 8], sizes = [8, 8], strides = [1, 1]} : vector<16x32xbf16> to vector<8x8xbf16>
    %cst_62 = arith.constant dense<0.000000e+00> : vector<8x8xf32>
    %144 = tpu.matmul %142, %143, %cst_62 {dimension_numbers = #tpu.dot_dimension_numbers<[1], [1], [0], [0], [0, 0, 1, 0], [], []>} : vector<8x8xbf16>, vector<8x8xbf16>, vector<8x8xf32> -> vector<8x8xf32>
    %cst_63 = arith.constant 0.353553385 : f32
    %145 = vector.broadcast %cst_63 : f32 to vector<8x8xf32>
    %146 = arith.mulf %144, %145 : vector<8x8xf32>
    %147 = arith.addf %146, %118 : vector<8x8xf32>
    %cst_64 = arith.constant dense<0xFF800000> : vector<8xf32>
    %148 = vector.multi_reduction <maximumf>, %147, %cst_64 [1] : vector<8x8xf32> to vector<8xf32>
    %149 = vector.shape_cast %148 : vector<8xf32> to vector<8x1xf32>
    %150 = vector.broadcast %149 : vector<8x1xf32> to vector<8x8xf32>
    %151 = arith.subf %147, %150 : vector<8x8xf32>
    %152 = math.exp %151 : vector<8x8xf32>
    %cst_65 = arith.constant dense<0.000000e+00> : vector<8xf32>
    %153 = vector.multi_reduction <add>, %152, %cst_65 [1] : vector<8x8xf32> to vector<8xf32>
    %154 = vector.shape_cast %153 : vector<8xf32> to vector<8x1xf32>
    %155 = tpu.reciprocal %154 {approx = true} : vector<8x1xf32> -> vector<8x1xf32>
    %156 = vector.broadcast %155 : vector<8x1xf32> to vector<8x8xf32>
    %157 = arith.mulf %152, %156 : vector<8x8xf32>
    %c0_66 = arith.constant 0 : index
    %c1_67 = arith.constant 1 : index
    %c0_68 = arith.constant 0 : index
    %c8_69 = arith.constant 8 : index
    %158 = vector.load %arg18[%c0_66, %c1_67, %c0_68, %c8_69] : memref<1x2x8x32xf32, #tpu.memory_space<vmem>>, vector<1x1x8x8xf32>
    %159 = vector.shape_cast %158 : vector<1x1x8x8xf32> to vector<8x8xf32>
    %160 = vector.shape_cast %157 : vector<8x8xf32> to vector<1x1x8x8xf32>
    tpu.vector_store %arg18[%c0_66, %c1_67, %c0_68, %c8_69], %160 {strides = array<i32>} : memref<1x2x8x32xf32, #tpu.memory_space<vmem>>, vector<1x1x8x8xf32>,
    %161 = arith.truncf %157 : vector<8x8xf32> to vector<8x8xbf16>
    %162 = vector.extract_strided_slice %18 {offsets = [8, 8], sizes = [8, 8], strides = [1, 1]} : vector<16x32xbf16> to vector<8x8xbf16>
    %cst_70 = arith.constant dense<0.000000e+00> : vector<8x8xf32>
    %163 = tpu.matmul %161, %162, %cst_70 {dimension_numbers = #tpu.dot_dimension_numbers<[1], [0], [0], [1], [0, 0, 1, 1], [], []>} : vector<8x8xbf16>, vector<8x8xbf16>, vector<8x8xf32> -> vector<8x8xf32>
    %c8_71 = arith.constant 8 : index
    %c8_72 = arith.constant 8 : index
    %164 = vector.load %arg21[%c8_71, %c8_72] : memref<16x32xf32, #tpu.memory_space<vmem>>, vector<8x8xf32>
    tpu.vector_store %arg21[%c8_71, %c8_72], %163 {strides = array<i32>} : memref<16x32xf32, #tpu.memory_space<vmem>>, vector<8x8xf32>,
    %165 = vector.extract_strided_slice %14 {offsets = [8, 16], sizes = [8, 8], strides = [1, 1]} : vector<16x32xbf16> to vector<8x8xbf16>
    %166 = vector.extract_strided_slice %16 {offsets = [8, 16], sizes = [8, 8], strides = [1, 1]} : vector<16x32xbf16> to vector<8x8xbf16>
    %cst_73 = arith.constant dense<0.000000e+00> : vector<8x8xf32>
    %167 = tpu.matmul %165, %166, %cst_73 {dimension_numbers = #tpu.dot_dimension_numbers<[1], [1], [0], [0], [0, 0, 1, 0], [], []>} : vector<8x8xbf16>, vector<8x8xbf16>, vector<8x8xf32> -> vector<8x8xf32>
    %cst_74 = arith.constant 0.353553385 : f32
    %168 = vector.broadcast %cst_74 : f32 to vector<8x8xf32>
    %169 = arith.mulf %167, %168 : vector<8x8xf32>
    %170 = arith.addf %169, %118 : vector<8x8xf32>
    %cst_75 = arith.constant dense<0xFF800000> : vector<8xf32>
    %171 = vector.multi_reduction <maximumf>, %170, %cst_75 [1] : vector<8x8xf32> to vector<8xf32>
    %172 = vector.shape_cast %171 : vector<8xf32> to vector<8x1xf32>
    %173 = vector.broadcast %172 : vector<8x1xf32> to vector<8x8xf32>
    %174 = arith.subf %170, %173 : vector<8x8xf32>
    %175 = math.exp %174 : vector<8x8xf32>
    %cst_76 = arith.constant dense<0.000000e+00> : vector<8xf32>
    %176 = vector.multi_reduction <add>, %175, %cst_76 [1] : vector<8x8xf32> to vector<8xf32>
    %177 = vector.shape_cast %176 : vector<8xf32> to vector<8x1xf32>
    %178 = tpu.reciprocal %177 {approx = true} : vector<8x1xf32> -> vector<8x1xf32>
    %179 = vector.broadcast %178 : vector<8x1xf32> to vector<8x8xf32>
    %180 = arith.mulf %175, %179 : vector<8x8xf32>
    %c0_77 = arith.constant 0 : index
    %c1_78 = arith.constant 1 : index
    %c0_79 = arith.constant 0 : index
    %c16_80 = arith.constant 16 : index
    %181 = vector.load %arg18[%c0_77, %c1_78, %c0_79, %c16_80] : memref<1x2x8x32xf32, #tpu.memory_space<vmem>>, vector<1x1x8x8xf32>
    %182 = vector.shape_cast %181 : vector<1x1x8x8xf32> to vector<8x8xf32>
    %183 = vector.shape_cast %180 : vector<8x8xf32> to vector<1x1x8x8xf32>
    tpu.vector_store %arg18[%c0_77, %c1_78, %c0_79, %c16_80], %183 {strides = array<i32>} : memref<1x2x8x32xf32, #tpu.memory_space<vmem>>, vector<1x1x8x8xf32>,
    %184 = arith.truncf %180 : vector<8x8xf32> to vector<8x8xbf16>
    %185 = vector.extract_strided_slice %18 {offsets = [8, 16], sizes = [8, 8], strides = [1, 1]} : vector<16x32xbf16> to vector<8x8xbf16>
    %cst_81 = arith.constant dense<0.000000e+00> : vector<8x8xf32>
    %186 = tpu.matmul %184, %185, %cst_81 {dimension_numbers = #tpu.dot_dimension_numbers<[1], [0], [0], [1], [0, 0, 1, 1], [], []>} : vector<8x8xbf16>, vector<8x8xbf16>, vector<8x8xf32> -> vector<8x8xf32>
    %c8_82 = arith.constant 8 : index
    %c16_83 = arith.constant 16 : index
    %187 = vector.load %arg21[%c8_82, %c16_83] : memref<16x32xf32, #tpu.memory_space<vmem>>, vector<8x8xf32>
    tpu.vector_store %arg21[%c8_82, %c16_83], %186 {strides = array<i32>} : memref<16x32xf32, #tpu.memory_space<vmem>>, vector<8x8xf32>,
    %188 = vector.extract_strided_slice %14 {offsets = [8, 24], sizes = [8, 8], strides = [1, 1]} : vector<16x32xbf16> to vector<8x8xbf16>
    %189 = vector.extract_strided_slice %16 {offsets = [8, 24], sizes = [8, 8], strides = [1, 1]} : vector<16x32xbf16> to vector<8x8xbf16>
    %cst_84 = arith.constant dense<0.000000e+00> : vector<8x8xf32>
    %190 = tpu.matmul %188, %189, %cst_84 {dimension_numbers = #tpu.dot_dimension_numbers<[1], [1], [0], [0], [0, 0, 1, 0], [], []>} : vector<8x8xbf16>, vector<8x8xbf16>, vector<8x8xf32> -> vector<8x8xf32>
    %cst_85 = arith.constant 0.353553385 : f32
    %191 = vector.broadcast %cst_85 : f32 to vector<8x8xf32>
    %192 = arith.mulf %190, %191 : vector<8x8xf32>
    %193 = arith.addf %192, %118 : vector<8x8xf32>
    %cst_86 = arith.constant dense<0xFF800000> : vector<8xf32>
    %194 = vector.multi_reduction <maximumf>, %193, %cst_86 [1] : vector<8x8xf32> to vector<8xf32>
    %195 = vector.shape_cast %194 : vector<8xf32> to vector<8x1xf32>
    %196 = vector.broadcast %195 : vector<8x1xf32> to vector<8x8xf32>
    %197 = arith.subf %193, %196 : vector<8x8xf32>
    %198 = math.exp %197 : vector<8x8xf32>
    %cst_87 = arith.constant dense<0.000000e+00> : vector<8xf32>
    %199 = vector.multi_reduction <add>, %198, %cst_87 [1] : vector<8x8xf32> to vector<8xf32>
    %200 = vector.shape_cast %199 : vector<8xf32> to vector<8x1xf32>
    %201 = tpu.reciprocal %200 {approx = true} : vector<8x1xf32> -> vector<8x1xf32>
    %202 = vector.broadcast %201 : vector<8x1xf32> to vector<8x8xf32>
    %203 = arith.mulf %198, %202 : vector<8x8xf32>
    %c0_88 = arith.constant 0 : index
    %c1_89 = arith.constant 1 : index
    %c0_90 = arith.constant 0 : index
    %c24_91 = arith.constant 24 : index
    %204 = vector.load %arg18[%c0_88, %c1_89, %c0_90, %c24_91] : memref<1x2x8x32xf32, #tpu.memory_space<vmem>>, vector<1x1x8x8xf32>
    %205 = vector.shape_cast %204 : vector<1x1x8x8xf32> to vector<8x8xf32>
    %206 = vector.shape_cast %203 : vector<8x8xf32> to vector<1x1x8x8xf32>
    tpu.vector_store %arg18[%c0_88, %c1_89, %c0_90, %c24_91], %206 {strides = array<i32>} : memref<1x2x8x32xf32, #tpu.memory_space<vmem>>, vector<1x1x8x8xf32>,
    %207 = arith.truncf %203 : vector<8x8xf32> to vector<8x8xbf16>
    %208 = vector.extract_strided_slice %18 {offsets = [8, 24], sizes = [8, 8], strides = [1, 1]} : vector<16x32xbf16> to vector<8x8xbf16>
    %cst_92 = arith.constant dense<0.000000e+00> : vector<8x8xf32>
    %209 = tpu.matmul %207, %208, %cst_92 {dimension_numbers = #tpu.dot_dimension_numbers<[1], [0], [0], [1], [0, 0, 1, 1], [], []>} : vector<8x8xbf16>, vector<8x8xbf16>, vector<8x8xf32> -> vector<8x8xf32>
    %c8_93 = arith.constant 8 : index
    %c24_94 = arith.constant 24 : index
    %210 = vector.load %arg21[%c8_93, %c24_94] : memref<16x32xf32, #tpu.memory_space<vmem>>, vector<8x8xf32>
    tpu.vector_store %arg21[%c8_93, %c24_94], %209 {strides = array<i32>} : memref<16x32xf32, #tpu.memory_space<vmem>>, vector<8x8xf32>,
    %c0_95 = arith.constant 0 : index
    %c0_96 = arith.constant 0 : index
    %211 = vector.load %arg21[%c0_95, %c0_96] : memref<16x32xf32, #tpu.memory_space<vmem>>, vector<16x32xf32>
    %212 = arith.truncf %211 : vector<16x32xf32> to vector<16x32xbf16>
    %c0_97 = arith.constant 0 : index
    %c0_98 = arith.constant 0 : index
    %c0_99 = arith.constant 0 : index
    %213 = vector.load %arg5[%c0_97, %c0_98, %c0_99] : memref<1x32x32xbf16, #tpu.memory_space<vmem>>, vector<1x32x32xbf16>
    %214 = vector.shape_cast %213 : vector<1x32x32xbf16> to vector<32x32xbf16>
    %cst_100 = arith.constant dense<0.000000e+00> : vector<16x32xf32>
    %215 = tpu.matmul %212, %214, %cst_100 {dimension_numbers = #tpu.dot_dimension_numbers<[1], [0], [0], [1], [0, 0, 1, 1], [], []>} : vector<16x32xbf16>, vector<32x32xbf16>, vector<16x32xf32> -> vector<16x32xf32>
    %c0_101 = arith.constant 0 : index
    %c0_102 = arith.constant 0 : index
    %c0_103 = arith.constant 0 : index
    %216 = vector.load %arg6[%c0_101, %c0_102, %c0_103] : memref<1x1x32xf32, #tpu.memory_space<vmem>>, vector<1x1x32xf32>
    %217 = vector.shape_cast %216 : vector<1x1x32xf32> to vector<1x32xf32>
    %218 = vector.broadcast %217 : vector<1x32xf32> to vector<16x32xf32>
    %219 = arith.addf %215, %218 : vector<16x32xf32>
    %220 = arith.addf %3, %219 : vector<16x32xf32>
    %c0_104 = arith.constant 0 : index
    %c0_105 = arith.constant 0 : index
    %c0_106 = arith.constant 0 : index
    %221 = vector.load %arg7[%c0_104, %c0_105, %c0_106] : memref<1x1x32xf32, #tpu.memory_space<vmem>>, vector<1x1x32xf32>
    %222 = vector.shape_cast %221 : vector<1x1x32xf32> to vector<1x32xf32>
    %c0_107 = arith.constant 0 : index
    %c0_108 = arith.constant 0 : index
    %c0_109 = arith.constant 0 : index
    %223 = vector.load %arg8[%c0_107, %c0_108, %c0_109] : memref<1x1x32xf32, #tpu.memory_space<vmem>>, vector<1x1x32xf32>
    %224 = vector.shape_cast %223 : vector<1x1x32xf32> to vector<1x32xf32>
    %cst_110 = arith.constant dense<0.000000e+00> : vector<16xf32>
    %225 = vector.multi_reduction <add>, %220, %cst_110 [1] : vector<16x32xf32> to vector<16xf32>
    %226 = vector.shape_cast %225 : vector<16xf32> to vector<16x1xf32>
    %cst_111 = arith.constant 3.200000e+01 : f32
    %227 = vector.broadcast %cst_111 : f32 to vector<16x1xf32>
    %228 = arith.divf %226, %227 : vector<16x1xf32>
    %229 = vector.broadcast %228 : vector<16x1xf32> to vector<16x32xf32>
    %230 = arith.subf %220, %229 : vector<16x32xf32>
    %231 = arith.mulf %230, %230 : vector<16x32xf32>
    %cst_112 = arith.constant dense<0.000000e+00> : vector<16xf32>
    %232 = vector.multi_reduction <add>, %231, %cst_112 [1] : vector<16x32xf32> to vector<16xf32>
    %233 = vector.shape_cast %232 : vector<16xf32> to vector<16x1xf32>
    %cst_113 = arith.constant 3.200000e+01 : f32
    %234 = vector.broadcast %cst_113 : f32 to vector<16x1xf32>
    %235 = arith.divf %233, %234 : vector<16x1xf32>
    %236 = vector.broadcast %228 : vector<16x1xf32> to vector<16x32xf32>
    %237 = arith.subf %220, %236 : vector<16x32xf32>
    %cst_114 = arith.constant 9.99999974E-6 : f32
    %238 = vector.broadcast %cst_114 : f32 to vector<16x1xf32>
    %239 = arith.addf %235, %238 : vector<16x1xf32>
    %240 = math.rsqrt %239 : vector<16x1xf32>
    %241 = vector.broadcast %240 : vector<16x1xf32> to vector<16x32xf32>
    %242 = arith.mulf %237, %241 : vector<16x32xf32>
    %243 = vector.broadcast %222 : vector<1x32xf32> to vector<16x32xf32>
    %244 = arith.mulf %242, %243 : vector<16x32xf32>
    %245 = vector.broadcast %224 : vector<1x32xf32> to vector<16x32xf32>
    %246 = arith.addf %244, %245 : vector<16x32xf32>
    %247 = arith.truncf %246 : vector<16x32xf32> to vector<16x32xbf16>
    %c0_115 = arith.constant 0 : index
    %c0_116 = arith.constant 0 : index
    %c0_117 = arith.constant 0 : index
    %248 = vector.load %arg9[%c0_115, %c0_116, %c0_117] : memref<1x32x64xbf16, #tpu.memory_space<vmem>>, vector<1x32x64xbf16>
    %249 = vector.shape_cast %248 : vector<1x32x64xbf16> to vector<32x64xbf16>
    %cst_118 = arith.constant dense<0.000000e+00> : vector<16x64xf32>
    %250 = tpu.matmul %247, %249, %cst_118 {dimension_numbers = #tpu.dot_dimension_numbers<[1], [0], [0], [1], [0, 0, 1, 1], [], []>} : vector<16x32xbf16>, vector<32x64xbf16>, vector<16x64xf32> -> vector<16x64xf32>
    %c0_119 = arith.constant 0 : index
    %c0_120 = arith.constant 0 : index
    %c0_121 = arith.constant 0 : index
    %251 = vector.load %arg10[%c0_119, %c0_120, %c0_121] : memref<1x1x64xf32, #tpu.memory_space<vmem>>, vector<1x1x64xf32>
    %252 = vector.shape_cast %251 : vector<1x1x64xf32> to vector<1x64xf32>
    %253 = vector.broadcast %252 : vector<1x64xf32> to vector<16x64xf32>
    %254 = arith.addf %250, %253 : vector<16x64xf32>
    %cst_122 = arith.constant 0.000000e+00 : f32
    %255 = vector.broadcast %cst_122 : f32 to vector<16x64xf32>
    %256 = arith.maximumf %254, %255 : vector<16x64xf32>
    %257 = arith.truncf %256 : vector<16x64xf32> to vector<16x64xbf16>
    %c0_123 = arith.constant 0 : index
    %c0_124 = arith.constant 0 : index
    %c0_125 = arith.constant 0 : index
    %258 = vector.load %arg11[%c0_123, %c0_124, %c0_125] : memref<1x64x32xbf16, #tpu.memory_space<vmem>>, vector<1x64x32xbf16>
    %259 = vector.shape_cast %258 : vector<1x64x32xbf16> to vector<64x32xbf16>
    %cst_126 = arith.constant dense<0.000000e+00> : vector<16x32xf32>
    %260 = tpu.matmul %257, %259, %cst_126 {dimension_numbers = #tpu.dot_dimension_numbers<[1], [0], [0], [1], [0, 0, 1, 1], [], []>} : vector<16x64xbf16>, vector<64x32xbf16>, vector<16x32xf32> -> vector<16x32xf32>
    %261 = arith.addf %246, %260 : vector<16x32xf32>
    %c0_127 = arith.constant 0 : index
    %c0_128 = arith.constant 0 : index
    %c0_129 = arith.constant 0 : index
    %262 = vector.load %arg12[%c0_127, %c0_128, %c0_129] : memref<1x1x32xf32, #tpu.memory_space<vmem>>, vector<1x1x32xf32>
    %263 = vector.shape_cast %262 : vector<1x1x32xf32> to vector<1x32xf32>
    %264 = vector.broadcast %263 : vector<1x32xf32> to vector<16x32xf32>
    %265 = arith.addf %261, %264 : vector<16x32xf32>
    %c0_130 = arith.constant 0 : index
    %c0_131 = arith.constant 0 : index
    %c0_132 = arith.constant 0 : index
    %266 = vector.load %arg13[%c0_130, %c0_131, %c0_132] : memref<1x1x32xf32, #tpu.memory_space<vmem>>, vector<1x1x32xf32>
    %267 = vector.shape_cast %266 : vector<1x1x32xf32> to vector<1x32xf32>
    %c0_133 = arith.constant 0 : index
    %c0_134 = arith.constant 0 : index
    %c0_135 = arith.constant 0 : index
    %268 = vector.load %arg14[%c0_133, %c0_134, %c0_135] : memref<1x1x32xf32, #tpu.memory_space<vmem>>, vector<1x1x32xf32>
    %269 = vector.shape_cast %268 : vector<1x1x32xf32> to vector<1x32xf32>
    %cst_136 = arith.constant dense<0.000000e+00> : vector<16xf32>
    %270 = vector.multi_reduction <add>, %265, %cst_136 [1] : vector<16x32xf32> to vector<16xf32>
    %271 = vector.shape_cast %270 : vector<16xf32> to vector<16x1xf32>
    %cst_137 = arith.constant 3.200000e+01 : f32
    %272 = vector.broadcast %cst_137 : f32 to vector<16x1xf32>
    %273 = arith.divf %271, %272 : vector<16x1xf32>
    %274 = vector.broadcast %273 : vector<16x1xf32> to vector<16x32xf32>
    %275 = arith.subf %265, %274 : vector<16x32xf32>
    %276 = arith.mulf %275, %275 : vector<16x32xf32>
    %cst_138 = arith.constant dense<0.000000e+00> : vector<16xf32>
    %277 = vector.multi_reduction <add>, %276, %cst_138 [1] : vector<16x32xf32> to vector<16xf32>
    %278 = vector.shape_cast %277 : vector<16xf32> to vector<16x1xf32>
    %cst_139 = arith.constant 3.200000e+01 : f32
    %279 = vector.broadcast %cst_139 : f32 to vector<16x1xf32>
    %280 = arith.divf %278, %279 : vector<16x1xf32>
    %281 = vector.broadcast %273 : vector<16x1xf32> to vector<16x32xf32>
    %282 = arith.subf %265, %281 : vector<16x32xf32>
    %cst_140 = arith.constant 9.99999974E-6 : f32
    %283 = vector.broadcast %cst_140 : f32 to vector<16x1xf32>
    %284 = arith.addf %280, %283 : vector<16x1xf32>
    %285 = math.rsqrt %284 : vector<16x1xf32>
    %286 = vector.broadcast %285 : vector<16x1xf32> to vector<16x32xf32>
    %287 = arith.mulf %282, %286 : vector<16x32xf32>
    %288 = vector.broadcast %267 : vector<1x32xf32> to vector<16x32xf32>
    %289 = arith.mulf %287, %288 : vector<16x32xf32>
    %290 = vector.broadcast %269 : vector<1x32xf32> to vector<16x32xf32>
    %291 = arith.addf %289, %290 : vector<16x32xf32>
    %c0_141 = arith.constant 0 : index
    %c0_142 = arith.constant 0 : index
    %292 = vector.load %arg20[%c0_141, %c0_142] : memref<16x32xf32, #tpu.memory_space<vmem>>, vector<16x32xf32>
    tpu.vector_store %arg20[%c0_141, %c0_142], %291 {strides = array<i32>} : memref<16x32xf32, #tpu.memory_space<vmem>>, vector<16x32xf32>,
    %c0_143 = arith.constant 0 : index
    %c0_144 = arith.constant 0 : index
    %c0_145 = arith.constant 0 : index
    %293 = vector.load %arg17[%c0_143, %c0_144, %c0_145] : memref<1x16x32xf32, #tpu.memory_space<vmem>>, vector<1x16x32xf32>
    %294 = vector.shape_cast %293 : vector<1x16x32xf32> to vector<16x32xf32>
    %295 = vector.shape_cast %291 : vector<16x32xf32> to vector<1x16x32xf32>
    tpu.vector_store %arg17[%c0_143, %c0_144, %c0_145], %295 {strides = array<i32>} : memref<1x16x32xf32, #tpu.memory_space<vmem>>, vector<1x16x32xf32>,
    %c0_146 = arith.constant 0 : index
    %c0_147 = arith.constant 0 : index
    %296 = vector.load %arg15[%c0_146, %c0_147] : memref<1x32xf32, #tpu.memory_space<vmem>>, vector<1x32xf32>
    %c0_148 = arith.constant 0 : index
    %c0_149 = arith.constant 0 : index
    %297 = vector.load %arg16[%c0_148, %c0_149] : memref<1x32xf32, #tpu.memory_space<vmem>>, vector<1x32xf32>
    %cst_150 = arith.constant dense<0.000000e+00> : vector<16xf32>
    %298 = vector.multi_reduction <add>, %291, %cst_150 [1] : vector<16x32xf32> to vector<16xf32>
    %299 = vector.shape_cast %298 : vector<16xf32> to vector<16x1xf32>
    %cst_151 = arith.constant 3.200000e+01 : f32
    %300 = vector.broadcast %cst_151 : f32 to vector<16x1xf32>
    %301 = arith.divf %299, %300 : vector<16x1xf32>
    %302 = vector.broadcast %301 : vector<16x1xf32> to vector<16x32xf32>
    %303 = arith.subf %291, %302 : vector<16x32xf32>
    %304 = arith.mulf %303, %303 : vector<16x32xf32>
    %cst_152 = arith.constant dense<0.000000e+00> : vector<16xf32>
    %305 = vector.multi_reduction <add>, %304, %cst_152 [1] : vector<16x32xf32> to vector<16xf32>
    %306 = vector.shape_cast %305 : vector<16xf32> to vector<16x1xf32>
    %cst_153 = arith.constant 3.200000e+01 : f32
    %307 = vector.broadcast %cst_153 : f32 to vector<16x1xf32>
    %308 = arith.divf %306, %307 : vector<16x1xf32>
    %309 = vector.broadcast %301 : vector<16x1xf32> to vector<16x32xf32>
    %310 = arith.subf %291, %309 : vector<16x32xf32>
    %cst_154 = arith.constant 9.99999974E-6 : f32
    %311 = vector.broadcast %cst_154 : f32 to vector<16x1xf32>
    %312 = arith.addf %308, %311 : vector<16x1xf32>
    %313 = math.rsqrt %312 : vector<16x1xf32>
    %314 = vector.broadcast %313 : vector<16x1xf32> to vector<16x32xf32>
    %315 = arith.mulf %310, %314 : vector<16x32xf32>
    %316 = vector.broadcast %296 : vector<1x32xf32> to vector<16x32xf32>
    %317 = arith.mulf %315, %316 : vector<16x32xf32>
    %318 = vector.broadcast %297 : vector<1x32xf32> to vector<16x32xf32>
    %319 = arith.addf %317, %318 : vector<16x32xf32>
    %c0_155 = arith.constant 0 : index
    %c0_156 = arith.constant 0 : index
    %320 = vector.load %arg19[%c0_155, %c0_156] : memref<16x32xf32, #tpu.memory_space<vmem>>, vector<16x32xf32>
    tpu.vector_store %arg19[%c0_155, %c0_156], %319 {strides = array<i32>} : memref<16x32xf32, #tpu.memory_space<vmem>>, vector<16x32xf32>,
    return
  }
  func.func @transform_0(%arg0: i32) -> (i32, i32) {
    %c0_i32 = arith.constant 0 : i32
    %c0_i32_0 = arith.constant 0 : i32
    %c0_i32_1 = arith.constant 0 : i32
    return %c0_i32, %c0_i32_0 : i32, i32
  }
  func.func @transform_1(%arg0: i32) -> (i32, i32, i32) {
    %c0_i32 = arith.constant 0 : i32
    %c0_i32_0 = arith.constant 0 : i32
    %c0_i32_1 = arith.constant 0 : i32
    %c0_i32_2 = arith.constant 0 : i32
    return %c0_i32, %c0_i32_0, %c0_i32_1 : i32, i32, i32
  }
  func.func @transform_2(%arg0: i32) -> (i32, i32, i32) {
    %c0_i32 = arith.constant 0 : i32
    %c0_i32_0 = arith.constant 0 : i32
    %c0_i32_1 = arith.constant 0 : i32
    return %arg0, %c0_i32, %c0_i32_0 : i32, i32, i32
  }
  func.func @transform_3(%arg0: i32) -> (i32, i32, i32) {
    %c0_i32 = arith.constant 0 : i32
    %c0_i32_0 = arith.constant 0 : i32
    %c0_i32_1 = arith.constant 0 : i32
    return %arg0, %c0_i32, %c0_i32_0 : i32, i32, i32
  }
  func.func @transform_4(%arg0: i32) -> (i32, i32, i32) {
    %c0_i32 = arith.constant 0 : i32
    %c0_i32_0 = arith.constant 0 : i32
    %c0_i32_1 = arith.constant 0 : i32
    return %arg0, %c0_i32, %c0_i32_0 : i32, i32, i32
  }
  func.func @transform_5(%arg0: i32) -> (i32, i32, i32) {
    %c0_i32 = arith.constant 0 : i32
    %c0_i32_0 = arith.constant 0 : i32
    %c0_i32_1 = arith.constant 0 : i32
    return %arg0, %c0_i32, %c0_i32_0 : i32, i32, i32
  }
  func.func @transform_6(%arg0: i32) -> (i32, i32, i32) {
    %c0_i32 = arith.constant 0 : i32
    %c0_i32_0 = arith.constant 0 : i32
    %c0_i32_1 = arith.constant 0 : i32
    return %arg0, %c0_i32, %c0_i32_0 : i32, i32, i32
  }
  func.func @transform_7(%arg0: i32) -> (i32, i32, i32) {
    %c0_i32 = arith.constant 0 : i32
    %c0_i32_0 = arith.constant 0 : i32
    %c0_i32_1 = arith.constant 0 : i32
    return %arg0, %c0_i32, %c0_i32_0 : i32, i32, i32
  }
  func.func @transform_8(%arg0: i32) -> (i32, i32, i32) {
    %c0_i32 = arith.constant 0 : i32
    %c0_i32_0 = arith.constant 0 : i32
    %c0_i32_1 = arith.constant 0 : i32
    return %arg0, %c0_i32, %c0_i32_0 : i32, i32, i32
  }
  func.func @transform_9(%arg0: i32) -> (i32, i32, i32) {
    %c0_i32 = arith.constant 0 : i32
    %c0_i32_0 = arith.constant 0 : i32
    %c0_i32_1 = arith.constant 0 : i32
    return %arg0, %c0_i32, %c0_i32_0 : i32, i32, i32
  }
  func.func @transform_10(%arg0: i32) -> (i32, i32, i32) {
    %c0_i32 = arith.constant 0 : i32
    %c0_i32_0 = arith.constant 0 : i32
    %c0_i32_1 = arith.constant 0 : i32
    return %arg0, %c0_i32, %c0_i32_0 : i32, i32, i32
  }
  func.func @transform_11(%arg0: i32) -> (i32, i32, i32) {
    %c0_i32 = arith.constant 0 : i32
    %c0_i32_0 = arith.constant 0 : i32
    %c0_i32_1 = arith.constant 0 : i32
    return %arg0, %c0_i32, %c0_i32_0 : i32, i32, i32
  }
  func.func @transform_12(%arg0: i32) -> (i32, i32, i32) {
    %c0_i32 = arith.constant 0 : i32
    %c0_i32_0 = arith.constant 0 : i32
    %c0_i32_1 = arith.constant 0 : i32
    return %arg0, %c0_i32, %c0_i32_0 : i32, i32, i32
  }
  func.func @transform_13(%arg0: i32) -> (i32, i32, i32) {
    %c0_i32 = arith.constant 0 : i32
    %c0_i32_0 = arith.constant 0 : i32
    %c0_i32_1 = arith.constant 0 : i32
    return %arg0, %c0_i32, %c0_i32_0 : i32, i32, i32
  }
  func.func @transform_14(%arg0: i32) -> (i32, i32) {
    %c0_i32 = arith.constant 0 : i32
    %c0_i32_0 = arith.constant 0 : i32
    %c0_i32_1 = arith.constant 0 : i32
    return %c0_i32, %c0_i32_0 : i32, i32
  }
  func.func @transform_15(%arg0: i32) -> (i32, i32) {
    %c0_i32 = arith.constant 0 : i32
    %c0_i32_0 = arith.constant 0 : i32
    %c0_i32_1 = arith.constant 0 : i32
    return %c0_i32, %c0_i32_0 : i32, i32
  }
  func.func @transform_16(%arg0: i32) -> (i32, i32, i32) {
    %c0_i32 = arith.constant 0 : i32
    %c0_i32_0 = arith.constant 0 : i32
    %c0_i32_1 = arith.constant 0 : i32
    return %arg0, %c0_i32, %c0_i32_0 : i32, i32, i32
  }
  func.func @transform_17(%arg0: i32) -> (i32, i32, i32, i32) {
    %c0_i32 = arith.constant 0 : i32
    %c0_i32_0 = arith.constant 0 : i32
    %c0_i32_1 = arith.constant 0 : i32
    %c0_i32_2 = arith.constant 0 : i32
    return %arg0, %c0_i32, %c0_i32_0, %c0_i32_1 : i32, i32, i32, i32
  }
  func.func @transform_18(%arg0: i32) -> (i32, i32) {
    %c0_i32 = arith.constant 0 : i32
    %c0_i32_0 = arith.constant 0 : i32
    %c0_i32_1 = arith.constant 0 : i32
    return %c0_i32, %c0_i32_0 : i32, i32
  }
}

module attributes {stable_mosaic.version = 11 : i64} {
  func.func @_decoder_stack_kernel(%arg0: i32, %arg1: memref<16x32xf32, #tpu.memory_space<vmem>>, %arg2: memref<16x32xf32, #tpu.memory_space<vmem>>, %arg3: memref<2x8x8xf32, #tpu.memory_space<vmem>>, %arg4: memref<2x1x8xf32, #tpu.memory_space<vmem>>, %arg5: memref<1x32x96xbf16, #tpu.memory_space<vmem>>, %arg6: memref<1x1x96xf32, #tpu.memory_space<vmem>>, %arg7: memref<1x32x32xbf16, #tpu.memory_space<vmem>>, %arg8: memref<1x1x32xf32, #tpu.memory_space<vmem>>, %arg9: memref<1x1x32xf32, #tpu.memory_space<vmem>>, %arg10: memref<1x1x32xf32, #tpu.memory_space<vmem>>, %arg11: memref<1x32x32xbf16, #tpu.memory_space<vmem>>, %arg12: memref<1x1x32xf32, #tpu.memory_space<vmem>>, %arg13: memref<1x32x64xbf16, #tpu.memory_space<vmem>>, %arg14: memref<1x1x64xf32, #tpu.memory_space<vmem>>, %arg15: memref<1x32x32xbf16, #tpu.memory_space<vmem>>, %arg16: memref<1x1x32xf32, #tpu.memory_space<vmem>>, %arg17: memref<1x1x32xf32, #tpu.memory_space<vmem>>, %arg18: memref<1x1x32xf32, #tpu.memory_space<vmem>>, %arg19: memref<1x32x64xbf16, #tpu.memory_space<vmem>>, %arg20: memref<1x1x64xf32, #tpu.memory_space<vmem>>, %arg21: memref<1x64x32xbf16, #tpu.memory_space<vmem>>, %arg22: memref<1x1x32xf32, #tpu.memory_space<vmem>>, %arg23: memref<1x1x32xf32, #tpu.memory_space<vmem>>, %arg24: memref<1x1x32xf32, #tpu.memory_space<vmem>>, %arg25: memref<1x32xf32, #tpu.memory_space<vmem>>, %arg26: memref<1x32xf32, #tpu.memory_space<vmem>>, %arg27: memref<1x16x32xf32, #tpu.memory_space<vmem>>, %arg28: memref<1x2x8x32xf32, #tpu.memory_space<vmem>>, %arg29: memref<1x2x8x32xf32, #tpu.memory_space<vmem>>, %arg30: memref<16x32xf32, #tpu.memory_space<vmem>>, %arg31: memref<16x32xf32, #tpu.memory_space<vmem>>, %arg32: memref<16x32xf32, #tpu.memory_space<vmem>>) attributes {dimension_semantics = [#tpu.dimension_semantics<arbitrary>], iteration_bounds = array<i64: 2>, scalar_prefetch = 0 : i64, scratch_operands = 2 : i64, tpu.core_type = #tpu.core_type<tc>, window_params = [{pipeline_mode = #tpu.pipeline_mode<synchronous>, transform_indices = @transform_0, window_bounds = array<i64: 16, 32>}, {pipeline_mode = #tpu.pipeline_mode<synchronous>, transform_indices = @transform_1, window_bounds = array<i64: 16, 32>}, {pipeline_mode = #tpu.pipeline_mode<synchronous>, transform_indices = @transform_2, window_bounds = array<i64: 2, 8, 8>}, {pipeline_mode = #tpu.pipeline_mode<synchronous>, transform_indices = @transform_3, window_bounds = array<i64: 2, 1, 8>}, {transform_indices = @transform_4, window_bounds = array<i64: 1, 32, 96>}, {transform_indices = @transform_5, window_bounds = array<i64: 1, 1, 96>}, {transform_indices = @transform_6, window_bounds = array<i64: 1, 32, 32>}, {transform_indices = @transform_7, window_bounds = array<i64: 1, 1, 32>}, {transform_indices = @transform_8, window_bounds = array<i64: 1, 1, 32>}, {transform_indices = @transform_9, window_bounds = array<i64: 1, 1, 32>}, {transform_indices = @transform_10, window_bounds = array<i64: 1, 32, 32>}, {transform_indices = @transform_11, window_bounds = array<i64: 1, 1, 32>}, {transform_indices = @transform_12, window_bounds = array<i64: 1, 32, 64>}, {transform_indices = @transform_13, window_bounds = array<i64: 1, 1, 64>}, {transform_indices = @transform_14, window_bounds = array<i64: 1, 32, 32>}, {transform_indices = @transform_15, window_bounds = array<i64: 1, 1, 32>}, {transform_indices = @transform_16, window_bounds = array<i64: 1, 1, 32>}, {transform_indices = @transform_17, window_bounds = array<i64: 1, 1, 32>}, {transform_indices = @transform_18, window_bounds = array<i64: 1, 32, 64>}, {transform_indices = @transform_19, window_bounds = array<i64: 1, 1, 64>}, {transform_indices = @transform_20, window_bounds = array<i64: 1, 64, 32>}, {transform_indices = @transform_21, window_bounds = array<i64: 1, 1, 32>}, {transform_indices = @transform_22, window_bounds = array<i64: 1, 1, 32>}, {transform_indices = @transform_23, window_bounds = array<i64: 1, 1, 32>}, {pipeline_mode = #tpu.pipeline_mode<synchronous>, transform_indices = @transform_24, window_bounds = array<i64: 1, 32>}, {pipeline_mode = #tpu.pipeline_mode<synchronous>, transform_indices = @transform_25, window_bounds = array<i64: 1, 32>}, {transform_indices = @transform_26, window_bounds = array<i64: 1, 16, 32>}, {transform_indices = @transform_27, window_bounds = array<i64: 1, 2, 8, 32>}, {transform_indices = @transform_28, window_bounds = array<i64: 1, 2, 8, 32>}, {pipeline_mode = #tpu.pipeline_mode<synchronous>, transform_indices = @transform_29, window_bounds = array<i64: 16, 32>}]} {
    %c0_i32 = arith.constant 0 : i32
    %0 = arith.cmpi eq, %arg0, %c0_i32 : i32
    %1 = arith.extui %0 : i1 to i32
    %c0_i32_0 = arith.constant 0 : i32
    %2 = arith.cmpi ne, %1, %c0_i32_0 : i32
    scf.if %2 {
      %c0_284 = arith.constant 0 : index
      %c0_285 = arith.constant 0 : index
      %568 = vector.load %arg1[%c0_284, %c0_285] : memref<16x32xf32, #tpu.memory_space<vmem>>, vector<16x32xf32>
      %c0_286 = arith.constant 0 : index
      %c0_287 = arith.constant 0 : index
      %569 = vector.load %arg31[%c0_286, %c0_287] : memref<16x32xf32, #tpu.memory_space<vmem>>, vector<16x32xf32>
      tpu.vector_store %arg31[%c0_286, %c0_287], %568 {strides = array<i32>} : memref<16x32xf32, #tpu.memory_space<vmem>>, vector<16x32xf32>,
    } else {
    }
    %c0 = arith.constant 0 : index
    %c0_1 = arith.constant 0 : index
    %3 = vector.load %arg31[%c0, %c0_1] : memref<16x32xf32, #tpu.memory_space<vmem>>, vector<16x32xf32>
    %c0_2 = arith.constant 0 : index
    %c0_3 = arith.constant 0 : index
    %4 = vector.load %arg2[%c0_2, %c0_3] : memref<16x32xf32, #tpu.memory_space<vmem>>, vector<16x32xf32>
    %c0_4 = arith.constant 0 : index
    %c0_5 = arith.constant 0 : index
    %c0_6 = arith.constant 0 : index
    %5 = vector.load %arg3[%c0_4, %c0_5, %c0_6] : memref<2x8x8xf32, #tpu.memory_space<vmem>>, vector<2x8x8xf32>
    %c0_7 = arith.constant 0 : index
    %c0_8 = arith.constant 0 : index
    %c0_9 = arith.constant 0 : index
    %6 = vector.load %arg4[%c0_7, %c0_8, %c0_9] : memref<2x1x8xf32, #tpu.memory_space<vmem>>, vector<2x1x8xf32>
    %7 = arith.truncf %3 : vector<16x32xf32> to vector<16x32xbf16>
    %c0_10 = arith.constant 0 : index
    %c0_11 = arith.constant 0 : index
    %c0_12 = arith.constant 0 : index
    %8 = vector.load %arg5[%c0_10, %c0_11, %c0_12] : memref<1x32x96xbf16, #tpu.memory_space<vmem>>, vector<1x32x96xbf16>
    %9 = vector.shape_cast %8 : vector<1x32x96xbf16> to vector<32x96xbf16>
    %cst = arith.constant dense<0.000000e+00> : vector<16x96xf32>
    %10 = tpu.matmul %7, %9, %cst {dimension_numbers = #tpu.dot_dimension_numbers<[1], [0], [0], [1], [0, 0, 1, 1], [], []>} : vector<16x32xbf16>, vector<32x96xbf16>, vector<16x96xf32> -> vector<16x96xf32>
    %c0_13 = arith.constant 0 : index
    %c0_14 = arith.constant 0 : index
    %c0_15 = arith.constant 0 : index
    %11 = vector.load %arg6[%c0_13, %c0_14, %c0_15] : memref<1x1x96xf32, #tpu.memory_space<vmem>>, vector<1x1x96xf32>
    %12 = vector.shape_cast %11 : vector<1x1x96xf32> to vector<1x96xf32>
    %13 = vector.broadcast %12 : vector<1x96xf32> to vector<16x96xf32>
    %14 = arith.addf %10, %13 : vector<16x96xf32>
    %15 = vector.extract_strided_slice %14 {offsets = [0, 0], sizes = [16, 32], strides = [1, 1]} : vector<16x96xf32> to vector<16x32xf32>
    %16 = arith.truncf %15 : vector<16x32xf32> to vector<16x32xbf16>
    %17 = vector.extract_strided_slice %14 {offsets = [0, 32], sizes = [16, 32], strides = [1, 1]} : vector<16x96xf32> to vector<16x32xf32>
    %18 = arith.truncf %17 : vector<16x32xf32> to vector<16x32xbf16>
    %19 = vector.extract_strided_slice %14 {offsets = [0, 64], sizes = [16, 32], strides = [1, 1]} : vector<16x96xf32> to vector<16x32xf32>
    %20 = arith.truncf %19 : vector<16x32xf32> to vector<16x32xbf16>
    %21 = vector.extract_strided_slice %5 {offsets = [0, 0, 0], sizes = [1, 8, 8], strides = [1, 1, 1]} : vector<2x8x8xf32> to vector<1x8x8xf32>
    %22 = vector.shape_cast %21 : vector<1x8x8xf32> to vector<8x8xf32>
    %23 = vector.extract_strided_slice %16 {offsets = [0, 0], sizes = [8, 8], strides = [1, 1]} : vector<16x32xbf16> to vector<8x8xbf16>
    %24 = vector.extract_strided_slice %18 {offsets = [0, 0], sizes = [8, 8], strides = [1, 1]} : vector<16x32xbf16> to vector<8x8xbf16>
    %cst_16 = arith.constant dense<0.000000e+00> : vector<8x8xf32>
    %25 = tpu.matmul %23, %24, %cst_16 {dimension_numbers = #tpu.dot_dimension_numbers<[1], [1], [0], [0], [0, 0, 1, 0], [], []>} : vector<8x8xbf16>, vector<8x8xbf16>, vector<8x8xf32> -> vector<8x8xf32>
    %cst_17 = arith.constant 0.353553385 : f32
    %26 = vector.broadcast %cst_17 : f32 to vector<8x8xf32>
    %27 = arith.mulf %25, %26 : vector<8x8xf32>
    %28 = arith.addf %27, %22 : vector<8x8xf32>
    %cst_18 = arith.constant dense<0xFF800000> : vector<8xf32>
    %29 = vector.multi_reduction <maximumf>, %28, %cst_18 [1] : vector<8x8xf32> to vector<8xf32>
    %30 = vector.shape_cast %29 : vector<8xf32> to vector<8x1xf32>
    %31 = vector.broadcast %30 : vector<8x1xf32> to vector<8x8xf32>
    %32 = arith.subf %28, %31 : vector<8x8xf32>
    %33 = math.exp %32 : vector<8x8xf32>
    %cst_19 = arith.constant dense<0.000000e+00> : vector<8xf32>
    %34 = vector.multi_reduction <add>, %33, %cst_19 [1] : vector<8x8xf32> to vector<8xf32>
    %35 = vector.shape_cast %34 : vector<8xf32> to vector<8x1xf32>
    %36 = tpu.reciprocal %35 {approx = true} : vector<8x1xf32> -> vector<8x1xf32>
    %37 = vector.broadcast %36 : vector<8x1xf32> to vector<8x8xf32>
    %38 = arith.mulf %33, %37 : vector<8x8xf32>
    %c0_20 = arith.constant 0 : index
    %c0_21 = arith.constant 0 : index
    %c0_22 = arith.constant 0 : index
    %c0_23 = arith.constant 0 : index
    %39 = vector.load %arg28[%c0_20, %c0_21, %c0_22, %c0_23] : memref<1x2x8x32xf32, #tpu.memory_space<vmem>>, vector<1x1x8x8xf32>
    %40 = vector.shape_cast %39 : vector<1x1x8x8xf32> to vector<8x8xf32>
    %41 = vector.shape_cast %38 : vector<8x8xf32> to vector<1x1x8x8xf32>
    tpu.vector_store %arg28[%c0_20, %c0_21, %c0_22, %c0_23], %41 {strides = array<i32>} : memref<1x2x8x32xf32, #tpu.memory_space<vmem>>, vector<1x1x8x8xf32>,
    %42 = arith.truncf %38 : vector<8x8xf32> to vector<8x8xbf16>
    %43 = vector.extract_strided_slice %20 {offsets = [0, 0], sizes = [8, 8], strides = [1, 1]} : vector<16x32xbf16> to vector<8x8xbf16>
    %cst_24 = arith.constant dense<0.000000e+00> : vector<8x8xf32>
    %44 = tpu.matmul %42, %43, %cst_24 {dimension_numbers = #tpu.dot_dimension_numbers<[1], [0], [0], [1], [0, 0, 1, 1], [], []>} : vector<8x8xbf16>, vector<8x8xbf16>, vector<8x8xf32> -> vector<8x8xf32>
    %c0_25 = arith.constant 0 : index
    %c0_26 = arith.constant 0 : index
    %45 = vector.load %arg32[%c0_25, %c0_26] : memref<16x32xf32, #tpu.memory_space<vmem>>, vector<8x8xf32>
    tpu.vector_store %arg32[%c0_25, %c0_26], %44 {strides = array<i32>} : memref<16x32xf32, #tpu.memory_space<vmem>>, vector<8x8xf32>,
    %46 = vector.extract_strided_slice %16 {offsets = [0, 8], sizes = [8, 8], strides = [1, 1]} : vector<16x32xbf16> to vector<8x8xbf16>
    %47 = vector.extract_strided_slice %18 {offsets = [0, 8], sizes = [8, 8], strides = [1, 1]} : vector<16x32xbf16> to vector<8x8xbf16>
    %cst_27 = arith.constant dense<0.000000e+00> : vector<8x8xf32>
    %48 = tpu.matmul %46, %47, %cst_27 {dimension_numbers = #tpu.dot_dimension_numbers<[1], [1], [0], [0], [0, 0, 1, 0], [], []>} : vector<8x8xbf16>, vector<8x8xbf16>, vector<8x8xf32> -> vector<8x8xf32>
    %cst_28 = arith.constant 0.353553385 : f32
    %49 = vector.broadcast %cst_28 : f32 to vector<8x8xf32>
    %50 = arith.mulf %48, %49 : vector<8x8xf32>
    %51 = arith.addf %50, %22 : vector<8x8xf32>
    %cst_29 = arith.constant dense<0xFF800000> : vector<8xf32>
    %52 = vector.multi_reduction <maximumf>, %51, %cst_29 [1] : vector<8x8xf32> to vector<8xf32>
    %53 = vector.shape_cast %52 : vector<8xf32> to vector<8x1xf32>
    %54 = vector.broadcast %53 : vector<8x1xf32> to vector<8x8xf32>
    %55 = arith.subf %51, %54 : vector<8x8xf32>
    %56 = math.exp %55 : vector<8x8xf32>
    %cst_30 = arith.constant dense<0.000000e+00> : vector<8xf32>
    %57 = vector.multi_reduction <add>, %56, %cst_30 [1] : vector<8x8xf32> to vector<8xf32>
    %58 = vector.shape_cast %57 : vector<8xf32> to vector<8x1xf32>
    %59 = tpu.reciprocal %58 {approx = true} : vector<8x1xf32> -> vector<8x1xf32>
    %60 = vector.broadcast %59 : vector<8x1xf32> to vector<8x8xf32>
    %61 = arith.mulf %56, %60 : vector<8x8xf32>
    %c0_31 = arith.constant 0 : index
    %c0_32 = arith.constant 0 : index
    %c0_33 = arith.constant 0 : index
    %c8 = arith.constant 8 : index
    %62 = vector.load %arg28[%c0_31, %c0_32, %c0_33, %c8] : memref<1x2x8x32xf32, #tpu.memory_space<vmem>>, vector<1x1x8x8xf32>
    %63 = vector.shape_cast %62 : vector<1x1x8x8xf32> to vector<8x8xf32>
    %64 = vector.shape_cast %61 : vector<8x8xf32> to vector<1x1x8x8xf32>
    tpu.vector_store %arg28[%c0_31, %c0_32, %c0_33, %c8], %64 {strides = array<i32>} : memref<1x2x8x32xf32, #tpu.memory_space<vmem>>, vector<1x1x8x8xf32>,
    %65 = arith.truncf %61 : vector<8x8xf32> to vector<8x8xbf16>
    %66 = vector.extract_strided_slice %20 {offsets = [0, 8], sizes = [8, 8], strides = [1, 1]} : vector<16x32xbf16> to vector<8x8xbf16>
    %cst_34 = arith.constant dense<0.000000e+00> : vector<8x8xf32>
    %67 = tpu.matmul %65, %66, %cst_34 {dimension_numbers = #tpu.dot_dimension_numbers<[1], [0], [0], [1], [0, 0, 1, 1], [], []>} : vector<8x8xbf16>, vector<8x8xbf16>, vector<8x8xf32> -> vector<8x8xf32>
    %c0_35 = arith.constant 0 : index
    %c8_36 = arith.constant 8 : index
    %68 = vector.load %arg32[%c0_35, %c8_36] : memref<16x32xf32, #tpu.memory_space<vmem>>, vector<8x8xf32>
    tpu.vector_store %arg32[%c0_35, %c8_36], %67 {strides = array<i32>} : memref<16x32xf32, #tpu.memory_space<vmem>>, vector<8x8xf32>,
    %69 = vector.extract_strided_slice %16 {offsets = [0, 16], sizes = [8, 8], strides = [1, 1]} : vector<16x32xbf16> to vector<8x8xbf16>
    %70 = vector.extract_strided_slice %18 {offsets = [0, 16], sizes = [8, 8], strides = [1, 1]} : vector<16x32xbf16> to vector<8x8xbf16>
    %cst_37 = arith.constant dense<0.000000e+00> : vector<8x8xf32>
    %71 = tpu.matmul %69, %70, %cst_37 {dimension_numbers = #tpu.dot_dimension_numbers<[1], [1], [0], [0], [0, 0, 1, 0], [], []>} : vector<8x8xbf16>, vector<8x8xbf16>, vector<8x8xf32> -> vector<8x8xf32>
    %cst_38 = arith.constant 0.353553385 : f32
    %72 = vector.broadcast %cst_38 : f32 to vector<8x8xf32>
    %73 = arith.mulf %71, %72 : vector<8x8xf32>
    %74 = arith.addf %73, %22 : vector<8x8xf32>
    %cst_39 = arith.constant dense<0xFF800000> : vector<8xf32>
    %75 = vector.multi_reduction <maximumf>, %74, %cst_39 [1] : vector<8x8xf32> to vector<8xf32>
    %76 = vector.shape_cast %75 : vector<8xf32> to vector<8x1xf32>
    %77 = vector.broadcast %76 : vector<8x1xf32> to vector<8x8xf32>
    %78 = arith.subf %74, %77 : vector<8x8xf32>
    %79 = math.exp %78 : vector<8x8xf32>
    %cst_40 = arith.constant dense<0.000000e+00> : vector<8xf32>
    %80 = vector.multi_reduction <add>, %79, %cst_40 [1] : vector<8x8xf32> to vector<8xf32>
    %81 = vector.shape_cast %80 : vector<8xf32> to vector<8x1xf32>
    %82 = tpu.reciprocal %81 {approx = true} : vector<8x1xf32> -> vector<8x1xf32>
    %83 = vector.broadcast %82 : vector<8x1xf32> to vector<8x8xf32>
    %84 = arith.mulf %79, %83 : vector<8x8xf32>
    %c0_41 = arith.constant 0 : index
    %c0_42 = arith.constant 0 : index
    %c0_43 = arith.constant 0 : index
    %c16 = arith.constant 16 : index
    %85 = vector.load %arg28[%c0_41, %c0_42, %c0_43, %c16] : memref<1x2x8x32xf32, #tpu.memory_space<vmem>>, vector<1x1x8x8xf32>
    %86 = vector.shape_cast %85 : vector<1x1x8x8xf32> to vector<8x8xf32>
    %87 = vector.shape_cast %84 : vector<8x8xf32> to vector<1x1x8x8xf32>
    tpu.vector_store %arg28[%c0_41, %c0_42, %c0_43, %c16], %87 {strides = array<i32>} : memref<1x2x8x32xf32, #tpu.memory_space<vmem>>, vector<1x1x8x8xf32>,
    %88 = arith.truncf %84 : vector<8x8xf32> to vector<8x8xbf16>
    %89 = vector.extract_strided_slice %20 {offsets = [0, 16], sizes = [8, 8], strides = [1, 1]} : vector<16x32xbf16> to vector<8x8xbf16>
    %cst_44 = arith.constant dense<0.000000e+00> : vector<8x8xf32>
    %90 = tpu.matmul %88, %89, %cst_44 {dimension_numbers = #tpu.dot_dimension_numbers<[1], [0], [0], [1], [0, 0, 1, 1], [], []>} : vector<8x8xbf16>, vector<8x8xbf16>, vector<8x8xf32> -> vector<8x8xf32>
    %c0_45 = arith.constant 0 : index
    %c16_46 = arith.constant 16 : index
    %91 = vector.load %arg32[%c0_45, %c16_46] : memref<16x32xf32, #tpu.memory_space<vmem>>, vector<8x8xf32>
    tpu.vector_store %arg32[%c0_45, %c16_46], %90 {strides = array<i32>} : memref<16x32xf32, #tpu.memory_space<vmem>>, vector<8x8xf32>,
    %92 = vector.extract_strided_slice %16 {offsets = [0, 24], sizes = [8, 8], strides = [1, 1]} : vector<16x32xbf16> to vector<8x8xbf16>
    %93 = vector.extract_strided_slice %18 {offsets = [0, 24], sizes = [8, 8], strides = [1, 1]} : vector<16x32xbf16> to vector<8x8xbf16>
    %cst_47 = arith.constant dense<0.000000e+00> : vector<8x8xf32>
    %94 = tpu.matmul %92, %93, %cst_47 {dimension_numbers = #tpu.dot_dimension_numbers<[1], [1], [0], [0], [0, 0, 1, 0], [], []>} : vector<8x8xbf16>, vector<8x8xbf16>, vector<8x8xf32> -> vector<8x8xf32>
    %cst_48 = arith.constant 0.353553385 : f32
    %95 = vector.broadcast %cst_48 : f32 to vector<8x8xf32>
    %96 = arith.mulf %94, %95 : vector<8x8xf32>
    %97 = arith.addf %96, %22 : vector<8x8xf32>
    %cst_49 = arith.constant dense<0xFF800000> : vector<8xf32>
    %98 = vector.multi_reduction <maximumf>, %97, %cst_49 [1] : vector<8x8xf32> to vector<8xf32>
    %99 = vector.shape_cast %98 : vector<8xf32> to vector<8x1xf32>
    %100 = vector.broadcast %99 : vector<8x1xf32> to vector<8x8xf32>
    %101 = arith.subf %97, %100 : vector<8x8xf32>
    %102 = math.exp %101 : vector<8x8xf32>
    %cst_50 = arith.constant dense<0.000000e+00> : vector<8xf32>
    %103 = vector.multi_reduction <add>, %102, %cst_50 [1] : vector<8x8xf32> to vector<8xf32>
    %104 = vector.shape_cast %103 : vector<8xf32> to vector<8x1xf32>
    %105 = tpu.reciprocal %104 {approx = true} : vector<8x1xf32> -> vector<8x1xf32>
    %106 = vector.broadcast %105 : vector<8x1xf32> to vector<8x8xf32>
    %107 = arith.mulf %102, %106 : vector<8x8xf32>
    %c0_51 = arith.constant 0 : index
    %c0_52 = arith.constant 0 : index
    %c0_53 = arith.constant 0 : index
    %c24 = arith.constant 24 : index
    %108 = vector.load %arg28[%c0_51, %c0_52, %c0_53, %c24] : memref<1x2x8x32xf32, #tpu.memory_space<vmem>>, vector<1x1x8x8xf32>
    %109 = vector.shape_cast %108 : vector<1x1x8x8xf32> to vector<8x8xf32>
    %110 = vector.shape_cast %107 : vector<8x8xf32> to vector<1x1x8x8xf32>
    tpu.vector_store %arg28[%c0_51, %c0_52, %c0_53, %c24], %110 {strides = array<i32>} : memref<1x2x8x32xf32, #tpu.memory_space<vmem>>, vector<1x1x8x8xf32>,
    %111 = arith.truncf %107 : vector<8x8xf32> to vector<8x8xbf16>
    %112 = vector.extract_strided_slice %20 {offsets = [0, 24], sizes = [8, 8], strides = [1, 1]} : vector<16x32xbf16> to vector<8x8xbf16>
    %cst_54 = arith.constant dense<0.000000e+00> : vector<8x8xf32>
    %113 = tpu.matmul %111, %112, %cst_54 {dimension_numbers = #tpu.dot_dimension_numbers<[1], [0], [0], [1], [0, 0, 1, 1], [], []>} : vector<8x8xbf16>, vector<8x8xbf16>, vector<8x8xf32> -> vector<8x8xf32>
    %c0_55 = arith.constant 0 : index
    %c24_56 = arith.constant 24 : index
    %114 = vector.load %arg32[%c0_55, %c24_56] : memref<16x32xf32, #tpu.memory_space<vmem>>, vector<8x8xf32>
    tpu.vector_store %arg32[%c0_55, %c24_56], %113 {strides = array<i32>} : memref<16x32xf32, #tpu.memory_space<vmem>>, vector<8x8xf32>,
    %115 = vector.extract_strided_slice %5 {offsets = [1, 0, 0], sizes = [1, 8, 8], strides = [1, 1, 1]} : vector<2x8x8xf32> to vector<1x8x8xf32>
    %116 = vector.shape_cast %115 : vector<1x8x8xf32> to vector<8x8xf32>
    %117 = vector.extract_strided_slice %16 {offsets = [8, 0], sizes = [8, 8], strides = [1, 1]} : vector<16x32xbf16> to vector<8x8xbf16>
    %118 = vector.extract_strided_slice %18 {offsets = [8, 0], sizes = [8, 8], strides = [1, 1]} : vector<16x32xbf16> to vector<8x8xbf16>
    %cst_57 = arith.constant dense<0.000000e+00> : vector<8x8xf32>
    %119 = tpu.matmul %117, %118, %cst_57 {dimension_numbers = #tpu.dot_dimension_numbers<[1], [1], [0], [0], [0, 0, 1, 0], [], []>} : vector<8x8xbf16>, vector<8x8xbf16>, vector<8x8xf32> -> vector<8x8xf32>
    %cst_58 = arith.constant 0.353553385 : f32
    %120 = vector.broadcast %cst_58 : f32 to vector<8x8xf32>
    %121 = arith.mulf %119, %120 : vector<8x8xf32>
    %122 = arith.addf %121, %116 : vector<8x8xf32>
    %cst_59 = arith.constant dense<0xFF800000> : vector<8xf32>
    %123 = vector.multi_reduction <maximumf>, %122, %cst_59 [1] : vector<8x8xf32> to vector<8xf32>
    %124 = vector.shape_cast %123 : vector<8xf32> to vector<8x1xf32>
    %125 = vector.broadcast %124 : vector<8x1xf32> to vector<8x8xf32>
    %126 = arith.subf %122, %125 : vector<8x8xf32>
    %127 = math.exp %126 : vector<8x8xf32>
    %cst_60 = arith.constant dense<0.000000e+00> : vector<8xf32>
    %128 = vector.multi_reduction <add>, %127, %cst_60 [1] : vector<8x8xf32> to vector<8xf32>
    %129 = vector.shape_cast %128 : vector<8xf32> to vector<8x1xf32>
    %130 = tpu.reciprocal %129 {approx = true} : vector<8x1xf32> -> vector<8x1xf32>
    %131 = vector.broadcast %130 : vector<8x1xf32> to vector<8x8xf32>
    %132 = arith.mulf %127, %131 : vector<8x8xf32>
    %c0_61 = arith.constant 0 : index
    %c1 = arith.constant 1 : index
    %c0_62 = arith.constant 0 : index
    %c0_63 = arith.constant 0 : index
    %133 = vector.load %arg28[%c0_61, %c1, %c0_62, %c0_63] : memref<1x2x8x32xf32, #tpu.memory_space<vmem>>, vector<1x1x8x8xf32>
    %134 = vector.shape_cast %133 : vector<1x1x8x8xf32> to vector<8x8xf32>
    %135 = vector.shape_cast %132 : vector<8x8xf32> to vector<1x1x8x8xf32>
    tpu.vector_store %arg28[%c0_61, %c1, %c0_62, %c0_63], %135 {strides = array<i32>} : memref<1x2x8x32xf32, #tpu.memory_space<vmem>>, vector<1x1x8x8xf32>,
    %136 = arith.truncf %132 : vector<8x8xf32> to vector<8x8xbf16>
    %137 = vector.extract_strided_slice %20 {offsets = [8, 0], sizes = [8, 8], strides = [1, 1]} : vector<16x32xbf16> to vector<8x8xbf16>
    %cst_64 = arith.constant dense<0.000000e+00> : vector<8x8xf32>
    %138 = tpu.matmul %136, %137, %cst_64 {dimension_numbers = #tpu.dot_dimension_numbers<[1], [0], [0], [1], [0, 0, 1, 1], [], []>} : vector<8x8xbf16>, vector<8x8xbf16>, vector<8x8xf32> -> vector<8x8xf32>
    %c8_65 = arith.constant 8 : index
    %c0_66 = arith.constant 0 : index
    %139 = vector.load %arg32[%c8_65, %c0_66] : memref<16x32xf32, #tpu.memory_space<vmem>>, vector<8x8xf32>
    tpu.vector_store %arg32[%c8_65, %c0_66], %138 {strides = array<i32>} : memref<16x32xf32, #tpu.memory_space<vmem>>, vector<8x8xf32>,
    %140 = vector.extract_strided_slice %16 {offsets = [8, 8], sizes = [8, 8], strides = [1, 1]} : vector<16x32xbf16> to vector<8x8xbf16>
    %141 = vector.extract_strided_slice %18 {offsets = [8, 8], sizes = [8, 8], strides = [1, 1]} : vector<16x32xbf16> to vector<8x8xbf16>
    %cst_67 = arith.constant dense<0.000000e+00> : vector<8x8xf32>
    %142 = tpu.matmul %140, %141, %cst_67 {dimension_numbers = #tpu.dot_dimension_numbers<[1], [1], [0], [0], [0, 0, 1, 0], [], []>} : vector<8x8xbf16>, vector<8x8xbf16>, vector<8x8xf32> -> vector<8x8xf32>
    %cst_68 = arith.constant 0.353553385 : f32
    %143 = vector.broadcast %cst_68 : f32 to vector<8x8xf32>
    %144 = arith.mulf %142, %143 : vector<8x8xf32>
    %145 = arith.addf %144, %116 : vector<8x8xf32>
    %cst_69 = arith.constant dense<0xFF800000> : vector<8xf32>
    %146 = vector.multi_reduction <maximumf>, %145, %cst_69 [1] : vector<8x8xf32> to vector<8xf32>
    %147 = vector.shape_cast %146 : vector<8xf32> to vector<8x1xf32>
    %148 = vector.broadcast %147 : vector<8x1xf32> to vector<8x8xf32>
    %149 = arith.subf %145, %148 : vector<8x8xf32>
    %150 = math.exp %149 : vector<8x8xf32>
    %cst_70 = arith.constant dense<0.000000e+00> : vector<8xf32>
    %151 = vector.multi_reduction <add>, %150, %cst_70 [1] : vector<8x8xf32> to vector<8xf32>
    %152 = vector.shape_cast %151 : vector<8xf32> to vector<8x1xf32>
    %153 = tpu.reciprocal %152 {approx = true} : vector<8x1xf32> -> vector<8x1xf32>
    %154 = vector.broadcast %153 : vector<8x1xf32> to vector<8x8xf32>
    %155 = arith.mulf %150, %154 : vector<8x8xf32>
    %c0_71 = arith.constant 0 : index
    %c1_72 = arith.constant 1 : index
    %c0_73 = arith.constant 0 : index
    %c8_74 = arith.constant 8 : index
    %156 = vector.load %arg28[%c0_71, %c1_72, %c0_73, %c8_74] : memref<1x2x8x32xf32, #tpu.memory_space<vmem>>, vector<1x1x8x8xf32>
    %157 = vector.shape_cast %156 : vector<1x1x8x8xf32> to vector<8x8xf32>
    %158 = vector.shape_cast %155 : vector<8x8xf32> to vector<1x1x8x8xf32>
    tpu.vector_store %arg28[%c0_71, %c1_72, %c0_73, %c8_74], %158 {strides = array<i32>} : memref<1x2x8x32xf32, #tpu.memory_space<vmem>>, vector<1x1x8x8xf32>,
    %159 = arith.truncf %155 : vector<8x8xf32> to vector<8x8xbf16>
    %160 = vector.extract_strided_slice %20 {offsets = [8, 8], sizes = [8, 8], strides = [1, 1]} : vector<16x32xbf16> to vector<8x8xbf16>
    %cst_75 = arith.constant dense<0.000000e+00> : vector<8x8xf32>
    %161 = tpu.matmul %159, %160, %cst_75 {dimension_numbers = #tpu.dot_dimension_numbers<[1], [0], [0], [1], [0, 0, 1, 1], [], []>} : vector<8x8xbf16>, vector<8x8xbf16>, vector<8x8xf32> -> vector<8x8xf32>
    %c8_76 = arith.constant 8 : index
    %c8_77 = arith.constant 8 : index
    %162 = vector.load %arg32[%c8_76, %c8_77] : memref<16x32xf32, #tpu.memory_space<vmem>>, vector<8x8xf32>
    tpu.vector_store %arg32[%c8_76, %c8_77], %161 {strides = array<i32>} : memref<16x32xf32, #tpu.memory_space<vmem>>, vector<8x8xf32>,
    %163 = vector.extract_strided_slice %16 {offsets = [8, 16], sizes = [8, 8], strides = [1, 1]} : vector<16x32xbf16> to vector<8x8xbf16>
    %164 = vector.extract_strided_slice %18 {offsets = [8, 16], sizes = [8, 8], strides = [1, 1]} : vector<16x32xbf16> to vector<8x8xbf16>
    %cst_78 = arith.constant dense<0.000000e+00> : vector<8x8xf32>
    %165 = tpu.matmul %163, %164, %cst_78 {dimension_numbers = #tpu.dot_dimension_numbers<[1], [1], [0], [0], [0, 0, 1, 0], [], []>} : vector<8x8xbf16>, vector<8x8xbf16>, vector<8x8xf32> -> vector<8x8xf32>
    %cst_79 = arith.constant 0.353553385 : f32
    %166 = vector.broadcast %cst_79 : f32 to vector<8x8xf32>
    %167 = arith.mulf %165, %166 : vector<8x8xf32>
    %168 = arith.addf %167, %116 : vector<8x8xf32>
    %cst_80 = arith.constant dense<0xFF800000> : vector<8xf32>
    %169 = vector.multi_reduction <maximumf>, %168, %cst_80 [1] : vector<8x8xf32> to vector<8xf32>
    %170 = vector.shape_cast %169 : vector<8xf32> to vector<8x1xf32>
    %171 = vector.broadcast %170 : vector<8x1xf32> to vector<8x8xf32>
    %172 = arith.subf %168, %171 : vector<8x8xf32>
    %173 = math.exp %172 : vector<8x8xf32>
    %cst_81 = arith.constant dense<0.000000e+00> : vector<8xf32>
    %174 = vector.multi_reduction <add>, %173, %cst_81 [1] : vector<8x8xf32> to vector<8xf32>
    %175 = vector.shape_cast %174 : vector<8xf32> to vector<8x1xf32>
    %176 = tpu.reciprocal %175 {approx = true} : vector<8x1xf32> -> vector<8x1xf32>
    %177 = vector.broadcast %176 : vector<8x1xf32> to vector<8x8xf32>
    %178 = arith.mulf %173, %177 : vector<8x8xf32>
    %c0_82 = arith.constant 0 : index
    %c1_83 = arith.constant 1 : index
    %c0_84 = arith.constant 0 : index
    %c16_85 = arith.constant 16 : index
    %179 = vector.load %arg28[%c0_82, %c1_83, %c0_84, %c16_85] : memref<1x2x8x32xf32, #tpu.memory_space<vmem>>, vector<1x1x8x8xf32>
    %180 = vector.shape_cast %179 : vector<1x1x8x8xf32> to vector<8x8xf32>
    %181 = vector.shape_cast %178 : vector<8x8xf32> to vector<1x1x8x8xf32>
    tpu.vector_store %arg28[%c0_82, %c1_83, %c0_84, %c16_85], %181 {strides = array<i32>} : memref<1x2x8x32xf32, #tpu.memory_space<vmem>>, vector<1x1x8x8xf32>,
    %182 = arith.truncf %178 : vector<8x8xf32> to vector<8x8xbf16>
    %183 = vector.extract_strided_slice %20 {offsets = [8, 16], sizes = [8, 8], strides = [1, 1]} : vector<16x32xbf16> to vector<8x8xbf16>
    %cst_86 = arith.constant dense<0.000000e+00> : vector<8x8xf32>
    %184 = tpu.matmul %182, %183, %cst_86 {dimension_numbers = #tpu.dot_dimension_numbers<[1], [0], [0], [1], [0, 0, 1, 1], [], []>} : vector<8x8xbf16>, vector<8x8xbf16>, vector<8x8xf32> -> vector<8x8xf32>
    %c8_87 = arith.constant 8 : index
    %c16_88 = arith.constant 16 : index
    %185 = vector.load %arg32[%c8_87, %c16_88] : memref<16x32xf32, #tpu.memory_space<vmem>>, vector<8x8xf32>
    tpu.vector_store %arg32[%c8_87, %c16_88], %184 {strides = array<i32>} : memref<16x32xf32, #tpu.memory_space<vmem>>, vector<8x8xf32>,
    %186 = vector.extract_strided_slice %16 {offsets = [8, 24], sizes = [8, 8], strides = [1, 1]} : vector<16x32xbf16> to vector<8x8xbf16>
    %187 = vector.extract_strided_slice %18 {offsets = [8, 24], sizes = [8, 8], strides = [1, 1]} : vector<16x32xbf16> to vector<8x8xbf16>
    %cst_89 = arith.constant dense<0.000000e+00> : vector<8x8xf32>
    %188 = tpu.matmul %186, %187, %cst_89 {dimension_numbers = #tpu.dot_dimension_numbers<[1], [1], [0], [0], [0, 0, 1, 0], [], []>} : vector<8x8xbf16>, vector<8x8xbf16>, vector<8x8xf32> -> vector<8x8xf32>
    %cst_90 = arith.constant 0.353553385 : f32
    %189 = vector.broadcast %cst_90 : f32 to vector<8x8xf32>
    %190 = arith.mulf %188, %189 : vector<8x8xf32>
    %191 = arith.addf %190, %116 : vector<8x8xf32>
    %cst_91 = arith.constant dense<0xFF800000> : vector<8xf32>
    %192 = vector.multi_reduction <maximumf>, %191, %cst_91 [1] : vector<8x8xf32> to vector<8xf32>
    %193 = vector.shape_cast %192 : vector<8xf32> to vector<8x1xf32>
    %194 = vector.broadcast %193 : vector<8x1xf32> to vector<8x8xf32>
    %195 = arith.subf %191, %194 : vector<8x8xf32>
    %196 = math.exp %195 : vector<8x8xf32>
    %cst_92 = arith.constant dense<0.000000e+00> : vector<8xf32>
    %197 = vector.multi_reduction <add>, %196, %cst_92 [1] : vector<8x8xf32> to vector<8xf32>
    %198 = vector.shape_cast %197 : vector<8xf32> to vector<8x1xf32>
    %199 = tpu.reciprocal %198 {approx = true} : vector<8x1xf32> -> vector<8x1xf32>
    %200 = vector.broadcast %199 : vector<8x1xf32> to vector<8x8xf32>
    %201 = arith.mulf %196, %200 : vector<8x8xf32>
    %c0_93 = arith.constant 0 : index
    %c1_94 = arith.constant 1 : index
    %c0_95 = arith.constant 0 : index
    %c24_96 = arith.constant 24 : index
    %202 = vector.load %arg28[%c0_93, %c1_94, %c0_95, %c24_96] : memref<1x2x8x32xf32, #tpu.memory_space<vmem>>, vector<1x1x8x8xf32>
    %203 = vector.shape_cast %202 : vector<1x1x8x8xf32> to vector<8x8xf32>
    %204 = vector.shape_cast %201 : vector<8x8xf32> to vector<1x1x8x8xf32>
    tpu.vector_store %arg28[%c0_93, %c1_94, %c0_95, %c24_96], %204 {strides = array<i32>} : memref<1x2x8x32xf32, #tpu.memory_space<vmem>>, vector<1x1x8x8xf32>,
    %205 = arith.truncf %201 : vector<8x8xf32> to vector<8x8xbf16>
    %206 = vector.extract_strided_slice %20 {offsets = [8, 24], sizes = [8, 8], strides = [1, 1]} : vector<16x32xbf16> to vector<8x8xbf16>
    %cst_97 = arith.constant dense<0.000000e+00> : vector<8x8xf32>
    %207 = tpu.matmul %205, %206, %cst_97 {dimension_numbers = #tpu.dot_dimension_numbers<[1], [0], [0], [1], [0, 0, 1, 1], [], []>} : vector<8x8xbf16>, vector<8x8xbf16>, vector<8x8xf32> -> vector<8x8xf32>
    %c8_98 = arith.constant 8 : index
    %c24_99 = arith.constant 24 : index
    %208 = vector.load %arg32[%c8_98, %c24_99] : memref<16x32xf32, #tpu.memory_space<vmem>>, vector<8x8xf32>
    tpu.vector_store %arg32[%c8_98, %c24_99], %207 {strides = array<i32>} : memref<16x32xf32, #tpu.memory_space<vmem>>, vector<8x8xf32>,
    %c0_100 = arith.constant 0 : index
    %c0_101 = arith.constant 0 : index
    %209 = vector.load %arg32[%c0_100, %c0_101] : memref<16x32xf32, #tpu.memory_space<vmem>>, vector<16x32xf32>
    %210 = arith.truncf %209 : vector<16x32xf32> to vector<16x32xbf16>
    %c0_102 = arith.constant 0 : index
    %c0_103 = arith.constant 0 : index
    %c0_104 = arith.constant 0 : index
    %211 = vector.load %arg7[%c0_102, %c0_103, %c0_104] : memref<1x32x32xbf16, #tpu.memory_space<vmem>>, vector<1x32x32xbf16>
    %212 = vector.shape_cast %211 : vector<1x32x32xbf16> to vector<32x32xbf16>
    %cst_105 = arith.constant dense<0.000000e+00> : vector<16x32xf32>
    %213 = tpu.matmul %210, %212, %cst_105 {dimension_numbers = #tpu.dot_dimension_numbers<[1], [0], [0], [1], [0, 0, 1, 1], [], []>} : vector<16x32xbf16>, vector<32x32xbf16>, vector<16x32xf32> -> vector<16x32xf32>
    %c0_106 = arith.constant 0 : index
    %c0_107 = arith.constant 0 : index
    %c0_108 = arith.constant 0 : index
    %214 = vector.load %arg8[%c0_106, %c0_107, %c0_108] : memref<1x1x32xf32, #tpu.memory_space<vmem>>, vector<1x1x32xf32>
    %215 = vector.shape_cast %214 : vector<1x1x32xf32> to vector<1x32xf32>
    %216 = vector.broadcast %215 : vector<1x32xf32> to vector<16x32xf32>
    %217 = arith.addf %213, %216 : vector<16x32xf32>
    %218 = arith.addf %3, %217 : vector<16x32xf32>
    %c0_109 = arith.constant 0 : index
    %c0_110 = arith.constant 0 : index
    %c0_111 = arith.constant 0 : index
    %219 = vector.load %arg9[%c0_109, %c0_110, %c0_111] : memref<1x1x32xf32, #tpu.memory_space<vmem>>, vector<1x1x32xf32>
    %220 = vector.shape_cast %219 : vector<1x1x32xf32> to vector<1x32xf32>
    %c0_112 = arith.constant 0 : index
    %c0_113 = arith.constant 0 : index
    %c0_114 = arith.constant 0 : index
    %221 = vector.load %arg10[%c0_112, %c0_113, %c0_114] : memref<1x1x32xf32, #tpu.memory_space<vmem>>, vector<1x1x32xf32>
    %222 = vector.shape_cast %221 : vector<1x1x32xf32> to vector<1x32xf32>
    %cst_115 = arith.constant dense<0.000000e+00> : vector<16xf32>
    %223 = vector.multi_reduction <add>, %218, %cst_115 [1] : vector<16x32xf32> to vector<16xf32>
    %224 = vector.shape_cast %223 : vector<16xf32> to vector<16x1xf32>
    %cst_116 = arith.constant 3.200000e+01 : f32
    %225 = vector.broadcast %cst_116 : f32 to vector<16x1xf32>
    %226 = arith.divf %224, %225 : vector<16x1xf32>
    %227 = vector.broadcast %226 : vector<16x1xf32> to vector<16x32xf32>
    %228 = arith.subf %218, %227 : vector<16x32xf32>
    %229 = arith.mulf %228, %228 : vector<16x32xf32>
    %cst_117 = arith.constant dense<0.000000e+00> : vector<16xf32>
    %230 = vector.multi_reduction <add>, %229, %cst_117 [1] : vector<16x32xf32> to vector<16xf32>
    %231 = vector.shape_cast %230 : vector<16xf32> to vector<16x1xf32>
    %cst_118 = arith.constant 3.200000e+01 : f32
    %232 = vector.broadcast %cst_118 : f32 to vector<16x1xf32>
    %233 = arith.divf %231, %232 : vector<16x1xf32>
    %234 = vector.broadcast %226 : vector<16x1xf32> to vector<16x32xf32>
    %235 = arith.subf %218, %234 : vector<16x32xf32>
    %cst_119 = arith.constant 9.99999974E-6 : f32
    %236 = vector.broadcast %cst_119 : f32 to vector<16x1xf32>
    %237 = arith.addf %233, %236 : vector<16x1xf32>
    %238 = math.rsqrt %237 : vector<16x1xf32>
    %239 = vector.broadcast %238 : vector<16x1xf32> to vector<16x32xf32>
    %240 = arith.mulf %235, %239 : vector<16x32xf32>
    %241 = vector.broadcast %220 : vector<1x32xf32> to vector<16x32xf32>
    %242 = arith.mulf %240, %241 : vector<16x32xf32>
    %243 = vector.broadcast %222 : vector<1x32xf32> to vector<16x32xf32>
    %244 = arith.addf %242, %243 : vector<16x32xf32>
    %245 = arith.truncf %244 : vector<16x32xf32> to vector<16x32xbf16>
    %c0_120 = arith.constant 0 : index
    %c0_121 = arith.constant 0 : index
    %c0_122 = arith.constant 0 : index
    %246 = vector.load %arg11[%c0_120, %c0_121, %c0_122] : memref<1x32x32xbf16, #tpu.memory_space<vmem>>, vector<1x32x32xbf16>
    %247 = vector.shape_cast %246 : vector<1x32x32xbf16> to vector<32x32xbf16>
    %cst_123 = arith.constant dense<0.000000e+00> : vector<16x32xf32>
    %248 = tpu.matmul %245, %247, %cst_123 {dimension_numbers = #tpu.dot_dimension_numbers<[1], [0], [0], [1], [0, 0, 1, 1], [], []>} : vector<16x32xbf16>, vector<32x32xbf16>, vector<16x32xf32> -> vector<16x32xf32>
    %c0_124 = arith.constant 0 : index
    %c0_125 = arith.constant 0 : index
    %c0_126 = arith.constant 0 : index
    %249 = vector.load %arg12[%c0_124, %c0_125, %c0_126] : memref<1x1x32xf32, #tpu.memory_space<vmem>>, vector<1x1x32xf32>
    %250 = vector.shape_cast %249 : vector<1x1x32xf32> to vector<1x32xf32>
    %251 = vector.broadcast %250 : vector<1x32xf32> to vector<16x32xf32>
    %252 = arith.addf %248, %251 : vector<16x32xf32>
    %253 = arith.truncf %4 : vector<16x32xf32> to vector<16x32xbf16>
    %c0_127 = arith.constant 0 : index
    %c0_128 = arith.constant 0 : index
    %c0_129 = arith.constant 0 : index
    %254 = vector.load %arg13[%c0_127, %c0_128, %c0_129] : memref<1x32x64xbf16, #tpu.memory_space<vmem>>, vector<1x32x64xbf16>
    %255 = vector.shape_cast %254 : vector<1x32x64xbf16> to vector<32x64xbf16>
    %cst_130 = arith.constant dense<0.000000e+00> : vector<16x64xf32>
    %256 = tpu.matmul %253, %255, %cst_130 {dimension_numbers = #tpu.dot_dimension_numbers<[1], [0], [0], [1], [0, 0, 1, 1], [], []>} : vector<16x32xbf16>, vector<32x64xbf16>, vector<16x64xf32> -> vector<16x64xf32>
    %c0_131 = arith.constant 0 : index
    %c0_132 = arith.constant 0 : index
    %c0_133 = arith.constant 0 : index
    %257 = vector.load %arg14[%c0_131, %c0_132, %c0_133] : memref<1x1x64xf32, #tpu.memory_space<vmem>>, vector<1x1x64xf32>
    %258 = vector.shape_cast %257 : vector<1x1x64xf32> to vector<1x64xf32>
    %259 = vector.broadcast %258 : vector<1x64xf32> to vector<16x64xf32>
    %260 = arith.addf %256, %259 : vector<16x64xf32>
    %261 = arith.truncf %252 : vector<16x32xf32> to vector<16x32xbf16>
    %262 = vector.extract_strided_slice %260 {offsets = [0, 0], sizes = [16, 32], strides = [1, 1]} : vector<16x64xf32> to vector<16x32xf32>
    %263 = arith.truncf %262 : vector<16x32xf32> to vector<16x32xbf16>
    %264 = vector.extract_strided_slice %260 {offsets = [0, 32], sizes = [16, 32], strides = [1, 1]} : vector<16x64xf32> to vector<16x32xf32>
    %265 = arith.truncf %264 : vector<16x32xf32> to vector<16x32xbf16>
    %266 = vector.extract_strided_slice %6 {offsets = [0, 0, 0], sizes = [1, 1, 8], strides = [1, 1, 1]} : vector<2x1x8xf32> to vector<1x1x8xf32>
    %267 = vector.shape_cast %266 : vector<1x1x8xf32> to vector<1x8xf32>
    %268 = vector.shape_cast %267 : vector<1x8xf32> to vector<1x8xf32>
    %269 = vector.broadcast %268 : vector<1x8xf32> to vector<8x8xf32>
    %270 = vector.extract_strided_slice %261 {offsets = [0, 0], sizes = [8, 8], strides = [1, 1]} : vector<16x32xbf16> to vector<8x8xbf16>
    %271 = vector.extract_strided_slice %263 {offsets = [0, 0], sizes = [8, 8], strides = [1, 1]} : vector<16x32xbf16> to vector<8x8xbf16>
    %cst_134 = arith.constant dense<0.000000e+00> : vector<8x8xf32>
    %272 = tpu.matmul %270, %271, %cst_134 {dimension_numbers = #tpu.dot_dimension_numbers<[1], [1], [0], [0], [0, 0, 1, 0], [], []>} : vector<8x8xbf16>, vector<8x8xbf16>, vector<8x8xf32> -> vector<8x8xf32>
    %cst_135 = arith.constant 0.353553385 : f32
    %273 = vector.broadcast %cst_135 : f32 to vector<8x8xf32>
    %274 = arith.mulf %272, %273 : vector<8x8xf32>
    %275 = arith.addf %274, %269 : vector<8x8xf32>
    %cst_136 = arith.constant dense<0xFF800000> : vector<8xf32>
    %276 = vector.multi_reduction <maximumf>, %275, %cst_136 [1] : vector<8x8xf32> to vector<8xf32>
    %277 = vector.shape_cast %276 : vector<8xf32> to vector<8x1xf32>
    %278 = vector.broadcast %277 : vector<8x1xf32> to vector<8x8xf32>
    %279 = arith.subf %275, %278 : vector<8x8xf32>
    %280 = math.exp %279 : vector<8x8xf32>
    %cst_137 = arith.constant dense<0.000000e+00> : vector<8xf32>
    %281 = vector.multi_reduction <add>, %280, %cst_137 [1] : vector<8x8xf32> to vector<8xf32>
    %282 = vector.shape_cast %281 : vector<8xf32> to vector<8x1xf32>
    %283 = tpu.reciprocal %282 {approx = true} : vector<8x1xf32> -> vector<8x1xf32>
    %284 = vector.broadcast %283 : vector<8x1xf32> to vector<8x8xf32>
    %285 = arith.mulf %280, %284 : vector<8x8xf32>
    %c0_138 = arith.constant 0 : index
    %c0_139 = arith.constant 0 : index
    %c0_140 = arith.constant 0 : index
    %c0_141 = arith.constant 0 : index
    %286 = vector.load %arg29[%c0_138, %c0_139, %c0_140, %c0_141] : memref<1x2x8x32xf32, #tpu.memory_space<vmem>>, vector<1x1x8x8xf32>
    %287 = vector.shape_cast %286 : vector<1x1x8x8xf32> to vector<8x8xf32>
    %288 = vector.shape_cast %285 : vector<8x8xf32> to vector<1x1x8x8xf32>
    tpu.vector_store %arg29[%c0_138, %c0_139, %c0_140, %c0_141], %288 {strides = array<i32>} : memref<1x2x8x32xf32, #tpu.memory_space<vmem>>, vector<1x1x8x8xf32>,
    %289 = arith.truncf %285 : vector<8x8xf32> to vector<8x8xbf16>
    %290 = vector.extract_strided_slice %265 {offsets = [0, 0], sizes = [8, 8], strides = [1, 1]} : vector<16x32xbf16> to vector<8x8xbf16>
    %cst_142 = arith.constant dense<0.000000e+00> : vector<8x8xf32>
    %291 = tpu.matmul %289, %290, %cst_142 {dimension_numbers = #tpu.dot_dimension_numbers<[1], [0], [0], [1], [0, 0, 1, 1], [], []>} : vector<8x8xbf16>, vector<8x8xbf16>, vector<8x8xf32> -> vector<8x8xf32>
    %c0_143 = arith.constant 0 : index
    %c0_144 = arith.constant 0 : index
    %292 = vector.load %arg32[%c0_143, %c0_144] : memref<16x32xf32, #tpu.memory_space<vmem>>, vector<8x8xf32>
    tpu.vector_store %arg32[%c0_143, %c0_144], %291 {strides = array<i32>} : memref<16x32xf32, #tpu.memory_space<vmem>>, vector<8x8xf32>,
    %293 = vector.extract_strided_slice %261 {offsets = [0, 8], sizes = [8, 8], strides = [1, 1]} : vector<16x32xbf16> to vector<8x8xbf16>
    %294 = vector.extract_strided_slice %263 {offsets = [0, 8], sizes = [8, 8], strides = [1, 1]} : vector<16x32xbf16> to vector<8x8xbf16>
    %cst_145 = arith.constant dense<0.000000e+00> : vector<8x8xf32>
    %295 = tpu.matmul %293, %294, %cst_145 {dimension_numbers = #tpu.dot_dimension_numbers<[1], [1], [0], [0], [0, 0, 1, 0], [], []>} : vector<8x8xbf16>, vector<8x8xbf16>, vector<8x8xf32> -> vector<8x8xf32>
    %cst_146 = arith.constant 0.353553385 : f32
    %296 = vector.broadcast %cst_146 : f32 to vector<8x8xf32>
    %297 = arith.mulf %295, %296 : vector<8x8xf32>
    %298 = arith.addf %297, %269 : vector<8x8xf32>
    %cst_147 = arith.constant dense<0xFF800000> : vector<8xf32>
    %299 = vector.multi_reduction <maximumf>, %298, %cst_147 [1] : vector<8x8xf32> to vector<8xf32>
    %300 = vector.shape_cast %299 : vector<8xf32> to vector<8x1xf32>
    %301 = vector.broadcast %300 : vector<8x1xf32> to vector<8x8xf32>
    %302 = arith.subf %298, %301 : vector<8x8xf32>
    %303 = math.exp %302 : vector<8x8xf32>
    %cst_148 = arith.constant dense<0.000000e+00> : vector<8xf32>
    %304 = vector.multi_reduction <add>, %303, %cst_148 [1] : vector<8x8xf32> to vector<8xf32>
    %305 = vector.shape_cast %304 : vector<8xf32> to vector<8x1xf32>
    %306 = tpu.reciprocal %305 {approx = true} : vector<8x1xf32> -> vector<8x1xf32>
    %307 = vector.broadcast %306 : vector<8x1xf32> to vector<8x8xf32>
    %308 = arith.mulf %303, %307 : vector<8x8xf32>
    %c0_149 = arith.constant 0 : index
    %c0_150 = arith.constant 0 : index
    %c0_151 = arith.constant 0 : index
    %c8_152 = arith.constant 8 : index
    %309 = vector.load %arg29[%c0_149, %c0_150, %c0_151, %c8_152] : memref<1x2x8x32xf32, #tpu.memory_space<vmem>>, vector<1x1x8x8xf32>
    %310 = vector.shape_cast %309 : vector<1x1x8x8xf32> to vector<8x8xf32>
    %311 = vector.shape_cast %308 : vector<8x8xf32> to vector<1x1x8x8xf32>
    tpu.vector_store %arg29[%c0_149, %c0_150, %c0_151, %c8_152], %311 {strides = array<i32>} : memref<1x2x8x32xf32, #tpu.memory_space<vmem>>, vector<1x1x8x8xf32>,
    %312 = arith.truncf %308 : vector<8x8xf32> to vector<8x8xbf16>
    %313 = vector.extract_strided_slice %265 {offsets = [0, 8], sizes = [8, 8], strides = [1, 1]} : vector<16x32xbf16> to vector<8x8xbf16>
    %cst_153 = arith.constant dense<0.000000e+00> : vector<8x8xf32>
    %314 = tpu.matmul %312, %313, %cst_153 {dimension_numbers = #tpu.dot_dimension_numbers<[1], [0], [0], [1], [0, 0, 1, 1], [], []>} : vector<8x8xbf16>, vector<8x8xbf16>, vector<8x8xf32> -> vector<8x8xf32>
    %c0_154 = arith.constant 0 : index
    %c8_155 = arith.constant 8 : index
    %315 = vector.load %arg32[%c0_154, %c8_155] : memref<16x32xf32, #tpu.memory_space<vmem>>, vector<8x8xf32>
    tpu.vector_store %arg32[%c0_154, %c8_155], %314 {strides = array<i32>} : memref<16x32xf32, #tpu.memory_space<vmem>>, vector<8x8xf32>,
    %316 = vector.extract_strided_slice %261 {offsets = [0, 16], sizes = [8, 8], strides = [1, 1]} : vector<16x32xbf16> to vector<8x8xbf16>
    %317 = vector.extract_strided_slice %263 {offsets = [0, 16], sizes = [8, 8], strides = [1, 1]} : vector<16x32xbf16> to vector<8x8xbf16>
    %cst_156 = arith.constant dense<0.000000e+00> : vector<8x8xf32>
    %318 = tpu.matmul %316, %317, %cst_156 {dimension_numbers = #tpu.dot_dimension_numbers<[1], [1], [0], [0], [0, 0, 1, 0], [], []>} : vector<8x8xbf16>, vector<8x8xbf16>, vector<8x8xf32> -> vector<8x8xf32>
    %cst_157 = arith.constant 0.353553385 : f32
    %319 = vector.broadcast %cst_157 : f32 to vector<8x8xf32>
    %320 = arith.mulf %318, %319 : vector<8x8xf32>
    %321 = arith.addf %320, %269 : vector<8x8xf32>
    %cst_158 = arith.constant dense<0xFF800000> : vector<8xf32>
    %322 = vector.multi_reduction <maximumf>, %321, %cst_158 [1] : vector<8x8xf32> to vector<8xf32>
    %323 = vector.shape_cast %322 : vector<8xf32> to vector<8x1xf32>
    %324 = vector.broadcast %323 : vector<8x1xf32> to vector<8x8xf32>
    %325 = arith.subf %321, %324 : vector<8x8xf32>
    %326 = math.exp %325 : vector<8x8xf32>
    %cst_159 = arith.constant dense<0.000000e+00> : vector<8xf32>
    %327 = vector.multi_reduction <add>, %326, %cst_159 [1] : vector<8x8xf32> to vector<8xf32>
    %328 = vector.shape_cast %327 : vector<8xf32> to vector<8x1xf32>
    %329 = tpu.reciprocal %328 {approx = true} : vector<8x1xf32> -> vector<8x1xf32>
    %330 = vector.broadcast %329 : vector<8x1xf32> to vector<8x8xf32>
    %331 = arith.mulf %326, %330 : vector<8x8xf32>
    %c0_160 = arith.constant 0 : index
    %c0_161 = arith.constant 0 : index
    %c0_162 = arith.constant 0 : index
    %c16_163 = arith.constant 16 : index
    %332 = vector.load %arg29[%c0_160, %c0_161, %c0_162, %c16_163] : memref<1x2x8x32xf32, #tpu.memory_space<vmem>>, vector<1x1x8x8xf32>
    %333 = vector.shape_cast %332 : vector<1x1x8x8xf32> to vector<8x8xf32>
    %334 = vector.shape_cast %331 : vector<8x8xf32> to vector<1x1x8x8xf32>
    tpu.vector_store %arg29[%c0_160, %c0_161, %c0_162, %c16_163], %334 {strides = array<i32>} : memref<1x2x8x32xf32, #tpu.memory_space<vmem>>, vector<1x1x8x8xf32>,
    %335 = arith.truncf %331 : vector<8x8xf32> to vector<8x8xbf16>
    %336 = vector.extract_strided_slice %265 {offsets = [0, 16], sizes = [8, 8], strides = [1, 1]} : vector<16x32xbf16> to vector<8x8xbf16>
    %cst_164 = arith.constant dense<0.000000e+00> : vector<8x8xf32>
    %337 = tpu.matmul %335, %336, %cst_164 {dimension_numbers = #tpu.dot_dimension_numbers<[1], [0], [0], [1], [0, 0, 1, 1], [], []>} : vector<8x8xbf16>, vector<8x8xbf16>, vector<8x8xf32> -> vector<8x8xf32>
    %c0_165 = arith.constant 0 : index
    %c16_166 = arith.constant 16 : index
    %338 = vector.load %arg32[%c0_165, %c16_166] : memref<16x32xf32, #tpu.memory_space<vmem>>, vector<8x8xf32>
    tpu.vector_store %arg32[%c0_165, %c16_166], %337 {strides = array<i32>} : memref<16x32xf32, #tpu.memory_space<vmem>>, vector<8x8xf32>,
    %339 = vector.extract_strided_slice %261 {offsets = [0, 24], sizes = [8, 8], strides = [1, 1]} : vector<16x32xbf16> to vector<8x8xbf16>
    %340 = vector.extract_strided_slice %263 {offsets = [0, 24], sizes = [8, 8], strides = [1, 1]} : vector<16x32xbf16> to vector<8x8xbf16>
    %cst_167 = arith.constant dense<0.000000e+00> : vector<8x8xf32>
    %341 = tpu.matmul %339, %340, %cst_167 {dimension_numbers = #tpu.dot_dimension_numbers<[1], [1], [0], [0], [0, 0, 1, 0], [], []>} : vector<8x8xbf16>, vector<8x8xbf16>, vector<8x8xf32> -> vector<8x8xf32>
    %cst_168 = arith.constant 0.353553385 : f32
    %342 = vector.broadcast %cst_168 : f32 to vector<8x8xf32>
    %343 = arith.mulf %341, %342 : vector<8x8xf32>
    %344 = arith.addf %343, %269 : vector<8x8xf32>
    %cst_169 = arith.constant dense<0xFF800000> : vector<8xf32>
    %345 = vector.multi_reduction <maximumf>, %344, %cst_169 [1] : vector<8x8xf32> to vector<8xf32>
    %346 = vector.shape_cast %345 : vector<8xf32> to vector<8x1xf32>
    %347 = vector.broadcast %346 : vector<8x1xf32> to vector<8x8xf32>
    %348 = arith.subf %344, %347 : vector<8x8xf32>
    %349 = math.exp %348 : vector<8x8xf32>
    %cst_170 = arith.constant dense<0.000000e+00> : vector<8xf32>
    %350 = vector.multi_reduction <add>, %349, %cst_170 [1] : vector<8x8xf32> to vector<8xf32>
    %351 = vector.shape_cast %350 : vector<8xf32> to vector<8x1xf32>
    %352 = tpu.reciprocal %351 {approx = true} : vector<8x1xf32> -> vector<8x1xf32>
    %353 = vector.broadcast %352 : vector<8x1xf32> to vector<8x8xf32>
    %354 = arith.mulf %349, %353 : vector<8x8xf32>
    %c0_171 = arith.constant 0 : index
    %c0_172 = arith.constant 0 : index
    %c0_173 = arith.constant 0 : index
    %c24_174 = arith.constant 24 : index
    %355 = vector.load %arg29[%c0_171, %c0_172, %c0_173, %c24_174] : memref<1x2x8x32xf32, #tpu.memory_space<vmem>>, vector<1x1x8x8xf32>
    %356 = vector.shape_cast %355 : vector<1x1x8x8xf32> to vector<8x8xf32>
    %357 = vector.shape_cast %354 : vector<8x8xf32> to vector<1x1x8x8xf32>
    tpu.vector_store %arg29[%c0_171, %c0_172, %c0_173, %c24_174], %357 {strides = array<i32>} : memref<1x2x8x32xf32, #tpu.memory_space<vmem>>, vector<1x1x8x8xf32>,
    %358 = arith.truncf %354 : vector<8x8xf32> to vector<8x8xbf16>
    %359 = vector.extract_strided_slice %265 {offsets = [0, 24], sizes = [8, 8], strides = [1, 1]} : vector<16x32xbf16> to vector<8x8xbf16>
    %cst_175 = arith.constant dense<0.000000e+00> : vector<8x8xf32>
    %360 = tpu.matmul %358, %359, %cst_175 {dimension_numbers = #tpu.dot_dimension_numbers<[1], [0], [0], [1], [0, 0, 1, 1], [], []>} : vector<8x8xbf16>, vector<8x8xbf16>, vector<8x8xf32> -> vector<8x8xf32>
    %c0_176 = arith.constant 0 : index
    %c24_177 = arith.constant 24 : index
    %361 = vector.load %arg32[%c0_176, %c24_177] : memref<16x32xf32, #tpu.memory_space<vmem>>, vector<8x8xf32>
    tpu.vector_store %arg32[%c0_176, %c24_177], %360 {strides = array<i32>} : memref<16x32xf32, #tpu.memory_space<vmem>>, vector<8x8xf32>,
    %362 = vector.extract_strided_slice %6 {offsets = [1, 0, 0], sizes = [1, 1, 8], strides = [1, 1, 1]} : vector<2x1x8xf32> to vector<1x1x8xf32>
    %363 = vector.shape_cast %362 : vector<1x1x8xf32> to vector<1x8xf32>
    %364 = vector.shape_cast %363 : vector<1x8xf32> to vector<1x8xf32>
    %365 = vector.broadcast %364 : vector<1x8xf32> to vector<8x8xf32>
    %366 = vector.extract_strided_slice %261 {offsets = [8, 0], sizes = [8, 8], strides = [1, 1]} : vector<16x32xbf16> to vector<8x8xbf16>
    %367 = vector.extract_strided_slice %263 {offsets = [8, 0], sizes = [8, 8], strides = [1, 1]} : vector<16x32xbf16> to vector<8x8xbf16>
    %cst_178 = arith.constant dense<0.000000e+00> : vector<8x8xf32>
    %368 = tpu.matmul %366, %367, %cst_178 {dimension_numbers = #tpu.dot_dimension_numbers<[1], [1], [0], [0], [0, 0, 1, 0], [], []>} : vector<8x8xbf16>, vector<8x8xbf16>, vector<8x8xf32> -> vector<8x8xf32>
    %cst_179 = arith.constant 0.353553385 : f32
    %369 = vector.broadcast %cst_179 : f32 to vector<8x8xf32>
    %370 = arith.mulf %368, %369 : vector<8x8xf32>
    %371 = arith.addf %370, %365 : vector<8x8xf32>
    %cst_180 = arith.constant dense<0xFF800000> : vector<8xf32>
    %372 = vector.multi_reduction <maximumf>, %371, %cst_180 [1] : vector<8x8xf32> to vector<8xf32>
    %373 = vector.shape_cast %372 : vector<8xf32> to vector<8x1xf32>
    %374 = vector.broadcast %373 : vector<8x1xf32> to vector<8x8xf32>
    %375 = arith.subf %371, %374 : vector<8x8xf32>
    %376 = math.exp %375 : vector<8x8xf32>
    %cst_181 = arith.constant dense<0.000000e+00> : vector<8xf32>
    %377 = vector.multi_reduction <add>, %376, %cst_181 [1] : vector<8x8xf32> to vector<8xf32>
    %378 = vector.shape_cast %377 : vector<8xf32> to vector<8x1xf32>
    %379 = tpu.reciprocal %378 {approx = true} : vector<8x1xf32> -> vector<8x1xf32>
    %380 = vector.broadcast %379 : vector<8x1xf32> to vector<8x8xf32>
    %381 = arith.mulf %376, %380 : vector<8x8xf32>
    %c0_182 = arith.constant 0 : index
    %c1_183 = arith.constant 1 : index
    %c0_184 = arith.constant 0 : index
    %c0_185 = arith.constant 0 : index
    %382 = vector.load %arg29[%c0_182, %c1_183, %c0_184, %c0_185] : memref<1x2x8x32xf32, #tpu.memory_space<vmem>>, vector<1x1x8x8xf32>
    %383 = vector.shape_cast %382 : vector<1x1x8x8xf32> to vector<8x8xf32>
    %384 = vector.shape_cast %381 : vector<8x8xf32> to vector<1x1x8x8xf32>
    tpu.vector_store %arg29[%c0_182, %c1_183, %c0_184, %c0_185], %384 {strides = array<i32>} : memref<1x2x8x32xf32, #tpu.memory_space<vmem>>, vector<1x1x8x8xf32>,
    %385 = arith.truncf %381 : vector<8x8xf32> to vector<8x8xbf16>
    %386 = vector.extract_strided_slice %265 {offsets = [8, 0], sizes = [8, 8], strides = [1, 1]} : vector<16x32xbf16> to vector<8x8xbf16>
    %cst_186 = arith.constant dense<0.000000e+00> : vector<8x8xf32>
    %387 = tpu.matmul %385, %386, %cst_186 {dimension_numbers = #tpu.dot_dimension_numbers<[1], [0], [0], [1], [0, 0, 1, 1], [], []>} : vector<8x8xbf16>, vector<8x8xbf16>, vector<8x8xf32> -> vector<8x8xf32>
    %c8_187 = arith.constant 8 : index
    %c0_188 = arith.constant 0 : index
    %388 = vector.load %arg32[%c8_187, %c0_188] : memref<16x32xf32, #tpu.memory_space<vmem>>, vector<8x8xf32>
    tpu.vector_store %arg32[%c8_187, %c0_188], %387 {strides = array<i32>} : memref<16x32xf32, #tpu.memory_space<vmem>>, vector<8x8xf32>,
    %389 = vector.extract_strided_slice %261 {offsets = [8, 8], sizes = [8, 8], strides = [1, 1]} : vector<16x32xbf16> to vector<8x8xbf16>
    %390 = vector.extract_strided_slice %263 {offsets = [8, 8], sizes = [8, 8], strides = [1, 1]} : vector<16x32xbf16> to vector<8x8xbf16>
    %cst_189 = arith.constant dense<0.000000e+00> : vector<8x8xf32>
    %391 = tpu.matmul %389, %390, %cst_189 {dimension_numbers = #tpu.dot_dimension_numbers<[1], [1], [0], [0], [0, 0, 1, 0], [], []>} : vector<8x8xbf16>, vector<8x8xbf16>, vector<8x8xf32> -> vector<8x8xf32>
    %cst_190 = arith.constant 0.353553385 : f32
    %392 = vector.broadcast %cst_190 : f32 to vector<8x8xf32>
    %393 = arith.mulf %391, %392 : vector<8x8xf32>
    %394 = arith.addf %393, %365 : vector<8x8xf32>
    %cst_191 = arith.constant dense<0xFF800000> : vector<8xf32>
    %395 = vector.multi_reduction <maximumf>, %394, %cst_191 [1] : vector<8x8xf32> to vector<8xf32>
    %396 = vector.shape_cast %395 : vector<8xf32> to vector<8x1xf32>
    %397 = vector.broadcast %396 : vector<8x1xf32> to vector<8x8xf32>
    %398 = arith.subf %394, %397 : vector<8x8xf32>
    %399 = math.exp %398 : vector<8x8xf32>
    %cst_192 = arith.constant dense<0.000000e+00> : vector<8xf32>
    %400 = vector.multi_reduction <add>, %399, %cst_192 [1] : vector<8x8xf32> to vector<8xf32>
    %401 = vector.shape_cast %400 : vector<8xf32> to vector<8x1xf32>
    %402 = tpu.reciprocal %401 {approx = true} : vector<8x1xf32> -> vector<8x1xf32>
    %403 = vector.broadcast %402 : vector<8x1xf32> to vector<8x8xf32>
    %404 = arith.mulf %399, %403 : vector<8x8xf32>
    %c0_193 = arith.constant 0 : index
    %c1_194 = arith.constant 1 : index
    %c0_195 = arith.constant 0 : index
    %c8_196 = arith.constant 8 : index
    %405 = vector.load %arg29[%c0_193, %c1_194, %c0_195, %c8_196] : memref<1x2x8x32xf32, #tpu.memory_space<vmem>>, vector<1x1x8x8xf32>
    %406 = vector.shape_cast %405 : vector<1x1x8x8xf32> to vector<8x8xf32>
    %407 = vector.shape_cast %404 : vector<8x8xf32> to vector<1x1x8x8xf32>
    tpu.vector_store %arg29[%c0_193, %c1_194, %c0_195, %c8_196], %407 {strides = array<i32>} : memref<1x2x8x32xf32, #tpu.memory_space<vmem>>, vector<1x1x8x8xf32>,
    %408 = arith.truncf %404 : vector<8x8xf32> to vector<8x8xbf16>
    %409 = vector.extract_strided_slice %265 {offsets = [8, 8], sizes = [8, 8], strides = [1, 1]} : vector<16x32xbf16> to vector<8x8xbf16>
    %cst_197 = arith.constant dense<0.000000e+00> : vector<8x8xf32>
    %410 = tpu.matmul %408, %409, %cst_197 {dimension_numbers = #tpu.dot_dimension_numbers<[1], [0], [0], [1], [0, 0, 1, 1], [], []>} : vector<8x8xbf16>, vector<8x8xbf16>, vector<8x8xf32> -> vector<8x8xf32>
    %c8_198 = arith.constant 8 : index
    %c8_199 = arith.constant 8 : index
    %411 = vector.load %arg32[%c8_198, %c8_199] : memref<16x32xf32, #tpu.memory_space<vmem>>, vector<8x8xf32>
    tpu.vector_store %arg32[%c8_198, %c8_199], %410 {strides = array<i32>} : memref<16x32xf32, #tpu.memory_space<vmem>>, vector<8x8xf32>,
    %412 = vector.extract_strided_slice %261 {offsets = [8, 16], sizes = [8, 8], strides = [1, 1]} : vector<16x32xbf16> to vector<8x8xbf16>
    %413 = vector.extract_strided_slice %263 {offsets = [8, 16], sizes = [8, 8], strides = [1, 1]} : vector<16x32xbf16> to vector<8x8xbf16>
    %cst_200 = arith.constant dense<0.000000e+00> : vector<8x8xf32>
    %414 = tpu.matmul %412, %413, %cst_200 {dimension_numbers = #tpu.dot_dimension_numbers<[1], [1], [0], [0], [0, 0, 1, 0], [], []>} : vector<8x8xbf16>, vector<8x8xbf16>, vector<8x8xf32> -> vector<8x8xf32>
    %cst_201 = arith.constant 0.353553385 : f32
    %415 = vector.broadcast %cst_201 : f32 to vector<8x8xf32>
    %416 = arith.mulf %414, %415 : vector<8x8xf32>
    %417 = arith.addf %416, %365 : vector<8x8xf32>
    %cst_202 = arith.constant dense<0xFF800000> : vector<8xf32>
    %418 = vector.multi_reduction <maximumf>, %417, %cst_202 [1] : vector<8x8xf32> to vector<8xf32>
    %419 = vector.shape_cast %418 : vector<8xf32> to vector<8x1xf32>
    %420 = vector.broadcast %419 : vector<8x1xf32> to vector<8x8xf32>
    %421 = arith.subf %417, %420 : vector<8x8xf32>
    %422 = math.exp %421 : vector<8x8xf32>
    %cst_203 = arith.constant dense<0.000000e+00> : vector<8xf32>
    %423 = vector.multi_reduction <add>, %422, %cst_203 [1] : vector<8x8xf32> to vector<8xf32>
    %424 = vector.shape_cast %423 : vector<8xf32> to vector<8x1xf32>
    %425 = tpu.reciprocal %424 {approx = true} : vector<8x1xf32> -> vector<8x1xf32>
    %426 = vector.broadcast %425 : vector<8x1xf32> to vector<8x8xf32>
    %427 = arith.mulf %422, %426 : vector<8x8xf32>
    %c0_204 = arith.constant 0 : index
    %c1_205 = arith.constant 1 : index
    %c0_206 = arith.constant 0 : index
    %c16_207 = arith.constant 16 : index
    %428 = vector.load %arg29[%c0_204, %c1_205, %c0_206, %c16_207] : memref<1x2x8x32xf32, #tpu.memory_space<vmem>>, vector<1x1x8x8xf32>
    %429 = vector.shape_cast %428 : vector<1x1x8x8xf32> to vector<8x8xf32>
    %430 = vector.shape_cast %427 : vector<8x8xf32> to vector<1x1x8x8xf32>
    tpu.vector_store %arg29[%c0_204, %c1_205, %c0_206, %c16_207], %430 {strides = array<i32>} : memref<1x2x8x32xf32, #tpu.memory_space<vmem>>, vector<1x1x8x8xf32>,
    %431 = arith.truncf %427 : vector<8x8xf32> to vector<8x8xbf16>
    %432 = vector.extract_strided_slice %265 {offsets = [8, 16], sizes = [8, 8], strides = [1, 1]} : vector<16x32xbf16> to vector<8x8xbf16>
    %cst_208 = arith.constant dense<0.000000e+00> : vector<8x8xf32>
    %433 = tpu.matmul %431, %432, %cst_208 {dimension_numbers = #tpu.dot_dimension_numbers<[1], [0], [0], [1], [0, 0, 1, 1], [], []>} : vector<8x8xbf16>, vector<8x8xbf16>, vector<8x8xf32> -> vector<8x8xf32>
    %c8_209 = arith.constant 8 : index
    %c16_210 = arith.constant 16 : index
    %434 = vector.load %arg32[%c8_209, %c16_210] : memref<16x32xf32, #tpu.memory_space<vmem>>, vector<8x8xf32>
    tpu.vector_store %arg32[%c8_209, %c16_210], %433 {strides = array<i32>} : memref<16x32xf32, #tpu.memory_space<vmem>>, vector<8x8xf32>,
    %435 = vector.extract_strided_slice %261 {offsets = [8, 24], sizes = [8, 8], strides = [1, 1]} : vector<16x32xbf16> to vector<8x8xbf16>
    %436 = vector.extract_strided_slice %263 {offsets = [8, 24], sizes = [8, 8], strides = [1, 1]} : vector<16x32xbf16> to vector<8x8xbf16>
    %cst_211 = arith.constant dense<0.000000e+00> : vector<8x8xf32>
    %437 = tpu.matmul %435, %436, %cst_211 {dimension_numbers = #tpu.dot_dimension_numbers<[1], [1], [0], [0], [0, 0, 1, 0], [], []>} : vector<8x8xbf16>, vector<8x8xbf16>, vector<8x8xf32> -> vector<8x8xf32>
    %cst_212 = arith.constant 0.353553385 : f32
    %438 = vector.broadcast %cst_212 : f32 to vector<8x8xf32>
    %439 = arith.mulf %437, %438 : vector<8x8xf32>
    %440 = arith.addf %439, %365 : vector<8x8xf32>
    %cst_213 = arith.constant dense<0xFF800000> : vector<8xf32>
    %441 = vector.multi_reduction <maximumf>, %440, %cst_213 [1] : vector<8x8xf32> to vector<8xf32>
    %442 = vector.shape_cast %441 : vector<8xf32> to vector<8x1xf32>
    %443 = vector.broadcast %442 : vector<8x1xf32> to vector<8x8xf32>
    %444 = arith.subf %440, %443 : vector<8x8xf32>
    %445 = math.exp %444 : vector<8x8xf32>
    %cst_214 = arith.constant dense<0.000000e+00> : vector<8xf32>
    %446 = vector.multi_reduction <add>, %445, %cst_214 [1] : vector<8x8xf32> to vector<8xf32>
    %447 = vector.shape_cast %446 : vector<8xf32> to vector<8x1xf32>
    %448 = tpu.reciprocal %447 {approx = true} : vector<8x1xf32> -> vector<8x1xf32>
    %449 = vector.broadcast %448 : vector<8x1xf32> to vector<8x8xf32>
    %450 = arith.mulf %445, %449 : vector<8x8xf32>
    %c0_215 = arith.constant 0 : index
    %c1_216 = arith.constant 1 : index
    %c0_217 = arith.constant 0 : index
    %c24_218 = arith.constant 24 : index
    %451 = vector.load %arg29[%c0_215, %c1_216, %c0_217, %c24_218] : memref<1x2x8x32xf32, #tpu.memory_space<vmem>>, vector<1x1x8x8xf32>
    %452 = vector.shape_cast %451 : vector<1x1x8x8xf32> to vector<8x8xf32>
    %453 = vector.shape_cast %450 : vector<8x8xf32> to vector<1x1x8x8xf32>
    tpu.vector_store %arg29[%c0_215, %c1_216, %c0_217, %c24_218], %453 {strides = array<i32>} : memref<1x2x8x32xf32, #tpu.memory_space<vmem>>, vector<1x1x8x8xf32>,
    %454 = arith.truncf %450 : vector<8x8xf32> to vector<8x8xbf16>
    %455 = vector.extract_strided_slice %265 {offsets = [8, 24], sizes = [8, 8], strides = [1, 1]} : vector<16x32xbf16> to vector<8x8xbf16>
    %cst_219 = arith.constant dense<0.000000e+00> : vector<8x8xf32>
    %456 = tpu.matmul %454, %455, %cst_219 {dimension_numbers = #tpu.dot_dimension_numbers<[1], [0], [0], [1], [0, 0, 1, 1], [], []>} : vector<8x8xbf16>, vector<8x8xbf16>, vector<8x8xf32> -> vector<8x8xf32>
    %c8_220 = arith.constant 8 : index
    %c24_221 = arith.constant 24 : index
    %457 = vector.load %arg32[%c8_220, %c24_221] : memref<16x32xf32, #tpu.memory_space<vmem>>, vector<8x8xf32>
    tpu.vector_store %arg32[%c8_220, %c24_221], %456 {strides = array<i32>} : memref<16x32xf32, #tpu.memory_space<vmem>>, vector<8x8xf32>,
    %c0_222 = arith.constant 0 : index
    %c0_223 = arith.constant 0 : index
    %458 = vector.load %arg32[%c0_222, %c0_223] : memref<16x32xf32, #tpu.memory_space<vmem>>, vector<16x32xf32>
    %459 = arith.truncf %458 : vector<16x32xf32> to vector<16x32xbf16>
    %c0_224 = arith.constant 0 : index
    %c0_225 = arith.constant 0 : index
    %c0_226 = arith.constant 0 : index
    %460 = vector.load %arg15[%c0_224, %c0_225, %c0_226] : memref<1x32x32xbf16, #tpu.memory_space<vmem>>, vector<1x32x32xbf16>
    %461 = vector.shape_cast %460 : vector<1x32x32xbf16> to vector<32x32xbf16>
    %cst_227 = arith.constant dense<0.000000e+00> : vector<16x32xf32>
    %462 = tpu.matmul %459, %461, %cst_227 {dimension_numbers = #tpu.dot_dimension_numbers<[1], [0], [0], [1], [0, 0, 1, 1], [], []>} : vector<16x32xbf16>, vector<32x32xbf16>, vector<16x32xf32> -> vector<16x32xf32>
    %c0_228 = arith.constant 0 : index
    %c0_229 = arith.constant 0 : index
    %c0_230 = arith.constant 0 : index
    %463 = vector.load %arg16[%c0_228, %c0_229, %c0_230] : memref<1x1x32xf32, #tpu.memory_space<vmem>>, vector<1x1x32xf32>
    %464 = vector.shape_cast %463 : vector<1x1x32xf32> to vector<1x32xf32>
    %465 = vector.broadcast %464 : vector<1x32xf32> to vector<16x32xf32>
    %466 = arith.addf %462, %465 : vector<16x32xf32>
    %467 = arith.addf %244, %466 : vector<16x32xf32>
    %c0_231 = arith.constant 0 : index
    %c0_232 = arith.constant 0 : index
    %c0_233 = arith.constant 0 : index
    %468 = vector.load %arg17[%c0_231, %c0_232, %c0_233] : memref<1x1x32xf32, #tpu.memory_space<vmem>>, vector<1x1x32xf32>
    %469 = vector.shape_cast %468 : vector<1x1x32xf32> to vector<1x32xf32>
    %c0_234 = arith.constant 0 : index
    %c0_235 = arith.constant 0 : index
    %c0_236 = arith.constant 0 : index
    %470 = vector.load %arg18[%c0_234, %c0_235, %c0_236] : memref<1x1x32xf32, #tpu.memory_space<vmem>>, vector<1x1x32xf32>
    %471 = vector.shape_cast %470 : vector<1x1x32xf32> to vector<1x32xf32>
    %cst_237 = arith.constant dense<0.000000e+00> : vector<16xf32>
    %472 = vector.multi_reduction <add>, %467, %cst_237 [1] : vector<16x32xf32> to vector<16xf32>
    %473 = vector.shape_cast %472 : vector<16xf32> to vector<16x1xf32>
    %cst_238 = arith.constant 3.200000e+01 : f32
    %474 = vector.broadcast %cst_238 : f32 to vector<16x1xf32>
    %475 = arith.divf %473, %474 : vector<16x1xf32>
    %476 = vector.broadcast %475 : vector<16x1xf32> to vector<16x32xf32>
    %477 = arith.subf %467, %476 : vector<16x32xf32>
    %478 = arith.mulf %477, %477 : vector<16x32xf32>
    %cst_239 = arith.constant dense<0.000000e+00> : vector<16xf32>
    %479 = vector.multi_reduction <add>, %478, %cst_239 [1] : vector<16x32xf32> to vector<16xf32>
    %480 = vector.shape_cast %479 : vector<16xf32> to vector<16x1xf32>
    %cst_240 = arith.constant 3.200000e+01 : f32
    %481 = vector.broadcast %cst_240 : f32 to vector<16x1xf32>
    %482 = arith.divf %480, %481 : vector<16x1xf32>
    %483 = vector.broadcast %475 : vector<16x1xf32> to vector<16x32xf32>
    %484 = arith.subf %467, %483 : vector<16x32xf32>
    %cst_241 = arith.constant 9.99999974E-6 : f32
    %485 = vector.broadcast %cst_241 : f32 to vector<16x1xf32>
    %486 = arith.addf %482, %485 : vector<16x1xf32>
    %487 = math.rsqrt %486 : vector<16x1xf32>
    %488 = vector.broadcast %487 : vector<16x1xf32> to vector<16x32xf32>
    %489 = arith.mulf %484, %488 : vector<16x32xf32>
    %490 = vector.broadcast %469 : vector<1x32xf32> to vector<16x32xf32>
    %491 = arith.mulf %489, %490 : vector<16x32xf32>
    %492 = vector.broadcast %471 : vector<1x32xf32> to vector<16x32xf32>
    %493 = arith.addf %491, %492 : vector<16x32xf32>
    %494 = arith.truncf %493 : vector<16x32xf32> to vector<16x32xbf16>
    %c0_242 = arith.constant 0 : index
    %c0_243 = arith.constant 0 : index
    %c0_244 = arith.constant 0 : index
    %495 = vector.load %arg19[%c0_242, %c0_243, %c0_244] : memref<1x32x64xbf16, #tpu.memory_space<vmem>>, vector<1x32x64xbf16>
    %496 = vector.shape_cast %495 : vector<1x32x64xbf16> to vector<32x64xbf16>
    %cst_245 = arith.constant dense<0.000000e+00> : vector<16x64xf32>
    %497 = tpu.matmul %494, %496, %cst_245 {dimension_numbers = #tpu.dot_dimension_numbers<[1], [0], [0], [1], [0, 0, 1, 1], [], []>} : vector<16x32xbf16>, vector<32x64xbf16>, vector<16x64xf32> -> vector<16x64xf32>
    %c0_246 = arith.constant 0 : index
    %c0_247 = arith.constant 0 : index
    %c0_248 = arith.constant 0 : index
    %498 = vector.load %arg20[%c0_246, %c0_247, %c0_248] : memref<1x1x64xf32, #tpu.memory_space<vmem>>, vector<1x1x64xf32>
    %499 = vector.shape_cast %498 : vector<1x1x64xf32> to vector<1x64xf32>
    %500 = vector.broadcast %499 : vector<1x64xf32> to vector<16x64xf32>
    %501 = arith.addf %497, %500 : vector<16x64xf32>
    %cst_249 = arith.constant 0.000000e+00 : f32
    %502 = vector.broadcast %cst_249 : f32 to vector<16x64xf32>
    %503 = arith.maximumf %501, %502 : vector<16x64xf32>
    %504 = arith.truncf %503 : vector<16x64xf32> to vector<16x64xbf16>
    %c0_250 = arith.constant 0 : index
    %c0_251 = arith.constant 0 : index
    %c0_252 = arith.constant 0 : index
    %505 = vector.load %arg21[%c0_250, %c0_251, %c0_252] : memref<1x64x32xbf16, #tpu.memory_space<vmem>>, vector<1x64x32xbf16>
    %506 = vector.shape_cast %505 : vector<1x64x32xbf16> to vector<64x32xbf16>
    %cst_253 = arith.constant dense<0.000000e+00> : vector<16x32xf32>
    %507 = tpu.matmul %504, %506, %cst_253 {dimension_numbers = #tpu.dot_dimension_numbers<[1], [0], [0], [1], [0, 0, 1, 1], [], []>} : vector<16x64xbf16>, vector<64x32xbf16>, vector<16x32xf32> -> vector<16x32xf32>
    %508 = arith.addf %493, %507 : vector<16x32xf32>
    %c0_254 = arith.constant 0 : index
    %c0_255 = arith.constant 0 : index
    %c0_256 = arith.constant 0 : index
    %509 = vector.load %arg22[%c0_254, %c0_255, %c0_256] : memref<1x1x32xf32, #tpu.memory_space<vmem>>, vector<1x1x32xf32>
    %510 = vector.shape_cast %509 : vector<1x1x32xf32> to vector<1x32xf32>
    %511 = vector.broadcast %510 : vector<1x32xf32> to vector<16x32xf32>
    %512 = arith.addf %508, %511 : vector<16x32xf32>
    %c0_257 = arith.constant 0 : index
    %c0_258 = arith.constant 0 : index
    %c0_259 = arith.constant 0 : index
    %513 = vector.load %arg23[%c0_257, %c0_258, %c0_259] : memref<1x1x32xf32, #tpu.memory_space<vmem>>, vector<1x1x32xf32>
    %514 = vector.shape_cast %513 : vector<1x1x32xf32> to vector<1x32xf32>
    %c0_260 = arith.constant 0 : index
    %c0_261 = arith.constant 0 : index
    %c0_262 = arith.constant 0 : index
    %515 = vector.load %arg24[%c0_260, %c0_261, %c0_262] : memref<1x1x32xf32, #tpu.memory_space<vmem>>, vector<1x1x32xf32>
    %516 = vector.shape_cast %515 : vector<1x1x32xf32> to vector<1x32xf32>
    %cst_263 = arith.constant dense<0.000000e+00> : vector<16xf32>
    %517 = vector.multi_reduction <add>, %512, %cst_263 [1] : vector<16x32xf32> to vector<16xf32>
    %518 = vector.shape_cast %517 : vector<16xf32> to vector<16x1xf32>
    %cst_264 = arith.constant 3.200000e+01 : f32
    %519 = vector.broadcast %cst_264 : f32 to vector<16x1xf32>
    %520 = arith.divf %518, %519 : vector<16x1xf32>
    %521 = vector.broadcast %520 : vector<16x1xf32> to vector<16x32xf32>
    %522 = arith.subf %512, %521 : vector<16x32xf32>
    %523 = arith.mulf %522, %522 : vector<16x32xf32>
    %cst_265 = arith.constant dense<0.000000e+00> : vector<16xf32>
    %524 = vector.multi_reduction <add>, %523, %cst_265 [1] : vector<16x32xf32> to vector<16xf32>
    %525 = vector.shape_cast %524 : vector<16xf32> to vector<16x1xf32>
    %cst_266 = arith.constant 3.200000e+01 : f32
    %526 = vector.broadcast %cst_266 : f32 to vector<16x1xf32>
    %527 = arith.divf %525, %526 : vector<16x1xf32>
    %528 = vector.broadcast %520 : vector<16x1xf32> to vector<16x32xf32>
    %529 = arith.subf %512, %528 : vector<16x32xf32>
    %cst_267 = arith.constant 9.99999974E-6 : f32
    %530 = vector.broadcast %cst_267 : f32 to vector<16x1xf32>
    %531 = arith.addf %527, %530 : vector<16x1xf32>
    %532 = math.rsqrt %531 : vector<16x1xf32>
    %533 = vector.broadcast %532 : vector<16x1xf32> to vector<16x32xf32>
    %534 = arith.mulf %529, %533 : vector<16x32xf32>
    %535 = vector.broadcast %514 : vector<1x32xf32> to vector<16x32xf32>
    %536 = arith.mulf %534, %535 : vector<16x32xf32>
    %537 = vector.broadcast %516 : vector<1x32xf32> to vector<16x32xf32>
    %538 = arith.addf %536, %537 : vector<16x32xf32>
    %c0_268 = arith.constant 0 : index
    %c0_269 = arith.constant 0 : index
    %539 = vector.load %arg31[%c0_268, %c0_269] : memref<16x32xf32, #tpu.memory_space<vmem>>, vector<16x32xf32>
    tpu.vector_store %arg31[%c0_268, %c0_269], %538 {strides = array<i32>} : memref<16x32xf32, #tpu.memory_space<vmem>>, vector<16x32xf32>,
    %c0_270 = arith.constant 0 : index
    %c0_271 = arith.constant 0 : index
    %c0_272 = arith.constant 0 : index
    %540 = vector.load %arg27[%c0_270, %c0_271, %c0_272] : memref<1x16x32xf32, #tpu.memory_space<vmem>>, vector<1x16x32xf32>
    %541 = vector.shape_cast %540 : vector<1x16x32xf32> to vector<16x32xf32>
    %542 = vector.shape_cast %538 : vector<16x32xf32> to vector<1x16x32xf32>
    tpu.vector_store %arg27[%c0_270, %c0_271, %c0_272], %542 {strides = array<i32>} : memref<1x16x32xf32, #tpu.memory_space<vmem>>, vector<1x16x32xf32>,
    %c0_273 = arith.constant 0 : index
    %c0_274 = arith.constant 0 : index
    %543 = vector.load %arg25[%c0_273, %c0_274] : memref<1x32xf32, #tpu.memory_space<vmem>>, vector<1x32xf32>
    %c0_275 = arith.constant 0 : index
    %c0_276 = arith.constant 0 : index
    %544 = vector.load %arg26[%c0_275, %c0_276] : memref<1x32xf32, #tpu.memory_space<vmem>>, vector<1x32xf32>
    %cst_277 = arith.constant dense<0.000000e+00> : vector<16xf32>
    %545 = vector.multi_reduction <add>, %538, %cst_277 [1] : vector<16x32xf32> to vector<16xf32>
    %546 = vector.shape_cast %545 : vector<16xf32> to vector<16x1xf32>
    %cst_278 = arith.constant 3.200000e+01 : f32
    %547 = vector.broadcast %cst_278 : f32 to vector<16x1xf32>
    %548 = arith.divf %546, %547 : vector<16x1xf32>
    %549 = vector.broadcast %548 : vector<16x1xf32> to vector<16x32xf32>
    %550 = arith.subf %538, %549 : vector<16x32xf32>
    %551 = arith.mulf %550, %550 : vector<16x32xf32>
    %cst_279 = arith.constant dense<0.000000e+00> : vector<16xf32>
    %552 = vector.multi_reduction <add>, %551, %cst_279 [1] : vector<16x32xf32> to vector<16xf32>
    %553 = vector.shape_cast %552 : vector<16xf32> to vector<16x1xf32>
    %cst_280 = arith.constant 3.200000e+01 : f32
    %554 = vector.broadcast %cst_280 : f32 to vector<16x1xf32>
    %555 = arith.divf %553, %554 : vector<16x1xf32>
    %556 = vector.broadcast %548 : vector<16x1xf32> to vector<16x32xf32>
    %557 = arith.subf %538, %556 : vector<16x32xf32>
    %cst_281 = arith.constant 9.99999974E-6 : f32
    %558 = vector.broadcast %cst_281 : f32 to vector<16x1xf32>
    %559 = arith.addf %555, %558 : vector<16x1xf32>
    %560 = math.rsqrt %559 : vector<16x1xf32>
    %561 = vector.broadcast %560 : vector<16x1xf32> to vector<16x32xf32>
    %562 = arith.mulf %557, %561 : vector<16x32xf32>
    %563 = vector.broadcast %543 : vector<1x32xf32> to vector<16x32xf32>
    %564 = arith.mulf %562, %563 : vector<16x32xf32>
    %565 = vector.broadcast %544 : vector<1x32xf32> to vector<16x32xf32>
    %566 = arith.addf %564, %565 : vector<16x32xf32>
    %c0_282 = arith.constant 0 : index
    %c0_283 = arith.constant 0 : index
    %567 = vector.load %arg30[%c0_282, %c0_283] : memref<16x32xf32, #tpu.memory_space<vmem>>, vector<16x32xf32>
    tpu.vector_store %arg30[%c0_282, %c0_283], %566 {strides = array<i32>} : memref<16x32xf32, #tpu.memory_space<vmem>>, vector<16x32xf32>,
    return
  }
  func.func @transform_0(%arg0: i32) -> (i32, i32) {
    %c0_i32 = arith.constant 0 : i32
    %c0_i32_0 = arith.constant 0 : i32
    %c0_i32_1 = arith.constant 0 : i32
    return %c0_i32, %c0_i32_0 : i32, i32
  }
  func.func @transform_1(%arg0: i32) -> (i32, i32) {
    %c0_i32 = arith.constant 0 : i32
    %c0_i32_0 = arith.constant 0 : i32
    %c0_i32_1 = arith.constant 0 : i32
    return %c0_i32, %c0_i32_0 : i32, i32
  }
  func.func @transform_2(%arg0: i32) -> (i32, i32, i32) {
    %c0_i32 = arith.constant 0 : i32
    %c0_i32_0 = arith.constant 0 : i32
    %c0_i32_1 = arith.constant 0 : i32
    %c0_i32_2 = arith.constant 0 : i32
    return %c0_i32, %c0_i32_0, %c0_i32_1 : i32, i32, i32
  }
  func.func @transform_3(%arg0: i32) -> (i32, i32, i32) {
    %c0_i32 = arith.constant 0 : i32
    %c0_i32_0 = arith.constant 0 : i32
    %c0_i32_1 = arith.constant 0 : i32
    %c0_i32_2 = arith.constant 0 : i32
    return %c0_i32, %c0_i32_0, %c0_i32_1 : i32, i32, i32
  }
  func.func @transform_4(%arg0: i32) -> (i32, i32, i32) {
    %c0_i32 = arith.constant 0 : i32
    %c0_i32_0 = arith.constant 0 : i32
    %c0_i32_1 = arith.constant 0 : i32
    return %arg0, %c0_i32, %c0_i32_0 : i32, i32, i32
  }
  func.func @transform_5(%arg0: i32) -> (i32, i32, i32) {
    %c0_i32 = arith.constant 0 : i32
    %c0_i32_0 = arith.constant 0 : i32
    %c0_i32_1 = arith.constant 0 : i32
    return %arg0, %c0_i32, %c0_i32_0 : i32, i32, i32
  }
  func.func @transform_6(%arg0: i32) -> (i32, i32, i32) {
    %c0_i32 = arith.constant 0 : i32
    %c0_i32_0 = arith.constant 0 : i32
    %c0_i32_1 = arith.constant 0 : i32
    return %arg0, %c0_i32, %c0_i32_0 : i32, i32, i32
  }
  func.func @transform_7(%arg0: i32) -> (i32, i32, i32) {
    %c0_i32 = arith.constant 0 : i32
    %c0_i32_0 = arith.constant 0 : i32
    %c0_i32_1 = arith.constant 0 : i32
    return %arg0, %c0_i32, %c0_i32_0 : i32, i32, i32
  }
  func.func @transform_8(%arg0: i32) -> (i32, i32, i32) {
    %c0_i32 = arith.constant 0 : i32
    %c0_i32_0 = arith.constant 0 : i32
    %c0_i32_1 = arith.constant 0 : i32
    return %arg0, %c0_i32, %c0_i32_0 : i32, i32, i32
  }
  func.func @transform_9(%arg0: i32) -> (i32, i32, i32) {
    %c0_i32 = arith.constant 0 : i32
    %c0_i32_0 = arith.constant 0 : i32
    %c0_i32_1 = arith.constant 0 : i32
    return %arg0, %c0_i32, %c0_i32_0 : i32, i32, i32
  }
  func.func @transform_10(%arg0: i32) -> (i32, i32, i32) {
    %c0_i32 = arith.constant 0 : i32
    %c0_i32_0 = arith.constant 0 : i32
    %c0_i32_1 = arith.constant 0 : i32
    return %arg0, %c0_i32, %c0_i32_0 : i32, i32, i32
  }
  func.func @transform_11(%arg0: i32) -> (i32, i32, i32) {
    %c0_i32 = arith.constant 0 : i32
    %c0_i32_0 = arith.constant 0 : i32
    %c0_i32_1 = arith.constant 0 : i32
    return %arg0, %c0_i32, %c0_i32_0 : i32, i32, i32
  }
  func.func @transform_12(%arg0: i32) -> (i32, i32, i32) {
    %c0_i32 = arith.constant 0 : i32
    %c0_i32_0 = arith.constant 0 : i32
    %c0_i32_1 = arith.constant 0 : i32
    return %arg0, %c0_i32, %c0_i32_0 : i32, i32, i32
  }
  func.func @transform_13(%arg0: i32) -> (i32, i32, i32) {
    %c0_i32 = arith.constant 0 : i32
    %c0_i32_0 = arith.constant 0 : i32
    %c0_i32_1 = arith.constant 0 : i32
    return %arg0, %c0_i32, %c0_i32_0 : i32, i32, i32
  }
  func.func @transform_14(%arg0: i32) -> (i32, i32, i32) {
    %c0_i32 = arith.constant 0 : i32
    %c0_i32_0 = arith.constant 0 : i32
    %c0_i32_1 = arith.constant 0 : i32
    return %arg0, %c0_i32, %c0_i32_0 : i32, i32, i32
  }
  func.func @transform_15(%arg0: i32) -> (i32, i32, i32) {
    %c0_i32 = arith.constant 0 : i32
    %c0_i32_0 = arith.constant 0 : i32
    %c0_i32_1 = arith.constant 0 : i32
    return %arg0, %c0_i32, %c0_i32_0 : i32, i32, i32
  }
  func.func @transform_16(%arg0: i32) -> (i32, i32, i32) {
    %c0_i32 = arith.constant 0 : i32
    %c0_i32_0 = arith.constant 0 : i32
    %c0_i32_1 = arith.constant 0 : i32
    return %arg0, %c0_i32, %c0_i32_0 : i32, i32, i32
  }
  func.func @transform_17(%arg0: i32) -> (i32, i32, i32) {
    %c0_i32 = arith.constant 0 : i32
    %c0_i32_0 = arith.constant 0 : i32
    %c0_i32_1 = arith.constant 0 : i32
    return %arg0, %c0_i32, %c0_i32_0 : i32, i32, i32
  }
  func.func @transform_18(%arg0: i32) -> (i32, i32, i32) {
    %c0_i32 = arith.constant 0 : i32
    %c0_i32_0 = arith.constant 0 : i32
    %c0_i32_1 = arith.constant 0 : i32
    return %arg0, %c0_i32, %c0_i32_0 : i32, i32, i32
  }
  func.func @transform_19(%arg0: i32) -> (i32, i32, i32) {
    %c0_i32 = arith.constant 0 : i32
    %c0_i32_0 = arith.constant 0 : i32
    %c0_i32_1 = arith.constant 0 : i32
    return %arg0, %c0_i32, %c0_i32_0 : i32, i32, i32
  }
  func.func @transform_20(%arg0: i32) -> (i32, i32, i32) {
    %c0_i32 = arith.constant 0 : i32
    %c0_i32_0 = arith.constant 0 : i32
    %c0_i32_1 = arith.constant 0 : i32
    return %arg0, %c0_i32, %c0_i32_0 : i32, i32, i32
  }
  func.func @transform_21(%arg0: i32) -> (i32, i32, i32) {
    %c0_i32 = arith.constant 0 : i32
    %c0_i32_0 = arith.constant 0 : i32
    %c0_i32_1 = arith.constant 0 : i32
    return %arg0, %c0_i32, %c0_i32_0 : i32, i32, i32
  }
  func.func @transform_22(%arg0: i32) -> (i32, i32, i32) {
    %c0_i32 = arith.constant 0 : i32
    %c0_i32_0 = arith.constant 0 : i32
    %c0_i32_1 = arith.constant 0 : i32
    return %arg0, %c0_i32, %c0_i32_0 : i32, i32, i32
  }
  func.func @transform_23(%arg0: i32) -> (i32, i32, i32) {
    %c0_i32 = arith.constant 0 : i32
    %c0_i32_0 = arith.constant 0 : i32
    %c0_i32_1 = arith.constant 0 : i32
    return %arg0, %c0_i32, %c0_i32_0 : i32, i32, i32
  }
  func.func @transform_24(%arg0: i32) -> (i32, i32) {
    %c0_i32 = arith.constant 0 : i32
    %c0_i32_0 = arith.constant 0 : i32
    %c0_i32_1 = arith.constant 0 : i32
    return %c0_i32, %c0_i32_0 : i32, i32
  }
  func.func @transform_25(%arg0: i32) -> (i32, i32) {
    %c0_i32 = arith.constant 0 : i32
    %c0_i32_0 = arith.constant 0 : i32
    %c0_i32_1 = arith.constant 0 : i32
    return %c0_i32, %c0_i32_0 : i32, i32
  }
  func.func @transform_26(%arg0: i32) -> (i32, i32, i32) {
    %c0_i32 = arith.constant 0 : i32
    %c0_i32_0 = arith.constant 0 : i32
    %c0_i32_1 = arith.constant 0 : i32
    return %arg0, %c0_i32, %c0_i32_0 : i32, i32, i32
  }
  func.func @transform_27(%arg0: i32) -> (i32, i32, i32, i32) {
    %c0_i32 = arith.constant 0 : i32
    %c0_i32_0 = arith.constant 0 : i32
    %c0_i32_1 = arith.constant 0 : i32
    %c0_i32_2 = arith.constant 0 : i32
    return %arg0, %c0_i32, %c0_i32_0, %c0_i32_1 : i32, i32, i32, i32
  }
  func.func @transform_28(%arg0: i32) -> (i32, i32, i32, i32) {
    %c0_i32 = arith.constant 0 : i32
    %c0_i32_0 = arith.constant 0 : i32
    %c0_i32_1 = arith.constant 0 : i32
    %c0_i32_2 = arith.constant 0 : i32
    return %arg0, %c0_i32, %c0_i32_0, %c0_i32_1 : i32, i32, i32, i32
  }
  func.func @transform_29(%arg0: i32) -> (i32, i32) {
    %c0_i32 = arith.constant 0 : i32
    %c0_i32_0 = arith.constant 0 : i32
    %c0_i32_1 = arith.constant 0 : i32
    return %c0_i32, %c0_i32_0 : i32, i32
  }
}

</mosaic_0001>

<llo_original>
// kernel: translation_model_forward.2
$region0: #{translation_model_forward.2}
  #allocation0 [shape = 'u32[]', space=smem, size = 0x4, offset = 0x4, fixed_abs, tag = 'smem constant byte address 0x4 - core index']
  #allocation1 [shape = 'u32[72,128]{1,0:T(1,128)}', space=vmem, size = 0x9000, scoped, tag = 'internal scratch']
  #allocation2 [shape = 'f32[16,32]{1,0:T(8,128)}', space=vmem, size = 0x2000, scoped, tag = 'scratch operand']
  #allocation3 [shape = 'f32[16,32]{1,0:T(8,128)}', space=vmem, size = 0x2000, scoped, tag = 'scratch operand']
  %s0 = inlined_call_operand.vmem [shape: f32[16,32], index: 0, kind: input, shape index: {}]
  %s1 = inlined_call_operand.vmem [shape: f32[2,1,8], index: 1, kind: input, shape index: {}]
  %s2 = inlined_call_operand.vmem [shape: bf16[2,32,96], index: 2, kind: input, shape index: {}]
  %s3 = inlined_call_operand.vmem [shape: f32[2,1,96], index: 3, kind: input, shape index: {}]
  %s4 = inlined_call_operand.vmem [shape: bf16[2,32,32], index: 4, kind: input, shape index: {}]
  %s5 = inlined_call_operand.vmem [shape: f32[2,1,32], index: 5, kind: input, shape index: {}]
  %s6 = inlined_call_operand.vmem [shape: f32[2,1,32], index: 6, kind: input, shape index: {}]
  %s7 = inlined_call_operand.vmem [shape: f32[2,1,32], index: 7, kind: input, shape index: {}]
  %s8 = inlined_call_operand.vmem [shape: bf16[2,32,64], index: 8, kind: input, shape index: {}]
  %s9 = inlined_call_operand.vmem [shape: f32[2,1,64], index: 9, kind: input, shape index: {}]
  %s10 = inlined_call_operand.vmem [shape: bf16[2,64,32], index: 10, kind: input, shape index: {}]
  %s11 = inlined_call_operand.vmem [shape: f32[2,1,32], index: 11, kind: input, shape index: {}]
  %s12 = inlined_call_operand.vmem [shape: f32[2,1,32], index: 12, kind: input, shape index: {}]
  %s13 = inlined_call_operand.vmem [shape: f32[2,1,32], index: 13, kind: input, shape index: {}]
  %s14 = inlined_call_operand.vmem [shape: f32[1,32], index: 14, kind: input, shape index: {}]
  %s15 = inlined_call_operand.vmem [shape: f32[1,32], index: 15, kind: input, shape index: {}]
  %s16 = inlined_call_operand.vmem [shape: f32[2,16,32], index: 16, kind: output, shape index: {0}]
  %s17 = inlined_call_operand.vmem [shape: f32[2,2,8,32], index: 17, kind: output, shape index: {1}]
  %s18 = inlined_call_operand.vmem [shape: f32[16,32], index: 18, kind: output, shape index: {2}]
  %19 = xla_tuple %s16, %s17, %s18
  %s20 = sld [smem:[#allocation0]]
  $region117: #{translation_model_forward.2} parent=0
    _
  %s22 = ssub.s32 1, %s20
  %s23 = scalar_select 0, %s22, %s20
  loop: start=0, step=1, limit=4
  $region2: #{translation_model_forward.2} parent=0 // loop_pre_header
    _
  $region3: #{translation_model_forward.2} parent=0 // loop_header
    %s25 = sphi 0, %s29
    %p26 = scmp.ge.s32.totalorder %s25, 4
    %s33 = sphi 0, %s33
    %s35 = sphi 0, %s33
    %s36 = sphi 0, %s35
    %s50 = sphi 0, %s36
    %s54 = sphi 0, %s54
    %s56 = sphi 0, %s54
    %s57 = sphi 0, %s56
    %s71 = sphi 0, %s57
    %s77 = sphi 0, %s79
    %s80 = sphi 0, %s77
    %s81 = sphi 0, %s80
    %s97 = sphi 0, %s81
    %s103 = sphi 0, %s105
    %s106 = sphi 0, %s103
    %s107 = sphi 0, %s106
    %s123 = sphi 0, %s107
    %s129 = sphi 0, %s131
    %s132 = sphi 0, %s129
    %s133 = sphi 0, %s132
    %s149 = sphi 0, %s133
    %s155 = sphi 0, %s157
    %s158 = sphi 0, %s155
    %s159 = sphi 0, %s158
    %s175 = sphi 0, %s159
    %s181 = sphi 0, %s183
    %s184 = sphi 0, %s181
    %s185 = sphi 0, %s184
    %s201 = sphi 0, %s185
    %s207 = sphi 0, %s209
    %s210 = sphi 0, %s207
    %s211 = sphi 0, %s210
    %s227 = sphi 0, %s211
    %s233 = sphi 0, %s235
    %s236 = sphi 0, %s233
    %s237 = sphi 0, %s236
    %s253 = sphi 0, %s237
    %s259 = sphi 0, %s261
    %s262 = sphi 0, %s259
    %s263 = sphi 0, %s262
    %s279 = sphi 0, %s263
    %s285 = sphi 0, %s287
    %s288 = sphi 0, %s285
    %s289 = sphi 0, %s288
    %s305 = sphi 0, %s289
    %s311 = sphi 0, %s313
    %s314 = sphi 0, %s311
    %s315 = sphi 0, %s314
    %s331 = sphi 0, %s315
    %s337 = sphi 0, %s339
    %s340 = sphi 0, %s337
    %s341 = sphi 0, %s340
    %s357 = sphi 0, %s341
    %s363 = sphi 0, %s365
    %s366 = sphi 0, %s363
    %s367 = sphi 0, %s366
    %s383 = sphi 0, %s367
    %s387 = sphi 0, %s387
    %s389 = sphi 0, %s387
    %s390 = sphi 0, %s389
    %s404 = sphi 0, %s390
    %s408 = sphi 0, %s408
    %s410 = sphi 0, %s408
    %s411 = sphi 0, %s410
    %s425 = sphi 0, %s411
    %s431 = sphi 0, %s433
    %s434 = sphi 0, %s431
    %s435 = sphi 0, %s434
    %s451 = sphi 0, %s435
    %s457 = sphi 0, %s459
    %s460 = sphi 0, %s457
    %s461 = sphi 0, %s460
    %s477 = sphi 0, %s461
    %s481 = sphi 0, %s481
    %s483 = sphi 0, %s481
    %s484 = sphi 0, %s483
    %s498 = sphi 0, %s484
  $region4: #{translation_model_forward.2} parent=0 // loop_header_branch
    %28 = sbr.rel (%p26) target = $region8
  $region5: #{translation_model_forward.2} parent=0 // loop_body
    %s30 = ssub.s32 %s25, 1
    %s31 = ssub.s32 %s25, 2
    %s32 = sadd.s32 %s25, 1
    %s34 = sadd.s32 %s33, 1
    %p37 = scmp.eq.s32.totalorder %s25, 1
    %p38 = scmp.ne.s32.totalorder %s33, %s35
    %p39 = scmp.eq.s32.totalorder %s25, 0
    %p40 = por %p38, %p39
    %p41 = scmp.ne.s32.totalorder %s33, %s35
    %p42 = scmp.eq.s32.totalorder %s30, 1
    %p43 = por %p41, %p42
    %p44 = scmp.ne.s32.totalorder %s35, %s36
    %p45 = scmp.eq.s32.totalorder %s30, 0
    %p46 = por %p44, %p45
    %p47 = scmp.ne.s32.totalorder %s35, %s36
    %p48 = scmp.eq.s32.totalorder %s31, 1
    %p49 = por %p47, %p48
    %p51 = scmp.ne.s32.totalorder %s36, %s50
    %p52 = scmp.eq.s32.totalorder %s31, 0
    %p53 = por %p51, %p52
    %s55 = sadd.s32 %s54, 1
    %p58 = scmp.eq.s32.totalorder %s25, 1
    %p59 = scmp.ne.s32.totalorder %s54, %s56
    %p60 = scmp.eq.s32.totalorder %s25, 0
    %p61 = por %p59, %p60
    %p62 = scmp.ne.s32.totalorder %s54, %s56
    %p63 = scmp.eq.s32.totalorder %s30, 1
    %p64 = por %p62, %p63
    %p65 = scmp.ne.s32.totalorder %s56, %s57
    %p66 = scmp.eq.s32.totalorder %s30, 0
    %p67 = por %p65, %p66
    %p68 = scmp.ne.s32.totalorder %s56, %s57
    %p69 = scmp.eq.s32.totalorder %s31, 1
    %p70 = por %p68, %p69
    %p72 = scmp.ne.s32.totalorder %s57, %s71
    %p73 = scmp.eq.s32.totalorder %s31, 0
    %p74 = por %p72, %p73
    %s75 = ssub.s32 %s25, %s32
    %p76 = scmp.eq.s32.totalorder %s75, 0
    %s78 = sadd.s32 %s77, 1
    %s79 = scalar_select %p76, %s77, %s78
    %p82 = pneg %p76
    %p83 = scmp.eq.s32.totalorder %s25, 1
    %p84 = por %p82, %p83
    %p85 = scmp.ne.s32.totalorder %s77, %s80
    %p86 = scmp.eq.s32.totalorder %s25, 0
    %p87 = por %p85, %p86
    %p88 = scmp.ne.s32.totalorder %s77, %s80
    %p89 = scmp.eq.s32.totalorder %s30, 1
    %p90 = por %p88, %p89
    %p91 = scmp.ne.s32.totalorder %s80, %s81
    %p92 = scmp.eq.s32.totalorder %s30, 0
    %p93 = por %p91, %p92
    %p94 = scmp.ne.s32.totalorder %s80, %s81
    %p95 = scmp.eq.s32.totalorder %s31, 1
    %p96 = por %p94, %p95
    %p98 = scmp.ne.s32.totalorder %s81, %s97
    %p99 = scmp.eq.s32.totalorder %s31, 0
    %p100 = por %p98, %p99
    %s101 = ssub.s32 %s25, %s32
    %p102 = scmp.eq.s32.totalorder %s101, 0
    %s104 = sadd.s32 %s103, 1
    %s105 = scalar_select %p102, %s103, %s104
    %p108 = pneg %p102
    %p109 = scmp.eq.s32.totalorder %s25, 1
    %p110 = por %p108, %p109
    %p111 = scmp.ne.s32.totalorder %s103, %s106
    %p112 = scmp.eq.s32.totalorder %s25, 0
    %p113 = por %p111, %p112
    %p114 = scmp.ne.s32.totalorder %s103, %s106
    %p115 = scmp.eq.s32.totalorder %s30, 1
    %p116 = por %p114, %p115
    %p117 = scmp.ne.s32.totalorder %s106, %s107
    %p118 = scmp.eq.s32.totalorder %s30, 0
    %p119 = por %p117, %p118
    %p120 = scmp.ne.s32.totalorder %s106, %s107
    %p121 = scmp.eq.s32.totalorder %s31, 1
    %p122 = por %p120, %p121
    %p124 = scmp.ne.s32.totalorder %s107, %s123
    %p125 = scmp.eq.s32.totalorder %s31, 0
    %p126 = por %p124, %p125
    %s127 = ssub.s32 %s25, %s32
    %p128 = scmp.eq.s32.totalorder %s127, 0
    %s130 = sadd.s32 %s129, 1
    %s131 = scalar_select %p128, %s129, %s130
    %p134 = pneg %p128
    %p135 = scmp.eq.s32.totalorder %s25, 1
    %p136 = por %p134, %p135
    %p137 = scmp.ne.s32.totalorder %s129, %s132
    %p138 = scmp.eq.s32.totalorder %s25, 0
    %p139 = por %p137, %p138
    %p140 = scmp.ne.s32.totalorder %s129, %s132
    %p141 = scmp.eq.s32.totalorder %s30, 1
    %p142 = por %p140, %p141
    %p143 = scmp.ne.s32.totalorder %s132, %s133
    %p144 = scmp.eq.s32.totalorder %s30, 0
    %p145 = por %p143, %p144
    %p146 = scmp.ne.s32.totalorder %s132, %s133
    %p147 = scmp.eq.s32.totalorder %s31, 1
    %p148 = por %p146, %p147
    %p150 = scmp.ne.s32.totalorder %s133, %s149
    %p151 = scmp.eq.s32.totalorder %s31, 0
    %p152 = por %p150, %p151
    %s153 = ssub.s32 %s25, %s32
    %p154 = scmp.eq.s32.totalorder %s153, 0
    %s156 = sadd.s32 %s155, 1
    %s157 = scalar_select %p154, %s155, %s156
    %p160 = pneg %p154
    %p161 = scmp.eq.s32.totalorder %s25, 1
    %p162 = por %p160, %p161
    %p163 = scmp.ne.s32.totalorder %s155, %s158
    %p164 = scmp.eq.s32.totalorder %s25, 0
    %p165 = por %p163, %p164
    %p166 = scmp.ne.s32.totalorder %s155, %s158
    %p167 = scmp.eq.s32.totalorder %s30, 1
    %p168 = por %p166, %p167
    %p169 = scmp.ne.s32.totalorder %s158, %s159
    %p170 = scmp.eq.s32.totalorder %s30, 0
    %p171 = por %p169, %p170
    %p172 = scmp.ne.s32.totalorder %s158, %s159
    %p173 = scmp.eq.s32.totalorder %s31, 1
    %p174 = por %p172, %p173
    %p176 = scmp.ne.s32.totalorder %s159, %s175
    %p177 = scmp.eq.s32.totalorder %s31, 0
    %p178 = por %p176, %p177
    %s179 = ssub.s32 %s25, %s32
    %p180 = scmp.eq.s32.totalorder %s179, 0
    %s182 = sadd.s32 %s181, 1
    %s183 = scalar_select %p180, %s181, %s182
    %p186 = pneg %p180
    %p187 = scmp.eq.s32.totalorder %s25, 1
    %p188 = por %p186, %p187
    %p189 = scmp.ne.s32.totalorder %s181, %s184
    %p190 = scmp.eq.s32.totalorder %s25, 0
    %p191 = por %p189, %p190
    %p192 = scmp.ne.s32.totalorder %s181, %s184
    %p193 = scmp.eq.s32.totalorder %s30, 1
    %p194 = por %p192, %p193
    %p195 = scmp.ne.s32.totalorder %s184, %s185
    %p196 = scmp.eq.s32.totalorder %s30, 0
    %p197 = por %p195, %p196
    %p198 = scmp.ne.s32.totalorder %s184, %s185
    %p199 = scmp.eq.s32.totalorder %s31, 1
    %p200 = por %p198, %p199
    %p202 = scmp.ne.s32.totalorder %s185, %s201
    %p203 = scmp.eq.s32.totalorder %s31, 0
    %p204 = por %p202, %p203
    %s205 = ssub.s32 %s25, %s32
    %p206 = scmp.eq.s32.totalorder %s205, 0
    %s208 = sadd.s32 %s207, 1
    %s209 = scalar_select %p206, %s207, %s208
    %p212 = pneg %p206
    %p213 = scmp.eq.s32.totalorder %s25, 1
    %p214 = por %p212, %p213
    %p215 = scmp.ne.s32.totalorder %s207, %s210
    %p216 = scmp.eq.s32.totalorder %s25, 0
    %p217 = por %p215, %p216
    %p218 = scmp.ne.s32.totalorder %s207, %s210
    %p219 = scmp.eq.s32.totalorder %s30, 1
    %p220 = por %p218, %p219
    %p221 = scmp.ne.s32.totalorder %s210, %s211
    %p222 = scmp.eq.s32.totalorder %s30, 0
    %p223 = por %p221, %p222
    %p224 = scmp.ne.s32.totalorder %s210, %s211
    %p225 = scmp.eq.s32.totalorder %s31, 1
    %p226 = por %p224, %p225
    %p228 = scmp.ne.s32.totalorder %s211, %s227
    %p229 = scmp.eq.s32.totalorder %s31, 0
    %p230 = por %p228, %p229
    %s231 = ssub.s32 %s25, %s32
    %p232 = scmp.eq.s32.totalorder %s231, 0
    %s234 = sadd.s32 %s233, 1
    %s235 = scalar_select %p232, %s233, %s234
    %p238 = pneg %p232
    %p239 = scmp.eq.s32.totalorder %s25, 1
    %p240 = por %p238, %p239
    %p241 = scmp.ne.s32.totalorder %s233, %s236
    %p242 = scmp.eq.s32.totalorder %s25, 0
    %p243 = por %p241, %p242
    %p244 = scmp.ne.s32.totalorder %s233, %s236
    %p245 = scmp.eq.s32.totalorder %s30, 1
    %p246 = por %p244, %p245
    %p247 = scmp.ne.s32.totalorder %s236, %s237
    %p248 = scmp.eq.s32.totalorder %s30, 0
    %p249 = por %p247, %p248
    %p250 = scmp.ne.s32.totalorder %s236, %s237
    %p251 = scmp.eq.s32.totalorder %s31, 1
    %p252 = por %p250, %p251
    %p254 = scmp.ne.s32.totalorder %s237, %s253
    %p255 = scmp.eq.s32.totalorder %s31, 0
    %p256 = por %p254, %p255
    %s257 = ssub.s32 %s25, %s32
    %p258 = scmp.eq.s32.totalorder %s257, 0
    %s260 = sadd.s32 %s259, 1
    %s261 = scalar_select %p258, %s259, %s260
    %p264 = pneg %p258
    %p265 = scmp.eq.s32.totalorder %s25, 1
    %p266 = por %p264, %p265
    %p267 = scmp.ne.s32.totalorder %s259, %s262
    %p268 = scmp.eq.s32.totalorder %s25, 0
    %p269 = por %p267, %p268
    %p270 = scmp.ne.s32.totalorder %s259, %s262
    %p271 = scmp.eq.s32.totalorder %s30, 1
    %p272 = por %p270, %p271
    %p273 = scmp.ne.s32.totalorder %s262, %s263
    %p274 = scmp.eq.s32.totalorder %s30, 0
    %p275 = por %p273, %p274
    %p276 = scmp.ne.s32.totalorder %s262, %s263
    %p277 = scmp.eq.s32.totalorder %s31, 1
    %p278 = por %p276, %p277
    %p280 = scmp.ne.s32.totalorder %s263, %s279
    %p281 = scmp.eq.s32.totalorder %s31, 0
    %p282 = por %p280, %p281
    %s283 = ssub.s32 %s25, %s32
    %p284 = scmp.eq.s32.totalorder %s283, 0
    %s286 = sadd.s32 %s285, 1
    %s287 = scalar_select %p284, %s285, %s286
    %p290 = pneg %p284
    %p291 = scmp.eq.s32.totalorder %s25, 1
    %p292 = por %p290, %p291
    %p293 = scmp.ne.s32.totalorder %s285, %s288
    %p294 = scmp.eq.s32.totalorder %s25, 0
    %p295 = por %p293, %p294
    %p296 = scmp.ne.s32.totalorder %s285, %s288
    %p297 = scmp.eq.s32.totalorder %s30, 1
    %p298 = por %p296, %p297
    %p299 = scmp.ne.s32.totalorder %s288, %s289
    %p300 = scmp.eq.s32.totalorder %s30, 0
    %p301 = por %p299, %p300
    %p302 = scmp.ne.s32.totalorder %s288, %s289
    %p303 = scmp.eq.s32.totalorder %s31, 1
    %p304 = por %p302, %p303
    %p306 = scmp.ne.s32.totalorder %s289, %s305
    %p307 = scmp.eq.s32.totalorder %s31, 0
    %p308 = por %p306, %p307
    %s309 = ssub.s32 %s25, %s32
    %p310 = scmp.eq.s32.totalorder %s309, 0
    %s312 = sadd.s32 %s311, 1
    %s313 = scalar_select %p310, %s311, %s312
    %p316 = pneg %p310
    %p317 = scmp.eq.s32.totalorder %s25, 1
    %p318 = por %p316, %p317
    %p319 = scmp.ne.s32.totalorder %s311, %s314
    %p320 = scmp.eq.s32.totalorder %s25, 0
    %p321 = por %p319, %p320
    %p322 = scmp.ne.s32.totalorder %s311, %s314
    %p323 = scmp.eq.s32.totalorder %s30, 1
    %p324 = por %p322, %p323
    %p325 = scmp.ne.s32.totalorder %s314, %s315
    %p326 = scmp.eq.s32.totalorder %s30, 0
    %p327 = por %p325, %p326
    %p328 = scmp.ne.s32.totalorder %s314, %s315
    %p329 = scmp.eq.s32.totalorder %s31, 1
    %p330 = por %p328, %p329
    %p332 = scmp.ne.s32.totalorder %s315, %s331
    %p333 = scmp.eq.s32.totalorder %s31, 0
    %p334 = por %p332, %p333
    %s335 = ssub.s32 %s25, %s32
    %p336 = scmp.eq.s32.totalorder %s335, 0
    %s338 = sadd.s32 %s337, 1
    %s339 = scalar_select %p336, %s337, %s338
    %p342 = pneg %p336
    %p343 = scmp.eq.s32.totalorder %s25, 1
    %p344 = por %p342, %p343
    %p345 = scmp.ne.s32.totalorder %s337, %s340
    %p346 = scmp.eq.s32.totalorder %s25, 0
    %p347 = por %p345, %p346
    %p348 = scmp.ne.s32.totalorder %s337, %s340
    %p349 = scmp.eq.s32.totalorder %s30, 1
    %p350 = por %p348, %p349
    %p351 = scmp.ne.s32.totalorder %s340, %s341
    %p352 = scmp.eq.s32.totalorder %s30, 0
    %p353 = por %p351, %p352
    %p354 = scmp.ne.s32.totalorder %s340, %s341
    %p355 = scmp.eq.s32.totalorder %s31, 1
    %p356 = por %p354, %p355
    %p358 = scmp.ne.s32.totalorder %s341, %s357
    %p359 = scmp.eq.s32.totalorder %s31, 0
    %p360 = por %p358, %p359
    %s361 = ssub.s32 %s25, %s32
    %p362 = scmp.eq.s32.totalorder %s361, 0
    %s364 = sadd.s32 %s363, 1
    %s365 = scalar_select %p362, %s363, %s364
    %p368 = pneg %p362
    %p369 = scmp.eq.s32.totalorder %s25, 1
    %p370 = por %p368, %p369
    %p371 = scmp.ne.s32.totalorder %s363, %s366
    %p372 = scmp.eq.s32.totalorder %s25, 0
    %p373 = por %p371, %p372
    %p374 = scmp.ne.s32.totalorder %s363, %s366
    %p375 = scmp.eq.s32.totalorder %s30, 1
    %p376 = por %p374, %p375
    %p377 = scmp.ne.s32.totalorder %s366, %s367
    %p378 = scmp.eq.s32.totalorder %s30, 0
    %p379 = por %p377, %p378
    %p380 = scmp.ne.s32.totalorder %s366, %s367
    %p381 = scmp.eq.s32.totalorder %s31, 1
    %p382 = por %p380, %p381
    %p384 = scmp.ne.s32.totalorder %s367, %s383
    %p385 = scmp.eq.s32.totalorder %s31, 0
    %p386 = por %p384, %p385
    %s388 = sadd.s32 %s387, 1
    %p391 = scmp.eq.s32.totalorder %s25, 1
    %p392 = scmp.ne.s32.totalorder %s387, %s389
    %p393 = scmp.eq.s32.totalorder %s25, 0
    %p394 = por %p392, %p393
    %p395 = scmp.ne.s32.totalorder %s387, %s389
    %p396 = scmp.eq.s32.totalorder %s30, 1
    %p397 = por %p395, %p396
    %p398 = scmp.ne.s32.totalorder %s389, %s390
    %p399 = scmp.eq.s32.totalorder %s30, 0
    %p400 = por %p398, %p399
    %p401 = scmp.ne.s32.totalorder %s389, %s390
    %p402 = scmp.eq.s32.totalorder %s31, 1
    %p403 = por %p401, %p402
    %p405 = scmp.ne.s32.totalorder %s390, %s404
    %p406 = scmp.eq.s32.totalorder %s31, 0
    %p407 = por %p405, %p406
    %s409 = sadd.s32 %s408, 1
    %p412 = scmp.eq.s32.totalorder %s25, 1
    %p413 = scmp.ne.s32.totalorder %s408, %s410
    %p414 = scmp.eq.s32.totalorder %s25, 0
    %p415 = por %p413, %p414
    %p416 = scmp.ne.s32.totalorder %s408, %s410
    %p417 = scmp.eq.s32.totalorder %s30, 1
    %p418 = por %p416, %p417
    %p419 = scmp.ne.s32.totalorder %s410, %s411
    %p420 = scmp.eq.s32.totalorder %s30, 0
    %p421 = por %p419, %p420
    %p422 = scmp.ne.s32.totalorder %s410, %s411
    %p423 = scmp.eq.s32.totalorder %s31, 1
    %p424 = por %p422, %p423
    %p426 = scmp.ne.s32.totalorder %s411, %s425
    %p427 = scmp.eq.s32.totalorder %s31, 0
    %p428 = por %p426, %p427
    %s429 = ssub.s32 %s25, %s32
    %p430 = scmp.eq.s32.totalorder %s429, 0
    %s432 = sadd.s32 %s431, 1
    %s433 = scalar_select %p430, %s431, %s432
    %p436 = pneg %p430
    %p437 = scmp.eq.s32.totalorder %s25, 1
    %p438 = por %p436, %p437
    %p439 = scmp.ne.s32.totalorder %s431, %s434
    %p440 = scmp.eq.s32.totalorder %s25, 0
    %p441 = por %p439, %p440
    %p442 = scmp.ne.s32.totalorder %s431, %s434
    %p443 = scmp.eq.s32.totalorder %s30, 1
    %p444 = por %p442, %p443
    %p445 = scmp.ne.s32.totalorder %s434, %s435
    %p446 = scmp.eq.s32.totalorder %s30, 0
    %p447 = por %p445, %p446
    %p448 = scmp.ne.s32.totalorder %s434, %s435
    %p449 = scmp.eq.s32.totalorder %s31, 1
    %p450 = por %p448, %p449
    %p452 = scmp.ne.s32.totalorder %s435, %s451
    %p453 = scmp.eq.s32.totalorder %s31, 0
    %p454 = por %p452, %p453
    %s455 = ssub.s32 %s25, %s32
    %p456 = scmp.eq.s32.totalorder %s455, 0
    %s458 = sadd.s32 %s457, 1
    %s459 = scalar_select %p456, %s457, %s458
    %p462 = pneg %p456
    %p463 = scmp.eq.s32.totalorder %s25, 1
    %p464 = por %p462, %p463
    %p465 = scmp.ne.s32.totalorder %s457, %s460
    %p466 = scmp.eq.s32.totalorder %s25, 0
    %p467 = por %p465, %p466
    %p468 = scmp.ne.s32.totalorder %s457, %s460
    %p469 = scmp.eq.s32.totalorder %s30, 1
    %p470 = por %p468, %p469
    %p471 = scmp.ne.s32.totalorder %s460, %s461
    %p472 = scmp.eq.s32.totalorder %s30, 0
    %p473 = por %p471, %p472
    %p474 = scmp.ne.s32.totalorder %s460, %s461
    %p475 = scmp.eq.s32.totalorder %s31, 1
    %p476 = por %p474, %p475
    %p478 = scmp.ne.s32.totalorder %s461, %s477
    %p479 = scmp.eq.s32.totalorder %s31, 0
    %p480 = por %p478, %p479
    %s482 = sadd.s32 %s481, 1
    %p485 = scmp.eq.s32.totalorder %s25, 1
    %p486 = scmp.ne.s32.totalorder %s481, %s483
    %p487 = scmp.eq.s32.totalorder %s25, 0
    %p488 = por %p486, %p487
    %p489 = scmp.ne.s32.totalorder %s481, %s483
    %p490 = scmp.eq.s32.totalorder %s30, 1
    %p491 = por %p489, %p490
    %p492 = scmp.ne.s32.totalorder %s483, %s484
    %p493 = scmp.eq.s32.totalorder %s30, 0
    %p494 = por %p492, %p493
    %p495 = scmp.ne.s32.totalorder %s483, %s484
    %p496 = scmp.eq.s32.totalorder %s31, 1
    %p497 = por %p495, %p496
    %p499 = scmp.ne.s32.totalorder %s484, %s498
    %p500 = scmp.eq.s32.totalorder %s31, 0
    %p501 = por %p499, %p500
    %p502 = scmp.le.s32.totalorder 1, %s25
    %p503 = scmp.lt.s32.totalorder %s25, 3
    %p504 = pnand %p502, %p503
    %p505 = pneg %p504
    // Predicated region
    $region9: #{translation_model_forward.2} parent=5 // pred_check
      _
    $region10: #{translation_model_forward.2} parent=5 // pred_check_branch
      %507 = sbr.rel (%p504) target = $region12
    $region11: #{translation_model_forward.2} parent=5 // pred_region
      %s508 = ssub.s32 %s25, 1
      // Predicated region
      $region13: #{translation_model_forward.2} parent=11 // pred_check
        %p509 = pneg %p46
      $region14: #{translation_model_forward.2} parent=11 // pred_check_branch
        %511 = sbr.rel (%p509) target = $region16
      $region15: #{translation_model_forward.2} parent=11 // pred_region
        _
      $region16: #{translation_model_forward.2} parent=11 // pred_fallthru
        _
      // Predicated region
      $region17: #{translation_model_forward.2} parent=11 // pred_check
        %p512 = pneg %p67
      $region18: #{translation_model_forward.2} parent=11 // pred_check_branch
        %514 = sbr.rel (%p512) target = $region20
      $region19: #{translation_model_forward.2} parent=11 // pred_region
        _
      $region20: #{translation_model_forward.2} parent=11 // pred_fallthru
        _
      // Predicated region
      $region21: #{translation_model_forward.2} parent=11 // pred_check
        %p515 = pneg %p400
      $region22: #{translation_model_forward.2} parent=11 // pred_check_branch
        %517 = sbr.rel (%p515) target = $region24
      $region23: #{translation_model_forward.2} parent=11 // pred_region
        _
      $region24: #{translation_model_forward.2} parent=11 // pred_fallthru
        _
      // Predicated region
      $region25: #{translation_model_forward.2} parent=11 // pred_check
        %p518 = pneg %p421
      $region26: #{translation_model_forward.2} parent=11 // pred_check_branch
        %520 = sbr.rel (%p518) target = $region28
      $region27: #{translation_model_forward.2} parent=11 // pred_region
        _
      $region28: #{translation_model_forward.2} parent=11 // pred_fallthru
        _
    $region12: #{translation_model_forward.2} parent=5 // pred_fallthru
      _
    %p521 = scmp.lt.s32.totalorder %s25, 2
    // Predicated region
    $region29: #{translation_model_forward.2} parent=5 // pred_check
      %p522 = pneg %p521
    $region30: #{translation_model_forward.2} parent=5 // pred_check_branch
      %524 = sbr.rel (%p522) target = $region32
    $region31: #{translation_model_forward.2} parent=5 // pred_region
      // Predicated region
      $region33: #{translation_model_forward.2} parent=31 // pred_check
        %p525 = pneg %p87
      $region34: #{translation_model_forward.2} parent=31 // pred_check_branch
        %527 = sbr.rel (%p525) target = $region36
      $region35: #{translation_model_forward.2} parent=31 // pred_region
        %p528 = scmp.lt.s32.totalorder %s25, 1
        %s529 = scalar_select %p528, %s25, 1
        %s530 = smul.addr %s529, 4
        %s531 = smul.addr %s530, 4
        %s532 = scalar_lea.vmem %s2, %s531
      $region36: #{translation_model_forward.2} parent=31 // pred_fallthru
        _
      // Predicated region
      $region37: #{translation_model_forward.2} parent=31 // pred_check
        %p533 = pneg %p113
      $region38: #{translation_model_forward.2} parent=31 // pred_check_branch
        %535 = sbr.rel (%p533) target = $region40
      $region39: #{translation_model_forward.2} parent=31 // pred_region
        %p536 = scmp.lt.s32.totalorder %s25, 1
        %s537 = scalar_select %p536, %s25, 1
        %s538 = scalar_lea.vmem %s3, %s537
      $region40: #{translation_model_forward.2} parent=31 // pred_fallthru
        _
      // Predicated region
      $region41: #{translation_model_forward.2} parent=31 // pred_check
        %p539 = pneg %p139
      $region42: #{translation_model_forward.2} parent=31 // pred_check_branch
        %541 = sbr.rel (%p539) target = $region44
      $region43: #{translation_model_forward.2} parent=31 // pred_region
        %p542 = scmp.lt.s32.totalorder %s25, 1
        %s543 = scalar_select %p542, %s25, 1
        %s544 = smul.addr %s543, 4
        %s545 = smul.addr %s544, 4
        %s546 = scalar_lea.vmem %s4, %s545
      $region44: #{translation_model_forward.2} parent=31 // pred_fallthru
        _
      // Predicated region
      $region45: #{translation_model_forward.2} parent=31 // pred_check
        %p547 = pneg %p165
      $region46: #{translation_model_forward.2} parent=31 // pred_check_branch
        %549 = sbr.rel (%p547) target = $region48
      $region47: #{translation_model_forward.2} parent=31 // pred_region
        %p550 = scmp.lt.s32.totalorder %s25, 1
        %s551 = scalar_select %p550, %s25, 1
        %s552 = scalar_lea.vmem %s5, %s551
      $region48: #{translation_model_forward.2} parent=31 // pred_fallthru
        _
      // Predicated region
      $region49: #{translation_model_forward.2} parent=31 // pred_check
        %p553 = pneg %p191
      $region50: #{translation_model_forward.2} parent=31 // pred_check_branch
        %555 = sbr.rel (%p553) target = $region52
      $region51: #{translation_model_forward.2} parent=31 // pred_region
        %p556 = scmp.lt.s32.totalorder %s25, 1
        %s557 = scalar_select %p556, %s25, 1
        %s558 = scalar_lea.vmem %s6, %s557
      $region52: #{translation_model_forward.2} parent=31 // pred_fallthru
        _
      // Predicated region
      $region53: #{translation_model_forward.2} parent=31 // pred_check
        %p559 = pneg %p217
      $region54: #{translation_model_forward.2} parent=31 // pred_check_branch
        %561 = sbr.rel (%p559) target = $region56
      $region55: #{translation_model_forward.2} parent=31 // pred_region
        %p562 = scmp.lt.s32.totalorder %s25, 1
        %s563 = scalar_select %p562, %s25, 1
        %s564 = scalar_lea.vmem %s7, %s563
      $region56: #{translation_model_forward.2} parent=31 // pred_fallthru
        _
      // Predicated region
      $region57: #{translation_model_forward.2} parent=31 // pred_check
        %p565 = pneg %p243
      $region58: #{translation_model_forward.2} parent=31 // pred_check_branch
        %567 = sbr.rel (%p565) target = $region60
      $region59: #{translation_model_forward.2} parent=31 // pred_region
        %p568 = scmp.lt.s32.totalorder %s25, 1
        %s569 = scalar_select %p568, %s25, 1
        %s570 = smul.addr %s569, 4
        %s571 = smul.addr %s570, 4
        %s572 = scalar_lea.vmem %s8, %s571
      $region60: #{translation_model_forward.2} parent=31 // pred_fallthru
        _
      // Predicated region
      $region61: #{translation_model_forward.2} parent=31 // pred_check
        %p573 = pneg %p269
      $region62: #{translation_model_forward.2} parent=31 // pred_check_branch
        %575 = sbr.rel (%p573) target = $region64
      $region63: #{translation_model_forward.2} parent=31 // pred_region
        %p576 = scmp.lt.s32.totalorder %s25, 1
        %s577 = scalar_select %p576, %s25, 1
        %s578 = scalar_lea.vmem %s9, %s577
      $region64: #{translation_model_forward.2} parent=31 // pred_fallthru
        _
      // Predicated region
      $region65: #{translation_model_forward.2} parent=31 // pred_check
        %p579 = pneg %p295
      $region66: #{translation_model_forward.2} parent=31 // pred_check_branch
        %581 = sbr.rel (%p579) target = $region68
      $region67: #{translation_model_forward.2} parent=31 // pred_region
        %p582 = scmp.lt.s32.totalorder %s25, 1
        %s583 = scalar_select %p582, %s25, 1
        %s584 = smul.addr %s583, 8
        %s585 = smul.addr %s584, 4
        %s586 = scalar_lea.vmem %s10, %s585
      $region68: #{translation_model_forward.2} parent=31 // pred_fallthru
        _
      // Predicated region
      $region69: #{translation_model_forward.2} parent=31 // pred_check
        %p587 = pneg %p321
      $region70: #{translation_model_forward.2} parent=31 // pred_check_branch
        %589 = sbr.rel (%p587) target = $region72
      $region71: #{translation_model_forward.2} parent=31 // pred_region
        %p590 = scmp.lt.s32.totalorder %s25, 1
        %s591 = scalar_select %p590, %s25, 1
        %s592 = scalar_lea.vmem %s11, %s591
      $region72: #{translation_model_forward.2} parent=31 // pred_fallthru
        _
      // Predicated region
      $region73: #{translation_model_forward.2} parent=31 // pred_check
        %p593 = pneg %p347
      $region74: #{translation_model_forward.2} parent=31 // pred_check_branch
        %595 = sbr.rel (%p593) target = $region76
      $region75: #{translation_model_forward.2} parent=31 // pred_region
        %p596 = scmp.lt.s32.totalorder %s25, 1
        %s597 = scalar_select %p596, %s25, 1
        %s598 = scalar_lea.vmem %s12, %s597
      $region76: #{translation_model_forward.2} parent=31 // pred_fallthru
        _
      // Predicated region
      $region77: #{translation_model_forward.2} parent=31 // pred_check
        %p599 = pneg %p373
      $region78: #{translation_model_forward.2} parent=31 // pred_check_branch
        %601 = sbr.rel (%p599) target = $region80
      $region79: #{translation_model_forward.2} parent=31 // pred_region
        %p602 = scmp.lt.s32.totalorder %s25, 1
        %s603 = scalar_select %p602, %s25, 1
        %s604 = scalar_lea.vmem %s13, %s603
      $region80: #{translation_model_forward.2} parent=31 // pred_fallthru
        _
    $region32: #{translation_model_forward.2} parent=5 // pred_fallthru
      _
    %p605 = scmp.le.s32.totalorder 1, %s25
    %p606 = scmp.lt.s32.totalorder %s25, 3
    %p607 = pnand %p605, %p606
    %p608 = pneg %p607
    // Predicated region
    $region81: #{translation_model_forward.2} parent=5 // pred_check
      _
    $region82: #{translation_model_forward.2} parent=5 // pred_check_branch
      %610 = sbr.rel (%p607) target = $region84
    $region83: #{translation_model_forward.2} parent=5 // pred_region
      %s611 = ssub.s32 %s25, 1
      %p612 = pneg %p46
      %p613 = pneg %p43
      %p614 = pneg %p67
      %p615 = pneg %p64
      %p616 = scmp.lt.s32.totalorder %s30, 1
      %s617 = scalar_select %p616, %s30, 1
      %s618 = smul.addr %s617, 4
      %s619 = smul.addr %s618, 4
      %s620 = scalar_lea.vmem %s2, %s619
      %p621 = pneg %p93
      %p622 = pneg %p90
      %p623 = scmp.lt.s32.totalorder %s30, 1
      %s624 = scalar_select %p623, %s30, 1
      %s625 = scalar_lea.vmem %s3, %s624
      %p626 = pneg %p119
      %p627 = pneg %p116
      %p628 = scmp.lt.s32.totalorder %s30, 1
      %s629 = scalar_select %p628, %s30, 1
      %s630 = smul.addr %s629, 4
      %s631 = smul.addr %s630, 4
      %s632 = scalar_lea.vmem %s4, %s631
      %p633 = pneg %p145
      %p634 = pneg %p142
      %p635 = scmp.lt.s32.totalorder %s30, 1
      %s636 = scalar_select %p635, %s30, 1
      %s637 = scalar_lea.vmem %s5, %s636
      %p638 = pneg %p171
      %p639 = pneg %p168
      %p640 = scmp.lt.s32.totalorder %s30, 1
      %s641 = scalar_select %p640, %s30, 1
      %s642 = scalar_lea.vmem %s6, %s641
      %p643 = pneg %p197
      %p644 = pneg %p194
      %p645 = scmp.lt.s32.totalorder %s30, 1
      %s646 = scalar_select %p645, %s30, 1
      %s647 = scalar_lea.vmem %s7, %s646
      %p648 = pneg %p223
      %p649 = pneg %p220
      %p650 = scmp.lt.s32.totalorder %s30, 1
      %s651 = scalar_select %p650, %s30, 1
      %s652 = smul.addr %s651, 4
      %s653 = smul.addr %s652, 4
      %s654 = scalar_lea.vmem %s8, %s653
      %p655 = pneg %p249
      %p656 = pneg %p246
      %p657 = scmp.lt.s32.totalorder %s30, 1
      %s658 = scalar_select %p657, %s30, 1
      %s659 = scalar_lea.vmem %s9, %s658
      %p660 = pneg %p275
      %p661 = pneg %p272
      %p662 = scmp.lt.s32.totalorder %s30, 1
      %s663 = scalar_select %p662, %s30, 1
      %s664 = smul.addr %s663, 8
      %s665 = smul.addr %s664, 4
      %s666 = scalar_lea.vmem %s10, %s665
      %p667 = pneg %p301
      %p668 = pneg %p298
      %p669 = scmp.lt.s32.totalorder %s30, 1
      %s670 = scalar_select %p669, %s30, 1
      %s671 = scalar_lea.vmem %s11, %s670
      %p672 = pneg %p327
      %p673 = pneg %p324
      %p674 = scmp.lt.s32.totalorder %s30, 1
      %s675 = scalar_select %p674, %s30, 1
      %s676 = scalar_lea.vmem %s12, %s675
      %p677 = pneg %p353
      %p678 = pneg %p350
      %p679 = scmp.lt.s32.totalorder %s30, 1
      %s680 = scalar_select %p679, %s30, 1
      %s681 = scalar_lea.vmem %s13, %s680
      %p682 = pneg %p379
      %p683 = pneg %p376
      %p684 = pneg %p400
      %p685 = pneg %p397
      %p686 = pneg %p421
      %p687 = pneg %p418
      %p688 = pneg %p447
      %p689 = pneg %p444
      %p690 = scmp.lt.s32.totalorder %s30, 1
      %s691 = scalar_select %p690, %s30, 1
      %s692 = smul.addr %s691, 2
      %s693 = smul.addr %s692, 8
      %s694 = scalar_lea.vmem %s16, %s693
      %p695 = pneg %p473
      %p696 = pneg %p470
      %p697 = scmp.lt.s32.totalorder %s30, 1
      %s698 = scalar_select %p697, %s30, 1
      %s699 = smul.addr %s698, 2
      %s700 = smul.addr %s699, 8
      %s701 = scalar_lea.vmem %s17, %s700
      %p702 = pneg %p494
      %p703 = pneg %p491
      %p704 = scmp.lt.s32.totalorder %s30, 1
      %s705 = scalar_select %p704, %s30, 1
      %s706 = smul.addr %s705, 4
      %s707 = smul.addr %s706, 4
      %s708 = scalar_lea.vmem %s2, %s707
      %p709 = scmp.lt.s32.totalorder %s30, 1
      %s710 = scalar_select %p709, %s30, 1
      %s711 = scalar_lea.vmem %s3, %s710
      %p712 = scmp.lt.s32.totalorder %s30, 1
      %s713 = scalar_select %p712, %s30, 1
      %s714 = smul.addr %s713, 4
      %s715 = smul.addr %s714, 4
      %s716 = scalar_lea.vmem %s4, %s715
      %p717 = scmp.lt.s32.totalorder %s30, 1
      %s718 = scalar_select %p717, %s30, 1
      %s719 = scalar_lea.vmem %s5, %s718
      %p720 = scmp.lt.s32.totalorder %s30, 1
      %s721 = scalar_select %p720, %s30, 1
      %s722 = scalar_lea.vmem %s6, %s721
      %p723 = scmp.lt.s32.totalorder %s30, 1
      %s724 = scalar_select %p723, %s30, 1
      %s725 = scalar_lea.vmem %s7, %s724
      %p726 = scmp.lt.s32.totalorder %s30, 1
      %s727 = scalar_select %p726, %s30, 1
      %s728 = smul.addr %s727, 4
      %s729 = smul.addr %s728, 4
      %s730 = scalar_lea.vmem %s8, %s729
      %p731 = scmp.lt.s32.totalorder %s30, 1
      %s732 = scalar_select %p731, %s30, 1
      %s733 = scalar_lea.vmem %s9, %s732
      %p734 = scmp.lt.s32.totalorder %s30, 1
      %s735 = scalar_select %p734, %s30, 1
      %s736 = smul.addr %s735, 8
      %s737 = smul.addr %s736, 4
      %s738 = scalar_lea.vmem %s10, %s737
      %p739 = scmp.lt.s32.totalorder %s30, 1
      %s740 = scalar_select %p739, %s30, 1
      %s741 = scalar_lea.vmem %s11, %s740
      %p742 = scmp.lt.s32.totalorder %s30, 1
      %s743 = scalar_select %p742, %s30, 1
      %s744 = scalar_lea.vmem %s12, %s743
      %p745 = scmp.lt.s32.totalorder %s30, 1
      %s746 = scalar_select %p745, %s30, 1
      %s747 = scalar_lea.vmem %s13, %s746
      %p748 = scmp.lt.s32.totalorder %s30, 1
      %s749 = scalar_select %p748, %s30, 1
      %s750 = smul.addr %s749, 2
      %s751 = smul.addr %s750, 8
      %s752 = scalar_lea.vmem %s16, %s751
      %p753 = scmp.lt.s32.totalorder %s30, 1
      %s754 = scalar_select %p753, %s30, 1
      %s755 = smul.addr %s754, 2
      %s756 = smul.addr %s755, 8
      %s757 = scalar_lea.vmem %s17, %s756
      %p759 = scmp.eq.s32.totalorder %s30, 0
      // Predicated region
      $region85: #{translation_model_forward.2} parent=83 // pred_check
        %p760 = pneg %p759
      $region86: #{translation_model_forward.2} parent=83 // pred_check_branch
        %762 = sbr.rel (%p760) target = $region88
      $region87: #{translation_model_forward.2} parent=83 // pred_region
        %v763 = vld [vmem:[%s0] sm:$0xff]
        %v764 = vld [vmem:[%s0 + $0x8] sm:$0xff]
        %vm765 = vcmask 261120
        %766 = vst.msk [vmem:[#allocation2] sm:$0xff] %vm765, %v763
        %767 = vst.msk [vmem:[#allocation2 + $0x8] sm:$0xff] %vm765, %v764
      $region88: #{translation_model_forward.2} parent=83 // pred_fallthru
        _
      %v768 = vld [vmem:[#allocation2] sm:$0xff]
      %v769 = vld [vmem:[#allocation2 + $0x8] sm:$0xff]
      %v770 = vld [vmem:[%s1] sm:$0x1]
      %v771 = vld [vmem:[%s1 + $0x1] sm:$0x1]
      %v772 = vpack.c.bf16 %v769, %v768
      %v773 = vld [vmem:[%s708] sm:$0xf]
      %v774 = vld [vmem:[%s708 + $0x4] sm:$0xf]
      %v775 = vld [vmem:[%s708 + $0x8] sm:$0xf]
      %v776 = vld [vmem:[%s708 + $0xc] sm:$0xf]
      %v777 = vld [vmem:[%s711] sm:$0x1]
      %v779 = vperm.slane %v777, 0
      %v785 = vunpack.c.l.b16 %v773
      %v786 = vunpack.c.l.b16 %v774
      %v787 = vunpack.c.l.b16 %v775
      %v788 = vunpack.c.l.b16 %v776
      %v789 = vpack.c.b16 %v786, %v785
      %v790 = vpack.c.b16 %v788, %v787
      %vm793 = vcmask 261120
      %v795 = vsel %vm793, %v772, 0
      %797 = vmatpush.bf16.msra.mxu0 0
      %798 = vmatpush.bf16.msra.mxu0 0
      %799 = vmatpush.bf16.msra.mxu0 0
      %800 = vmatpush.bf16.msra.mxu0 0
      %801 = vmatpush.bf16.msra.mxu0 0
      %802 = vmatpush.bf16.msra.mxu0 0
      %803 = vmatpush.bf16.msra.mxu0 %v790
      %804 = vmatpush.bf16.msra.mxu0 %v789
      %805 = vmatmul.bf16.gmra.mxu0 %v795
      %v806 = vpop.f32.mrf.mxu0
      %v807 = vadd.f32 %v779, %v806
      %v808 = vpop.f32.mrf.mxu0
      %v809 = vadd.f32 %v779, %v808
      %810 = vdwg.mxu0
      %v811 = vpack.c.bf16 %v807, %v807
      %v812 = vpack.c.bf16 %v809, %v809
      %v814 = vperm.slane %v770, 0
      %v817 = vunpack.c.l.b16 %v811
      %v818 = vpack.c.b16 %v817, %v817
      %819 = vrot.lane.b32.xlu0 %v818, 96
      %v820 = vpop.permute.xlu0 %819
      %vm821 = vcmask 64512
      %v823 = vsel %vm821, %v811, 0
      %v826 = vsel %vm821, %v820, 0
      %828 = vmatpush.bf16.xpose.msra.mxu0 0
      %829 = vmatpush.bf16.xpose.msra.mxu0 0
      %830 = vmatpush.bf16.xpose.msra.mxu0 0
      %831 = vmatpush.bf16.xpose.msra.mxu0 0
      %832 = vmatpush.bf16.xpose.msra.mxu0 0
      %833 = vmatpush.bf16.xpose.msra.mxu0 0
      %834 = vmatpush.bf16.xpose.msra.mxu0 0
      %835 = vmatpush.bf16.xpose.msra.mxu0 %v826
      %836 = vmatmul.bf16.gmra.mxu0 %v823
      %v837 = vpop.f32.mrf.mxu0
      %v838 = vadd.f32 0.0, %v837
      %v839 = vpop.f32.mrf.mxu0
      %840 = vdwg.mxu0
      %v841 = vmul.f32 %v838, 0.35355338
      %v842 = vadd.f32 %v841, %v814
      %v843 = vsel %vm821, %v842, -inf
      %844 = vmax.xlane.f32.xlu0 %v843
      %v845 = vpop.xlane.xlu0 %844
      %v846 = vsub.f32 %v842, %v845
      %v847 = vmul.f32 %v846, 1.442695
      %v848 = vpow.pop %v847
      %v849 = vsel %vm821, %v848, 0.0
      %850 = vadd.xlane.f32.xlu0 %v849
      %v851 = vpop.xlane.xlu0 %850
      %v852 = vrcp.pop %v851
      %v853 = vmul.f32 %v848, %v852
      %854 = vst.msk [vmem:[%s757] sm:$0xff] %vm821, %v853
      %v855 = vpack.c.bf16 %v853, %v853
      %856 = vrot.lane.b32.xlu0 %v818, 64
      %v857 = vpop.permute.xlu0 %856
      %v859 = vsel %vm821, %v855, 0
      %vm861 = vcmask 1043456
      %v863 = vsel %vm861, %v857, 0
      %865 = vmatpush.bf16.msra.mxu0 0
      %866 = vmatpush.bf16.msra.mxu0 0
      %867 = vmatpush.bf16.msra.mxu0 0
      %868 = vmatpush.bf16.msra.mxu0 0
      %869 = vmatpush.bf16.msra.mxu0 0
      %870 = vmatpush.bf16.msra.mxu0 0
      %871 = vmatpush.bf16.msra.mxu0 0
      %872 = vmatpush.bf16.msra.mxu0 %v863
      %873 = vmatmul.bf16.gmra.mxu0 %v859
      %v874 = vpop.f32.mrf.mxu0
      %v875 = vadd.f32 0.0, %v874
      %v876 = vpop.f32.mrf.mxu0
      %877 = vdwg.mxu0
      %878 = vst.msk [vmem:[#allocation3] sm:$0xff] %vm821, %v875
      %879 = vrot.lane.b32.xlu0 %v818, 120
      %v880 = vpop.permute.xlu0 %879
      %881 = vrot.lane.b32.xlu0 %v818, 88
      %v882 = vpop.permute.xlu0 %881
      %v884 = vsel %vm821, %v880, 0
      %v887 = vsel %vm821, %v882, 0
      %889 = vmatpush.bf16.xpose.msra.mxu0 0
      %890 = vmatpush.bf16.xpose.msra.mxu0 0
      %891 = vmatpush.bf16.xpose.msra.mxu0 0
      %892 = vmatpush.bf16.xpose.msra.mxu0 0
      %893 = vmatpush.bf16.xpose.msra.mxu0 0
      %894 = vmatpush.bf16.xpose.msra.mxu0 0
      %895 = vmatpush.bf16.xpose.msra.mxu0 0
      %896 = vmatpush.bf16.xpose.msra.mxu0 %v887
      %897 = vmatmul.bf16.gmra.mxu0 %v884
      %v898 = vpop.f32.mrf.mxu0
      %v899 = vadd.f32 0.0, %v898
      %v900 = vpop.f32.mrf.mxu0
      %901 = vdwg.mxu0
      %v902 = vmul.f32 %v899, 0.35355338
      %v903 = vadd.f32 %v902, %v814
      %v904 = vsel %vm821, %v903, -inf
      %905 = vmax.xlane.f32.xlu0 %v904
      %v906 = vpop.xlane.xlu0 %905
      %v907 = vsub.f32 %v903, %v906
      %v908 = vmul.f32 %v907, 1.442695
      %v909 = vpow.pop %v908
      %v910 = vsel %vm821, %v909, 0.0
      %911 = vadd.xlane.f32.xlu0 %v910
      %v912 = vpop.xlane.xlu0 %911
      %v913 = vrcp.pop %v912
      %v914 = vmul.f32 %v909, %v913
      %916 = vrot.lane.b32.xlu0 %v914, 8
      %v917 = vpop.permute.xlu0 %916
      %vm919 = vcmask 130112
      %920 = vst.msk [vmem:[%s757] sm:$0xff] %vm919, %v917
      %v921 = vpack.c.bf16 %v914, %v914
      %922 = vrot.lane.b32.xlu0 %v818, 56
      %v923 = vpop.permute.xlu0 %922
      %v925 = vsel %vm821, %v921, 0
      %v928 = vsel %vm861, %v923, 0
      %930 = vmatpush.bf16.msra.mxu0 0
      %931 = vmatpush.bf16.msra.mxu0 0
      %932 = vmatpush.bf16.msra.mxu0 0
      %933 = vmatpush.bf16.msra.mxu0 0
      %934 = vmatpush.bf16.msra.mxu0 0
      %935 = vmatpush.bf16.msra.mxu0 0
      %936 = vmatpush.bf16.msra.mxu0 0
      %937 = vmatpush.bf16.msra.mxu0 %v928
      %938 = vmatmul.bf16.gmra.mxu0 %v925
      %v939 = vpop.f32.mrf.mxu0
      %v940 = vadd.f32 0.0, %v939
      %v941 = vpop.f32.mrf.mxu0
      %942 = vdwg.mxu0
      %944 = vrot.lane.b32.xlu0 %v940, 8
      %v945 = vpop.permute.xlu0 %944
      %947 = vst.msk [vmem:[#allocation3] sm:$0xff] %vm919, %v945
      %948 = vrot.lane.b32.xlu0 %v818, 112
      %v949 = vpop.permute.xlu0 %948
      %950 = vrot.lane.b32.xlu0 %v818, 80
      %v951 = vpop.permute.xlu0 %950
      %v953 = vsel %vm821, %v949, 0
      %v956 = vsel %vm821, %v951, 0
      %958 = vmatpush.bf16.xpose.msra.mxu0 0
      %959 = vmatpush.bf16.xpose.msra.mxu0 0
      %960 = vmatpush.bf16.xpose.msra.mxu0 0
      %961 = vmatpush.bf16.xpose.msra.mxu0 0
      %962 = vmatpush.bf16.xpose.msra.mxu0 0
      %963 = vmatpush.bf16.xpose.msra.mxu0 0
      %964 = vmatpush.bf16.xpose.msra.mxu0 0
      %965 = vmatpush.bf16.xpose.msra.mxu0 %v956
      %966 = vmatmul.bf16.gmra.mxu0 %v953
      %v967 = vpop.f32.mrf.mxu0
      %v968 = vadd.f32 0.0, %v967
      %v969 = vpop.f32.mrf.mxu0
      %970 = vdwg.mxu0
      %v971 = vmul.f32 %v968, 0.35355338
      %v972 = vadd.f32 %v971, %v814
      %v973 = vsel %vm821, %v972, -inf
      %974 = vmax.xlane.f32.xlu0 %v973
      %v975 = vpop.xlane.xlu0 %974
      %v976 = vsub.f32 %v972, %v975
      %v977 = vmul.f32 %v976, 1.442695
      %v978 = vpow.pop %v977
      %v979 = vsel %vm821, %v978, 0.0
      %980 = vadd.xlane.f32.xlu0 %v979
      %v981 = vpop.xlane.xlu0 %980
      %v982 = vrcp.pop %v981
      %v983 = vmul.f32 %v978, %v982
      %985 = vrot.lane.b32.xlu0 %v983, 16
      %v986 = vpop.permute.xlu0 %985
      %vm988 = vcmask 195712
      %989 = vst.msk [vmem:[%s757] sm:$0xff] %vm988, %v986
      %v990 = vpack.c.bf16 %v983, %v983
      %991 = vrot.lane.b32.xlu0 %v818, 48
      %v992 = vpop.permute.xlu0 %991
      %v994 = vsel %vm821, %v990, 0
      %v997 = vsel %vm861, %v992, 0
      %999 = vmatpush.bf16.msra.mxu0 0
      %1000 = vmatpush.bf16.msra.mxu0 0
      %1001 = vmatpush.bf16.msra.mxu0 0
      %1002 = vmatpush.bf16.msra.mxu0 0
      %1003 = vmatpush.bf16.msra.mxu0 0
      %1004 = vmatpush.bf16.msra.mxu0 0
      %1005 = vmatpush.bf16.msra.mxu0 0
      %1006 = vmatpush.bf16.msra.mxu0 %v997
      %1007 = vmatmul.bf16.gmra.mxu0 %v994
      %v1008 = vpop.f32.mrf.mxu0
      %v1009 = vadd.f32 0.0, %v1008
      %v1010 = vpop.f32.mrf.mxu0
      %1011 = vdwg.mxu0
      %1013 = vrot.lane.b32.xlu0 %v1009, 16
      %v1014 = vpop.permute.xlu0 %1013
      %1016 = vst.msk [vmem:[#allocation3] sm:$0xff] %vm988, %v1014
      %1017 = vrot.lane.b32.xlu0 %v818, 104
      %v1018 = vpop.permute.xlu0 %1017
      %1019 = vrot.lane.b32.xlu0 %v818, 72
      %v1020 = vpop.permute.xlu0 %1019
      %v1022 = vsel %vm821, %v1018, 0
      %v1025 = vsel %vm821, %v1020, 0
      %1027 = vmatpush.bf16.xpose.msra.mxu0 0
      %1028 = vmatpush.bf16.xpose.msra.mxu0 0
      %1029 = vmatpush.bf16.xpose.msra.mxu0 0
      %1030 = vmatpush.bf16.xpose.msra.mxu0 0
      %1031 = vmatpush.bf16.xpose.msra.mxu0 0
      %1032 = vmatpush.bf16.xpose.msra.mxu0 0
      %1033 = vmatpush.bf16.xpose.msra.mxu0 0
      %1034 = vmatpush.bf16.xpose.msra.mxu0 %v1025
      %1035 = vmatmul.bf16.gmra.mxu0 %v1022
      %v1036 = vpop.f32.mrf.mxu0
      %v1037 = vadd.f32 0.0, %v1036
      %v1038 = vpop.f32.mrf.mxu0
      %1039 = vdwg.mxu0
      %v1040 = vmul.f32 %v1037, 0.35355338
      %v1041 = vadd.f32 %v1040, %v814
      %v1042 = vsel %vm821, %v1041, -inf
      %1043 = vmax.xlane.f32.xlu0 %v1042
      %v1044 = vpop.xlane.xlu0 %1043
      %v1045 = vsub.f32 %v1041, %v1044
      %v1046 = vmul.f32 %v1045, 1.442695
      %v1047 = vpow.pop %v1046
      %v1048 = vsel %vm821, %v1047, 0.0
      %1049 = vadd.xlane.f32.xlu0 %v1048
      %v1050 = vpop.xlane.xlu0 %1049
      %v1051 = vrcp.pop %v1050
      %v1052 = vmul.f32 %v1047, %v1051
      %1054 = vrot.lane.b32.xlu0 %v1052, 24
      %v1055 = vpop.permute.xlu0 %1054
      %vm1057 = vcmask 261312
      %1058 = vst.msk [vmem:[%s757] sm:$0xff] %vm1057, %v1055
      %v1059 = vpack.c.bf16 %v1052, %v1052
      %1060 = vrot.lane.b32.xlu0 %v818, 40
      %v1061 = vpop.permute.xlu0 %1060
      %v1063 = vsel %vm821, %v1059, 0
      %v1066 = vsel %vm861, %v1061, 0
      %1068 = vmatpush.bf16.msra.mxu0 0
      %1069 = vmatpush.bf16.msra.mxu0 0
      %1070 = vmatpush.bf16.msra.mxu0 0
      %1071 = vmatpush.bf16.msra.mxu0 0
      %1072 = vmatpush.bf16.msra.mxu0 0
      %1073 = vmatpush.bf16.msra.mxu0 0
      %1074 = vmatpush.bf16.msra.mxu0 0
      %1075 = vmatpush.bf16.msra.mxu0 %v1066
      %1076 = vmatmul.bf16.gmra.mxu0 %v1063
      %v1077 = vpop.f32.mrf.mxu0
      %v1078 = vadd.f32 0.0, %v1077
      %v1079 = vpop.f32.mrf.mxu0
      %1080 = vdwg.mxu0
      %1082 = vrot.lane.b32.xlu0 %v1078, 24
      %v1083 = vpop.permute.xlu0 %1082
      %1085 = vst.msk [vmem:[#allocation3] sm:$0xff] %vm1057, %v1083
      %v1087 = vperm.slane %v771, 0
      %v1090 = vunpack.c.l.b16 %v812
      %v1091 = vpack.c.b16 %v1090, %v1090
      %1092 = vrot.lane.b32.xlu0 %v1091, 96
      %v1093 = vpop.permute.xlu0 %1092
      %v1095 = vsel %vm821, %v812, 0
      %v1098 = vsel %vm821, %v1093, 0
      %1100 = vmatpush.bf16.xpose.msra.mxu0 0
      %1101 = vmatpush.bf16.xpose.msra.mxu0 0
      %1102 = vmatpush.bf16.xpose.msra.mxu0 0
      %1103 = vmatpush.bf16.xpose.msra.mxu0 0
      %1104 = vmatpush.bf16.xpose.msra.mxu0 0
      %1105 = vmatpush.bf16.xpose.msra.mxu0 0
      %1106 = vmatpush.bf16.xpose.msra.mxu0 0
      %1107 = vmatpush.bf16.xpose.msra.mxu0 %v1098
      %1108 = vmatmul.bf16.gmra.mxu0 %v1095
      %v1109 = vpop.f32.mrf.mxu0
      %v1110 = vadd.f32 0.0, %v1109
      %v1111 = vpop.f32.mrf.mxu0
      %1112 = vdwg.mxu0
      %v1113 = vmul.f32 %v1110, 0.35355338
      %v1114 = vadd.f32 %v1113, %v1087
      %v1115 = vsel %vm821, %v1114, -inf
      %1116 = vmax.xlane.f32.xlu0 %v1115
      %v1117 = vpop.xlane.xlu0 %1116
      %v1118 = vsub.f32 %v1114, %v1117
      %v1119 = vmul.f32 %v1118, 1.442695
      %v1120 = vpow.pop %v1119
      %v1121 = vsel %vm821, %v1120, 0.0
      %1122 = vadd.xlane.f32.xlu0 %v1121
      %v1123 = vpop.xlane.xlu0 %1122
      %v1124 = vrcp.pop %v1123
      %v1125 = vmul.f32 %v1120, %v1124
      %s1126 = scalar_lea.vmem %s757, 8
      %1127 = vst.msk [vmem:[%s1126] sm:$0xff] %vm821, %v1125
      %v1128 = vpack.c.bf16 %v1125, %v1125
      %1129 = vrot.lane.b32.xlu0 %v1091, 64
      %v1130 = vpop.permute.xlu0 %1129
      %v1132 = vsel %vm821, %v1128, 0
      %v1135 = vsel %vm861, %v1130, 0
      %1137 = vmatpush.bf16.msra.mxu0 0
      %1138 = vmatpush.bf16.msra.mxu0 0
      %1139 = vmatpush.bf16.msra.mxu0 0
      %1140 = vmatpush.bf16.msra.mxu0 0
      %1141 = vmatpush.bf16.msra.mxu0 0
      %1142 = vmatpush.bf16.msra.mxu0 0
      %1143 = vmatpush.bf16.msra.mxu0 0
      %1144 = vmatpush.bf16.msra.mxu0 %v1135
      %1145 = vmatmul.bf16.gmra.mxu0 %v1132
      %v1146 = vpop.f32.mrf.mxu0
      %v1147 = vadd.f32 0.0, %v1146
      %v1148 = vpop.f32.mrf.mxu0
      %1149 = vdwg.mxu0
      %1150 = vst.msk [vmem:[#allocation3 + $0x8] sm:$0xff] %vm821, %v1147
      %1151 = vrot.lane.b32.xlu0 %v1091, 120
      %v1152 = vpop.permute.xlu0 %1151
      %1153 = vrot.lane.b32.xlu0 %v1091, 88
      %v1154 = vpop.permute.xlu0 %1153
      %v1156 = vsel %vm821, %v1152, 0
      %v1159 = vsel %vm821, %v1154, 0
      %1161 = vmatpush.bf16.xpose.msra.mxu0 0
      %1162 = vmatpush.bf16.xpose.msra.mxu0 0
      %1163 = vmatpush.bf16.xpose.msra.mxu0 0
      %1164 = vmatpush.bf16.xpose.msra.mxu0 0
      %1165 = vmatpush.bf16.xpose.msra.mxu0 0
      %1166 = vmatpush.bf16.xpose.msra.mxu0 0
      %1167 = vmatpush.bf16.xpose.msra.mxu0 0
      %1168 = vmatpush.bf16.xpose.msra.mxu0 %v1159
      %1169 = vmatmul.bf16.gmra.mxu0 %v1156
      %v1170 = vpop.f32.mrf.mxu0
      %v1171 = vadd.f32 0.0, %v1170
      %v1172 = vpop.f32.mrf.mxu0
      %1173 = vdwg.mxu0
      %v1174 = vmul.f32 %v1171, 0.35355338
      %v1175 = vadd.f32 %v1174, %v1087
      %v1176 = vsel %vm821, %v1175, -inf
      %1177 = vmax.xlane.f32.xlu0 %v1176
      %v1178 = vpop.xlane.xlu0 %1177
      %v1179 = vsub.f32 %v1175, %v1178
      %v1180 = vmul.f32 %v1179, 1.442695
      %v1181 = vpow.pop %v1180
      %v1182 = vsel %vm821, %v1181, 0.0
      %1183 = vadd.xlane.f32.xlu0 %v1182
      %v1184 = vpop.xlane.xlu0 %1183
      %v1185 = vrcp.pop %v1184
      %v1186 = vmul.f32 %v1181, %v1185
      %1188 = vrot.lane.b32.xlu0 %v1186, 8
      %v1189 = vpop.permute.xlu0 %1188
      %1191 = vst.msk [vmem:[%s1126] sm:$0xff] %vm919, %v1189
      %v1192 = vpack.c.bf16 %v1186, %v1186
      %1193 = vrot.lane.b32.xlu0 %v1091, 56
      %v1194 = vpop.permute.xlu0 %1193
      %v1196 = vsel %vm821, %v1192, 0
      %v1199 = vsel %vm861, %v1194, 0
      %1201 = vmatpush.bf16.msra.mxu0 0
      %1202 = vmatpush.bf16.msra.mxu0 0
      %1203 = vmatpush.bf16.msra.mxu0 0
      %1204 = vmatpush.bf16.msra.mxu0 0
      %1205 = vmatpush.bf16.msra.mxu0 0
      %1206 = vmatpush.bf16.msra.mxu0 0
      %1207 = vmatpush.bf16.msra.mxu0 0
      %1208 = vmatpush.bf16.msra.mxu0 %v1199
      %1209 = vmatmul.bf16.gmra.mxu0 %v1196
      %v1210 = vpop.f32.mrf.mxu0
      %v1211 = vadd.f32 0.0, %v1210
      %v1212 = vpop.f32.mrf.mxu0
      %1213 = vdwg.mxu0
      %1215 = vrot.lane.b32.xlu0 %v1211, 8
      %v1216 = vpop.permute.xlu0 %1215
      %1218 = vst.msk [vmem:[#allocation3 + $0x8] sm:$0xff] %vm919, %v1216
      %1219 = vrot.lane.b32.xlu0 %v1091, 112
      %v1220 = vpop.permute.xlu0 %1219
      %1221 = vrot.lane.b32.xlu0 %v1091, 80
      %v1222 = vpop.permute.xlu0 %1221
      %v1224 = vsel %vm821, %v1220, 0
      %v1227 = vsel %vm821, %v1222, 0
      %1229 = vmatpush.bf16.xpose.msra.mxu0 0
      %1230 = vmatpush.bf16.xpose.msra.mxu0 0
      %1231 = vmatpush.bf16.xpose.msra.mxu0 0
      %1232 = vmatpush.bf16.xpose.msra.mxu0 0
      %1233 = vmatpush.bf16.xpose.msra.mxu0 0
      %1234 = vmatpush.bf16.xpose.msra.mxu0 0
      %1235 = vmatpush.bf16.xpose.msra.mxu0 0
      %1236 = vmatpush.bf16.xpose.msra.mxu0 %v1227
      %1237 = vmatmul.bf16.gmra.mxu0 %v1224
      %v1238 = vpop.f32.mrf.mxu0
      %v1239 = vadd.f32 0.0, %v1238
      %v1240 = vpop.f32.mrf.mxu0
      %1241 = vdwg.mxu0
      %v1242 = vmul.f32 %v1239, 0.35355338
      %v1243 = vadd.f32 %v1242, %v1087
      %v1244 = vsel %vm821, %v1243, -inf
      %1245 = vmax.xlane.f32.xlu0 %v1244
      %v1246 = vpop.xlane.xlu0 %1245
      %v1247 = vsub.f32 %v1243, %v1246
      %v1248 = vmul.f32 %v1247, 1.442695
      %v1249 = vpow.pop %v1248
      %v1250 = vsel %vm821, %v1249, 0.0
      %1251 = vadd.xlane.f32.xlu0 %v1250
      %v1252 = vpop.xlane.xlu0 %1251
      %v1253 = vrcp.pop %v1252
      %v1254 = vmul.f32 %v1249, %v1253
      %1256 = vrot.lane.b32.xlu0 %v1254, 16
      %v1257 = vpop.permute.xlu0 %1256
      %1259 = vst.msk [vmem:[%s1126] sm:$0xff] %vm988, %v1257
      %v1260 = vpack.c.bf16 %v1254, %v1254
      %1261 = vrot.lane.b32.xlu0 %v1091, 48
      %v1262 = vpop.permute.xlu0 %1261
      %v1264 = vsel %vm821, %v1260, 0
      %v1267 = vsel %vm861, %v1262, 0
      %1269 = vmatpush.bf16.msra.mxu0 0
      %1270 = vmatpush.bf16.msra.mxu0 0
      %1271 = vmatpush.bf16.msra.mxu0 0
      %1272 = vmatpush.bf16.msra.mxu0 0
      %1273 = vmatpush.bf16.msra.mxu0 0
      %1274 = vmatpush.bf16.msra.mxu0 0
      %1275 = vmatpush.bf16.msra.mxu0 0
      %1276 = vmatpush.bf16.msra.mxu0 %v1267
      %1277 = vmatmul.bf16.gmra.mxu0 %v1264
      %v1278 = vpop.f32.mrf.mxu0
      %v1279 = vadd.f32 0.0, %v1278
      %v1280 = vpop.f32.mrf.mxu0
      %1281 = vdwg.mxu0
      %1283 = vrot.lane.b32.xlu0 %v1279, 16
      %v1284 = vpop.permute.xlu0 %1283
      %1286 = vst.msk [vmem:[#allocation3 + $0x8] sm:$0xff] %vm988, %v1284
      %1287 = vrot.lane.b32.xlu0 %v1091, 104
      %v1288 = vpop.permute.xlu0 %1287
      %1289 = vrot.lane.b32.xlu0 %v1091, 72
      %v1290 = vpop.permute.xlu0 %1289
      %v1292 = vsel %vm821, %v1288, 0
      %v1295 = vsel %vm821, %v1290, 0
      %1297 = vmatpush.bf16.xpose.msra.mxu0 0
      %1298 = vmatpush.bf16.xpose.msra.mxu0 0
      %1299 = vmatpush.bf16.xpose.msra.mxu0 0
      %1300 = vmatpush.bf16.xpose.msra.mxu0 0
      %1301 = vmatpush.bf16.xpose.msra.mxu0 0
      %1302 = vmatpush.bf16.xpose.msra.mxu0 0
      %1303 = vmatpush.bf16.xpose.msra.mxu0 0
      %1304 = vmatpush.bf16.xpose.msra.mxu0 %v1295
      %1305 = vmatmul.bf16.gmra.mxu0 %v1292
      %v1306 = vpop.f32.mrf.mxu0
      %v1307 = vadd.f32 0.0, %v1306
      %v1308 = vpop.f32.mrf.mxu0
      %1309 = vdwg.mxu0
      %v1310 = vmul.f32 %v1307, 0.35355338
      %v1311 = vadd.f32 %v1310, %v1087
      %v1312 = vsel %vm821, %v1311, -inf
      %1313 = vmax.xlane.f32.xlu0 %v1312
      %v1314 = vpop.xlane.xlu0 %1313
      %v1315 = vsub.f32 %v1311, %v1314
      %v1316 = vmul.f32 %v1315, 1.442695
      %v1317 = vpow.pop %v1316
      %v1318 = vsel %vm821, %v1317, 0.0
      %1319 = vadd.xlane.f32.xlu0 %v1318
      %v1320 = vpop.xlane.xlu0 %1319
      %v1321 = vrcp.pop %v1320
      %v1322 = vmul.f32 %v1317, %v1321
      %1324 = vrot.lane.b32.xlu0 %v1322, 24
      %v1325 = vpop.permute.xlu0 %1324
      %1327 = vst.msk [vmem:[%s1126] sm:$0xff] %vm1057, %v1325
      %v1328 = vpack.c.bf16 %v1322, %v1322
      %1329 = vrot.lane.b32.xlu0 %v1091, 40
      %v1330 = vpop.permute.xlu0 %1329
      %v1332 = vsel %vm821, %v1328, 0
      %v1335 = vsel %vm861, %v1330, 0
      %1337 = vmatpush.bf16.msra.mxu0 0
      %1338 = vmatpush.bf16.msra.mxu0 0
      %1339 = vmatpush.bf16.msra.mxu0 0
      %1340 = vmatpush.bf16.msra.mxu0 0
      %1341 = vmatpush.bf16.msra.mxu0 0
      %1342 = vmatpush.bf16.msra.mxu0 0
      %1343 = vmatpush.bf16.msra.mxu0 0
      %1344 = vmatpush.bf16.msra.mxu0 %v1335
      %1345 = vmatmul.bf16.gmra.mxu0 %v1332
      %v1346 = vpop.f32.mrf.mxu0
      %v1347 = vadd.f32 0.0, %v1346
      %v1348 = vpop.f32.mrf.mxu0
      %1349 = vdwg.mxu0
      %1351 = vrot.lane.b32.xlu0 %v1347, 24
      %v1352 = vpop.permute.xlu0 %1351
      %1354 = vst.msk [vmem:[#allocation3 + $0x8] sm:$0xff] %vm1057, %v1352
      %v1355 = vld [vmem:[#allocation3] sm:$0xff]
      %v1356 = vld [vmem:[#allocation3 + $0x8] sm:$0xff]
      %v1357 = vpack.c.bf16 %v1356, %v1355
      %v1358 = vld [vmem:[%s716] sm:$0xf]
      %v1359 = vld [vmem:[%s716 + $0x4] sm:$0xf]
      %v1360 = vld [vmem:[%s716 + $0x8] sm:$0xf]
      %v1361 = vld [vmem:[%s716 + $0xc] sm:$0xf]
      %v1362 = vld [vmem:[%s719] sm:$0x1]
      %v1364 = vperm.slane %v1362, 0
      %v1370 = vunpack.c.l.b16 %v1358
      %v1371 = vunpack.c.l.b16 %v1359
      %v1372 = vunpack.c.l.b16 %v1360
      %v1373 = vunpack.c.l.b16 %v1361
      %v1374 = vpack.c.b16 %v1371, %v1370
      %v1375 = vpack.c.b16 %v1373, %v1372
      %v1379 = vsel %vm793, %v1357, 0
      %1381 = vmatpush.bf16.msra.mxu0 0
      %1382 = vmatpush.bf16.msra.mxu0 0
      %1383 = vmatpush.bf16.msra.mxu0 0
      %1384 = vmatpush.bf16.msra.mxu0 0
      %1385 = vmatpush.bf16.msra.mxu0 0
      %1386 = vmatpush.bf16.msra.mxu0 0
      %1387 = vmatpush.bf16.msra.mxu0 %v1375
      %1388 = vmatpush.bf16.msra.mxu0 %v1374
      %1389 = vmatmul.bf16.gmra.mxu0 %v1379
      %v1390 = vpop.f32.mrf.mxu0
      %v1391 = vadd.f32 %v1364, %v1390
      %v1392 = vpop.f32.mrf.mxu0
      %v1393 = vadd.f32 %v1364, %v1392
      %1394 = vdwg.mxu0
      %v1395 = vadd.f32 %v768, %v1391
      %v1396 = vadd.f32 %v769, %v1393
      %v1397 = vld [vmem:[%s722] sm:$0x1]
      %v1398 = vld [vmem:[%s725] sm:$0x1]
      %v1399 = vsel %vm793, %v1395, 0.0
      %1400 = vadd.xlane.f32.xlu0 %v1399
      %v1401 = vpop.xlane.xlu0 %1400
      %v1402 = vsel %vm793, %v1396, 0.0
      %1403 = vadd.xlane.f32.xlu0 %v1402
      %v1404 = vpop.xlane.xlu0 %1403
      %v1405 = vrcp.pop 32.0
      %v1406 = vmul.f32 32.0, %v1405
      %v1407 = vsub.f32 1.0, %v1406
      %v1408 = vmul.f32 %v1405, %v1407
      %v1409 = vadd.f32 %v1405, %v1408
      %vm1410 = vweird.f32 %v1405
      %v1411 = vsel %vm1410, %v1405, %v1409
      %v1412 = vmul.f32 %v1401, %v1411
      %v1413 = vmul.f32 %v1404, %v1411
      %v1414 = vsub.f32 %v1395, %v1412
      %v1415 = vsub.f32 %v1396, %v1413
      %v1416 = vmul.f32 %v1414, %v1414
      %v1417 = vmul.f32 %v1415, %v1415
      %v1418 = vsel %vm793, %v1416, 0.0
      %1419 = vadd.xlane.f32.xlu0 %v1418
      %v1420 = vpop.xlane.xlu0 %1419
      %v1421 = vsel %vm793, %v1417, 0.0
      %1422 = vadd.xlane.f32.xlu0 %v1421
      %v1423 = vpop.xlane.xlu0 %1422
      %v1424 = vmul.f32 %v1420, %v1411
      %v1425 = vmul.f32 %v1423, %v1411
      %v1426 = vadd.f32 %v1424, 1e-05
      %v1427 = vadd.f32 %v1425, 1e-05
      %v1428 = vrsqrt.pop %v1426
      %v1429 = vmul.f32 %v1428, %v1426
      %v1430 = vmul.f32 %v1429, %v1428
      %v1431 = vmul.f32 0.5, %v1430
      %v1432 = vsub.f32 1.5, %v1431
      %v1433 = vmul.f32 %v1428, %v1432
      %vm1434 = vweird.f32 %v1426
      %vm1435 = vweird.f32 %v1428
      %vm1436 = vmor %vm1434, %vm1435
      %v1437 = vsel %vm1436, %v1428, %v1433
      %v1438 = vrsqrt.pop %v1427
      %v1439 = vmul.f32 %v1438, %v1427
      %v1440 = vmul.f32 %v1439, %v1438
      %v1441 = vmul.f32 0.5, %v1440
      %v1442 = vsub.f32 1.5, %v1441
      %v1443 = vmul.f32 %v1438, %v1442
      %vm1444 = vweird.f32 %v1427
      %vm1445 = vweird.f32 %v1438
      %vm1446 = vmor %vm1444, %vm1445
      %v1447 = vsel %vm1446, %v1438, %v1443
      %v1448 = vmul.f32 %v1414, %v1437
      %v1449 = vmul.f32 %v1415, %v1447
      %v1451 = vperm.slane %v1397, 0
      %v1453 = vmul.f32 %v1448, %v1451
      %v1454 = vmul.f32 %v1449, %v1451
      %v1456 = vperm.slane %v1398, 0
      %v1458 = vadd.f32 %v1453, %v1456
      %v1459 = vadd.f32 %v1454, %v1456
      %v1460 = vpack.c.bf16 %v1459, %v1458
      %v1461 = vld [vmem:[%s730] sm:$0xf]
      %v1462 = vld [vmem:[%s730 + $0x4] sm:$0xf]
      %v1463 = vld [vmem:[%s730 + $0x8] sm:$0xf]
      %v1464 = vld [vmem:[%s730 + $0xc] sm:$0xf]
      %v1465 = vld [vmem:[%s733] sm:$0x1]
      %v1467 = vperm.slane %v1465, 0
      %v1473 = vunpack.c.l.b16 %v1461
      %v1474 = vunpack.c.l.b16 %v1462
      %v1475 = vunpack.c.l.b16 %v1463
      %v1476 = vunpack.c.l.b16 %v1464
      %v1477 = vpack.c.b16 %v1474, %v1473
      %v1478 = vpack.c.b16 %v1476, %v1475
      %v1482 = vsel %vm793, %v1460, 0
      %1484 = vmatpush.bf16.msra.mxu0 0
      %1485 = vmatpush.bf16.msra.mxu0 0
      %1486 = vmatpush.bf16.msra.mxu0 0
      %1487 = vmatpush.bf16.msra.mxu0 0
      %1488 = vmatpush.bf16.msra.mxu0 0
      %1489 = vmatpush.bf16.msra.mxu0 0
      %1490 = vmatpush.bf16.msra.mxu0 %v1478
      %1491 = vmatpush.bf16.msra.mxu0 %v1477
      %1492 = vmatmul.bf16.gmra.mxu0 %v1482
      %v1493 = vpop.f32.mrf.mxu0
      %v1494 = vadd.f32 %v1467, %v1493
      %v1495 = vpop.f32.mrf.mxu0
      %v1496 = vadd.f32 %v1467, %v1495
      %1497 = vdwg.mxu0
      %v1498 = vmax.f32 %v1494, 0.0
      %v1499 = vmax.f32 %v1496, 0.0
      %v1500 = vpack.c.bf16 %v1499, %v1498
      %v1501 = vld [vmem:[%s738] sm:$0xf]
      %v1502 = vld [vmem:[%s738 + $0x4] sm:$0xf]
      %v1503 = vld [vmem:[%s738 + $0x8] sm:$0xf]
      %v1504 = vld [vmem:[%s738 + $0xc] sm:$0xf]
      %v1505 = vld [vmem:[%s738 + $0x10] sm:$0xf]
      %v1506 = vld [vmem:[%s738 + $0x14] sm:$0xf]
      %v1507 = vld [vmem:[%s738 + $0x18] sm:$0xf]
      %v1508 = vld [vmem:[%s738 + $0x1c] sm:$0xf]
      %v1517 = vunpack.c.l.b16 %v1501
      %v1518 = vunpack.c.l.b16 %v1502
      %v1519 = vunpack.c.l.b16 %v1503
      %v1520 = vunpack.c.l.b16 %v1504
      %v1521 = vunpack.c.l.b16 %v1505
      %v1522 = vunpack.c.l.b16 %v1506
      %v1523 = vunpack.c.l.b16 %v1507
      %v1524 = vunpack.c.l.b16 %v1508
      %v1525 = vpack.c.b16 %v1518, %v1517
      %v1526 = vpack.c.b16 %v1520, %v1519
      %v1527 = vpack.c.b16 %v1522, %v1521
      %v1528 = vpack.c.b16 %v1524, %v1523
      %vm1533 = vcmask 523264
      %v1535 = vsel %vm1533, %v1500, 0
      %1537 = vmatpush.bf16.msra.mxu0 0
      %1538 = vmatpush.bf16.msra.mxu0 0
      %1539 = vmatpush.bf16.msra.mxu0 0
      %1540 = vmatpush.bf16.msra.mxu0 0
      %1541 = vmatpush.bf16.msra.mxu0 %v1528
      %1542 = vmatpush.bf16.msra.mxu0 %v1527
      %1543 = vmatpush.bf16.msra.mxu0 %v1526
      %1544 = vmatpush.bf16.msra.mxu0 %v1525
      %1545 = vmatmul.bf16.gmra.mxu0 %v1535
      %v1546 = vpop.f32.mrf.mxu0
      %v1547 = vadd.f32 0.0, %v1546
      %v1548 = vpop.f32.mrf.mxu0
      %v1549 = vadd.f32 0.0, %v1548
      %1550 = vdwg.mxu0
      %v1551 = vadd.f32 %v1458, %v1547
      %v1552 = vadd.f32 %v1459, %v1549
      %v1553 = vld [vmem:[%s741] sm:$0x1]
      %v1555 = vperm.slane %v1553, 0
      %v1557 = vadd.f32 %v1551, %v1555
      %v1558 = vadd.f32 %v1552, %v1555
      %v1559 = vld [vmem:[%s744] sm:$0x1]
      %v1560 = vld [vmem:[%s747] sm:$0x1]
      %v1561 = vsel %vm793, %v1557, 0.0
      %1562 = vadd.xlane.f32.xlu0 %v1561
      %v1563 = vpop.xlane.xlu0 %1562
      %v1564 = vsel %vm793, %v1558, 0.0
      %1565 = vadd.xlane.f32.xlu0 %v1564
      %v1566 = vpop.xlane.xlu0 %1565
      %v1567 = vmul.f32 %v1563, %v1411
      %v1568 = vmul.f32 %v1566, %v1411
      %v1569 = vsub.f32 %v1557, %v1567
      %v1570 = vsub.f32 %v1558, %v1568
      %v1571 = vmul.f32 %v1569, %v1569
      %v1572 = vmul.f32 %v1570, %v1570
      %v1573 = vsel %vm793, %v1571, 0.0
      %1574 = vadd.xlane.f32.xlu0 %v1573
      %v1575 = vpop.xlane.xlu0 %1574
      %v1576 = vsel %vm793, %v1572, 0.0
      %1577 = vadd.xlane.f32.xlu0 %v1576
      %v1578 = vpop.xlane.xlu0 %1577
      %v1579 = vmul.f32 %v1575, %v1411
      %v1580 = vmul.f32 %v1578, %v1411
      %v1581 = vadd.f32 %v1579, 1e-05
      %v1582 = vadd.f32 %v1580, 1e-05
      %v1583 = vrsqrt.pop %v1581
      %v1584 = vmul.f32 %v1583, %v1581
      %v1585 = vmul.f32 %v1584, %v1583
      %v1586 = vmul.f32 0.5, %v1585
      %v1587 = vsub.f32 1.5, %v1586
      %v1588 = vmul.f32 %v1583, %v1587
      %vm1589 = vweird.f32 %v1581
      %vm1590 = vweird.f32 %v1583
      %vm1591 = vmor %vm1589, %vm1590
      %v1592 = vsel %vm1591, %v1583, %v1588
      %v1593 = vrsqrt.pop %v1582
      %v1594 = vmul.f32 %v1593, %v1582
      %v1595 = vmul.f32 %v1594, %v1593
      %v1596 = vmul.f32 0.5, %v1595
      %v1597 = vsub.f32 1.5, %v1596
      %v1598 = vmul.f32 %v1593, %v1597
      %vm1599 = vweird.f32 %v1582
      %vm1600 = vweird.f32 %v1593
      %vm1601 = vmor %vm1599, %vm1600
      %v1602 = vsel %vm1601, %v1593, %v1598
      %v1603 = vmul.f32 %v1569, %v1592
      %v1604 = vmul.f32 %v1570, %v1602
      %v1606 = vperm.slane %v1559, 0
      %v1608 = vmul.f32 %v1603, %v1606
      %v1609 = vmul.f32 %v1604, %v1606
      %v1611 = vperm.slane %v1560, 0
      %v1613 = vadd.f32 %v1608, %v1611
      %v1614 = vadd.f32 %v1609, %v1611
      %1615 = vst.msk [vmem:[#allocation2] sm:$0xff] %vm793, %v1613
      %1616 = vst.msk [vmem:[#allocation2 + $0x8] sm:$0xff] %vm793, %v1614
      %1617 = vst.msk [vmem:[%s752] sm:$0xff] %vm793, %v1613
      %1618 = vst.msk [vmem:[%s752 + $0x8] sm:$0xff] %vm793, %v1614
      %v1619 = vld [vmem:[%s14] sm:$0x1]
      %v1620 = vld [vmem:[%s15] sm:$0x1]
      %v1621 = vsel %vm793, %v1613, 0.0
      %1622 = vadd.xlane.f32.xlu0 %v1621
      %v1623 = vpop.xlane.xlu0 %1622
      %v1624 = vsel %vm793, %v1614, 0.0
      %1625 = vadd.xlane.f32.xlu0 %v1624
      %v1626 = vpop.xlane.xlu0 %1625
      %v1627 = vmul.f32 %v1623, %v1411
      %v1628 = vmul.f32 %v1626, %v1411
      %v1629 = vsub.f32 %v1613, %v1627
      %v1630 = vsub.f32 %v1614, %v1628
      %v1631 = vmul.f32 %v1629, %v1629
      %v1632 = vmul.f32 %v1630, %v1630
      %v1633 = vsel %vm793, %v1631, 0.0
      %1634 = vadd.xlane.f32.xlu0 %v1633
      %v1635 = vpop.xlane.xlu0 %1634
      %v1636 = vsel %vm793, %v1632, 0.0
      %1637 = vadd.xlane.f32.xlu0 %v1636
      %v1638 = vpop.xlane.xlu0 %1637
      %v1639 = vmul.f32 %v1635, %v1411
      %v1640 = vmul.f32 %v1638, %v1411
      %v1641 = vadd.f32 %v1639, 1e-05
      %v1642 = vadd.f32 %v1640, 1e-05
      %v1643 = vrsqrt.pop %v1641
      %v1644 = vmul.f32 %v1643, %v1641
      %v1645 = vmul.f32 %v1644, %v1643
      %v1646 = vmul.f32 0.5, %v1645
      %v1647 = vsub.f32 1.5, %v1646
      %v1648 = vmul.f32 %v1643, %v1647
      %vm1649 = vweird.f32 %v1641
      %vm1650 = vweird.f32 %v1643
      %vm1651 = vmor %vm1649, %vm1650
      %v1652 = vsel %vm1651, %v1643, %v1648
      %v1653 = vrsqrt.pop %v1642
      %v1654 = vmul.f32 %v1653, %v1642
      %v1655 = vmul.f32 %v1654, %v1653
      %v1656 = vmul.f32 0.5, %v1655
      %v1657 = vsub.f32 1.5, %v1656
      %v1658 = vmul.f32 %v1653, %v1657
      %vm1659 = vweird.f32 %v1642
      %vm1660 = vweird.f32 %v1653
      %vm1661 = vmor %vm1659, %vm1660
      %v1662 = vsel %vm1661, %v1653, %v1658
      %v1663 = vmul.f32 %v1629, %v1652
      %v1664 = vmul.f32 %v1630, %v1662
      %v1666 = vperm.slane %v1619, 0
      %v1668 = vmul.f32 %v1663, %v1666
      %v1669 = vmul.f32 %v1664, %v1666
      %v1671 = vperm.slane %v1620, 0
      %v1673 = vadd.f32 %v1668, %v1671
      %v1674 = vadd.f32 %v1669, %v1671
      %1675 = vst.msk [vmem:[%s18] sm:$0xff] %vm793, %v1673
      %1676 = vst.msk [vmem:[%s18 + $0x8] sm:$0xff] %vm793, %v1674
      %p1677 = scmp.lt.s32.totalorder %s30, 1
      %s1678 = scalar_select %p1677, %s30, 1
      %s1679 = smul.addr %s1678, 2
      %s1680 = smul.addr %s1679, 8
      %s1681 = scalar_lea.vmem %s16, %s1680
      %p1682 = scmp.lt.s32.totalorder %s30, 1
      %s1683 = scalar_select %p1682, %s30, 1
      %s1684 = smul.addr %s1683, 2
      %s1685 = smul.addr %s1684, 8
      %s1686 = scalar_lea.vmem %s17, %s1685
      // Predicated region
      $region89: #{translation_model_forward.2} parent=83 // pred_check
        %p1687 = pneg %p444
      $region90: #{translation_model_forward.2} parent=83 // pred_check_branch
        %1689 = sbr.rel (%p1687) target = $region92
      $region91: #{translation_model_forward.2} parent=83 // pred_region
        _
      $region92: #{translation_model_forward.2} parent=83 // pred_fallthru
        _
      // Predicated region
      $region93: #{translation_model_forward.2} parent=83 // pred_check
        %p1690 = pneg %p470
      $region94: #{translation_model_forward.2} parent=83 // pred_check_branch
        %1692 = sbr.rel (%p1690) target = $region96
      $region95: #{translation_model_forward.2} parent=83 // pred_region
        _
      $region96: #{translation_model_forward.2} parent=83 // pred_fallthru
        _
      // Predicated region
      $region97: #{translation_model_forward.2} parent=83 // pred_check
        %p1693 = pneg %p491
      $region98: #{translation_model_forward.2} parent=83 // pred_check_branch
        %1695 = sbr.rel (%p1693) target = $region100
      $region99: #{translation_model_forward.2} parent=83 // pred_region
        _
      $region100: #{translation_model_forward.2} parent=83 // pred_fallthru
        _
      // Predicated region
      $region101: #{translation_model_forward.2} parent=83 // pred_check
        %p1696 = pneg %p491
      $region102: #{translation_model_forward.2} parent=83 // pred_check_branch
        %1698 = sbr.rel (%p1696) target = $region104
      $region103: #{translation_model_forward.2} parent=83 // pred_region
        _
      $region104: #{translation_model_forward.2} parent=83 // pred_fallthru
        _
    $region84: #{translation_model_forward.2} parent=5 // pred_fallthru
      _
    %p1699 = scmp.le.s32.totalorder 2, %s25
    // Predicated region
    $region105: #{translation_model_forward.2} parent=5 // pred_check
      %p1700 = pneg %p1699
    $region106: #{translation_model_forward.2} parent=5 // pred_check_branch
      %1702 = sbr.rel (%p1700) target = $region108
    $region107: #{translation_model_forward.2} parent=5 // pred_region
      %s1703 = ssub.s32 %s25, 2
      // Predicated region
      $region109: #{translation_model_forward.2} parent=107 // pred_check
        %p1704 = pneg %p450
      $region110: #{translation_model_forward.2} parent=107 // pred_check_branch
        %1706 = sbr.rel (%p1704) target = $region112
      $region111: #{translation_model_forward.2} parent=107 // pred_region
        %p1707 = scmp.lt.s32.totalorder %s31, 1
        %s1708 = scalar_select %p1707, %s31, 1
        %s1709 = smul.addr %s1708, 2
        %s1710 = smul.addr %s1709, 8
        %s1711 = scalar_lea.vmem %s16, %s1710
      $region112: #{translation_model_forward.2} parent=107 // pred_fallthru
        _
      // Predicated region
      $region113: #{translation_model_forward.2} parent=107 // pred_check
        %p1712 = pneg %p476
      $region114: #{translation_model_forward.2} parent=107 // pred_check_branch
        %1714 = sbr.rel (%p1712) target = $region116
      $region115: #{translation_model_forward.2} parent=107 // pred_region
        %p1715 = scmp.lt.s32.totalorder %s31, 1
        %s1716 = scalar_select %p1715, %s31, 1
        %s1717 = smul.addr %s1716, 2
        %s1718 = smul.addr %s1717, 8
        %s1719 = scalar_lea.vmem %s17, %s1718
      $region116: #{translation_model_forward.2} parent=107 // pred_fallthru
        _
    $region108: #{translation_model_forward.2} parent=5 // pred_fallthru
      _
  $region6: #{translation_model_forward.2} parent=0 // loop_footer
    %s29 = sadd.s32 1, %s25
  $region7: #{translation_model_forward.2} parent=0 // loop_footer_branch
    %24 = sbr.rel target = $region3
  $region8: #{translation_model_forward.2} parent=0 // loop_exit
    _

// kernel: translation_model_forward.3
$region0: #{translation_model_forward.3}
  #allocation0 [shape = 'u32[]', space=smem, size = 0x4, offset = 0x4, fixed_abs, tag = 'smem constant byte address 0x4 - core index']
  #allocation1 [shape = 'u32[72,128]{1,0:T(1,128)}', space=vmem, size = 0x9000, scoped, tag = 'internal scratch']
  #allocation2 [shape = 'f32[16,32]{1,0:T(8,128)}', space=vmem, size = 0x2000, scoped, tag = 'scratch operand']
  #allocation3 [shape = 'f32[16,32]{1,0:T(8,128)}', space=vmem, size = 0x2000, scoped, tag = 'scratch operand']
  %s0 = inlined_call_operand.smem [shape: u32[30], index: -1, kind: input, shape index: {}]
  %s1 = sld [smem:[%s0]]
  %s2 = scalar_lea.smem %s0, 1
  %s3 = sld [smem:[%s2]]
  %s4 = scalar_lea.smem %s0, 2
  %s5 = sld [smem:[%s4]]
  %s6 = scalar_lea.smem %s0, 3
  %s7 = sld [smem:[%s6]]
  %s8 = scalar_lea.smem %s0, 4
  %s9 = sld [smem:[%s8]]
  %s10 = scalar_lea.smem %s0, 5
  %s11 = sld [smem:[%s10]]
  %s12 = scalar_lea.smem %s0, 6
  %s13 = sld [smem:[%s12]]
  %s14 = scalar_lea.smem %s0, 7
  %s15 = sld [smem:[%s14]]
  %s16 = scalar_lea.smem %s0, 8
  %s17 = sld [smem:[%s16]]
  %s18 = scalar_lea.smem %s0, 9
  %s19 = sld [smem:[%s18]]
  %s20 = scalar_lea.smem %s0, 10
  %s21 = sld [smem:[%s20]]
  %s22 = scalar_lea.smem %s0, 11
  %s23 = sld [smem:[%s22]]
  %s24 = scalar_lea.smem %s0, 12
  %s25 = sld [smem:[%s24]]
  %s26 = scalar_lea.smem %s0, 13
  %s27 = sld [smem:[%s26]]
  %s28 = scalar_lea.smem %s0, 14
  %s29 = sld [smem:[%s28]]
  %s30 = scalar_lea.smem %s0, 15
  %s31 = sld [smem:[%s30]]
  %s32 = scalar_lea.smem %s0, 16
  %s33 = sld [smem:[%s32]]
  %s34 = scalar_lea.smem %s0, 17
  %s35 = sld [smem:[%s34]]
  %s36 = scalar_lea.smem %s0, 18
  %s37 = sld [smem:[%s36]]
  %s38 = scalar_lea.smem %s0, 19
  %s39 = sld [smem:[%s38]]
  %s40 = scalar_lea.smem %s0, 20
  %s41 = sld [smem:[%s40]]
  %s42 = scalar_lea.smem %s0, 21
  %s43 = sld [smem:[%s42]]
  %s44 = scalar_lea.smem %s0, 22
  %s45 = sld [smem:[%s44]]
  %s46 = scalar_lea.smem %s0, 23
  %s47 = sld [smem:[%s46]]
  %s48 = scalar_lea.smem %s0, 24
  %s49 = sld [smem:[%s48]]
  %s50 = scalar_lea.smem %s0, 25
  %s51 = sld [smem:[%s50]]
  %s52 = scalar_lea.smem %s0, 26
  %s53 = sld [smem:[%s52]]
  %s54 = scalar_lea.smem %s0, 27
  %s55 = sld [smem:[%s54]]
  %s56 = scalar_lea.smem %s0, 28
  %s57 = sld [smem:[%s56]]
  %s58 = scalar_lea.smem %s0, 29
  %s59 = sld [smem:[%s58]]
  %60 = xla_tuple %s53, %s55, %s57, %s59
  %s61 = sld [smem:[#allocation0]]
  $region165: #{translation_model_forward.3} parent=0
    _
  %s63 = ssub.s32 1, %s61
  %s64 = scalar_select 0, %s63, %s61
  $region1: #{translation_model_forward.3} parent=0
    #allocation4 [shape = 'u8[8192]{0}', space=vmem, size = 0x2000, scoped, tag = 'output window, operand 3, single buffered']
    #allocation5 [shape = 's32[2]{0}', space=sflag, size = 0x8, scoped, tag = 'scoped memory for translation_model_forward.3']
    %65 = vsyncpa [#allocation5], 0
    loop: start=0, step=1, limit=4
    $region2: #{translation_model_forward.3} parent=1 // loop_pre_header
      _
    $region3: #{translation_model_forward.3} parent=1 // loop_header
      %s67 = sphi 0, %s71
      %p68 = scmp.ge.s32.totalorder %s67, 4
      %s75 = sphi 0, %s75
      %s77 = sphi 0, %s75
      %s78 = sphi 0, %s77
      %s92 = sphi 0, %s78
      %s96 = sphi 0, %s96
      %s98 = sphi 0, %s96
      %s99 = sphi 0, %s98
      %s113 = sphi 0, %s99
      %s117 = sphi 0, %s117
      %s119 = sphi 0, %s117
      %s120 = sphi 0, %s119
      %s134 = sphi 0, %s120
      %s138 = sphi 0, %s138
      %s140 = sphi 0, %s138
      %s141 = sphi 0, %s140
      %s155 = sphi 0, %s141
      %s161 = sphi 0, %s163
      %s164 = sphi 0, %s161
      %s165 = sphi 0, %s164
      %s181 = sphi 0, %s165
      %s187 = sphi 0, %s189
      %s190 = sphi 0, %s187
      %s191 = sphi 0, %s190
      %s207 = sphi 0, %s191
      %s213 = sphi 0, %s215
      %s216 = sphi 0, %s213
      %s217 = sphi 0, %s216
      %s233 = sphi 0, %s217
      %s239 = sphi 0, %s241
      %s242 = sphi 0, %s239
      %s243 = sphi 0, %s242
      %s259 = sphi 0, %s243
      %s265 = sphi 0, %s267
      %s268 = sphi 0, %s265
      %s269 = sphi 0, %s268
      %s285 = sphi 0, %s269
      %s291 = sphi 0, %s293
      %s294 = sphi 0, %s291
      %s295 = sphi 0, %s294
      %s311 = sphi 0, %s295
      %s317 = sphi 0, %s319
      %s320 = sphi 0, %s317
      %s321 = sphi 0, %s320
      %s337 = sphi 0, %s321
      %s343 = sphi 0, %s345
      %s346 = sphi 0, %s343
      %s347 = sphi 0, %s346
      %s363 = sphi 0, %s347
      %s369 = sphi 0, %s371
      %s372 = sphi 0, %s369
      %s373 = sphi 0, %s372
      %s389 = sphi 0, %s373
      %s395 = sphi 0, %s397
      %s398 = sphi 0, %s395
      %s399 = sphi 0, %s398
      %s415 = sphi 0, %s399
      %s421 = sphi 0, %s423
      %s424 = sphi 0, %s421
      %s425 = sphi 0, %s424
      %s441 = sphi 0, %s425
      %s447 = sphi 0, %s449
      %s450 = sphi 0, %s447
      %s451 = sphi 0, %s450
      %s467 = sphi 0, %s451
      %s473 = sphi 0, %s475
      %s476 = sphi 0, %s473
      %s477 = sphi 0, %s476
      %s493 = sphi 0, %s477
      %s499 = sphi 0, %s501
      %s502 = sphi 0, %s499
      %s503 = sphi 0, %s502
      %s519 = sphi 0, %s503
      %s525 = sphi 0, %s527
      %s528 = sphi 0, %s525
      %s529 = sphi 0, %s528
      %s545 = sphi 0, %s529
      %s551 = sphi 0, %s553
      %s554 = sphi 0, %s551
      %s555 = sphi 0, %s554
      %s571 = sphi 0, %s555
      %s577 = sphi 0, %s579
      %s580 = sphi 0, %s577
      %s581 = sphi 0, %s580
      %s597 = sphi 0, %s581
      %s603 = sphi 0, %s605
      %s606 = sphi 0, %s603
      %s607 = sphi 0, %s606
      %s623 = sphi 0, %s607
      %s629 = sphi 0, %s631
      %s632 = sphi 0, %s629
      %s633 = sphi 0, %s632
      %s649 = sphi 0, %s633
      %s655 = sphi 0, %s657
      %s658 = sphi 0, %s655
      %s659 = sphi 0, %s658
      %s675 = sphi 0, %s659
      %s679 = sphi 0, %s679
      %s681 = sphi 0, %s679
      %s682 = sphi 0, %s681
      %s696 = sphi 0, %s682
      %s700 = sphi 0, %s700
      %s702 = sphi 0, %s700
      %s703 = sphi 0, %s702
      %s717 = sphi 0, %s703
      %s723 = sphi 0, %s725
      %s726 = sphi 0, %s723
      %s727 = sphi 0, %s726
      %s743 = sphi 0, %s727
      %s749 = sphi 0, %s751
      %s752 = sphi 0, %s749
      %s753 = sphi 0, %s752
      %s769 = sphi 0, %s753
      %s775 = sphi 0, %s777
      %s778 = sphi 0, %s775
      %s779 = sphi 0, %s778
      %s795 = sphi 0, %s779
      %s799 = sphi 0, %s799
      %s801 = sphi 0, %s799
      %s802 = sphi 0, %s801
      %s816 = sphi 0, %s802
    $region4: #{translation_model_forward.3} parent=1 // loop_header_branch
      %70 = sbr.rel (%p68) target = $region8
    $region5: #{translation_model_forward.3} parent=1 // loop_body
      %s72 = ssub.s32 %s67, 1
      %s73 = ssub.s32 %s67, 2
      %s74 = sadd.s32 %s67, 1
      %s76 = sadd.s32 %s75, 1
      %p79 = scmp.eq.s32.totalorder %s67, 1
      %p80 = scmp.ne.s32.totalorder %s75, %s77
      %p81 = scmp.eq.s32.totalorder %s67, 0
      %p82 = por %p80, %p81
      %p83 = scmp.ne.s32.totalorder %s75, %s77
      %p84 = scmp.eq.s32.totalorder %s72, 1
      %p85 = por %p83, %p84
      %p86 = scmp.ne.s32.totalorder %s77, %s78
      %p87 = scmp.eq.s32.totalorder %s72, 0
      %p88 = por %p86, %p87
      %p89 = scmp.ne.s32.totalorder %s77, %s78
      %p90 = scmp.eq.s32.totalorder %s73, 1
      %p91 = por %p89, %p90
      %p93 = scmp.ne.s32.totalorder %s78, %s92
      %p94 = scmp.eq.s32.totalorder %s73, 0
      %p95 = por %p93, %p94
      %s97 = sadd.s32 %s96, 1
      %p100 = scmp.eq.s32.totalorder %s67, 1
      %p101 = scmp.ne.s32.totalorder %s96, %s98
      %p102 = scmp.eq.s32.totalorder %s67, 0
      %p103 = por %p101, %p102
      %p104 = scmp.ne.s32.totalorder %s96, %s98
      %p105 = scmp.eq.s32.totalorder %s72, 1
      %p106 = por %p104, %p105
      %p107 = scmp.ne.s32.totalorder %s98, %s99
      %p108 = scmp.eq.s32.totalorder %s72, 0
      %p109 = por %p107, %p108
      %p110 = scmp.ne.s32.totalorder %s98, %s99
      %p111 = scmp.eq.s32.totalorder %s73, 1
      %p112 = por %p110, %p111
      %p114 = scmp.ne.s32.totalorder %s99, %s113
      %p115 = scmp.eq.s32.totalorder %s73, 0
      %p116 = por %p114, %p115
      %s118 = sadd.s32 %s117, 1
      %p121 = scmp.eq.s32.totalorder %s67, 1
      %p122 = scmp.ne.s32.totalorder %s117, %s119
      %p123 = scmp.eq.s32.totalorder %s67, 0
      %p124 = por %p122, %p123
      %p125 = scmp.ne.s32.totalorder %s117, %s119
      %p126 = scmp.eq.s32.totalorder %s72, 1
      %p127 = por %p125, %p126
      %p128 = scmp.ne.s32.totalorder %s119, %s120
      %p129 = scmp.eq.s32.totalorder %s72, 0
      %p130 = por %p128, %p129
      %p131 = scmp.ne.s32.totalorder %s119, %s120
      %p132 = scmp.eq.s32.totalorder %s73, 1
      %p133 = por %p131, %p132
      %p135 = scmp.ne.s32.totalorder %s120, %s134
      %p136 = scmp.eq.s32.totalorder %s73, 0
      %p137 = por %p135, %p136
      %s139 = sadd.s32 %s138, 1
      %p142 = scmp.eq.s32.totalorder %s67, 1
      %p143 = scmp.ne.s32.totalorder %s138, %s140
      %p144 = scmp.eq.s32.totalorder %s67, 0
      %p145 = por %p143, %p144
      %p146 = scmp.ne.s32.totalorder %s138, %s140
      %p147 = scmp.eq.s32.totalorder %s72, 1
      %p148 = por %p146, %p147
      %p149 = scmp.ne.s32.totalorder %s140, %s141
      %p150 = scmp.eq.s32.totalorder %s72, 0
      %p151 = por %p149, %p150
      %p152 = scmp.ne.s32.totalorder %s140, %s141
      %p153 = scmp.eq.s32.totalorder %s73, 1
      %p154 = por %p152, %p153
      %p156 = scmp.ne.s32.totalorder %s141, %s155
      %p157 = scmp.eq.s32.totalorder %s73, 0
      %p158 = por %p156, %p157
      %s159 = ssub.s32 %s67, %s74
      %p160 = scmp.eq.s32.totalorder %s159, 0
      %s162 = sadd.s32 %s161, 1
      %s163 = scalar_select %p160, %s161, %s162
      %p166 = pneg %p160
      %p167 = scmp.eq.s32.totalorder %s67, 1
      %p168 = por %p166, %p167
      %p169 = scmp.ne.s32.totalorder %s161, %s164
      %p170 = scmp.eq.s32.totalorder %s67, 0
      %p171 = por %p169, %p170
      %p172 = scmp.ne.s32.totalorder %s161, %s164
      %p173 = scmp.eq.s32.totalorder %s72, 1
      %p174 = por %p172, %p173
      %p175 = scmp.ne.s32.totalorder %s164, %s165
      %p176 = scmp.eq.s32.totalorder %s72, 0
      %p177 = por %p175, %p176
      %p178 = scmp.ne.s32.totalorder %s164, %s165
      %p179 = scmp.eq.s32.totalorder %s73, 1
      %p180 = por %p178, %p179
      %p182 = scmp.ne.s32.totalorder %s165, %s181
      %p183 = scmp.eq.s32.totalorder %s73, 0
      %p184 = por %p182, %p183
      %s185 = ssub.s32 %s67, %s74
      %p186 = scmp.eq.s32.totalorder %s185, 0
      %s188 = sadd.s32 %s187, 1
      %s189 = scalar_select %p186, %s187, %s188
      %p192 = pneg %p186
      %p193 = scmp.eq.s32.totalorder %s67, 1
      %p194 = por %p192, %p193
      %p195 = scmp.ne.s32.totalorder %s187, %s190
      %p196 = scmp.eq.s32.totalorder %s67, 0
      %p197 = por %p195, %p196
      %p198 = scmp.ne.s32.totalorder %s187, %s190
      %p199 = scmp.eq.s32.totalorder %s72, 1
      %p200 = por %p198, %p199
      %p201 = scmp.ne.s32.totalorder %s190, %s191
      %p202 = scmp.eq.s32.totalorder %s72, 0
      %p203 = por %p201, %p202
      %p204 = scmp.ne.s32.totalorder %s190, %s191
      %p205 = scmp.eq.s32.totalorder %s73, 1
      %p206 = por %p204, %p205
      %p208 = scmp.ne.s32.totalorder %s191, %s207
      %p209 = scmp.eq.s32.totalorder %s73, 0
      %p210 = por %p208, %p209
      %s211 = ssub.s32 %s67, %s74
      %p212 = scmp.eq.s32.totalorder %s211, 0
      %s214 = sadd.s32 %s213, 1
      %s215 = scalar_select %p212, %s213, %s214
      %p218 = pneg %p212
      %p219 = scmp.eq.s32.totalorder %s67, 1
      %p220 = por %p218, %p219
      %p221 = scmp.ne.s32.totalorder %s213, %s216
      %p222 = scmp.eq.s32.totalorder %s67, 0
      %p223 = por %p221, %p222
      %p224 = scmp.ne.s32.totalorder %s213, %s216
      %p225 = scmp.eq.s32.totalorder %s72, 1
      %p226 = por %p224, %p225
      %p227 = scmp.ne.s32.totalorder %s216, %s217
      %p228 = scmp.eq.s32.totalorder %s72, 0
      %p229 = por %p227, %p228
      %p230 = scmp.ne.s32.totalorder %s216, %s217
      %p231 = scmp.eq.s32.totalorder %s73, 1
      %p232 = por %p230, %p231
      %p234 = scmp.ne.s32.totalorder %s217, %s233
      %p235 = scmp.eq.s32.totalorder %s73, 0
      %p236 = por %p234, %p235
      %s237 = ssub.s32 %s67, %s74
      %p238 = scmp.eq.s32.totalorder %s237, 0
      %s240 = sadd.s32 %s239, 1
      %s241 = scalar_select %p238, %s239, %s240
      %p244 = pneg %p238
      %p245 = scmp.eq.s32.totalorder %s67, 1
      %p246 = por %p244, %p245
      %p247 = scmp.ne.s32.totalorder %s239, %s242
      %p248 = scmp.eq.s32.totalorder %s67, 0
      %p249 = por %p247, %p248
      %p250 = scmp.ne.s32.totalorder %s239, %s242
      %p251 = scmp.eq.s32.totalorder %s72, 1
      %p252 = por %p250, %p251
      %p253 = scmp.ne.s32.totalorder %s242, %s243
      %p254 = scmp.eq.s32.totalorder %s72, 0
      %p255 = por %p253, %p254
      %p256 = scmp.ne.s32.totalorder %s242, %s243
      %p257 = scmp.eq.s32.totalorder %s73, 1
      %p258 = por %p256, %p257
      %p260 = scmp.ne.s32.totalorder %s243, %s259
      %p261 = scmp.eq.s32.totalorder %s73, 0
      %p262 = por %p260, %p261
      %s263 = ssub.s32 %s67, %s74
      %p264 = scmp.eq.s32.totalorder %s263, 0
      %s266 = sadd.s32 %s265, 1
      %s267 = scalar_select %p264, %s265, %s266
      %p270 = pneg %p264
      %p271 = scmp.eq.s32.totalorder %s67, 1
      %p272 = por %p270, %p271
      %p273 = scmp.ne.s32.totalorder %s265, %s268
      %p274 = scmp.eq.s32.totalorder %s67, 0
      %p275 = por %p273, %p274
      %p276 = scmp.ne.s32.totalorder %s265, %s268
      %p277 = scmp.eq.s32.totalorder %s72, 1
      %p278 = por %p276, %p277
      %p279 = scmp.ne.s32.totalorder %s268, %s269
      %p280 = scmp.eq.s32.totalorder %s72, 0
      %p281 = por %p279, %p280
      %p282 = scmp.ne.s32.totalorder %s268, %s269
      %p283 = scmp.eq.s32.totalorder %s73, 1
      %p284 = por %p282, %p283
      %p286 = scmp.ne.s32.totalorder %s269, %s285
      %p287 = scmp.eq.s32.totalorder %s73, 0
      %p288 = por %p286, %p287
      %s289 = ssub.s32 %s67, %s74
      %p290 = scmp.eq.s32.totalorder %s289, 0
      %s292 = sadd.s32 %s291, 1
      %s293 = scalar_select %p290, %s291, %s292
      %p296 = pneg %p290
      %p297 = scmp.eq.s32.totalorder %s67, 1
      %p298 = por %p296, %p297
      %p299 = scmp.ne.s32.totalorder %s291, %s294
      %p300 = scmp.eq.s32.totalorder %s67, 0
      %p301 = por %p299, %p300
      %p302 = scmp.ne.s32.totalorder %s291, %s294
      %p303 = scmp.eq.s32.totalorder %s72, 1
      %p304 = por %p302, %p303
      %p305 = scmp.ne.s32.totalorder %s294, %s295
      %p306 = scmp.eq.s32.totalorder %s72, 0
      %p307 = por %p305, %p306
      %p308 = scmp.ne.s32.totalorder %s294, %s295
      %p309 = scmp.eq.s32.totalorder %s73, 1
      %p310 = por %p308, %p309
      %p312 = scmp.ne.s32.totalorder %s295, %s311
      %p313 = scmp.eq.s32.totalorder %s73, 0
      %p314 = por %p312, %p313
      %s315 = ssub.s32 %s67, %s74
      %p316 = scmp.eq.s32.totalorder %s315, 0
      %s318 = sadd.s32 %s317, 1
      %s319 = scalar_select %p316, %s317, %s318
      %p322 = pneg %p316
      %p323 = scmp.eq.s32.totalorder %s67, 1
      %p324 = por %p322, %p323
      %p325 = scmp.ne.s32.totalorder %s317, %s320
      %p326 = scmp.eq.s32.totalorder %s67, 0
      %p327 = por %p325, %p326
      %p328 = scmp.ne.s32.totalorder %s317, %s320
      %p329 = scmp.eq.s32.totalorder %s72, 1
      %p330 = por %p328, %p329
      %p331 = scmp.ne.s32.totalorder %s320, %s321
      %p332 = scmp.eq.s32.totalorder %s72, 0
      %p333 = por %p331, %p332
      %p334 = scmp.ne.s32.totalorder %s320, %s321
      %p335 = scmp.eq.s32.totalorder %s73, 1
      %p336 = por %p334, %p335
      %p338 = scmp.ne.s32.totalorder %s321, %s337
      %p339 = scmp.eq.s32.totalorder %s73, 0
      %p340 = por %p338, %p339
      %s341 = ssub.s32 %s67, %s74
      %p342 = scmp.eq.s32.totalorder %s341, 0
      %s344 = sadd.s32 %s343, 1
      %s345 = scalar_select %p342, %s343, %s344
      %p348 = pneg %p342
      %p349 = scmp.eq.s32.totalorder %s67, 1
      %p350 = por %p348, %p349
      %p351 = scmp.ne.s32.totalorder %s343, %s346
      %p352 = scmp.eq.s32.totalorder %s67, 0
      %p353 = por %p351, %p352
      %p354 = scmp.ne.s32.totalorder %s343, %s346
      %p355 = scmp.eq.s32.totalorder %s72, 1
      %p356 = por %p354, %p355
      %p357 = scmp.ne.s32.totalorder %s346, %s347
      %p358 = scmp.eq.s32.totalorder %s72, 0
      %p359 = por %p357, %p358
      %p360 = scmp.ne.s32.totalorder %s346, %s347
      %p361 = scmp.eq.s32.totalorder %s73, 1
      %p362 = por %p360, %p361
      %p364 = scmp.ne.s32.totalorder %s347, %s363
      %p365 = scmp.eq.s32.totalorder %s73, 0
      %p366 = por %p364, %p365
      %s367 = ssub.s32 %s67, %s74
      %p368 = scmp.eq.s32.totalorder %s367, 0
      %s370 = sadd.s32 %s369, 1
      %s371 = scalar_select %p368, %s369, %s370
      %p374 = pneg %p368
      %p375 = scmp.eq.s32.totalorder %s67, 1
      %p376 = por %p374, %p375
      %p377 = scmp.ne.s32.totalorder %s369, %s372
      %p378 = scmp.eq.s32.totalorder %s67, 0
      %p379 = por %p377, %p378
      %p380 = scmp.ne.s32.totalorder %s369, %s372
      %p381 = scmp.eq.s32.totalorder %s72, 1
      %p382 = por %p380, %p381
      %p383 = scmp.ne.s32.totalorder %s372, %s373
      %p384 = scmp.eq.s32.totalorder %s72, 0
      %p385 = por %p383, %p384
      %p386 = scmp.ne.s32.totalorder %s372, %s373
      %p387 = scmp.eq.s32.totalorder %s73, 1
      %p388 = por %p386, %p387
      %p390 = scmp.ne.s32.totalorder %s373, %s389
      %p391 = scmp.eq.s32.totalorder %s73, 0
      %p392 = por %p390, %p391
      %s393 = ssub.s32 %s67, %s74
      %p394 = scmp.eq.s32.totalorder %s393, 0
      %s396 = sadd.s32 %s395, 1
      %s397 = scalar_select %p394, %s395, %s396
      %p400 = pneg %p394
      %p401 = scmp.eq.s32.totalorder %s67, 1
      %p402 = por %p400, %p401
      %p403 = scmp.ne.s32.totalorder %s395, %s398
      %p404 = scmp.eq.s32.totalorder %s67, 0
      %p405 = por %p403, %p404
      %p406 = scmp.ne.s32.totalorder %s395, %s398
      %p407 = scmp.eq.s32.totalorder %s72, 1
      %p408 = por %p406, %p407
      %p409 = scmp.ne.s32.totalorder %s398, %s399
      %p410 = scmp.eq.s32.totalorder %s72, 0
      %p411 = por %p409, %p410
      %p412 = scmp.ne.s32.totalorder %s398, %s399
      %p413 = scmp.eq.s32.totalorder %s73, 1
      %p414 = por %p412, %p413
      %p416 = scmp.ne.s32.totalorder %s399, %s415
      %p417 = scmp.eq.s32.totalorder %s73, 0
      %p418 = por %p416, %p417
      %s419 = ssub.s32 %s67, %s74
      %p420 = scmp.eq.s32.totalorder %s419, 0
      %s422 = sadd.s32 %s421, 1
      %s423 = scalar_select %p420, %s421, %s422
      %p426 = pneg %p420
      %p427 = scmp.eq.s32.totalorder %s67, 1
      %p428 = por %p426, %p427
      %p429 = scmp.ne.s32.totalorder %s421, %s424
      %p430 = scmp.eq.s32.totalorder %s67, 0
      %p431 = por %p429, %p430
      %p432 = scmp.ne.s32.totalorder %s421, %s424
      %p433 = scmp.eq.s32.totalorder %s72, 1
      %p434 = por %p432, %p433
      %p435 = scmp.ne.s32.totalorder %s424, %s425
      %p436 = scmp.eq.s32.totalorder %s72, 0
      %p437 = por %p435, %p436
      %p438 = scmp.ne.s32.totalorder %s424, %s425
      %p439 = scmp.eq.s32.totalorder %s73, 1
      %p440 = por %p438, %p439
      %p442 = scmp.ne.s32.totalorder %s425, %s441
      %p443 = scmp.eq.s32.totalorder %s73, 0
      %p444 = por %p442, %p443
      %s445 = ssub.s32 %s67, %s74
      %p446 = scmp.eq.s32.totalorder %s445, 0
      %s448 = sadd.s32 %s447, 1
      %s449 = scalar_select %p446, %s447, %s448
      %p452 = pneg %p446
      %p453 = scmp.eq.s32.totalorder %s67, 1
      %p454 = por %p452, %p453
      %p455 = scmp.ne.s32.totalorder %s447, %s450
      %p456 = scmp.eq.s32.totalorder %s67, 0
      %p457 = por %p455, %p456
      %p458 = scmp.ne.s32.totalorder %s447, %s450
      %p459 = scmp.eq.s32.totalorder %s72, 1
      %p460 = por %p458, %p459
      %p461 = scmp.ne.s32.totalorder %s450, %s451
      %p462 = scmp.eq.s32.totalorder %s72, 0
      %p463 = por %p461, %p462
      %p464 = scmp.ne.s32.totalorder %s450, %s451
      %p465 = scmp.eq.s32.totalorder %s73, 1
      %p466 = por %p464, %p465
      %p468 = scmp.ne.s32.totalorder %s451, %s467
      %p469 = scmp.eq.s32.totalorder %s73, 0
      %p470 = por %p468, %p469
      %s471 = ssub.s32 %s67, %s74
      %p472 = scmp.eq.s32.totalorder %s471, 0
      %s474 = sadd.s32 %s473, 1
      %s475 = scalar_select %p472, %s473, %s474
      %p478 = pneg %p472
      %p479 = scmp.eq.s32.totalorder %s67, 1
      %p480 = por %p478, %p479
      %p481 = scmp.ne.s32.totalorder %s473, %s476
      %p482 = scmp.eq.s32.totalorder %s67, 0
      %p483 = por %p481, %p482
      %p484 = scmp.ne.s32.totalorder %s473, %s476
      %p485 = scmp.eq.s32.totalorder %s72, 1
      %p486 = por %p484, %p485
      %p487 = scmp.ne.s32.totalorder %s476, %s477
      %p488 = scmp.eq.s32.totalorder %s72, 0
      %p489 = por %p487, %p488
      %p490 = scmp.ne.s32.totalorder %s476, %s477
      %p491 = scmp.eq.s32.totalorder %s73, 1
      %p492 = por %p490, %p491
      %p494 = scmp.ne.s32.totalorder %s477, %s493
      %p495 = scmp.eq.s32.totalorder %s73, 0
      %p496 = por %p494, %p495
      %s497 = ssub.s32 %s67, %s74
      %p498 = scmp.eq.s32.totalorder %s497, 0
      %s500 = sadd.s32 %s499, 1
      %s501 = scalar_select %p498, %s499, %s500
      %p504 = pneg %p498
      %p505 = scmp.eq.s32.totalorder %s67, 1
      %p506 = por %p504, %p505
      %p507 = scmp.ne.s32.totalorder %s499, %s502
      %p508 = scmp.eq.s32.totalorder %s67, 0
      %p509 = por %p507, %p508
      %p510 = scmp.ne.s32.totalorder %s499, %s502
      %p511 = scmp.eq.s32.totalorder %s72, 1
      %p512 = por %p510, %p511
      %p513 = scmp.ne.s32.totalorder %s502, %s503
      %p514 = scmp.eq.s32.totalorder %s72, 0
      %p515 = por %p513, %p514
      %p516 = scmp.ne.s32.totalorder %s502, %s503
      %p517 = scmp.eq.s32.totalorder %s73, 1
      %p518 = por %p516, %p517
      %p520 = scmp.ne.s32.totalorder %s503, %s519
      %p521 = scmp.eq.s32.totalorder %s73, 0
      %p522 = por %p520, %p521
      %s523 = ssub.s32 %s67, %s74
      %p524 = scmp.eq.s32.totalorder %s523, 0
      %s526 = sadd.s32 %s525, 1
      %s527 = scalar_select %p524, %s525, %s526
      %p530 = pneg %p524
      %p531 = scmp.eq.s32.totalorder %s67, 1
      %p532 = por %p530, %p531
      %p533 = scmp.ne.s32.totalorder %s525, %s528
      %p534 = scmp.eq.s32.totalorder %s67, 0
      %p535 = por %p533, %p534
      %p536 = scmp.ne.s32.totalorder %s525, %s528
      %p537 = scmp.eq.s32.totalorder %s72, 1
      %p538 = por %p536, %p537
      %p539 = scmp.ne.s32.totalorder %s528, %s529
      %p540 = scmp.eq.s32.totalorder %s72, 0
      %p541 = por %p539, %p540
      %p542 = scmp.ne.s32.totalorder %s528, %s529
      %p543 = scmp.eq.s32.totalorder %s73, 1
      %p544 = por %p542, %p543
      %p546 = scmp.ne.s32.totalorder %s529, %s545
      %p547 = scmp.eq.s32.totalorder %s73, 0
      %p548 = por %p546, %p547
      %s549 = ssub.s32 %s67, %s74
      %p550 = scmp.eq.s32.totalorder %s549, 0
      %s552 = sadd.s32 %s551, 1
      %s553 = scalar_select %p550, %s551, %s552
      %p556 = pneg %p550
      %p557 = scmp.eq.s32.totalorder %s67, 1
      %p558 = por %p556, %p557
      %p559 = scmp.ne.s32.totalorder %s551, %s554
      %p560 = scmp.eq.s32.totalorder %s67, 0
      %p561 = por %p559, %p560
      %p562 = scmp.ne.s32.totalorder %s551, %s554
      %p563 = scmp.eq.s32.totalorder %s72, 1
      %p564 = por %p562, %p563
      %p565 = scmp.ne.s32.totalorder %s554, %s555
      %p566 = scmp.eq.s32.totalorder %s72, 0
      %p567 = por %p565, %p566
      %p568 = scmp.ne.s32.totalorder %s554, %s555
      %p569 = scmp.eq.s32.totalorder %s73, 1
      %p570 = por %p568, %p569
      %p572 = scmp.ne.s32.totalorder %s555, %s571
      %p573 = scmp.eq.s32.totalorder %s73, 0
      %p574 = por %p572, %p573
      %s575 = ssub.s32 %s67, %s74
      %p576 = scmp.eq.s32.totalorder %s575, 0
      %s578 = sadd.s32 %s577, 1
      %s579 = scalar_select %p576, %s577, %s578
      %p582 = pneg %p576
      %p583 = scmp.eq.s32.totalorder %s67, 1
      %p584 = por %p582, %p583
      %p585 = scmp.ne.s32.totalorder %s577, %s580
      %p586 = scmp.eq.s32.totalorder %s67, 0
      %p587 = por %p585, %p586
      %p588 = scmp.ne.s32.totalorder %s577, %s580
      %p589 = scmp.eq.s32.totalorder %s72, 1
      %p590 = por %p588, %p589
      %p591 = scmp.ne.s32.totalorder %s580, %s581
      %p592 = scmp.eq.s32.totalorder %s72, 0
      %p593 = por %p591, %p592
      %p594 = scmp.ne.s32.totalorder %s580, %s581
      %p595 = scmp.eq.s32.totalorder %s73, 1
      %p596 = por %p594, %p595
      %p598 = scmp.ne.s32.totalorder %s581, %s597
      %p599 = scmp.eq.s32.totalorder %s73, 0
      %p600 = por %p598, %p599
      %s601 = ssub.s32 %s67, %s74
      %p602 = scmp.eq.s32.totalorder %s601, 0
      %s604 = sadd.s32 %s603, 1
      %s605 = scalar_select %p602, %s603, %s604
      %p608 = pneg %p602
      %p609 = scmp.eq.s32.totalorder %s67, 1
      %p610 = por %p608, %p609
      %p611 = scmp.ne.s32.totalorder %s603, %s606
      %p612 = scmp.eq.s32.totalorder %s67, 0
      %p613 = por %p611, %p612
      %p614 = scmp.ne.s32.totalorder %s603, %s606
      %p615 = scmp.eq.s32.totalorder %s72, 1
      %p616 = por %p614, %p615
      %p617 = scmp.ne.s32.totalorder %s606, %s607
      %p618 = scmp.eq.s32.totalorder %s72, 0
      %p619 = por %p617, %p618
      %p620 = scmp.ne.s32.totalorder %s606, %s607
      %p621 = scmp.eq.s32.totalorder %s73, 1
      %p622 = por %p620, %p621
      %p624 = scmp.ne.s32.totalorder %s607, %s623
      %p625 = scmp.eq.s32.totalorder %s73, 0
      %p626 = por %p624, %p625
      %s627 = ssub.s32 %s67, %s74
      %p628 = scmp.eq.s32.totalorder %s627, 0
      %s630 = sadd.s32 %s629, 1
      %s631 = scalar_select %p628, %s629, %s630
      %p634 = pneg %p628
      %p635 = scmp.eq.s32.totalorder %s67, 1
      %p636 = por %p634, %p635
      %p637 = scmp.ne.s32.totalorder %s629, %s632
      %p638 = scmp.eq.s32.totalorder %s67, 0
      %p639 = por %p637, %p638
      %p640 = scmp.ne.s32.totalorder %s629, %s632
      %p641 = scmp.eq.s32.totalorder %s72, 1
      %p642 = por %p640, %p641
      %p643 = scmp.ne.s32.totalorder %s632, %s633
      %p644 = scmp.eq.s32.totalorder %s72, 0
      %p645 = por %p643, %p644
      %p646 = scmp.ne.s32.totalorder %s632, %s633
      %p647 = scmp.eq.s32.totalorder %s73, 1
      %p648 = por %p646, %p647
      %p650 = scmp.ne.s32.totalorder %s633, %s649
      %p651 = scmp.eq.s32.totalorder %s73, 0
      %p652 = por %p650, %p651
      %s653 = ssub.s32 %s67, %s74
      %p654 = scmp.eq.s32.totalorder %s653, 0
      %s656 = sadd.s32 %s655, 1
      %s657 = scalar_select %p654, %s655, %s656
      %p660 = pneg %p654
      %p661 = scmp.eq.s32.totalorder %s67, 1
      %p662 = por %p660, %p661
      %p663 = scmp.ne.s32.totalorder %s655, %s658
      %p664 = scmp.eq.s32.totalorder %s67, 0
      %p665 = por %p663, %p664
      %p666 = scmp.ne.s32.totalorder %s655, %s658
      %p667 = scmp.eq.s32.totalorder %s72, 1
      %p668 = por %p666, %p667
      %p669 = scmp.ne.s32.totalorder %s658, %s659
      %p670 = scmp.eq.s32.totalorder %s72, 0
      %p671 = por %p669, %p670
      %p672 = scmp.ne.s32.totalorder %s658, %s659
      %p673 = scmp.eq.s32.totalorder %s73, 1
      %p674 = por %p672, %p673
      %p676 = scmp.ne.s32.totalorder %s659, %s675
      %p677 = scmp.eq.s32.totalorder %s73, 0
      %p678 = por %p676, %p677
      %s680 = sadd.s32 %s679, 1
      %p683 = scmp.eq.s32.totalorder %s67, 1
      %p684 = scmp.ne.s32.totalorder %s679, %s681
      %p685 = scmp.eq.s32.totalorder %s67, 0
      %p686 = por %p684, %p685
      %p687 = scmp.ne.s32.totalorder %s679, %s681
      %p688 = scmp.eq.s32.totalorder %s72, 1
      %p689 = por %p687, %p688
      %p690 = scmp.ne.s32.totalorder %s681, %s682
      %p691 = scmp.eq.s32.totalorder %s72, 0
      %p692 = por %p690, %p691
      %p693 = scmp.ne.s32.totalorder %s681, %s682
      %p694 = scmp.eq.s32.totalorder %s73, 1
      %p695 = por %p693, %p694
      %p697 = scmp.ne.s32.totalorder %s682, %s696
      %p698 = scmp.eq.s32.totalorder %s73, 0
      %p699 = por %p697, %p698
      %s701 = sadd.s32 %s700, 1
      %p704 = scmp.eq.s32.totalorder %s67, 1
      %p705 = scmp.ne.s32.totalorder %s700, %s702
      %p706 = scmp.eq.s32.totalorder %s67, 0
      %p707 = por %p705, %p706
      %p708 = scmp.ne.s32.totalorder %s700, %s702
      %p709 = scmp.eq.s32.totalorder %s72, 1
      %p710 = por %p708, %p709
      %p711 = scmp.ne.s32.totalorder %s702, %s703
      %p712 = scmp.eq.s32.totalorder %s72, 0
      %p713 = por %p711, %p712
      %p714 = scmp.ne.s32.totalorder %s702, %s703
      %p715 = scmp.eq.s32.totalorder %s73, 1
      %p716 = por %p714, %p715
      %p718 = scmp.ne.s32.totalorder %s703, %s717
      %p719 = scmp.eq.s32.totalorder %s73, 0
      %p720 = por %p718, %p719
      %s721 = ssub.s32 %s67, %s74
      %p722 = scmp.eq.s32.totalorder %s721, 0
      %s724 = sadd.s32 %s723, 1
      %s725 = scalar_select %p722, %s723, %s724
      %p728 = pneg %p722
      %p729 = scmp.eq.s32.totalorder %s67, 1
      %p730 = por %p728, %p729
      %p731 = scmp.ne.s32.totalorder %s723, %s726
      %p732 = scmp.eq.s32.totalorder %s67, 0
      %p733 = por %p731, %p732
      %p734 = scmp.ne.s32.totalorder %s723, %s726
      %p735 = scmp.eq.s32.totalorder %s72, 1
      %p736 = por %p734, %p735
      %p737 = scmp.ne.s32.totalorder %s726, %s727
      %p738 = scmp.eq.s32.totalorder %s72, 0
      %p739 = por %p737, %p738
      %p740 = scmp.ne.s32.totalorder %s726, %s727
      %p741 = scmp.eq.s32.totalorder %s73, 1
      %p742 = por %p740, %p741
      %p744 = scmp.ne.s32.totalorder %s727, %s743
      %p745 = scmp.eq.s32.totalorder %s73, 0
      %p746 = por %p744, %p745
      %s747 = ssub.s32 %s67, %s74
      %p748 = scmp.eq.s32.totalorder %s747, 0
      %s750 = sadd.s32 %s749, 1
      %s751 = scalar_select %p748, %s749, %s750
      %p754 = pneg %p748
      %p755 = scmp.eq.s32.totalorder %s67, 1
      %p756 = por %p754, %p755
      %p757 = scmp.ne.s32.totalorder %s749, %s752
      %p758 = scmp.eq.s32.totalorder %s67, 0
      %p759 = por %p757, %p758
      %p760 = scmp.ne.s32.totalorder %s749, %s752
      %p761 = scmp.eq.s32.totalorder %s72, 1
      %p762 = por %p760, %p761
      %p763 = scmp.ne.s32.totalorder %s752, %s753
      %p764 = scmp.eq.s32.totalorder %s72, 0
      %p765 = por %p763, %p764
      %p766 = scmp.ne.s32.totalorder %s752, %s753
      %p767 = scmp.eq.s32.totalorder %s73, 1
      %p768 = por %p766, %p767
      %p770 = scmp.ne.s32.totalorder %s753, %s769
      %p771 = scmp.eq.s32.totalorder %s73, 0
      %p772 = por %p770, %p771
      %s773 = ssub.s32 %s67, %s74
      %p774 = scmp.eq.s32.totalorder %s773, 0
      %s776 = sadd.s32 %s775, 1
      %s777 = scalar_select %p774, %s775, %s776
      %p780 = pneg %p774
      %p781 = scmp.eq.s32.totalorder %s67, 1
      %p782 = por %p780, %p781
      %p783 = scmp.ne.s32.totalorder %s775, %s778
      %p784 = scmp.eq.s32.totalorder %s67, 0
      %p785 = por %p783, %p784
      %p786 = scmp.ne.s32.totalorder %s775, %s778
      %p787 = scmp.eq.s32.totalorder %s72, 1
      %p788 = por %p786, %p787
      %p789 = scmp.ne.s32.totalorder %s778, %s779
      %p790 = scmp.eq.s32.totalorder %s72, 0
      %p791 = por %p789, %p790
      %p792 = scmp.ne.s32.totalorder %s778, %s779
      %p793 = scmp.eq.s32.totalorder %s73, 1
      %p794 = por %p792, %p793
      %p796 = scmp.ne.s32.totalorder %s779, %s795
      %p797 = scmp.eq.s32.totalorder %s73, 0
      %p798 = por %p796, %p797
      %s800 = sadd.s32 %s799, 1
      %p803 = scmp.eq.s32.totalorder %s67, 1
      %p804 = scmp.ne.s32.totalorder %s799, %s801
      %p805 = scmp.eq.s32.totalorder %s67, 0
      %p806 = por %p804, %p805
      %p807 = scmp.ne.s32.totalorder %s799, %s801
      %p808 = scmp.eq.s32.totalorder %s72, 1
      %p809 = por %p807, %p808
      %p810 = scmp.ne.s32.totalorder %s801, %s802
      %p811 = scmp.eq.s32.totalorder %s72, 0
      %p812 = por %p810, %p811
      %p813 = scmp.ne.s32.totalorder %s801, %s802
      %p814 = scmp.eq.s32.totalorder %s73, 1
      %p815 = por %p813, %p814
      %p817 = scmp.ne.s32.totalorder %s802, %s816
      %p818 = scmp.eq.s32.totalorder %s73, 0
      %p819 = por %p817, %p818
      %p820 = scmp.le.s32.totalorder 1, %s67
      %p821 = scmp.lt.s32.totalorder %s67, 3
      %p822 = pnand %p820, %p821
      %p823 = pneg %p822
      // Predicated region
      $region9: #{translation_model_forward.3} parent=5 // pred_check
        _
      $region10: #{translation_model_forward.3} parent=5 // pred_check_branch
        %825 = sbr.rel (%p822) target = $region12
      $region11: #{translation_model_forward.3} parent=5 // pred_region
        %s826 = ssub.s32 %s67, 1
        // Predicated region
        $region13: #{translation_model_forward.3} parent=11 // pred_check
          %p827 = pneg %p88
        $region14: #{translation_model_forward.3} parent=11 // pred_check_branch
          %829 = sbr.rel (%p827) target = $region16
        $region15: #{translation_model_forward.3} parent=11 // pred_region
          _
        $region16: #{translation_model_forward.3} parent=11 // pred_fallthru
          _
        // Predicated region
        $region17: #{translation_model_forward.3} parent=11 // pred_check
          %p830 = pneg %p109
        $region18: #{translation_model_forward.3} parent=11 // pred_check_branch
          %832 = sbr.rel (%p830) target = $region20
        $region19: #{translation_model_forward.3} parent=11 // pred_region
          _
        $region20: #{translation_model_forward.3} parent=11 // pred_fallthru
          _
        // Predicated region
        $region21: #{translation_model_forward.3} parent=11 // pred_check
          %p833 = pneg %p130
        $region22: #{translation_model_forward.3} parent=11 // pred_check_branch
          %835 = sbr.rel (%p833) target = $region24
        $region23: #{translation_model_forward.3} parent=11 // pred_region
          _
        $region24: #{translation_model_forward.3} parent=11 // pred_fallthru
          _
        // Predicated region
        $region25: #{translation_model_forward.3} parent=11 // pred_check
          %p836 = pneg %p151
        $region26: #{translation_model_forward.3} parent=11 // pred_check_branch
          %838 = sbr.rel (%p836) target = $region28
        $region27: #{translation_model_forward.3} parent=11 // pred_region
          _
        $region28: #{translation_model_forward.3} parent=11 // pred_fallthru
          _
        // Predicated region
        $region29: #{translation_model_forward.3} parent=11 // pred_check
          %p839 = pneg %p692
        $region30: #{translation_model_forward.3} parent=11 // pred_check_branch
          %841 = sbr.rel (%p839) target = $region32
        $region31: #{translation_model_forward.3} parent=11 // pred_region
          _
        $region32: #{translation_model_forward.3} parent=11 // pred_fallthru
          _
        // Predicated region
        $region33: #{translation_model_forward.3} parent=11 // pred_check
          %p842 = pneg %p713
        $region34: #{translation_model_forward.3} parent=11 // pred_check_branch
          %844 = sbr.rel (%p842) target = $region36
        $region35: #{translation_model_forward.3} parent=11 // pred_region
          _
        $region36: #{translation_model_forward.3} parent=11 // pred_fallthru
          _
      $region12: #{translation_model_forward.3} parent=5 // pred_fallthru
        _
      %p845 = scmp.lt.s32.totalorder %s67, 2
      // Predicated region
      $region37: #{translation_model_forward.3} parent=5 // pred_check
        %p846 = pneg %p845
      $region38: #{translation_model_forward.3} parent=5 // pred_check_branch
        %848 = sbr.rel (%p846) target = $region40
      $region39: #{translation_model_forward.3} parent=5 // pred_region
        // Predicated region
        $region41: #{translation_model_forward.3} parent=39 // pred_check
          %p849 = pneg %p171
        $region42: #{translation_model_forward.3} parent=39 // pred_check_branch
          %851 = sbr.rel (%p849) target = $region44
        $region43: #{translation_model_forward.3} parent=39 // pred_region
          %p852 = scmp.lt.s32.totalorder %s67, 1
          %s853 = scalar_select %p852, %s67, 1
          %s854 = smul.addr %s853, 4
          %s855 = smul.addr %s854, 4
          %s856 = scalar_lea.vmem %s9, %s855
        $region44: #{translation_model_forward.3} parent=39 // pred_fallthru
          _
        // Predicated region
        $region45: #{translation_model_forward.3} parent=39 // pred_check
          %p857 = pneg %p197
        $region46: #{translation_model_forward.3} parent=39 // pred_check_branch
          %859 = sbr.rel (%p857) target = $region48
        $region47: #{translation_model_forward.3} parent=39 // pred_region
          %p860 = scmp.lt.s32.totalorder %s67, 1
          %s861 = scalar_select %p860, %s67, 1
          %s862 = scalar_lea.vmem %s11, %s861
        $region48: #{translation_model_forward.3} parent=39 // pred_fallthru
          _
        // Predicated region
        $region49: #{translation_model_forward.3} parent=39 // pred_check
          %p863 = pneg %p223
        $region50: #{translation_model_forward.3} parent=39 // pred_check_branch
          %865 = sbr.rel (%p863) target = $region52
        $region51: #{translation_model_forward.3} parent=39 // pred_region
          %p866 = scmp.lt.s32.totalorder %s67, 1
          %s867 = scalar_select %p866, %s67, 1
          %s868 = smul.addr %s867, 4
          %s869 = smul.addr %s868, 4
          %s870 = scalar_lea.vmem %s13, %s869
        $region52: #{translation_model_forward.3} parent=39 // pred_fallthru
          _
        // Predicated region
        $region53: #{translation_model_forward.3} parent=39 // pred_check
          %p871 = pneg %p249
        $region54: #{translation_model_forward.3} parent=39 // pred_check_branch
          %873 = sbr.rel (%p871) target = $region56
        $region55: #{translation_model_forward.3} parent=39 // pred_region
          %p874 = scmp.lt.s32.totalorder %s67, 1
          %s875 = scalar_select %p874, %s67, 1
          %s876 = scalar_lea.vmem %s15, %s875
        $region56: #{translation_model_forward.3} parent=39 // pred_fallthru
          _
        // Predicated region
        $region57: #{translation_model_forward.3} parent=39 // pred_check
          %p877 = pneg %p275
        $region58: #{translation_model_forward.3} parent=39 // pred_check_branch
          %879 = sbr.rel (%p877) target = $region60
        $region59: #{translation_model_forward.3} parent=39 // pred_region
          %p880 = scmp.lt.s32.totalorder %s67, 1
          %s881 = scalar_select %p880, %s67, 1
          %s882 = scalar_lea.vmem %s17, %s881
        $region60: #{translation_model_forward.3} parent=39 // pred_fallthru
          _
        // Predicated region
        $region61: #{translation_model_forward.3} parent=39 // pred_check
          %p883 = pneg %p301
        $region62: #{translation_model_forward.3} parent=39 // pred_check_branch
          %885 = sbr.rel (%p883) target = $region64
        $region63: #{translation_model_forward.3} parent=39 // pred_region
          %p886 = scmp.lt.s32.totalorder %s67, 1
          %s887 = scalar_select %p886, %s67, 1
          %s888 = scalar_lea.vmem %s19, %s887
        $region64: #{translation_model_forward.3} parent=39 // pred_fallthru
          _
        // Predicated region
        $region65: #{translation_model_forward.3} parent=39 // pred_check
          %p889 = pneg %p327
        $region66: #{translation_model_forward.3} parent=39 // pred_check_branch
          %891 = sbr.rel (%p889) target = $region68
        $region67: #{translation_model_forward.3} parent=39 // pred_region
          %p892 = scmp.lt.s32.totalorder %s67, 1
          %s893 = scalar_select %p892, %s67, 1
          %s894 = smul.addr %s893, 4
          %s895 = smul.addr %s894, 4
          %s896 = scalar_lea.vmem %s21, %s895
        $region68: #{translation_model_forward.3} parent=39 // pred_fallthru
          _
        // Predicated region
        $region69: #{translation_model_forward.3} parent=39 // pred_check
          %p897 = pneg %p353
        $region70: #{translation_model_forward.3} parent=39 // pred_check_branch
          %899 = sbr.rel (%p897) target = $region72
        $region71: #{translation_model_forward.3} parent=39 // pred_region
          %p900 = scmp.lt.s32.totalorder %s67, 1
          %s901 = scalar_select %p900, %s67, 1
          %s902 = scalar_lea.vmem %s23, %s901
        $region72: #{translation_model_forward.3} parent=39 // pred_fallthru
          _
        // Predicated region
        $region73: #{translation_model_forward.3} parent=39 // pred_check
          %p903 = pneg %p379
        $region74: #{translation_model_forward.3} parent=39 // pred_check_branch
          %905 = sbr.rel (%p903) target = $region76
        $region75: #{translation_model_forward.3} parent=39 // pred_region
          %p906 = scmp.lt.s32.totalorder %s67, 1
          %s907 = scalar_select %p906, %s67, 1
          %s908 = smul.addr %s907, 4
          %s909 = smul.addr %s908, 4
          %s910 = scalar_lea.vmem %s25, %s909
        $region76: #{translation_model_forward.3} parent=39 // pred_fallthru
          _
        // Predicated region
        $region77: #{translation_model_forward.3} parent=39 // pred_check
          %p911 = pneg %p405
        $region78: #{translation_model_forward.3} parent=39 // pred_check_branch
          %913 = sbr.rel (%p911) target = $region80
        $region79: #{translation_model_forward.3} parent=39 // pred_region
          %p914 = scmp.lt.s32.totalorder %s67, 1
          %s915 = scalar_select %p914, %s67, 1
          %s916 = scalar_lea.vmem %s27, %s915
        $region80: #{translation_model_forward.3} parent=39 // pred_fallthru
          _
        // Predicated region
        $region81: #{translation_model_forward.3} parent=39 // pred_check
          %p917 = pneg %p431
        $region82: #{translation_model_forward.3} parent=39 // pred_check_branch
          %919 = sbr.rel (%p917) target = $region84
        $region83: #{translation_model_forward.3} parent=39 // pred_region
          %p920 = scmp.lt.s32.totalorder %s67, 1
          %s921 = scalar_select %p920, %s67, 1
          %s922 = smul.addr %s921, 4
          %s923 = smul.addr %s922, 4
          %s924 = scalar_lea.vmem %s29, %s923
        $region84: #{translation_model_forward.3} parent=39 // pred_fallthru
          _
        // Predicated region
        $region85: #{translation_model_forward.3} parent=39 // pred_check
          %p925 = pneg %p457
        $region86: #{translation_model_forward.3} parent=39 // pred_check_branch
          %927 = sbr.rel (%p925) target = $region88
        $region87: #{translation_model_forward.3} parent=39 // pred_region
          %p928 = scmp.lt.s32.totalorder %s67, 1
          %s929 = scalar_select %p928, %s67, 1
          %s930 = scalar_lea.vmem %s31, %s929
        $region88: #{translation_model_forward.3} parent=39 // pred_fallthru
          _
        // Predicated region
        $region89: #{translation_model_forward.3} parent=39 // pred_check
          %p931 = pneg %p483
        $region90: #{translation_model_forward.3} parent=39 // pred_check_branch
          %933 = sbr.rel (%p931) target = $region92
        $region91: #{translation_model_forward.3} parent=39 // pred_region
          %p934 = scmp.lt.s32.totalorder %s67, 1
          %s935 = scalar_select %p934, %s67, 1
          %s936 = scalar_lea.vmem %s33, %s935
        $region92: #{translation_model_forward.3} parent=39 // pred_fallthru
          _
        // Predicated region
        $region93: #{translation_model_forward.3} parent=39 // pred_check
          %p937 = pneg %p509
        $region94: #{translation_model_forward.3} parent=39 // pred_check_branch
          %939 = sbr.rel (%p937) target = $region96
        $region95: #{translation_model_forward.3} parent=39 // pred_region
          %p940 = scmp.lt.s32.totalorder %s67, 1
          %s941 = scalar_select %p940, %s67, 1
          %s942 = scalar_lea.vmem %s35, %s941
        $region96: #{translation_model_forward.3} parent=39 // pred_fallthru
          _
        // Predicated region
        $region97: #{translation_model_forward.3} parent=39 // pred_check
          %p943 = pneg %p535
        $region98: #{translation_model_forward.3} parent=39 // pred_check_branch
          %945 = sbr.rel (%p943) target = $region100
        $region99: #{translation_model_forward.3} parent=39 // pred_region
          %p946 = scmp.lt.s32.totalorder %s67, 1
          %s947 = scalar_select %p946, %s67, 1
          %s948 = smul.addr %s947, 4
          %s949 = smul.addr %s948, 4
          %s950 = scalar_lea.vmem %s37, %s949
        $region100: #{translation_model_forward.3} parent=39 // pred_fallthru
          _
        // Predicated region
        $region101: #{translation_model_forward.3} parent=39 // pred_check
          %p951 = pneg %p561
        $region102: #{translation_model_forward.3} parent=39 // pred_check_branch
          %953 = sbr.rel (%p951) target = $region104
        $region103: #{translation_model_forward.3} parent=39 // pred_region
          %p954 = scmp.lt.s32.totalorder %s67, 1
          %s955 = scalar_select %p954, %s67, 1
          %s956 = scalar_lea.vmem %s39, %s955
        $region104: #{translation_model_forward.3} parent=39 // pred_fallthru
          _
        // Predicated region
        $region105: #{translation_model_forward.3} parent=39 // pred_check
          %p957 = pneg %p587
        $region106: #{translation_model_forward.3} parent=39 // pred_check_branch
          %959 = sbr.rel (%p957) target = $region108
        $region107: #{translation_model_forward.3} parent=39 // pred_region
          %p960 = scmp.lt.s32.totalorder %s67, 1
          %s961 = scalar_select %p960, %s67, 1
          %s962 = smul.addr %s961, 8
          %s963 = smul.addr %s962, 4
          %s964 = scalar_lea.vmem %s41, %s963
        $region108: #{translation_model_forward.3} parent=39 // pred_fallthru
          _
        // Predicated region
        $region109: #{translation_model_forward.3} parent=39 // pred_check
          %p965 = pneg %p613
        $region110: #{translation_model_forward.3} parent=39 // pred_check_branch
          %967 = sbr.rel (%p965) target = $region112
        $region111: #{translation_model_forward.3} parent=39 // pred_region
          %p968 = scmp.lt.s32.totalorder %s67, 1
          %s969 = scalar_select %p968, %s67, 1
          %s970 = scalar_lea.vmem %s43, %s969
        $region112: #{translation_model_forward.3} parent=39 // pred_fallthru
          _
        // Predicated region
        $region113: #{translation_model_forward.3} parent=39 // pred_check
          %p971 = pneg %p639
        $region114: #{translation_model_forward.3} parent=39 // pred_check_branch
          %973 = sbr.rel (%p971) target = $region116
        $region115: #{translation_model_forward.3} parent=39 // pred_region
          %p974 = scmp.lt.s32.totalorder %s67, 1
          %s975 = scalar_select %p974, %s67, 1
          %s976 = scalar_lea.vmem %s45, %s975
        $region116: #{translation_model_forward.3} parent=39 // pred_fallthru
          _
        // Predicated region
        $region117: #{translation_model_forward.3} parent=39 // pred_check
          %p977 = pneg %p665
        $region118: #{translation_model_forward.3} parent=39 // pred_check_branch
          %979 = sbr.rel (%p977) target = $region120
        $region119: #{translation_model_forward.3} parent=39 // pred_region
          %p980 = scmp.lt.s32.totalorder %s67, 1
          %s981 = scalar_select %p980, %s67, 1
          %s982 = scalar_lea.vmem %s47, %s981
        $region120: #{translation_model_forward.3} parent=39 // pred_fallthru
          _
      $region40: #{translation_model_forward.3} parent=5 // pred_fallthru
        _
      %p983 = scmp.le.s32.totalorder 1, %s67
      %p984 = scmp.lt.s32.totalorder %s67, 3
      %p985 = pnand %p983, %p984
      %p986 = pneg %p985
      // Predicated region
      $region121: #{translation_model_forward.3} parent=5 // pred_check
        _
      $region122: #{translation_model_forward.3} parent=5 // pred_check_branch
        %988 = sbr.rel (%p985) target = $region124
      $region123: #{translation_model_forward.3} parent=5 // pred_region
        %s989 = ssub.s32 %s67, 1
        %p990 = pneg %p88
        %p991 = pneg %p85
        %p992 = pneg %p109
        %p993 = pneg %p106
        %p994 = pneg %p130
        %p995 = pneg %p127
        %p996 = pneg %p151
        %p997 = pneg %p148
        %p998 = scmp.lt.s32.totalorder %s72, 1
        %s999 = scalar_select %p998, %s72, 1
        %s1000 = smul.addr %s999, 4
        %s1001 = smul.addr %s1000, 4
        %s1002 = scalar_lea.vmem %s9, %s1001
        %p1003 = pneg %p177
        %p1004 = pneg %p174
        %p1005 = scmp.lt.s32.totalorder %s72, 1
        %s1006 = scalar_select %p1005, %s72, 1
        %s1007 = scalar_lea.vmem %s11, %s1006
        %p1008 = pneg %p203
        %p1009 = pneg %p200
        %p1010 = scmp.lt.s32.totalorder %s72, 1
        %s1011 = scalar_select %p1010, %s72, 1
        %s1012 = smul.addr %s1011, 4
        %s1013 = smul.addr %s1012, 4
        %s1014 = scalar_lea.vmem %s13, %s1013
        %p1015 = pneg %p229
        %p1016 = pneg %p226
        %p1017 = scmp.lt.s32.totalorder %s72, 1
        %s1018 = scalar_select %p1017, %s72, 1
        %s1019 = scalar_lea.vmem %s15, %s1018
        %p1020 = pneg %p255
        %p1021 = pneg %p252
        %p1022 = scmp.lt.s32.totalorder %s72, 1
        %s1023 = scalar_select %p1022, %s72, 1
        %s1024 = scalar_lea.vmem %s17, %s1023
        %p1025 = pneg %p281
        %p1026 = pneg %p278
        %p1027 = scmp.lt.s32.totalorder %s72, 1
        %s1028 = scalar_select %p1027, %s72, 1
        %s1029 = scalar_lea.vmem %s19, %s1028
        %p1030 = pneg %p307
        %p1031 = pneg %p304
        %p1032 = scmp.lt.s32.totalorder %s72, 1
        %s1033 = scalar_select %p1032, %s72, 1
        %s1034 = smul.addr %s1033, 4
        %s1035 = smul.addr %s1034, 4
        %s1036 = scalar_lea.vmem %s21, %s1035
        %p1037 = pneg %p333
        %p1038 = pneg %p330
        %p1039 = scmp.lt.s32.totalorder %s72, 1
        %s1040 = scalar_select %p1039, %s72, 1
        %s1041 = scalar_lea.vmem %s23, %s1040
        %p1042 = pneg %p359
        %p1043 = pneg %p356
        %p1044 = scmp.lt.s32.totalorder %s72, 1
        %s1045 = scalar_select %p1044, %s72, 1
        %s1046 = smul.addr %s1045, 4
        %s1047 = smul.addr %s1046, 4
        %s1048 = scalar_lea.vmem %s25, %s1047
        %p1049 = pneg %p385
        %p1050 = pneg %p382
        %p1051 = scmp.lt.s32.totalorder %s72, 1
        %s1052 = scalar_select %p1051, %s72, 1
        %s1053 = scalar_lea.vmem %s27, %s1052
        %p1054 = pneg %p411
        %p1055 = pneg %p408
        %p1056 = scmp.lt.s32.totalorder %s72, 1
        %s1057 = scalar_select %p1056, %s72, 1
        %s1058 = smul.addr %s1057, 4
        %s1059 = smul.addr %s1058, 4
        %s1060 = scalar_lea.vmem %s29, %s1059
        %p1061 = pneg %p437
        %p1062 = pneg %p434
        %p1063 = scmp.lt.s32.totalorder %s72, 1
        %s1064 = scalar_select %p1063, %s72, 1
        %s1065 = scalar_lea.vmem %s31, %s1064
        %p1066 = pneg %p463
        %p1067 = pneg %p460
        %p1068 = scmp.lt.s32.totalorder %s72, 1
        %s1069 = scalar_select %p1068, %s72, 1
        %s1070 = scalar_lea.vmem %s33, %s1069
        %p1071 = pneg %p489
        %p1072 = pneg %p486
        %p1073 = scmp.lt.s32.totalorder %s72, 1
        %s1074 = scalar_select %p1073, %s72, 1
        %s1075 = scalar_lea.vmem %s35, %s1074
        %p1076 = pneg %p515
        %p1077 = pneg %p512
        %p1078 = scmp.lt.s32.totalorder %s72, 1
        %s1079 = scalar_select %p1078, %s72, 1
        %s1080 = smul.addr %s1079, 4
        %s1081 = smul.addr %s1080, 4
        %s1082 = scalar_lea.vmem %s37, %s1081
        %p1083 = pneg %p541
        %p1084 = pneg %p538
        %p1085 = scmp.lt.s32.totalorder %s72, 1
        %s1086 = scalar_select %p1085, %s72, 1
        %s1087 = scalar_lea.vmem %s39, %s1086
        %p1088 = pneg %p567
        %p1089 = pneg %p564
        %p1090 = scmp.lt.s32.totalorder %s72, 1
        %s1091 = scalar_select %p1090, %s72, 1
        %s1092 = smul.addr %s1091, 8
        %s1093 = smul.addr %s1092, 4
        %s1094 = scalar_lea.vmem %s41, %s1093
        %p1095 = pneg %p593
        %p1096 = pneg %p590
        %p1097 = scmp.lt.s32.totalorder %s72, 1
        %s1098 = scalar_select %p1097, %s72, 1
        %s1099 = scalar_lea.vmem %s43, %s1098
        %p1100 = pneg %p619
        %p1101 = pneg %p616
        %p1102 = scmp.lt.s32.totalorder %s72, 1
        %s1103 = scalar_select %p1102, %s72, 1
        %s1104 = scalar_lea.vmem %s45, %s1103
        %p1105 = pneg %p645
        %p1106 = pneg %p642
        %p1107 = scmp.lt.s32.totalorder %s72, 1
        %s1108 = scalar_select %p1107, %s72, 1
        %s1109 = scalar_lea.vmem %s47, %s1108
        %p1110 = pneg %p671
        %p1111 = pneg %p668
        %p1112 = pneg %p692
        %p1113 = pneg %p689
        %p1114 = pneg %p713
        %p1115 = pneg %p710
        %p1116 = pneg %p739
        %p1117 = pneg %p736
        %p1118 = scmp.lt.s32.totalorder %s72, 1
        %s1119 = scalar_select %p1118, %s72, 1
        %s1120 = smul.addr %s1119, 2
        %s1121 = smul.addr %s1120, 8
        %s1122 = scalar_lea.vmem %s53, %s1121
        %p1123 = pneg %p765
        %p1124 = pneg %p762
        %p1125 = scmp.lt.s32.totalorder %s72, 1
        %s1126 = scalar_select %p1125, %s72, 1
        %s1127 = smul.addr %s1126, 2
        %s1128 = smul.addr %s1127, 8
        %s1129 = scalar_lea.vmem %s55, %s1128
        %p1130 = pneg %p791
        %p1131 = pneg %p788
        %p1132 = scmp.lt.s32.totalorder %s72, 1
        %s1133 = scalar_select %p1132, %s72, 1
        %s1134 = smul.addr %s1133, 2
        %s1135 = smul.addr %s1134, 8
        %s1136 = scalar_lea.vmem %s57, %s1135
        %p1137 = pneg %p812
        %p1138 = pneg %p809
        %p1139 = scmp.lt.s32.totalorder %s72, 1
        %s1140 = scalar_select %p1139, %s72, 1
        %s1141 = smul.addr %s1140, 4
        %s1142 = smul.addr %s1141, 4
        %s1143 = scalar_lea.vmem %s9, %s1142
        %p1144 = scmp.lt.s32.totalorder %s72, 1
        %s1145 = scalar_select %p1144, %s72, 1
        %s1146 = scalar_lea.vmem %s11, %s1145
        %p1147 = scmp.lt.s32.totalorder %s72, 1
        %s1148 = scalar_select %p1147, %s72, 1
        %s1149 = smul.addr %s1148, 4
        %s1150 = smul.addr %s1149, 4
        %s1151 = scalar_lea.vmem %s13, %s1150
        %p1152 = scmp.lt.s32.totalorder %s72, 1
        %s1153 = scalar_select %p1152, %s72, 1
        %s1154 = scalar_lea.vmem %s15, %s1153
        %p1155 = scmp.lt.s32.totalorder %s72, 1
        %s1156 = scalar_select %p1155, %s72, 1
        %s1157 = scalar_lea.vmem %s17, %s1156
        %p1158 = scmp.lt.s32.totalorder %s72, 1
        %s1159 = scalar_select %p1158, %s72, 1
        %s1160 = scalar_lea.vmem %s19, %s1159
        %p1161 = scmp.lt.s32.totalorder %s72, 1
        %s1162 = scalar_select %p1161, %s72, 1
        %s1163 = smul.addr %s1162, 4
        %s1164 = smul.addr %s1163, 4
        %s1165 = scalar_lea.vmem %s21, %s1164
        %p1166 = scmp.lt.s32.totalorder %s72, 1
        %s1167 = scalar_select %p1166, %s72, 1
        %s1168 = scalar_lea.vmem %s23, %s1167
        %p1169 = scmp.lt.s32.totalorder %s72, 1
        %s1170 = scalar_select %p1169, %s72, 1
        %s1171 = smul.addr %s1170, 4
        %s1172 = smul.addr %s1171, 4
        %s1173 = scalar_lea.vmem %s25, %s1172
        %p1174 = scmp.lt.s32.totalorder %s72, 1
        %s1175 = scalar_select %p1174, %s72, 1
        %s1176 = scalar_lea.vmem %s27, %s1175
        %p1177 = scmp.lt.s32.totalorder %s72, 1
        %s1178 = scalar_select %p1177, %s72, 1
        %s1179 = smul.addr %s1178, 4
        %s1180 = smul.addr %s1179, 4
        %s1181 = scalar_lea.vmem %s29, %s1180
        %p1182 = scmp.lt.s32.totalorder %s72, 1
        %s1183 = scalar_select %p1182, %s72, 1
        %s1184 = scalar_lea.vmem %s31, %s1183
        %p1185 = scmp.lt.s32.totalorder %s72, 1
        %s1186 = scalar_select %p1185, %s72, 1
        %s1187 = scalar_lea.vmem %s33, %s1186
        %p1188 = scmp.lt.s32.totalorder %s72, 1
        %s1189 = scalar_select %p1188, %s72, 1
        %s1190 = scalar_lea.vmem %s35, %s1189
        %p1191 = scmp.lt.s32.totalorder %s72, 1
        %s1192 = scalar_select %p1191, %s72, 1
        %s1193 = smul.addr %s1192, 4
        %s1194 = smul.addr %s1193, 4
        %s1195 = scalar_lea.vmem %s37, %s1194
        %p1196 = scmp.lt.s32.totalorder %s72, 1
        %s1197 = scalar_select %p1196, %s72, 1
        %s1198 = scalar_lea.vmem %s39, %s1197
        %p1199 = scmp.lt.s32.totalorder %s72, 1
        %s1200 = scalar_select %p1199, %s72, 1
        %s1201 = smul.addr %s1200, 8
        %s1202 = smul.addr %s1201, 4
        %s1203 = scalar_lea.vmem %s41, %s1202
        %p1204 = scmp.lt.s32.totalorder %s72, 1
        %s1205 = scalar_select %p1204, %s72, 1
        %s1206 = scalar_lea.vmem %s43, %s1205
        %p1207 = scmp.lt.s32.totalorder %s72, 1
        %s1208 = scalar_select %p1207, %s72, 1
        %s1209 = scalar_lea.vmem %s45, %s1208
        %p1210 = scmp.lt.s32.totalorder %s72, 1
        %s1211 = scalar_select %p1210, %s72, 1
        %s1212 = scalar_lea.vmem %s47, %s1211
        %p1213 = scmp.lt.s32.totalorder %s72, 1
        %s1214 = scalar_select %p1213, %s72, 1
        %s1215 = smul.addr %s1214, 2
        %s1216 = smul.addr %s1215, 8
        %s1217 = scalar_lea.vmem %s53, %s1216
        %p1218 = scmp.lt.s32.totalorder %s72, 1
        %s1219 = scalar_select %p1218, %s72, 1
        %s1220 = smul.addr %s1219, 2
        %s1221 = smul.addr %s1220, 8
        %s1222 = scalar_lea.vmem %s55, %s1221
        %p1223 = scmp.lt.s32.totalorder %s72, 1
        %s1224 = scalar_select %p1223, %s72, 1
        %s1225 = smul.addr %s1224, 2
        %s1226 = smul.addr %s1225, 8
        %s1227 = scalar_lea.vmem %s57, %s1226
        %p1229 = scmp.eq.s32.totalorder %s72, 0
        // Predicated region
        $region125: #{translation_model_forward.3} parent=123 // pred_check
          %p1230 = pneg %p1229
        $region126: #{translation_model_forward.3} parent=123 // pred_check_branch
          %1232 = sbr.rel (%p1230) target = $region128
        $region127: #{translation_model_forward.3} parent=123 // pred_region
          %v1233 = vld [vmem:[%s1] sm:$0xff]
          %v1234 = vld [vmem:[%s1 + $0x8] sm:$0xff]
          %vm1235 = vcmask 261120
          %1236 = vst.msk [vmem:[#allocation2] sm:$0xff] %vm1235, %v1233
          %1237 = vst.msk [vmem:[#allocation2 + $0x8] sm:$0xff] %vm1235, %v1234
        $region128: #{translation_model_forward.3} parent=123 // pred_fallthru
          _
        %v1238 = vld [vmem:[#allocation2] sm:$0xff]
        %v1239 = vld [vmem:[#allocation2 + $0x8] sm:$0xff]
        %v1240 = vld [vmem:[%s3] sm:$0xff]
        %v1241 = vld [vmem:[%s3 + $0x8] sm:$0xff]
        %v1242 = vld [vmem:[%s5] sm:$0xff]
        %v1243 = vld [vmem:[%s5 + $0x8] sm:$0xff]
        %v1244 = vld [vmem:[%s7] sm:$0x1]
        %v1245 = vld [vmem:[%s7 + $0x1] sm:$0x1]
        %v1246 = vpack.c.bf16 %v1239, %v1238
        %v1247 = vld [vmem:[%s1143] sm:$0xf]
        %v1248 = vld [vmem:[%s1143 + $0x4] sm:$0xf]
        %v1249 = vld [vmem:[%s1143 + $0x8] sm:$0xf]
        %v1250 = vld [vmem:[%s1143 + $0xc] sm:$0xf]
        %v1251 = vld [vmem:[%s1146] sm:$0x1]
        %v1253 = vperm.slane %v1251, 0
        %v1259 = vunpack.c.l.b16 %v1247
        %v1260 = vunpack.c.l.b16 %v1248
        %v1261 = vunpack.c.l.b16 %v1249
        %v1262 = vunpack.c.l.b16 %v1250
        %v1263 = vpack.c.b16 %v1260, %v1259
        %v1264 = vpack.c.b16 %v1262, %v1261
        %vm1267 = vcmask 261120
        %v1269 = vsel %vm1267, %v1246, 0
        %1271 = vmatpush.bf16.msra.mxu0 0
        %1272 = vmatpush.bf16.msra.mxu0 0
        %1273 = vmatpush.bf16.msra.mxu0 0
        %1274 = vmatpush.bf16.msra.mxu0 0
        %1275 = vmatpush.bf16.msra.mxu0 0
        %1276 = vmatpush.bf16.msra.mxu0 0
        %1277 = vmatpush.bf16.msra.mxu0 %v1264
        %1278 = vmatpush.bf16.msra.mxu0 %v1263
        %1279 = vmatmul.bf16.gmra.mxu0 %v1269
        %v1280 = vpop.f32.mrf.mxu0
        %v1281 = vadd.f32 %v1253, %v1280
        %v1282 = vpop.f32.mrf.mxu0
        %v1283 = vadd.f32 %v1253, %v1282
        %1284 = vdwg.mxu0
        %v1285 = vpack.c.bf16 %v1281, %v1281
        %v1286 = vpack.c.bf16 %v1283, %v1283
        %v1288 = vunpack.c.l.b16 %v1285
        %v1289 = vpack.c.b16 %v1288, %v1288
        %1290 = vrot.lane.b32.xlu0 %v1289, 96
        %v1291 = vpop.permute.xlu0 %1290
        %vm1292 = vcmask 64512
        %v1294 = vsel %vm1292, %v1285, 0
        %v1297 = vsel %vm1292, %v1291, 0
        %1299 = vmatpush.bf16.xpose.msra.mxu0 0
        %1300 = vmatpush.bf16.xpose.msra.mxu0 0
        %1301 = vmatpush.bf16.xpose.msra.mxu0 0
        %1302 = vmatpush.bf16.xpose.msra.mxu0 0
        %1303 = vmatpush.bf16.xpose.msra.mxu0 0
        %1304 = vmatpush.bf16.xpose.msra.mxu0 0
        %1305 = vmatpush.bf16.xpose.msra.mxu0 0
        %1306 = vmatpush.bf16.xpose.msra.mxu0 %v1297
        %1307 = vmatmul.bf16.gmra.mxu0 %v1294
        %v1308 = vpop.f32.mrf.mxu0
        %v1309 = vadd.f32 0.0, %v1308
        %v1310 = vpop.f32.mrf.mxu0
        %1311 = vdwg.mxu0
        %v1312 = vmul.f32 %v1309, 0.35355338
        %v1313 = vadd.f32 %v1312, %v1242
        %v1314 = vsel %vm1292, %v1313, -inf
        %1315 = vmax.xlane.f32.xlu0 %v1314
        %v1316 = vpop.xlane.xlu0 %1315
        %v1317 = vsub.f32 %v1313, %v1316
        %v1318 = vmul.f32 %v1317, 1.442695
        %v1319 = vpow.pop %v1318
        %v1320 = vsel %vm1292, %v1319, 0.0
        %1321 = vadd.xlane.f32.xlu0 %v1320
        %v1322 = vpop.xlane.xlu0 %1321
        %v1323 = vrcp.pop %v1322
        %v1324 = vmul.f32 %v1319, %v1323
        %1325 = vst.msk [vmem:[%s1222] sm:$0xff] %vm1292, %v1324
        %v1326 = vpack.c.bf16 %v1324, %v1324
        %1327 = vrot.lane.b32.xlu0 %v1289, 64
        %v1328 = vpop.permute.xlu0 %1327
        %v1330 = vsel %vm1292, %v1326, 0
        %vm1332 = vcmask 1043456
        %v1334 = vsel %vm1332, %v1328, 0
        %1336 = vmatpush.bf16.msra.mxu0 0
        %1337 = vmatpush.bf16.msra.mxu0 0
        %1338 = vmatpush.bf16.msra.mxu0 0
        %1339 = vmatpush.bf16.msra.mxu0 0
        %1340 = vmatpush.bf16.msra.mxu0 0
        %1341 = vmatpush.bf16.msra.mxu0 0
        %1342 = vmatpush.bf16.msra.mxu0 0
        %1343 = vmatpush.bf16.msra.mxu0 %v1334
        %1344 = vmatmul.bf16.gmra.mxu0 %v1330
        %v1345 = vpop.f32.mrf.mxu0
        %v1346 = vadd.f32 0.0, %v1345
        %v1347 = vpop.f32.mrf.mxu0
        %1348 = vdwg.mxu0
        %1349 = vst.msk [vmem:[#allocation3] sm:$0xff] %vm1292, %v1346
        %1350 = vrot.lane.b32.xlu0 %v1289, 120
        %v1351 = vpop.permute.xlu0 %1350
        %1352 = vrot.lane.b32.xlu0 %v1289, 88
        %v1353 = vpop.permute.xlu0 %1352
        %v1355 = vsel %vm1292, %v1351, 0
        %v1358 = vsel %vm1292, %v1353, 0
        %1360 = vmatpush.bf16.xpose.msra.mxu0 0
        %1361 = vmatpush.bf16.xpose.msra.mxu0 0
        %1362 = vmatpush.bf16.xpose.msra.mxu0 0
        %1363 = vmatpush.bf16.xpose.msra.mxu0 0
        %1364 = vmatpush.bf16.xpose.msra.mxu0 0
        %1365 = vmatpush.bf16.xpose.msra.mxu0 0
        %1366 = vmatpush.bf16.xpose.msra.mxu0 0
        %1367 = vmatpush.bf16.xpose.msra.mxu0 %v1358
        %1368 = vmatmul.bf16.gmra.mxu0 %v1355
        %v1369 = vpop.f32.mrf.mxu0
        %v1370 = vadd.f32 0.0, %v1369
        %v1371 = vpop.f32.mrf.mxu0
        %1372 = vdwg.mxu0
        %v1373 = vmul.f32 %v1370, 0.35355338
        %v1374 = vadd.f32 %v1373, %v1242
        %v1375 = vsel %vm1292, %v1374, -inf
        %1376 = vmax.xlane.f32.xlu0 %v1375
        %v1377 = vpop.xlane.xlu0 %1376
        %v1378 = vsub.f32 %v1374, %v1377
        %v1379 = vmul.f32 %v1378, 1.442695
        %v1380 = vpow.pop %v1379
        %v1381 = vsel %vm1292, %v1380, 0.0
        %1382 = vadd.xlane.f32.xlu0 %v1381
        %v1383 = vpop.xlane.xlu0 %1382
        %v1384 = vrcp.pop %v1383
        %v1385 = vmul.f32 %v1380, %v1384
        %1387 = vrot.lane.b32.xlu0 %v1385, 8
        %v1388 = vpop.permute.xlu0 %1387
        %vm1390 = vcmask 130112
        %1391 = vst.msk [vmem:[%s1222] sm:$0xff] %vm1390, %v1388
        %v1392 = vpack.c.bf16 %v1385, %v1385
        %1393 = vrot.lane.b32.xlu0 %v1289, 56
        %v1394 = vpop.permute.xlu0 %1393
        %v1396 = vsel %vm1292, %v1392, 0
        %v1399 = vsel %vm1332, %v1394, 0
        %1401 = vmatpush.bf16.msra.mxu0 0
        %1402 = vmatpush.bf16.msra.mxu0 0
        %1403 = vmatpush.bf16.msra.mxu0 0
        %1404 = vmatpush.bf16.msra.mxu0 0
        %1405 = vmatpush.bf16.msra.mxu0 0
        %1406 = vmatpush.bf16.msra.mxu0 0
        %1407 = vmatpush.bf16.msra.mxu0 0
        %1408 = vmatpush.bf16.msra.mxu0 %v1399
        %1409 = vmatmul.bf16.gmra.mxu0 %v1396
        %v1410 = vpop.f32.mrf.mxu0
        %v1411 = vadd.f32 0.0, %v1410
        %v1412 = vpop.f32.mrf.mxu0
        %1413 = vdwg.mxu0
        %1415 = vrot.lane.b32.xlu0 %v1411, 8
        %v1416 = vpop.permute.xlu0 %1415
        %1418 = vst.msk [vmem:[#allocation3] sm:$0xff] %vm1390, %v1416
        %1419 = vrot.lane.b32.xlu0 %v1289, 112
        %v1420 = vpop.permute.xlu0 %1419
        %1421 = vrot.lane.b32.xlu0 %v1289, 80
        %v1422 = vpop.permute.xlu0 %1421
        %v1424 = vsel %vm1292, %v1420, 0
        %v1427 = vsel %vm1292, %v1422, 0
        %1429 = vmatpush.bf16.xpose.msra.mxu0 0
        %1430 = vmatpush.bf16.xpose.msra.mxu0 0
        %1431 = vmatpush.bf16.xpose.msra.mxu0 0
        %1432 = vmatpush.bf16.xpose.msra.mxu0 0
        %1433 = vmatpush.bf16.xpose.msra.mxu0 0
        %1434 = vmatpush.bf16.xpose.msra.mxu0 0
        %1435 = vmatpush.bf16.xpose.msra.mxu0 0
        %1436 = vmatpush.bf16.xpose.msra.mxu0 %v1427
        %1437 = vmatmul.bf16.gmra.mxu0 %v1424
        %v1438 = vpop.f32.mrf.mxu0
        %v1439 = vadd.f32 0.0, %v1438
        %v1440 = vpop.f32.mrf.mxu0
        %1441 = vdwg.mxu0
        %v1442 = vmul.f32 %v1439, 0.35355338
        %v1443 = vadd.f32 %v1442, %v1242
        %v1444 = vsel %vm1292, %v1443, -inf
        %1445 = vmax.xlane.f32.xlu0 %v1444
        %v1446 = vpop.xlane.xlu0 %1445
        %v1447 = vsub.f32 %v1443, %v1446
        %v1448 = vmul.f32 %v1447, 1.442695
        %v1449 = vpow.pop %v1448
        %v1450 = vsel %vm1292, %v1449, 0.0
        %1451 = vadd.xlane.f32.xlu0 %v1450
        %v1452 = vpop.xlane.xlu0 %1451
        %v1453 = vrcp.pop %v1452
        %v1454 = vmul.f32 %v1449, %v1453
        %1456 = vrot.lane.b32.xlu0 %v1454, 16
        %v1457 = vpop.permute.xlu0 %1456
        %vm1459 = vcmask 195712
        %1460 = vst.msk [vmem:[%s1222] sm:$0xff] %vm1459, %v1457
        %v1461 = vpack.c.bf16 %v1454, %v1454
        %1462 = vrot.lane.b32.xlu0 %v1289, 48
        %v1463 = vpop.permute.xlu0 %1462
        %v1465 = vsel %vm1292, %v1461, 0
        %v1468 = vsel %vm1332, %v1463, 0
        %1470 = vmatpush.bf16.msra.mxu0 0
        %1471 = vmatpush.bf16.msra.mxu0 0
        %1472 = vmatpush.bf16.msra.mxu0 0
        %1473 = vmatpush.bf16.msra.mxu0 0
        %1474 = vmatpush.bf16.msra.mxu0 0
        %1475 = vmatpush.bf16.msra.mxu0 0
        %1476 = vmatpush.bf16.msra.mxu0 0
        %1477 = vmatpush.bf16.msra.mxu0 %v1468
        %1478 = vmatmul.bf16.gmra.mxu0 %v1465
        %v1479 = vpop.f32.mrf.mxu0
        %v1480 = vadd.f32 0.0, %v1479
        %v1481 = vpop.f32.mrf.mxu0
        %1482 = vdwg.mxu0
        %1484 = vrot.lane.b32.xlu0 %v1480, 16
        %v1485 = vpop.permute.xlu0 %1484
        %1487 = vst.msk [vmem:[#allocation3] sm:$0xff] %vm1459, %v1485
        %1488 = vrot.lane.b32.xlu0 %v1289, 104
        %v1489 = vpop.permute.xlu0 %1488
        %1490 = vrot.lane.b32.xlu0 %v1289, 72
        %v1491 = vpop.permute.xlu0 %1490
        %v1493 = vsel %vm1292, %v1489, 0
        %v1496 = vsel %vm1292, %v1491, 0
        %1498 = vmatpush.bf16.xpose.msra.mxu0 0
        %1499 = vmatpush.bf16.xpose.msra.mxu0 0
        %1500 = vmatpush.bf16.xpose.msra.mxu0 0
        %1501 = vmatpush.bf16.xpose.msra.mxu0 0
        %1502 = vmatpush.bf16.xpose.msra.mxu0 0
        %1503 = vmatpush.bf16.xpose.msra.mxu0 0
        %1504 = vmatpush.bf16.xpose.msra.mxu0 0
        %1505 = vmatpush.bf16.xpose.msra.mxu0 %v1496
        %1506 = vmatmul.bf16.gmra.mxu0 %v1493
        %v1507 = vpop.f32.mrf.mxu0
        %v1508 = vadd.f32 0.0, %v1507
        %v1509 = vpop.f32.mrf.mxu0
        %1510 = vdwg.mxu0
        %v1511 = vmul.f32 %v1508, 0.35355338
        %v1512 = vadd.f32 %v1511, %v1242
        %v1513 = vsel %vm1292, %v1512, -inf
        %1514 = vmax.xlane.f32.xlu0 %v1513
        %v1515 = vpop.xlane.xlu0 %1514
        %v1516 = vsub.f32 %v1512, %v1515
        %v1517 = vmul.f32 %v1516, 1.442695
        %v1518 = vpow.pop %v1517
        %v1519 = vsel %vm1292, %v1518, 0.0
        %1520 = vadd.xlane.f32.xlu0 %v1519
        %v1521 = vpop.xlane.xlu0 %1520
        %v1522 = vrcp.pop %v1521
        %v1523 = vmul.f32 %v1518, %v1522
        %1525 = vrot.lane.b32.xlu0 %v1523, 24
        %v1526 = vpop.permute.xlu0 %1525
        %vm1528 = vcmask 261312
        %1529 = vst.msk [vmem:[%s1222] sm:$0xff] %vm1528, %v1526
        %v1530 = vpack.c.bf16 %v1523, %v1523
        %1531 = vrot.lane.b32.xlu0 %v1289, 40
        %v1532 = vpop.permute.xlu0 %1531
        %v1534 = vsel %vm1292, %v1530, 0
        %v1537 = vsel %vm1332, %v1532, 0
        %1539 = vmatpush.bf16.msra.mxu0 0
        %1540 = vmatpush.bf16.msra.mxu0 0
        %1541 = vmatpush.bf16.msra.mxu0 0
        %1542 = vmatpush.bf16.msra.mxu0 0
        %1543 = vmatpush.bf16.msra.mxu0 0
        %1544 = vmatpush.bf16.msra.mxu0 0
        %1545 = vmatpush.bf16.msra.mxu0 0
        %1546 = vmatpush.bf16.msra.mxu0 %v1537
        %1547 = vmatmul.bf16.gmra.mxu0 %v1534
        %v1548 = vpop.f32.mrf.mxu0
        %v1549 = vadd.f32 0.0, %v1548
        %v1550 = vpop.f32.mrf.mxu0
        %1551 = vdwg.mxu0
        %1553 = vrot.lane.b32.xlu0 %v1549, 24
        %v1554 = vpop.permute.xlu0 %1553
        %1556 = vst.msk [vmem:[#allocation3] sm:$0xff] %vm1528, %v1554
        %v1558 = vunpack.c.l.b16 %v1286
        %v1559 = vpack.c.b16 %v1558, %v1558
        %1560 = vrot.lane.b32.xlu0 %v1559, 96
        %v1561 = vpop.permute.xlu0 %1560
        %v1563 = vsel %vm1292, %v1286, 0
        %v1566 = vsel %vm1292, %v1561, 0
        %1568 = vmatpush.bf16.xpose.msra.mxu0 0
        %1569 = vmatpush.bf16.xpose.msra.mxu0 0
        %1570 = vmatpush.bf16.xpose.msra.mxu0 0
        %1571 = vmatpush.bf16.xpose.msra.mxu0 0
        %1572 = vmatpush.bf16.xpose.msra.mxu0 0
        %1573 = vmatpush.bf16.xpose.msra.mxu0 0
        %1574 = vmatpush.bf16.xpose.msra.mxu0 0
        %1575 = vmatpush.bf16.xpose.msra.mxu0 %v1566
        %1576 = vmatmul.bf16.gmra.mxu0 %v1563
        %v1577 = vpop.f32.mrf.mxu0
        %v1578 = vadd.f32 0.0, %v1577
        %v1579 = vpop.f32.mrf.mxu0
        %1580 = vdwg.mxu0
        %v1581 = vmul.f32 %v1578, 0.35355338
        %v1582 = vadd.f32 %v1581, %v1243
        %v1583 = vsel %vm1292, %v1582, -inf
        %1584 = vmax.xlane.f32.xlu0 %v1583
        %v1585 = vpop.xlane.xlu0 %1584
        %v1586 = vsub.f32 %v1582, %v1585
        %v1587 = vmul.f32 %v1586, 1.442695
        %v1588 = vpow.pop %v1587
        %v1589 = vsel %vm1292, %v1588, 0.0
        %1590 = vadd.xlane.f32.xlu0 %v1589
        %v1591 = vpop.xlane.xlu0 %1590
        %v1592 = vrcp.pop %v1591
        %v1593 = vmul.f32 %v1588, %v1592
        %s1594 = scalar_lea.vmem %s1222, 8
        %1595 = vst.msk [vmem:[%s1594] sm:$0xff] %vm1292, %v1593
        %v1596 = vpack.c.bf16 %v1593, %v1593
        %1597 = vrot.lane.b32.xlu0 %v1559, 64
        %v1598 = vpop.permute.xlu0 %1597
        %v1600 = vsel %vm1292, %v1596, 0
        %v1603 = vsel %vm1332, %v1598, 0
        %1605 = vmatpush.bf16.msra.mxu0 0
        %1606 = vmatpush.bf16.msra.mxu0 0
        %1607 = vmatpush.bf16.msra.mxu0 0
        %1608 = vmatpush.bf16.msra.mxu0 0
        %1609 = vmatpush.bf16.msra.mxu0 0
        %1610 = vmatpush.bf16.msra.mxu0 0
        %1611 = vmatpush.bf16.msra.mxu0 0
        %1612 = vmatpush.bf16.msra.mxu0 %v1603
        %1613 = vmatmul.bf16.gmra.mxu0 %v1600
        %v1614 = vpop.f32.mrf.mxu0
        %v1615 = vadd.f32 0.0, %v1614
        %v1616 = vpop.f32.mrf.mxu0
        %1617 = vdwg.mxu0
        %1618 = vst.msk [vmem:[#allocation3 + $0x8] sm:$0xff] %vm1292, %v1615
        %1619 = vrot.lane.b32.xlu0 %v1559, 120
        %v1620 = vpop.permute.xlu0 %1619
        %1621 = vrot.lane.b32.xlu0 %v1559, 88
        %v1622 = vpop.permute.xlu0 %1621
        %v1624 = vsel %vm1292, %v1620, 0
        %v1627 = vsel %vm1292, %v1622, 0
        %1629 = vmatpush.bf16.xpose.msra.mxu0 0
        %1630 = vmatpush.bf16.xpose.msra.mxu0 0
        %1631 = vmatpush.bf16.xpose.msra.mxu0 0
        %1632 = vmatpush.bf16.xpose.msra.mxu0 0
        %1633 = vmatpush.bf16.xpose.msra.mxu0 0
        %1634 = vmatpush.bf16.xpose.msra.mxu0 0
        %1635 = vmatpush.bf16.xpose.msra.mxu0 0
        %1636 = vmatpush.bf16.xpose.msra.mxu0 %v1627
        %1637 = vmatmul.bf16.gmra.mxu0 %v1624
        %v1638 = vpop.f32.mrf.mxu0
        %v1639 = vadd.f32 0.0, %v1638
        %v1640 = vpop.f32.mrf.mxu0
        %1641 = vdwg.mxu0
        %v1642 = vmul.f32 %v1639, 0.35355338
        %v1643 = vadd.f32 %v1642, %v1243
        %v1644 = vsel %vm1292, %v1643, -inf
        %1645 = vmax.xlane.f32.xlu0 %v1644
        %v1646 = vpop.xlane.xlu0 %1645
        %v1647 = vsub.f32 %v1643, %v1646
        %v1648 = vmul.f32 %v1647, 1.442695
        %v1649 = vpow.pop %v1648
        %v1650 = vsel %vm1292, %v1649, 0.0
        %1651 = vadd.xlane.f32.xlu0 %v1650
        %v1652 = vpop.xlane.xlu0 %1651
        %v1653 = vrcp.pop %v1652
        %v1654 = vmul.f32 %v1649, %v1653
        %1656 = vrot.lane.b32.xlu0 %v1654, 8
        %v1657 = vpop.permute.xlu0 %1656
        %1659 = vst.msk [vmem:[%s1594] sm:$0xff] %vm1390, %v1657
        %v1660 = vpack.c.bf16 %v1654, %v1654
        %1661 = vrot.lane.b32.xlu0 %v1559, 56
        %v1662 = vpop.permute.xlu0 %1661
        %v1664 = vsel %vm1292, %v1660, 0
        %v1667 = vsel %vm1332, %v1662, 0
        %1669 = vmatpush.bf16.msra.mxu0 0
        %1670 = vmatpush.bf16.msra.mxu0 0
        %1671 = vmatpush.bf16.msra.mxu0 0
        %1672 = vmatpush.bf16.msra.mxu0 0
        %1673 = vmatpush.bf16.msra.mxu0 0
        %1674 = vmatpush.bf16.msra.mxu0 0
        %1675 = vmatpush.bf16.msra.mxu0 0
        %1676 = vmatpush.bf16.msra.mxu0 %v1667
        %1677 = vmatmul.bf16.gmra.mxu0 %v1664
        %v1678 = vpop.f32.mrf.mxu0
        %v1679 = vadd.f32 0.0, %v1678
        %v1680 = vpop.f32.mrf.mxu0
        %1681 = vdwg.mxu0
        %1683 = vrot.lane.b32.xlu0 %v1679, 8
        %v1684 = vpop.permute.xlu0 %1683
        %1686 = vst.msk [vmem:[#allocation3 + $0x8] sm:$0xff] %vm1390, %v1684
        %1687 = vrot.lane.b32.xlu0 %v1559, 112
        %v1688 = vpop.permute.xlu0 %1687
        %1689 = vrot.lane.b32.xlu0 %v1559, 80
        %v1690 = vpop.permute.xlu0 %1689
        %v1692 = vsel %vm1292, %v1688, 0
        %v1695 = vsel %vm1292, %v1690, 0
        %1697 = vmatpush.bf16.xpose.msra.mxu0 0
        %1698 = vmatpush.bf16.xpose.msra.mxu0 0
        %1699 = vmatpush.bf16.xpose.msra.mxu0 0
        %1700 = vmatpush.bf16.xpose.msra.mxu0 0
        %1701 = vmatpush.bf16.xpose.msra.mxu0 0
        %1702 = vmatpush.bf16.xpose.msra.mxu0 0
        %1703 = vmatpush.bf16.xpose.msra.mxu0 0
        %1704 = vmatpush.bf16.xpose.msra.mxu0 %v1695
        %1705 = vmatmul.bf16.gmra.mxu0 %v1692
        %v1706 = vpop.f32.mrf.mxu0
        %v1707 = vadd.f32 0.0, %v1706
        %v1708 = vpop.f32.mrf.mxu0
        %1709 = vdwg.mxu0
        %v1710 = vmul.f32 %v1707, 0.35355338
        %v1711 = vadd.f32 %v1710, %v1243
        %v1712 = vsel %vm1292, %v1711, -inf
        %1713 = vmax.xlane.f32.xlu0 %v1712
        %v1714 = vpop.xlane.xlu0 %1713
        %v1715 = vsub.f32 %v1711, %v1714
        %v1716 = vmul.f32 %v1715, 1.442695
        %v1717 = vpow.pop %v1716
        %v1718 = vsel %vm1292, %v1717, 0.0
        %1719 = vadd.xlane.f32.xlu0 %v1718
        %v1720 = vpop.xlane.xlu0 %1719
        %v1721 = vrcp.pop %v1720
        %v1722 = vmul.f32 %v1717, %v1721
        %1724 = vrot.lane.b32.xlu0 %v1722, 16
        %v1725 = vpop.permute.xlu0 %1724
        %1727 = vst.msk [vmem:[%s1594] sm:$0xff] %vm1459, %v1725
        %v1728 = vpack.c.bf16 %v1722, %v1722
        %1729 = vrot.lane.b32.xlu0 %v1559, 48
        %v1730 = vpop.permute.xlu0 %1729
        %v1732 = vsel %vm1292, %v1728, 0
        %v1735 = vsel %vm1332, %v1730, 0
        %1737 = vmatpush.bf16.msra.mxu0 0
        %1738 = vmatpush.bf16.msra.mxu0 0
        %1739 = vmatpush.bf16.msra.mxu0 0
        %1740 = vmatpush.bf16.msra.mxu0 0
        %1741 = vmatpush.bf16.msra.mxu0 0
        %1742 = vmatpush.bf16.msra.mxu0 0
        %1743 = vmatpush.bf16.msra.mxu0 0
        %1744 = vmatpush.bf16.msra.mxu0 %v1735
        %1745 = vmatmul.bf16.gmra.mxu0 %v1732
        %v1746 = vpop.f32.mrf.mxu0
        %v1747 = vadd.f32 0.0, %v1746
        %v1748 = vpop.f32.mrf.mxu0
        %1749 = vdwg.mxu0
        %1751 = vrot.lane.b32.xlu0 %v1747, 16
        %v1752 = vpop.permute.xlu0 %1751
        %1754 = vst.msk [vmem:[#allocation3 + $0x8] sm:$0xff] %vm1459, %v1752
        %1755 = vrot.lane.b32.xlu0 %v1559, 104
        %v1756 = vpop.permute.xlu0 %1755
        %1757 = vrot.lane.b32.xlu0 %v1559, 72
        %v1758 = vpop.permute.xlu0 %1757
        %v1760 = vsel %vm1292, %v1756, 0
        %v1763 = vsel %vm1292, %v1758, 0
        %1765 = vmatpush.bf16.xpose.msra.mxu0 0
        %1766 = vmatpush.bf16.xpose.msra.mxu0 0
        %1767 = vmatpush.bf16.xpose.msra.mxu0 0
        %1768 = vmatpush.bf16.xpose.msra.mxu0 0
        %1769 = vmatpush.bf16.xpose.msra.mxu0 0
        %1770 = vmatpush.bf16.xpose.msra.mxu0 0
        %1771 = vmatpush.bf16.xpose.msra.mxu0 0
        %1772 = vmatpush.bf16.xpose.msra.mxu0 %v1763
        %1773 = vmatmul.bf16.gmra.mxu0 %v1760
        %v1774 = vpop.f32.mrf.mxu0
        %v1775 = vadd.f32 0.0, %v1774
        %v1776 = vpop.f32.mrf.mxu0
        %1777 = vdwg.mxu0
        %v1778 = vmul.f32 %v1775, 0.35355338
        %v1779 = vadd.f32 %v1778, %v1243
        %v1780 = vsel %vm1292, %v1779, -inf
        %1781 = vmax.xlane.f32.xlu0 %v1780
        %v1782 = vpop.xlane.xlu0 %1781
        %v1783 = vsub.f32 %v1779, %v1782
        %v1784 = vmul.f32 %v1783, 1.442695
        %v1785 = vpow.pop %v1784
        %v1786 = vsel %vm1292, %v1785, 0.0
        %1787 = vadd.xlane.f32.xlu0 %v1786
        %v1788 = vpop.xlane.xlu0 %1787
        %v1789 = vrcp.pop %v1788
        %v1790 = vmul.f32 %v1785, %v1789
        %1792 = vrot.lane.b32.xlu0 %v1790, 24
        %v1793 = vpop.permute.xlu0 %1792
        %1795 = vst.msk [vmem:[%s1594] sm:$0xff] %vm1528, %v1793
        %v1796 = vpack.c.bf16 %v1790, %v1790
        %1797 = vrot.lane.b32.xlu0 %v1559, 40
        %v1798 = vpop.permute.xlu0 %1797
        %v1800 = vsel %vm1292, %v1796, 0
        %v1803 = vsel %vm1332, %v1798, 0
        %1805 = vmatpush.bf16.msra.mxu0 0
        %1806 = vmatpush.bf16.msra.mxu0 0
        %1807 = vmatpush.bf16.msra.mxu0 0
        %1808 = vmatpush.bf16.msra.mxu0 0
        %1809 = vmatpush.bf16.msra.mxu0 0
        %1810 = vmatpush.bf16.msra.mxu0 0
        %1811 = vmatpush.bf16.msra.mxu0 0
        %1812 = vmatpush.bf16.msra.mxu0 %v1803
        %1813 = vmatmul.bf16.gmra.mxu0 %v1800
        %v1814 = vpop.f32.mrf.mxu0
        %v1815 = vadd.f32 0.0, %v1814
        %v1816 = vpop.f32.mrf.mxu0
        %1817 = vdwg.mxu0
        %1819 = vrot.lane.b32.xlu0 %v1815, 24
        %v1820 = vpop.permute.xlu0 %1819
        %1822 = vst.msk [vmem:[#allocation3 + $0x8] sm:$0xff] %vm1528, %v1820
        %v1823 = vld [vmem:[#allocation3] sm:$0xff]
        %v1824 = vld [vmem:[#allocation3 + $0x8] sm:$0xff]
        %v1825 = vpack.c.bf16 %v1824, %v1823
        %v1826 = vld [vmem:[%s1151] sm:$0xf]
        %v1827 = vld [vmem:[%s1151 + $0x4] sm:$0xf]
        %v1828 = vld [vmem:[%s1151 + $0x8] sm:$0xf]
        %v1829 = vld [vmem:[%s1151 + $0xc] sm:$0xf]
        %v1830 = vld [vmem:[%s1154] sm:$0x1]
        %v1832 = vperm.slane %v1830, 0
        %v1838 = vunpack.c.l.b16 %v1826
        %v1839 = vunpack.c.l.b16 %v1827
        %v1840 = vunpack.c.l.b16 %v1828
        %v1841 = vunpack.c.l.b16 %v1829
        %v1842 = vpack.c.b16 %v1839, %v1838
        %v1843 = vpack.c.b16 %v1841, %v1840
        %v1847 = vsel %vm1267, %v1825, 0
        %1849 = vmatpush.bf16.msra.mxu0 0
        %1850 = vmatpush.bf16.msra.mxu0 0
        %1851 = vmatpush.bf16.msra.mxu0 0
        %1852 = vmatpush.bf16.msra.mxu0 0
        %1853 = vmatpush.bf16.msra.mxu0 0
        %1854 = vmatpush.bf16.msra.mxu0 0
        %1855 = vmatpush.bf16.msra.mxu0 %v1843
        %1856 = vmatpush.bf16.msra.mxu0 %v1842
        %1857 = vmatmul.bf16.gmra.mxu0 %v1847
        %v1858 = vpop.f32.mrf.mxu0
        %v1859 = vadd.f32 %v1832, %v1858
        %v1860 = vpop.f32.mrf.mxu0
        %v1861 = vadd.f32 %v1832, %v1860
        %1862 = vdwg.mxu0
        %v1863 = vadd.f32 %v1238, %v1859
        %v1864 = vadd.f32 %v1239, %v1861
        %v1865 = vld [vmem:[%s1157] sm:$0x1]
        %v1866 = vld [vmem:[%s1160] sm:$0x1]
        %v1867 = vsel %vm1267, %v1863, 0.0
        %1868 = vadd.xlane.f32.xlu0 %v1867
        %v1869 = vpop.xlane.xlu0 %1868
        %v1870 = vsel %vm1267, %v1864, 0.0
        %1871 = vadd.xlane.f32.xlu0 %v1870
        %v1872 = vpop.xlane.xlu0 %1871
        %v1873 = vrcp.pop 32.0
        %v1874 = vmul.f32 32.0, %v1873
        %v1875 = vsub.f32 1.0, %v1874
        %v1876 = vmul.f32 %v1873, %v1875
        %v1877 = vadd.f32 %v1873, %v1876
        %vm1878 = vweird.f32 %v1873
        %v1879 = vsel %vm1878, %v1873, %v1877
        %v1880 = vmul.f32 %v1869, %v1879
        %v1881 = vmul.f32 %v1872, %v1879
        %v1882 = vsub.f32 %v1863, %v1880
        %v1883 = vsub.f32 %v1864, %v1881
        %v1884 = vmul.f32 %v1882, %v1882
        %v1885 = vmul.f32 %v1883, %v1883
        %v1886 = vsel %vm1267, %v1884, 0.0
        %1887 = vadd.xlane.f32.xlu0 %v1886
        %v1888 = vpop.xlane.xlu0 %1887
        %v1889 = vsel %vm1267, %v1885, 0.0
        %1890 = vadd.xlane.f32.xlu0 %v1889
        %v1891 = vpop.xlane.xlu0 %1890
        %v1892 = vmul.f32 %v1888, %v1879
        %v1893 = vmul.f32 %v1891, %v1879
        %v1894 = vadd.f32 %v1892, 1e-05
        %v1895 = vadd.f32 %v1893, 1e-05
        %v1896 = vrsqrt.pop %v1894
        %v1897 = vmul.f32 %v1896, %v1894
        %v1898 = vmul.f32 %v1897, %v1896
        %v1899 = vmul.f32 0.5, %v1898
        %v1900 = vsub.f32 1.5, %v1899
        %v1901 = vmul.f32 %v1896, %v1900
        %vm1902 = vweird.f32 %v1894
        %vm1903 = vweird.f32 %v1896
        %vm1904 = vmor %vm1902, %vm1903
        %v1905 = vsel %vm1904, %v1896, %v1901
        %v1906 = vrsqrt.pop %v1895
        %v1907 = vmul.f32 %v1906, %v1895
        %v1908 = vmul.f32 %v1907, %v1906
        %v1909 = vmul.f32 0.5, %v1908
        %v1910 = vsub.f32 1.5, %v1909
        %v1911 = vmul.f32 %v1906, %v1910
        %vm1912 = vweird.f32 %v1895
        %vm1913 = vweird.f32 %v1906
        %vm1914 = vmor %vm1912, %vm1913
        %v1915 = vsel %vm1914, %v1906, %v1911
        %v1916 = vmul.f32 %v1882, %v1905
        %v1917 = vmul.f32 %v1883, %v1915
        %v1919 = vperm.slane %v1865, 0
        %v1921 = vmul.f32 %v1916, %v1919
        %v1922 = vmul.f32 %v1917, %v1919
        %v1924 = vperm.slane %v1866, 0
        %v1926 = vadd.f32 %v1921, %v1924
        %v1927 = vadd.f32 %v1922, %v1924
        %v1928 = vpack.c.bf16 %v1927, %v1926
        %v1929 = vld [vmem:[%s1165] sm:$0xf]
        %v1930 = vld [vmem:[%s1165 + $0x4] sm:$0xf]
        %v1931 = vld [vmem:[%s1165 + $0x8] sm:$0xf]
        %v1932 = vld [vmem:[%s1165 + $0xc] sm:$0xf]
        %v1933 = vld [vmem:[%s1168] sm:$0x1]
        %v1935 = vperm.slane %v1933, 0
        %v1941 = vunpack.c.l.b16 %v1929
        %v1942 = vunpack.c.l.b16 %v1930
        %v1943 = vunpack.c.l.b16 %v1931
        %v1944 = vunpack.c.l.b16 %v1932
        %v1945 = vpack.c.b16 %v1942, %v1941
        %v1946 = vpack.c.b16 %v1944, %v1943
        %v1950 = vsel %vm1267, %v1928, 0
        %1952 = vmatpush.bf16.msra.mxu0 0
        %1953 = vmatpush.bf16.msra.mxu0 0
        %1954 = vmatpush.bf16.msra.mxu0 0
        %1955 = vmatpush.bf16.msra.mxu0 0
        %1956 = vmatpush.bf16.msra.mxu0 0
        %1957 = vmatpush.bf16.msra.mxu0 0
        %1958 = vmatpush.bf16.msra.mxu0 %v1946
        %1959 = vmatpush.bf16.msra.mxu0 %v1945
        %1960 = vmatmul.bf16.gmra.mxu0 %v1950
        %v1961 = vpop.f32.mrf.mxu0
        %v1962 = vadd.f32 %v1935, %v1961
        %v1963 = vpop.f32.mrf.mxu0
        %v1964 = vadd.f32 %v1935, %v1963
        %1965 = vdwg.mxu0
        %v1966 = vpack.c.bf16 %v1241, %v1240
        %v1967 = vld [vmem:[%s1173] sm:$0xf]
        %v1968 = vld [vmem:[%s1173 + $0x4] sm:$0xf]
        %v1969 = vld [vmem:[%s1173 + $0x8] sm:$0xf]
        %v1970 = vld [vmem:[%s1173 + $0xc] sm:$0xf]
        %v1971 = vld [vmem:[%s1176] sm:$0x1]
        %v1973 = vperm.slane %v1971, 0
        %v1979 = vunpack.c.l.b16 %v1967
        %v1980 = vunpack.c.l.b16 %v1968
        %v1981 = vunpack.c.l.b16 %v1969
        %v1982 = vunpack.c.l.b16 %v1970
        %v1983 = vpack.c.b16 %v1980, %v1979
        %v1984 = vpack.c.b16 %v1982, %v1981
        %v1988 = vsel %vm1267, %v1966, 0
        %1990 = vmatpush.bf16.msra.mxu0 0
        %1991 = vmatpush.bf16.msra.mxu0 0
        %1992 = vmatpush.bf16.msra.mxu0 0
        %1993 = vmatpush.bf16.msra.mxu0 0
        %1994 = vmatpush.bf16.msra.mxu0 0
        %1995 = vmatpush.bf16.msra.mxu0 0
        %1996 = vmatpush.bf16.msra.mxu0 %v1984
        %1997 = vmatpush.bf16.msra.mxu0 %v1983
        %1998 = vmatmul.bf16.gmra.mxu0 %v1988
        %v1999 = vpop.f32.mrf.mxu0
        %v2000 = vadd.f32 %v1973, %v1999
        %v2001 = vpop.f32.mrf.mxu0
        %v2002 = vadd.f32 %v1973, %v2001
        %2003 = vdwg.mxu0
        %v2004 = vpack.c.bf16 %v1962, %v1962
        %v2005 = vpack.c.bf16 %v1964, %v1964
        %v2006 = vpack.c.bf16 %v2000, %v2000
        %v2007 = vpack.c.bf16 %v2002, %v2002
        %v2009 = vperm.slane %v1244, 0
        %v2012 = vsel %vm1292, %v2004, 0
        %v2015 = vsel %vm1292, %v2006, 0
        %2017 = vmatpush.bf16.xpose.msra.mxu0 0
        %2018 = vmatpush.bf16.xpose.msra.mxu0 0
        %2019 = vmatpush.bf16.xpose.msra.mxu0 0
        %2020 = vmatpush.bf16.xpose.msra.mxu0 0
        %2021 = vmatpush.bf16.xpose.msra.mxu0 0
        %2022 = vmatpush.bf16.xpose.msra.mxu0 0
        %2023 = vmatpush.bf16.xpose.msra.mxu0 0
        %2024 = vmatpush.bf16.xpose.msra.mxu0 %v2015
        %2025 = vmatmul.bf16.gmra.mxu0 %v2012
        %v2026 = vpop.f32.mrf.mxu0
        %v2027 = vadd.f32 0.0, %v2026
        %v2028 = vpop.f32.mrf.mxu0
        %2029 = vdwg.mxu0
        %v2030 = vmul.f32 %v2027, 0.35355338
        %v2031 = vadd.f32 %v2030, %v2009
        %v2032 = vsel %vm1292, %v2031, -inf
        %2033 = vmax.xlane.f32.xlu0 %v2032
        %v2034 = vpop.xlane.xlu0 %2033
        %v2035 = vsub.f32 %v2031, %v2034
        %v2036 = vmul.f32 %v2035, 1.442695
        %v2037 = vpow.pop %v2036
        %v2038 = vsel %vm1292, %v2037, 0.0
        %2039 = vadd.xlane.f32.xlu0 %v2038
        %v2040 = vpop.xlane.xlu0 %2039
        %v2041 = vrcp.pop %v2040
        %v2042 = vmul.f32 %v2037, %v2041
        %2043 = vst.msk [vmem:[%s1227] sm:$0xff] %vm1292, %v2042
        %v2044 = vpack.c.bf16 %v2042, %v2042
        %v2046 = vunpack.c.l.b16 %v2006
        %v2047 = vpack.c.b16 %v2046, %v2046
        %2048 = vrot.lane.b32.xlu0 %v2047, 96
        %v2049 = vpop.permute.xlu0 %2048
        %v2051 = vsel %vm1292, %v2044, 0
        %v2054 = vsel %vm1332, %v2049, 0
        %2056 = vmatpush.bf16.msra.mxu0 0
        %2057 = vmatpush.bf16.msra.mxu0 0
        %2058 = vmatpush.bf16.msra.mxu0 0
        %2059 = vmatpush.bf16.msra.mxu0 0
        %2060 = vmatpush.bf16.msra.mxu0 0
        %2061 = vmatpush.bf16.msra.mxu0 0
        %2062 = vmatpush.bf16.msra.mxu0 0
        %2063 = vmatpush.bf16.msra.mxu0 %v2054
        %2064 = vmatmul.bf16.gmra.mxu0 %v2051
        %v2065 = vpop.f32.mrf.mxu0
        %v2066 = vadd.f32 0.0, %v2065
        %v2067 = vpop.f32.mrf.mxu0
        %2068 = vdwg.mxu0
        %2069 = vst.msk [vmem:[#allocation3] sm:$0xff] %vm1292, %v2066
        %v2071 = vunpack.c.l.b16 %v2004
        %v2072 = vpack.c.b16 %v2071, %v2071
        %2073 = vrot.lane.b32.xlu0 %v2072, 120
        %v2074 = vpop.permute.xlu0 %2073
        %2075 = vrot.lane.b32.xlu0 %v2047, 120
        %v2076 = vpop.permute.xlu0 %2075
        %v2078 = vsel %vm1292, %v2074, 0
        %v2081 = vsel %vm1292, %v2076, 0
        %2083 = vmatpush.bf16.xpose.msra.mxu0 0
        %2084 = vmatpush.bf16.xpose.msra.mxu0 0
        %2085 = vmatpush.bf16.xpose.msra.mxu0 0
        %2086 = vmatpush.bf16.xpose.msra.mxu0 0
        %2087 = vmatpush.bf16.xpose.msra.mxu0 0
        %2088 = vmatpush.bf16.xpose.msra.mxu0 0
        %2089 = vmatpush.bf16.xpose.msra.mxu0 0
        %2090 = vmatpush.bf16.xpose.msra.mxu0 %v2081
        %2091 = vmatmul.bf16.gmra.mxu0 %v2078
        %v2092 = vpop.f32.mrf.mxu0
        %v2093 = vadd.f32 0.0, %v2092
        %v2094 = vpop.f32.mrf.mxu0
        %2095 = vdwg.mxu0
        %v2096 = vmul.f32 %v2093, 0.35355338
        %v2097 = vadd.f32 %v2096, %v2009
        %v2098 = vsel %vm1292, %v2097, -inf
        %2099 = vmax.xlane.f32.xlu0 %v2098
        %v2100 = vpop.xlane.xlu0 %2099
        %v2101 = vsub.f32 %v2097, %v2100
        %v2102 = vmul.f32 %v2101, 1.442695
        %v2103 = vpow.pop %v2102
        %v2104 = vsel %vm1292, %v2103, 0.0
        %2105 = vadd.xlane.f32.xlu0 %v2104
        %v2106 = vpop.xlane.xlu0 %2105
        %v2107 = vrcp.pop %v2106
        %v2108 = vmul.f32 %v2103, %v2107
        %2110 = vrot.lane.b32.xlu0 %v2108, 8
        %v2111 = vpop.permute.xlu0 %2110
        %2113 = vst.msk [vmem:[%s1227] sm:$0xff] %vm1390, %v2111
        %v2114 = vpack.c.bf16 %v2108, %v2108
        %2115 = vrot.lane.b32.xlu0 %v2047, 88
        %v2116 = vpop.permute.xlu0 %2115
        %v2118 = vsel %vm1292, %v2114, 0
        %v2121 = vsel %vm1332, %v2116, 0
        %2123 = vmatpush.bf16.msra.mxu0 0
        %2124 = vmatpush.bf16.msra.mxu0 0
        %2125 = vmatpush.bf16.msra.mxu0 0
        %2126 = vmatpush.bf16.msra.mxu0 0
        %2127 = vmatpush.bf16.msra.mxu0 0
        %2128 = vmatpush.bf16.msra.mxu0 0
        %2129 = vmatpush.bf16.msra.mxu0 0
        %2130 = vmatpush.bf16.msra.mxu0 %v2121
        %2131 = vmatmul.bf16.gmra.mxu0 %v2118
        %v2132 = vpop.f32.mrf.mxu0
        %v2133 = vadd.f32 0.0, %v2132
        %v2134 = vpop.f32.mrf.mxu0
        %2135 = vdwg.mxu0
        %2137 = vrot.lane.b32.xlu0 %v2133, 8
        %v2138 = vpop.permute.xlu0 %2137
        %2140 = vst.msk [vmem:[#allocation3] sm:$0xff] %vm1390, %v2138
        %2141 = vrot.lane.b32.xlu0 %v2072, 112
        %v2142 = vpop.permute.xlu0 %2141
        %2143 = vrot.lane.b32.xlu0 %v2047, 112
        %v2144 = vpop.permute.xlu0 %2143
        %v2146 = vsel %vm1292, %v2142, 0
        %v2149 = vsel %vm1292, %v2144, 0
        %2151 = vmatpush.bf16.xpose.msra.mxu0 0
        %2152 = vmatpush.bf16.xpose.msra.mxu0 0
        %2153 = vmatpush.bf16.xpose.msra.mxu0 0
        %2154 = vmatpush.bf16.xpose.msra.mxu0 0
        %2155 = vmatpush.bf16.xpose.msra.mxu0 0
        %2156 = vmatpush.bf16.xpose.msra.mxu0 0
        %2157 = vmatpush.bf16.xpose.msra.mxu0 0
        %2158 = vmatpush.bf16.xpose.msra.mxu0 %v2149
        %2159 = vmatmul.bf16.gmra.mxu0 %v2146
        %v2160 = vpop.f32.mrf.mxu0
        %v2161 = vadd.f32 0.0, %v2160
        %v2162 = vpop.f32.mrf.mxu0
        %2163 = vdwg.mxu0
        %v2164 = vmul.f32 %v2161, 0.35355338
        %v2165 = vadd.f32 %v2164, %v2009
        %v2166 = vsel %vm1292, %v2165, -inf
        %2167 = vmax.xlane.f32.xlu0 %v2166
        %v2168 = vpop.xlane.xlu0 %2167
        %v2169 = vsub.f32 %v2165, %v2168
        %v2170 = vmul.f32 %v2169, 1.442695
        %v2171 = vpow.pop %v2170
        %v2172 = vsel %vm1292, %v2171, 0.0
        %2173 = vadd.xlane.f32.xlu0 %v2172
        %v2174 = vpop.xlane.xlu0 %2173
        %v2175 = vrcp.pop %v2174
        %v2176 = vmul.f32 %v2171, %v2175
        %2178 = vrot.lane.b32.xlu0 %v2176, 16
        %v2179 = vpop.permute.xlu0 %2178
        %2181 = vst.msk [vmem:[%s1227] sm:$0xff] %vm1459, %v2179
        %v2182 = vpack.c.bf16 %v2176, %v2176
        %2183 = vrot.lane.b32.xlu0 %v2047, 80
        %v2184 = vpop.permute.xlu0 %2183
        %v2186 = vsel %vm1292, %v2182, 0
        %v2189 = vsel %vm1332, %v2184, 0
        %2191 = vmatpush.bf16.msra.mxu0 0
        %2192 = vmatpush.bf16.msra.mxu0 0
        %2193 = vmatpush.bf16.msra.mxu0 0
        %2194 = vmatpush.bf16.msra.mxu0 0
        %2195 = vmatpush.bf16.msra.mxu0 0
        %2196 = vmatpush.bf16.msra.mxu0 0
        %2197 = vmatpush.bf16.msra.mxu0 0
        %2198 = vmatpush.bf16.msra.mxu0 %v2189
        %2199 = vmatmul.bf16.gmra.mxu0 %v2186
        %v2200 = vpop.f32.mrf.mxu0
        %v2201 = vadd.f32 0.0, %v2200
        %v2202 = vpop.f32.mrf.mxu0
        %2203 = vdwg.mxu0
        %2205 = vrot.lane.b32.xlu0 %v2201, 16
        %v2206 = vpop.permute.xlu0 %2205
        %2208 = vst.msk [vmem:[#allocation3] sm:$0xff] %vm1459, %v2206
        %2209 = vrot.lane.b32.xlu0 %v2072, 104
        %v2210 = vpop.permute.xlu0 %2209
        %2211 = vrot.lane.b32.xlu0 %v2047, 104
        %v2212 = vpop.permute.xlu0 %2211
        %v2214 = vsel %vm1292, %v2210, 0
        %v2217 = vsel %vm1292, %v2212, 0
        %2219 = vmatpush.bf16.xpose.msra.mxu0 0
        %2220 = vmatpush.bf16.xpose.msra.mxu0 0
        %2221 = vmatpush.bf16.xpose.msra.mxu0 0
        %2222 = vmatpush.bf16.xpose.msra.mxu0 0
        %2223 = vmatpush.bf16.xpose.msra.mxu0 0
        %2224 = vmatpush.bf16.xpose.msra.mxu0 0
        %2225 = vmatpush.bf16.xpose.msra.mxu0 0
        %2226 = vmatpush.bf16.xpose.msra.mxu0 %v2217
        %2227 = vmatmul.bf16.gmra.mxu0 %v2214
        %v2228 = vpop.f32.mrf.mxu0
        %v2229 = vadd.f32 0.0, %v2228
        %v2230 = vpop.f32.mrf.mxu0
        %2231 = vdwg.mxu0
        %v2232 = vmul.f32 %v2229, 0.35355338
        %v2233 = vadd.f32 %v2232, %v2009
        %v2234 = vsel %vm1292, %v2233, -inf
        %2235 = vmax.xlane.f32.xlu0 %v2234
        %v2236 = vpop.xlane.xlu0 %2235
        %v2237 = vsub.f32 %v2233, %v2236
        %v2238 = vmul.f32 %v2237, 1.442695
        %v2239 = vpow.pop %v2238
        %v2240 = vsel %vm1292, %v2239, 0.0
        %2241 = vadd.xlane.f32.xlu0 %v2240
        %v2242 = vpop.xlane.xlu0 %2241
        %v2243 = vrcp.pop %v2242
        %v2244 = vmul.f32 %v2239, %v2243
        %2246 = vrot.lane.b32.xlu0 %v2244, 24
        %v2247 = vpop.permute.xlu0 %2246
        %2249 = vst.msk [vmem:[%s1227] sm:$0xff] %vm1528, %v2247
        %v2250 = vpack.c.bf16 %v2244, %v2244
        %2251 = vrot.lane.b32.xlu0 %v2047, 72
        %v2252 = vpop.permute.xlu0 %2251
        %v2254 = vsel %vm1292, %v2250, 0
        %v2257 = vsel %vm1332, %v2252, 0
        %2259 = vmatpush.bf16.msra.mxu0 0
        %2260 = vmatpush.bf16.msra.mxu0 0
        %2261 = vmatpush.bf16.msra.mxu0 0
        %2262 = vmatpush.bf16.msra.mxu0 0
        %2263 = vmatpush.bf16.msra.mxu0 0
        %2264 = vmatpush.bf16.msra.mxu0 0
        %2265 = vmatpush.bf16.msra.mxu0 0
        %2266 = vmatpush.bf16.msra.mxu0 %v2257
        %2267 = vmatmul.bf16.gmra.mxu0 %v2254
        %v2268 = vpop.f32.mrf.mxu0
        %v2269 = vadd.f32 0.0, %v2268
        %v2270 = vpop.f32.mrf.mxu0
        %2271 = vdwg.mxu0
        %2273 = vrot.lane.b32.xlu0 %v2269, 24
        %v2274 = vpop.permute.xlu0 %2273
        %2276 = vst.msk [vmem:[#allocation3] sm:$0xff] %vm1528, %v2274
        %v2278 = vperm.slane %v1245, 0
        %v2281 = vsel %vm1292, %v2005, 0
        %v2284 = vsel %vm1292, %v2007, 0
        %2286 = vmatpush.bf16.xpose.msra.mxu0 0
        %2287 = vmatpush.bf16.xpose.msra.mxu0 0
        %2288 = vmatpush.bf16.xpose.msra.mxu0 0
        %2289 = vmatpush.bf16.xpose.msra.mxu0 0
        %2290 = vmatpush.bf16.xpose.msra.mxu0 0
        %2291 = vmatpush.bf16.xpose.msra.mxu0 0
        %2292 = vmatpush.bf16.xpose.msra.mxu0 0
        %2293 = vmatpush.bf16.xpose.msra.mxu0 %v2284
        %2294 = vmatmul.bf16.gmra.mxu0 %v2281
        %v2295 = vpop.f32.mrf.mxu0
        %v2296 = vadd.f32 0.0, %v2295
        %v2297 = vpop.f32.mrf.mxu0
        %2298 = vdwg.mxu0
        %v2299 = vmul.f32 %v2296, 0.35355338
        %v2300 = vadd.f32 %v2299, %v2278
        %v2301 = vsel %vm1292, %v2300, -inf
        %2302 = vmax.xlane.f32.xlu0 %v2301
        %v2303 = vpop.xlane.xlu0 %2302
        %v2304 = vsub.f32 %v2300, %v2303
        %v2305 = vmul.f32 %v2304, 1.442695
        %v2306 = vpow.pop %v2305
        %v2307 = vsel %vm1292, %v2306, 0.0
        %2308 = vadd.xlane.f32.xlu0 %v2307
        %v2309 = vpop.xlane.xlu0 %2308
        %v2310 = vrcp.pop %v2309
        %v2311 = vmul.f32 %v2306, %v2310
        %s2312 = scalar_lea.vmem %s1227, 8
        %2313 = vst.msk [vmem:[%s2312] sm:$0xff] %vm1292, %v2311
        %v2314 = vpack.c.bf16 %v2311, %v2311
        %v2316 = vunpack.c.l.b16 %v2007
        %v2317 = vpack.c.b16 %v2316, %v2316
        %2318 = vrot.lane.b32.xlu0 %v2317, 96
        %v2319 = vpop.permute.xlu0 %2318
        %v2321 = vsel %vm1292, %v2314, 0
        %v2324 = vsel %vm1332, %v2319, 0
        %2326 = vmatpush.bf16.msra.mxu0 0
        %2327 = vmatpush.bf16.msra.mxu0 0
        %2328 = vmatpush.bf16.msra.mxu0 0
        %2329 = vmatpush.bf16.msra.mxu0 0
        %2330 = vmatpush.bf16.msra.mxu0 0
        %2331 = vmatpush.bf16.msra.mxu0 0
        %2332 = vmatpush.bf16.msra.mxu0 0
        %2333 = vmatpush.bf16.msra.mxu0 %v2324
        %2334 = vmatmul.bf16.gmra.mxu0 %v2321
        %v2335 = vpop.f32.mrf.mxu0
        %v2336 = vadd.f32 0.0, %v2335
        %v2337 = vpop.f32.mrf.mxu0
        %2338 = vdwg.mxu0
        %2339 = vst.msk [vmem:[#allocation3 + $0x8] sm:$0xff] %vm1292, %v2336
        %v2341 = vunpack.c.l.b16 %v2005
        %v2342 = vpack.c.b16 %v2341, %v2341
        %2343 = vrot.lane.b32.xlu0 %v2342, 120
        %v2344 = vpop.permute.xlu0 %2343
        %2345 = vrot.lane.b32.xlu0 %v2317, 120
        %v2346 = vpop.permute.xlu0 %2345
        %v2348 = vsel %vm1292, %v2344, 0
        %v2351 = vsel %vm1292, %v2346, 0
        %2353 = vmatpush.bf16.xpose.msra.mxu0 0
        %2354 = vmatpush.bf16.xpose.msra.mxu0 0
        %2355 = vmatpush.bf16.xpose.msra.mxu0 0
        %2356 = vmatpush.bf16.xpose.msra.mxu0 0
        %2357 = vmatpush.bf16.xpose.msra.mxu0 0
        %2358 = vmatpush.bf16.xpose.msra.mxu0 0
        %2359 = vmatpush.bf16.xpose.msra.mxu0 0
        %2360 = vmatpush.bf16.xpose.msra.mxu0 %v2351
        %2361 = vmatmul.bf16.gmra.mxu0 %v2348
        %v2362 = vpop.f32.mrf.mxu0
        %v2363 = vadd.f32 0.0, %v2362
        %v2364 = vpop.f32.mrf.mxu0
        %2365 = vdwg.mxu0
        %v2366 = vmul.f32 %v2363, 0.35355338
        %v2367 = vadd.f32 %v2366, %v2278
        %v2368 = vsel %vm1292, %v2367, -inf
        %2369 = vmax.xlane.f32.xlu0 %v2368
        %v2370 = vpop.xlane.xlu0 %2369
        %v2371 = vsub.f32 %v2367, %v2370
        %v2372 = vmul.f32 %v2371, 1.442695
        %v2373 = vpow.pop %v2372
        %v2374 = vsel %vm1292, %v2373, 0.0
        %2375 = vadd.xlane.f32.xlu0 %v2374
        %v2376 = vpop.xlane.xlu0 %2375
        %v2377 = vrcp.pop %v2376
        %v2378 = vmul.f32 %v2373, %v2377
        %2380 = vrot.lane.b32.xlu0 %v2378, 8
        %v2381 = vpop.permute.xlu0 %2380
        %2383 = vst.msk [vmem:[%s2312] sm:$0xff] %vm1390, %v2381
        %v2384 = vpack.c.bf16 %v2378, %v2378
        %2385 = vrot.lane.b32.xlu0 %v2317, 88
        %v2386 = vpop.permute.xlu0 %2385
        %v2388 = vsel %vm1292, %v2384, 0
        %v2391 = vsel %vm1332, %v2386, 0
        %2393 = vmatpush.bf16.msra.mxu0 0
        %2394 = vmatpush.bf16.msra.mxu0 0
        %2395 = vmatpush.bf16.msra.mxu0 0
        %2396 = vmatpush.bf16.msra.mxu0 0
        %2397 = vmatpush.bf16.msra.mxu0 0
        %2398 = vmatpush.bf16.msra.mxu0 0
        %2399 = vmatpush.bf16.msra.mxu0 0
        %2400 = vmatpush.bf16.msra.mxu0 %v2391
        %2401 = vmatmul.bf16.gmra.mxu0 %v2388
        %v2402 = vpop.f32.mrf.mxu0
        %v2403 = vadd.f32 0.0, %v2402
        %v2404 = vpop.f32.mrf.mxu0
        %2405 = vdwg.mxu0
        %2407 = vrot.lane.b32.xlu0 %v2403, 8
        %v2408 = vpop.permute.xlu0 %2407
        %2410 = vst.msk [vmem:[#allocation3 + $0x8] sm:$0xff] %vm1390, %v2408
        %2411 = vrot.lane.b32.xlu0 %v2342, 112
        %v2412 = vpop.permute.xlu0 %2411
        %2413 = vrot.lane.b32.xlu0 %v2317, 112
        %v2414 = vpop.permute.xlu0 %2413
        %v2416 = vsel %vm1292, %v2412, 0
        %v2419 = vsel %vm1292, %v2414, 0
        %2421 = vmatpush.bf16.xpose.msra.mxu0 0
        %2422 = vmatpush.bf16.xpose.msra.mxu0 0
        %2423 = vmatpush.bf16.xpose.msra.mxu0 0
        %2424 = vmatpush.bf16.xpose.msra.mxu0 0
        %2425 = vmatpush.bf16.xpose.msra.mxu0 0
        %2426 = vmatpush.bf16.xpose.msra.mxu0 0
        %2427 = vmatpush.bf16.xpose.msra.mxu0 0
        %2428 = vmatpush.bf16.xpose.msra.mxu0 %v2419
        %2429 = vmatmul.bf16.gmra.mxu0 %v2416
        %v2430 = vpop.f32.mrf.mxu0
        %v2431 = vadd.f32 0.0, %v2430
        %v2432 = vpop.f32.mrf.mxu0
        %2433 = vdwg.mxu0
        %v2434 = vmul.f32 %v2431, 0.35355338
        %v2435 = vadd.f32 %v2434, %v2278
        %v2436 = vsel %vm1292, %v2435, -inf
        %2437 = vmax.xlane.f32.xlu0 %v2436
        %v2438 = vpop.xlane.xlu0 %2437
        %v2439 = vsub.f32 %v2435, %v2438
        %v2440 = vmul.f32 %v2439, 1.442695
        %v2441 = vpow.pop %v2440
        %v2442 = vsel %vm1292, %v2441, 0.0
        %2443 = vadd.xlane.f32.xlu0 %v2442
        %v2444 = vpop.xlane.xlu0 %2443
        %v2445 = vrcp.pop %v2444
        %v2446 = vmul.f32 %v2441, %v2445
        %2448 = vrot.lane.b32.xlu0 %v2446, 16
        %v2449 = vpop.permute.xlu0 %2448
        %2451 = vst.msk [vmem:[%s2312] sm:$0xff] %vm1459, %v2449
        %v2452 = vpack.c.bf16 %v2446, %v2446
        %2453 = vrot.lane.b32.xlu0 %v2317, 80
        %v2454 = vpop.permute.xlu0 %2453
        %v2456 = vsel %vm1292, %v2452, 0
        %v2459 = vsel %vm1332, %v2454, 0
        %2461 = vmatpush.bf16.msra.mxu0 0
        %2462 = vmatpush.bf16.msra.mxu0 0
        %2463 = vmatpush.bf16.msra.mxu0 0
        %2464 = vmatpush.bf16.msra.mxu0 0
        %2465 = vmatpush.bf16.msra.mxu0 0
        %2466 = vmatpush.bf16.msra.mxu0 0
        %2467 = vmatpush.bf16.msra.mxu0 0
        %2468 = vmatpush.bf16.msra.mxu0 %v2459
        %2469 = vmatmul.bf16.gmra.mxu0 %v2456
        %v2470 = vpop.f32.mrf.mxu0
        %v2471 = vadd.f32 0.0, %v2470
        %v2472 = vpop.f32.mrf.mxu0
        %2473 = vdwg.mxu0
        %2475 = vrot.lane.b32.xlu0 %v2471, 16
        %v2476 = vpop.permute.xlu0 %2475
        %2478 = vst.msk [vmem:[#allocation3 + $0x8] sm:$0xff] %vm1459, %v2476
        %2479 = vrot.lane.b32.xlu0 %v2342, 104
        %v2480 = vpop.permute.xlu0 %2479
        %2481 = vrot.lane.b32.xlu0 %v2317, 104
        %v2482 = vpop.permute.xlu0 %2481
        %v2484 = vsel %vm1292, %v2480, 0
        %v2487 = vsel %vm1292, %v2482, 0
        %2489 = vmatpush.bf16.xpose.msra.mxu0 0
        %2490 = vmatpush.bf16.xpose.msra.mxu0 0
        %2491 = vmatpush.bf16.xpose.msra.mxu0 0
        %2492 = vmatpush.bf16.xpose.msra.mxu0 0
        %2493 = vmatpush.bf16.xpose.msra.mxu0 0
        %2494 = vmatpush.bf16.xpose.msra.mxu0 0
        %2495 = vmatpush.bf16.xpose.msra.mxu0 0
        %2496 = vmatpush.bf16.xpose.msra.mxu0 %v2487
        %2497 = vmatmul.bf16.gmra.mxu0 %v2484
        %v2498 = vpop.f32.mrf.mxu0
        %v2499 = vadd.f32 0.0, %v2498
        %v2500 = vpop.f32.mrf.mxu0
        %2501 = vdwg.mxu0
        %v2502 = vmul.f32 %v2499, 0.35355338
        %v2503 = vadd.f32 %v2502, %v2278
        %v2504 = vsel %vm1292, %v2503, -inf
        %2505 = vmax.xlane.f32.xlu0 %v2504
        %v2506 = vpop.xlane.xlu0 %2505
        %v2507 = vsub.f32 %v2503, %v2506
        %v2508 = vmul.f32 %v2507, 1.442695
        %v2509 = vpow.pop %v2508
        %v2510 = vsel %vm1292, %v2509, 0.0
        %2511 = vadd.xlane.f32.xlu0 %v2510
        %v2512 = vpop.xlane.xlu0 %2511
        %v2513 = vrcp.pop %v2512
        %v2514 = vmul.f32 %v2509, %v2513
        %2516 = vrot.lane.b32.xlu0 %v2514, 24
        %v2517 = vpop.permute.xlu0 %2516
        %2519 = vst.msk [vmem:[%s2312] sm:$0xff] %vm1528, %v2517
        %v2520 = vpack.c.bf16 %v2514, %v2514
        %2521 = vrot.lane.b32.xlu0 %v2317, 72
        %v2522 = vpop.permute.xlu0 %2521
        %v2524 = vsel %vm1292, %v2520, 0
        %v2527 = vsel %vm1332, %v2522, 0
        %2529 = vmatpush.bf16.msra.mxu0 0
        %2530 = vmatpush.bf16.msra.mxu0 0
        %2531 = vmatpush.bf16.msra.mxu0 0
        %2532 = vmatpush.bf16.msra.mxu0 0
        %2533 = vmatpush.bf16.msra.mxu0 0
        %2534 = vmatpush.bf16.msra.mxu0 0
        %2535 = vmatpush.bf16.msra.mxu0 0
        %2536 = vmatpush.bf16.msra.mxu0 %v2527
        %2537 = vmatmul.bf16.gmra.mxu0 %v2524
        %v2538 = vpop.f32.mrf.mxu0
        %v2539 = vadd.f32 0.0, %v2538
        %v2540 = vpop.f32.mrf.mxu0
        %2541 = vdwg.mxu0
        %2543 = vrot.lane.b32.xlu0 %v2539, 24
        %v2544 = vpop.permute.xlu0 %2543
        %2546 = vst.msk [vmem:[#allocation3 + $0x8] sm:$0xff] %vm1528, %v2544
        %v2547 = vld [vmem:[#allocation3] sm:$0xff]
        %v2548 = vld [vmem:[#allocation3 + $0x8] sm:$0xff]
        %v2549 = vpack.c.bf16 %v2548, %v2547
        %v2550 = vld [vmem:[%s1181] sm:$0xf]
        %v2551 = vld [vmem:[%s1181 + $0x4] sm:$0xf]
        %v2552 = vld [vmem:[%s1181 + $0x8] sm:$0xf]
        %v2553 = vld [vmem:[%s1181 + $0xc] sm:$0xf]
        %v2554 = vld [vmem:[%s1184] sm:$0x1]
        %v2556 = vperm.slane %v2554, 0
        %v2562 = vunpack.c.l.b16 %v2550
        %v2563 = vunpack.c.l.b16 %v2551
        %v2564 = vunpack.c.l.b16 %v2552
        %v2565 = vunpack.c.l.b16 %v2553
        %v2566 = vpack.c.b16 %v2563, %v2562
        %v2567 = vpack.c.b16 %v2565, %v2564
        %v2571 = vsel %vm1267, %v2549, 0
        %2573 = vmatpush.bf16.msra.mxu0 0
        %2574 = vmatpush.bf16.msra.mxu0 0
        %2575 = vmatpush.bf16.msra.mxu0 0
        %2576 = vmatpush.bf16.msra.mxu0 0
        %2577 = vmatpush.bf16.msra.mxu0 0
        %2578 = vmatpush.bf16.msra.mxu0 0
        %2579 = vmatpush.bf16.msra.mxu0 %v2567
        %2580 = vmatpush.bf16.msra.mxu0 %v2566
        %2581 = vmatmul.bf16.gmra.mxu0 %v2571
        %v2582 = vpop.f32.mrf.mxu0
        %v2583 = vadd.f32 %v2556, %v2582
        %v2584 = vpop.f32.mrf.mxu0
        %v2585 = vadd.f32 %v2556, %v2584
        %2586 = vdwg.mxu0
        %v2587 = vadd.f32 %v1926, %v2583
        %v2588 = vadd.f32 %v1927, %v2585
        %v2589 = vld [vmem:[%s1187] sm:$0x1]
        %v2590 = vld [vmem:[%s1190] sm:$0x1]
        %v2591 = vsel %vm1267, %v2587, 0.0
        %2592 = vadd.xlane.f32.xlu0 %v2591
        %v2593 = vpop.xlane.xlu0 %2592
        %v2594 = vsel %vm1267, %v2588, 0.0
        %2595 = vadd.xlane.f32.xlu0 %v2594
        %v2596 = vpop.xlane.xlu0 %2595
        %v2597 = vmul.f32 %v2593, %v1879
        %v2598 = vmul.f32 %v2596, %v1879
        %v2599 = vsub.f32 %v2587, %v2597
        %v2600 = vsub.f32 %v2588, %v2598
        %v2601 = vmul.f32 %v2599, %v2599
        %v2602 = vmul.f32 %v2600, %v2600
        %v2603 = vsel %vm1267, %v2601, 0.0
        %2604 = vadd.xlane.f32.xlu0 %v2603
        %v2605 = vpop.xlane.xlu0 %2604
        %v2606 = vsel %vm1267, %v2602, 0.0
        %2607 = vadd.xlane.f32.xlu0 %v2606
        %v2608 = vpop.xlane.xlu0 %2607
        %v2609 = vmul.f32 %v2605, %v1879
        %v2610 = vmul.f32 %v2608, %v1879
        %v2611 = vadd.f32 %v2609, 1e-05
        %v2612 = vadd.f32 %v2610, 1e-05
        %v2613 = vrsqrt.pop %v2611
        %v2614 = vmul.f32 %v2613, %v2611
        %v2615 = vmul.f32 %v2614, %v2613
        %v2616 = vmul.f32 0.5, %v2615
        %v2617 = vsub.f32 1.5, %v2616
        %v2618 = vmul.f32 %v2613, %v2617
        %vm2619 = vweird.f32 %v2611
        %vm2620 = vweird.f32 %v2613
        %vm2621 = vmor %vm2619, %vm2620
        %v2622 = vsel %vm2621, %v2613, %v2618
        %v2623 = vrsqrt.pop %v2612
        %v2624 = vmul.f32 %v2623, %v2612
        %v2625 = vmul.f32 %v2624, %v2623
        %v2626 = vmul.f32 0.5, %v2625
        %v2627 = vsub.f32 1.5, %v2626
        %v2628 = vmul.f32 %v2623, %v2627
        %vm2629 = vweird.f32 %v2612
        %vm2630 = vweird.f32 %v2623
        %vm2631 = vmor %vm2629, %vm2630
        %v2632 = vsel %vm2631, %v2623, %v2628
        %v2633 = vmul.f32 %v2599, %v2622
        %v2634 = vmul.f32 %v2600, %v2632
        %v2636 = vperm.slane %v2589, 0
        %v2638 = vmul.f32 %v2633, %v2636
        %v2639 = vmul.f32 %v2634, %v2636
        %v2641 = vperm.slane %v2590, 0
        %v2643 = vadd.f32 %v2638, %v2641
        %v2644 = vadd.f32 %v2639, %v2641
        %v2645 = vpack.c.bf16 %v2644, %v2643
        %v2646 = vld [vmem:[%s1195] sm:$0xf]
        %v2647 = vld [vmem:[%s1195 + $0x4] sm:$0xf]
        %v2648 = vld [vmem:[%s1195 + $0x8] sm:$0xf]
        %v2649 = vld [vmem:[%s1195 + $0xc] sm:$0xf]
        %v2650 = vld [vmem:[%s1198] sm:$0x1]
        %v2652 = vperm.slane %v2650, 0
        %v2658 = vunpack.c.l.b16 %v2646
        %v2659 = vunpack.c.l.b16 %v2647
        %v2660 = vunpack.c.l.b16 %v2648
        %v2661 = vunpack.c.l.b16 %v2649
        %v2662 = vpack.c.b16 %v2659, %v2658
        %v2663 = vpack.c.b16 %v2661, %v2660
        %v2667 = vsel %vm1267, %v2645, 0
        %2669 = vmatpush.bf16.msra.mxu0 0
        %2670 = vmatpush.bf16.msra.mxu0 0
        %2671 = vmatpush.bf16.msra.mxu0 0
        %2672 = vmatpush.bf16.msra.mxu0 0
        %2673 = vmatpush.bf16.msra.mxu0 0
        %2674 = vmatpush.bf16.msra.mxu0 0
        %2675 = vmatpush.bf16.msra.mxu0 %v2663
        %2676 = vmatpush.bf16.msra.mxu0 %v2662
        %2677 = vmatmul.bf16.gmra.mxu0 %v2667
        %v2678 = vpop.f32.mrf.mxu0
        %v2679 = vadd.f32 %v2652, %v2678
        %v2680 = vpop.f32.mrf.mxu0
        %v2681 = vadd.f32 %v2652, %v2680
        %2682 = vdwg.mxu0
        %v2683 = vmax.f32 %v2679, 0.0
        %v2684 = vmax.f32 %v2681, 0.0
        %v2685 = vpack.c.bf16 %v2684, %v2683
        %v2686 = vld [vmem:[%s1203] sm:$0xf]
        %v2687 = vld [vmem:[%s1203 + $0x4] sm:$0xf]
        %v2688 = vld [vmem:[%s1203 + $0x8] sm:$0xf]
        %v2689 = vld [vmem:[%s1203 + $0xc] sm:$0xf]
        %v2690 = vld [vmem:[%s1203 + $0x10] sm:$0xf]
        %v2691 = vld [vmem:[%s1203 + $0x14] sm:$0xf]
        %v2692 = vld [vmem:[%s1203 + $0x18] sm:$0xf]
        %v2693 = vld [vmem:[%s1203 + $0x1c] sm:$0xf]
        %v2702 = vunpack.c.l.b16 %v2686
        %v2703 = vunpack.c.l.b16 %v2687
        %v2704 = vunpack.c.l.b16 %v2688
        %v2705 = vunpack.c.l.b16 %v2689
        %v2706 = vunpack.c.l.b16 %v2690
        %v2707 = vunpack.c.l.b16 %v2691
        %v2708 = vunpack.c.l.b16 %v2692
        %v2709 = vunpack.c.l.b16 %v2693
        %v2710 = vpack.c.b16 %v2703, %v2702
        %v2711 = vpack.c.b16 %v2705, %v2704
        %v2712 = vpack.c.b16 %v2707, %v2706
        %v2713 = vpack.c.b16 %v2709, %v2708
        %vm2718 = vcmask 523264
        %v2720 = vsel %vm2718, %v2685, 0
        %2722 = vmatpush.bf16.msra.mxu0 0
        %2723 = vmatpush.bf16.msra.mxu0 0
        %2724 = vmatpush.bf16.msra.mxu0 0
        %2725 = vmatpush.bf16.msra.mxu0 0
        %2726 = vmatpush.bf16.msra.mxu0 %v2713
        %2727 = vmatpush.bf16.msra.mxu0 %v2712
        %2728 = vmatpush.bf16.msra.mxu0 %v2711
        %2729 = vmatpush.bf16.msra.mxu0 %v2710
        %2730 = vmatmul.bf16.gmra.mxu0 %v2720
        %v2731 = vpop.f32.mrf.mxu0
        %v2732 = vadd.f32 0.0, %v2731
        %v2733 = vpop.f32.mrf.mxu0
        %v2734 = vadd.f32 0.0, %v2733
        %2735 = vdwg.mxu0
        %v2736 = vadd.f32 %v2643, %v2732
        %v2737 = vadd.f32 %v2644, %v2734
        %v2738 = vld [vmem:[%s1206] sm:$0x1]
        %v2740 = vperm.slane %v2738, 0
        %v2742 = vadd.f32 %v2736, %v2740
        %v2743 = vadd.f32 %v2737, %v2740
        %v2744 = vld [vmem:[%s1209] sm:$0x1]
        %v2745 = vld [vmem:[%s1212] sm:$0x1]
        %v2746 = vsel %vm1267, %v2742, 0.0
        %2747 = vadd.xlane.f32.xlu0 %v2746
        %v2748 = vpop.xlane.xlu0 %2747
        %v2749 = vsel %vm1267, %v2743, 0.0
        %2750 = vadd.xlane.f32.xlu0 %v2749
        %v2751 = vpop.xlane.xlu0 %2750
        %v2752 = vmul.f32 %v2748, %v1879
        %v2753 = vmul.f32 %v2751, %v1879
        %v2754 = vsub.f32 %v2742, %v2752
        %v2755 = vsub.f32 %v2743, %v2753
        %v2756 = vmul.f32 %v2754, %v2754
        %v2757 = vmul.f32 %v2755, %v2755
        %v2758 = vsel %vm1267, %v2756, 0.0
        %2759 = vadd.xlane.f32.xlu0 %v2758
        %v2760 = vpop.xlane.xlu0 %2759
        %v2761 = vsel %vm1267, %v2757, 0.0
        %2762 = vadd.xlane.f32.xlu0 %v2761
        %v2763 = vpop.xlane.xlu0 %2762
        %v2764 = vmul.f32 %v2760, %v1879
        %v2765 = vmul.f32 %v2763, %v1879
        %v2766 = vadd.f32 %v2764, 1e-05
        %v2767 = vadd.f32 %v2765, 1e-05
        %v2768 = vrsqrt.pop %v2766
        %v2769 = vmul.f32 %v2768, %v2766
        %v2770 = vmul.f32 %v2769, %v2768
        %v2771 = vmul.f32 0.5, %v2770
        %v2772 = vsub.f32 1.5, %v2771
        %v2773 = vmul.f32 %v2768, %v2772
        %vm2774 = vweird.f32 %v2766
        %vm2775 = vweird.f32 %v2768
        %vm2776 = vmor %vm2774, %vm2775
        %v2777 = vsel %vm2776, %v2768, %v2773
        %v2778 = vrsqrt.pop %v2767
        %v2779 = vmul.f32 %v2778, %v2767
        %v2780 = vmul.f32 %v2779, %v2778
        %v2781 = vmul.f32 0.5, %v2780
        %v2782 = vsub.f32 1.5, %v2781
        %v2783 = vmul.f32 %v2778, %v2782
        %vm2784 = vweird.f32 %v2767
        %vm2785 = vweird.f32 %v2778
        %vm2786 = vmor %vm2784, %vm2785
        %v2787 = vsel %vm2786, %v2778, %v2783
        %v2788 = vmul.f32 %v2754, %v2777
        %v2789 = vmul.f32 %v2755, %v2787
        %v2791 = vperm.slane %v2744, 0
        %v2793 = vmul.f32 %v2788, %v2791
        %v2794 = vmul.f32 %v2789, %v2791
        %v2796 = vperm.slane %v2745, 0
        %v2798 = vadd.f32 %v2793, %v2796
        %v2799 = vadd.f32 %v2794, %v2796
        %2800 = vst.msk [vmem:[#allocation2] sm:$0xff] %vm1267, %v2798
        %2801 = vst.msk [vmem:[#allocation2 + $0x8] sm:$0xff] %vm1267, %v2799
        %2802 = vst.msk [vmem:[%s1217] sm:$0xff] %vm1267, %v2798
        %2803 = vst.msk [vmem:[%s1217 + $0x8] sm:$0xff] %vm1267, %v2799
        %v2804 = vld [vmem:[%s49] sm:$0x1]
        %v2805 = vld [vmem:[%s51] sm:$0x1]
        %v2806 = vsel %vm1267, %v2798, 0.0
        %2807 = vadd.xlane.f32.xlu0 %v2806
        %v2808 = vpop.xlane.xlu0 %2807
        %v2809 = vsel %vm1267, %v2799, 0.0
        %2810 = vadd.xlane.f32.xlu0 %v2809
        %v2811 = vpop.xlane.xlu0 %2810
        %v2812 = vmul.f32 %v2808, %v1879
        %v2813 = vmul.f32 %v2811, %v1879
        %v2814 = vsub.f32 %v2798, %v2812
        %v2815 = vsub.f32 %v2799, %v2813
        %v2816 = vmul.f32 %v2814, %v2814
        %v2817 = vmul.f32 %v2815, %v2815
        %v2818 = vsel %vm1267, %v2816, 0.0
        %2819 = vadd.xlane.f32.xlu0 %v2818
        %v2820 = vpop.xlane.xlu0 %2819
        %v2821 = vsel %vm1267, %v2817, 0.0
        %2822 = vadd.xlane.f32.xlu0 %v2821
        %v2823 = vpop.xlane.xlu0 %2822
        %v2824 = vmul.f32 %v2820, %v1879
        %v2825 = vmul.f32 %v2823, %v1879
        %v2826 = vadd.f32 %v2824, 1e-05
        %v2827 = vadd.f32 %v2825, 1e-05
        %v2828 = vrsqrt.pop %v2826
        %v2829 = vmul.f32 %v2828, %v2826
        %v2830 = vmul.f32 %v2829, %v2828
        %v2831 = vmul.f32 0.5, %v2830
        %v2832 = vsub.f32 1.5, %v2831
        %v2833 = vmul.f32 %v2828, %v2832
        %vm2834 = vweird.f32 %v2826
        %vm2835 = vweird.f32 %v2828
        %vm2836 = vmor %vm2834, %vm2835
        %v2837 = vsel %vm2836, %v2828, %v2833
        %v2838 = vrsqrt.pop %v2827
        %v2839 = vmul.f32 %v2838, %v2827
        %v2840 = vmul.f32 %v2839, %v2838
        %v2841 = vmul.f32 0.5, %v2840
        %v2842 = vsub.f32 1.5, %v2841
        %v2843 = vmul.f32 %v2838, %v2842
        %vm2844 = vweird.f32 %v2827
        %vm2845 = vweird.f32 %v2838
        %vm2846 = vmor %vm2844, %vm2845
        %v2847 = vsel %vm2846, %v2838, %v2843
        %v2848 = vmul.f32 %v2814, %v2837
        %v2849 = vmul.f32 %v2815, %v2847
        %v2851 = vperm.slane %v2804, 0
        %v2853 = vmul.f32 %v2848, %v2851
        %v2854 = vmul.f32 %v2849, %v2851
        %v2856 = vperm.slane %v2805, 0
        %v2858 = vadd.f32 %v2853, %v2856
        %v2859 = vadd.f32 %v2854, %v2856
        %2860 = vst.msk [vmem:[#allocation4] sm:$0xff] %vm1267, %v2858
        %2861 = vst.msk [vmem:[#allocation4 + $0x8] sm:$0xff] %vm1267, %v2859
        %p2862 = scmp.lt.s32.totalorder %s72, 1
        %s2863 = scalar_select %p2862, %s72, 1
        %s2864 = smul.addr %s2863, 2
        %s2865 = smul.addr %s2864, 8
        %s2866 = scalar_lea.vmem %s53, %s2865
        %p2867 = scmp.lt.s32.totalorder %s72, 1
        %s2868 = scalar_select %p2867, %s72, 1
        %s2869 = smul.addr %s2868, 2
        %s2870 = smul.addr %s2869, 8
        %s2871 = scalar_lea.vmem %s55, %s2870
        %p2872 = scmp.lt.s32.totalorder %s72, 1
        %s2873 = scalar_select %p2872, %s72, 1
        %s2874 = smul.addr %s2873, 2
        %s2875 = smul.addr %s2874, 8
        %s2876 = scalar_lea.vmem %s57, %s2875
        // Predicated region
        $region129: #{translation_model_forward.3} parent=123 // pred_check
          %p2877 = pneg %p736
        $region130: #{translation_model_forward.3} parent=123 // pred_check_branch
          %2879 = sbr.rel (%p2877) target = $region132
        $region131: #{translation_model_forward.3} parent=123 // pred_region
          _
        $region132: #{translation_model_forward.3} parent=123 // pred_fallthru
          _
        // Predicated region
        $region133: #{translation_model_forward.3} parent=123 // pred_check
          %p2880 = pneg %p762
        $region134: #{translation_model_forward.3} parent=123 // pred_check_branch
          %2882 = sbr.rel (%p2880) target = $region136
        $region135: #{translation_model_forward.3} parent=123 // pred_region
          _
        $region136: #{translation_model_forward.3} parent=123 // pred_fallthru
          _
        // Predicated region
        $region137: #{translation_model_forward.3} parent=123 // pred_check
          %p2883 = pneg %p788
        $region138: #{translation_model_forward.3} parent=123 // pred_check_branch
          %2885 = sbr.rel (%p2883) target = $region140
        $region139: #{translation_model_forward.3} parent=123 // pred_region
          _
        $region140: #{translation_model_forward.3} parent=123 // pred_fallthru
          _
        // Predicated region
        $region141: #{translation_model_forward.3} parent=123 // pred_check
          %p2886 = pneg %p809
        $region142: #{translation_model_forward.3} parent=123 // pred_check_branch
          %2888 = sbr.rel (%p2886) target = $region144
        $region143: #{translation_model_forward.3} parent=123 // pred_region
          %2890 = vsyncadd [#allocation5], 0
          %s2891 = sshll.u32 [#allocation4], 4
          %s2892 = int_to_ptr.vmem [resolvable:$true] %s2891
          %s2893 = sshll.u32 %s59, 4
          %s2894 = int_to_ptr.hbm [resolvable:$true] %s2893
          %2899 = dma.vmem_to_hbm [thread:$0]  %s2892, 256, %s2894, [#allocation5], 128, 128, 8
        $region144: #{translation_model_forward.3} parent=123 // pred_fallthru
          _
        // Predicated region
        $region145: #{translation_model_forward.3} parent=123 // pred_check
          %p2900 = pneg %p809
        $region146: #{translation_model_forward.3} parent=123 // pred_check_branch
          %2902 = sbr.rel (%p2900) target = $region148
        $region147: #{translation_model_forward.3} parent=123 // pred_region
          %2904 = dma.done [#allocation5], 256
        $region148: #{translation_model_forward.3} parent=123 // pred_fallthru
          _
      $region124: #{translation_model_forward.3} parent=5 // pred_fallthru
        _
      %p2905 = scmp.le.s32.totalorder 2, %s67
      // Predicated region
      $region149: #{translation_model_forward.3} parent=5 // pred_check
        %p2906 = pneg %p2905
      $region150: #{translation_model_forward.3} parent=5 // pred_check_branch
        %2908 = sbr.rel (%p2906) target = $region152
      $region151: #{translation_model_forward.3} parent=5 // pred_region
        %s2909 = ssub.s32 %s67, 2
        // Predicated region
        $region153: #{translation_model_forward.3} parent=151 // pred_check
          %p2910 = pneg %p742
        $region154: #{translation_model_forward.3} parent=151 // pred_check_branch
          %2912 = sbr.rel (%p2910) target = $region156
        $region155: #{translation_model_forward.3} parent=151 // pred_region
          %p2913 = scmp.lt.s32.totalorder %s73, 1
          %s2914 = scalar_select %p2913, %s73, 1
          %s2915 = smul.addr %s2914, 2
          %s2916 = smul.addr %s2915, 8
          %s2917 = scalar_lea.vmem %s53, %s2916
        $region156: #{translation_model_forward.3} parent=151 // pred_fallthru
          _
        // Predicated region
        $region157: #{translation_model_forward.3} parent=151 // pred_check
          %p2918 = pneg %p768
        $region158: #{translation_model_forward.3} parent=151 // pred_check_branch
          %2920 = sbr.rel (%p2918) target = $region160
        $region159: #{translation_model_forward.3} parent=151 // pred_region
          %p2921 = scmp.lt.s32.totalorder %s73, 1
          %s2922 = scalar_select %p2921, %s73, 1
          %s2923 = smul.addr %s2922, 2
          %s2924 = smul.addr %s2923, 8
          %s2925 = scalar_lea.vmem %s55, %s2924
        $region160: #{translation_model_forward.3} parent=151 // pred_fallthru
          _
        // Predicated region
        $region161: #{translation_model_forward.3} parent=151 // pred_check
          %p2926 = pneg %p794
        $region162: #{translation_model_forward.3} parent=151 // pred_check_branch
          %2928 = sbr.rel (%p2926) target = $region164
        $region163: #{translation_model_forward.3} parent=151 // pred_region
          %p2929 = scmp.lt.s32.totalorder %s73, 1
          %s2930 = scalar_select %p2929, %s73, 1
          %s2931 = smul.addr %s2930, 2
          %s2932 = smul.addr %s2931, 8
          %s2933 = scalar_lea.vmem %s57, %s2932
        $region164: #{translation_model_forward.3} parent=151 // pred_fallthru
          _
      $region152: #{translation_model_forward.3} parent=5 // pred_fallthru
        _
    $region6: #{translation_model_forward.3} parent=1 // loop_footer
      %s71 = sadd.s32 1, %s67
    $region7: #{translation_model_forward.3} parent=1 // loop_footer_branch
      %66 = sbr.rel target = $region3
    $region8: #{translation_model_forward.3} parent=1 // loop_exit
      _
    %2934 = vsyncpa [#allocation5], 1
    %s2935 = scalar_lea.sflag [#allocation5], 1
    %2936 = vsyncpa %s2935, 1

</llo_original>
